<compile_context>
chip_gen: v7x
topology: tpu7x:2x2x1
jax: 0.10.0
libtpu: 0.0.40
codegen_flags: <defaults>
</compile_context>

<pallas_src>
import functools

import jax
import jax.numpy as jnp
from jax.experimental import pallas as pl
from jax.experimental.pallas import tpu as pltpu

LEAKY_SLOPE = 0.2
BN_EPS = 1e-5


def _pick_tile(dim, target, align):
    """Largest tile <= target that divides dim and is a multiple of `align`.

    Falls back to the full dim (always a legal block size)."""
    if dim <= target:
        return dim
    t = (min(target, dim) // align) * align
    while t >= align:
        if dim % t == 0:
            return t
        t -= align
    return dim


# ----------------------------------------------------------------------------
# Pallas kernels
# ----------------------------------------------------------------------------
def _conv_matmul_kernel(a_ref, b_ref, *rest, activation, compute_stats):
    """Tiled (M,N,K) matmul, f32 accumulator, fused activation and optional
    per-channel sum / sum-of-squares (for BatchNorm) in the last-K epilogue."""
    if compute_stats:
        o_ref, sum_ref, sq_ref, acc_ref = rest
    else:
        o_ref, acc_ref = rest

    @pl.when(pl.program_id(2) == 0)
    def _():
        acc_ref[...] = jnp.zeros_like(acc_ref)

    acc_ref[...] += jnp.dot(a_ref[...], b_ref[...],
                            preferred_element_type=jnp.float32)

    @pl.when(pl.program_id(2) == pl.num_programs(2) - 1)
    def _():
        y = acc_ref[...]
        if compute_stats:
            sum_ref[...] = jnp.sum(y, axis=0, keepdims=True).reshape(sum_ref.shape)
            sq_ref[...] = jnp.sum(y * y, axis=0, keepdims=True).reshape(sq_ref.shape)
        if activation == "leaky":
            y = jnp.where(y > 0, y, LEAKY_SLOPE * y)
        elif activation == "sigmoid":
            y = jax.nn.sigmoid(y)
        o_ref[...] = y.astype(o_ref.dtype)


def conv_matmul(a, b, *, activation=None, compute_stats=False,
                out_dtype=jnp.float32,
                tm_target=512, tn_target=512, tk_target=512):
    """(M, K) @ (K, N) with fused activation and optional BN-stat outputs.

    Returns y                      if compute_stats is False
            (y, sums, sumsqs)      if compute_stats is True
    where sums/sumsqs have shape (M_tiles, 1, N) (partial per-M-tile sums)."""
    M, K = a.shape
    K2, N = b.shape
    assert K == K2
    tm = _pick_tile(M, tm_target, 8)
    tn = _pick_tile(N, tn_target, 128)
    tk = _pick_tile(K, tk_target, 128)
    gm, gn, gk = M // tm, N // tn, K // tk

    out_shapes = [jax.ShapeDtypeStruct((M, N), out_dtype)]
    out_specs = [pl.BlockSpec((tm, tn), lambda i, j, k: (i, j))]
    if compute_stats:
        out_shapes += [jax.ShapeDtypeStruct((gm, 1, N), jnp.float32)] * 2
        out_specs += [pl.BlockSpec((1, 1, tn), lambda i, j, k: (i, 0, j))] * 2

    res = pl.pallas_call(
        functools.partial(_conv_matmul_kernel, activation=activation,
                          compute_stats=compute_stats),
        out_shape=tuple(out_shapes),
        grid_spec=pltpu.PrefetchScalarGridSpec(
            num_scalar_prefetch=0,
            grid=(gm, gn, gk),
            in_specs=[pl.BlockSpec((tm, tk), lambda i, j, k: (i, k)),
                      pl.BlockSpec((tk, tn), lambda i, j, k: (k, j))],
            out_specs=tuple(out_specs),
            scratch_shapes=[pltpu.VMEM((tm, tn), jnp.float32)]),
        compiler_params=pltpu.CompilerParams(
            dimension_semantics=("parallel", "parallel", "arbitrary")),
    )(a, b)
    return res if compute_stats else res[0]


def _bn_apply_leaky_kernel(x_ref, scale_ref, shift_ref, o_ref):
    y = x_ref[...] * scale_ref[...] + shift_ref[...]
    o_ref[...] = jnp.where(y > 0, y, LEAKY_SLOPE * y)


def batchnorm_leaky_apply(y, sums, sqs, gamma, beta, tm_target=512):
    """Training-mode BatchNorm (batch stats) + LeakyReLU(0.2) on (M, C) rows.

    Stats come pre-reduced per M-tile from the matmul epilogue, so y is only
    read once here (apply pass), not twice."""
    M, C = y.shape
    s = jnp.sum(sums, axis=(0, 1))          # (C,)
    sq = jnp.sum(sqs, axis=(0, 1))          # (C,)
    mean = s / M
    # Biased variance (matches PyTorch BN normalization); clamp guards against
    # tiny negative values from the sum-of-squares formulation.
    var = jnp.maximum(sq / M - mean * mean, 0.0)
    inv_std = jax.lax.rsqrt(var + BN_EPS)
    scale = (gamma * inv_std)[None, :]
    shift = (beta - mean * gamma * inv_std)[None, :]

    tm = _pick_tile(M, tm_target, 8)
    return pl.pallas_call(
        _bn_apply_leaky_kernel,
        out_shape=jax.ShapeDtypeStruct((M, C), jnp.float32),
        grid_spec=pltpu.PrefetchScalarGridSpec(
            num_scalar_prefetch=0,
            grid=(M // tm,),
            in_specs=[pl.BlockSpec((tm, C), lambda i: (i, 0)),
                      pl.BlockSpec((1, C), lambda i: (0, 0)),
                      pl.BlockSpec((1, C), lambda i: (0, 0))],
            out_specs=pl.BlockSpec((tm, C), lambda i: (i, 0))),
        compiler_params=pltpu.CompilerParams(
            dimension_semantics=("parallel",)),
    )(y, scale, shift)


def _final_head_kernel(a_ref, w_ref, o_ref):
    o_ref[...] = jax.nn.sigmoid(
        jnp.dot(a_ref[...], w_ref[...], preferred_element_type=jnp.float32))


def final_conv_sigmoid(a, w, tm_target=512):
    """Final Conv(512,1,4,1,0)+Sigmoid: (M, K) @ (K, 1).

    N=1 would be the worst-case lane layout and K-tiled pipelining would be
    pure overhead, so we pad the weight to a lane-dense (K, 128) slab, run a
    single K step per M tile, and slice column 0 afterwards."""
    M, K = a.shape
    w_pad = jnp.zeros((K, 128), jnp.bfloat16).at[:, 0].set(
        w[:, 0].astype(jnp.bfloat16))
    tm = _pick_tile(M, tm_target, 8)
    out = pl.pallas_call(
        _final_head_kernel,
        out_shape=jax.ShapeDtypeStruct((M, 128), jnp.float32),
        grid_spec=pltpu.PrefetchScalarGridSpec(
            num_scalar_prefetch=0,
            grid=(M // tm,),
            in_specs=[pl.BlockSpec((tm, K), lambda i: (i, 0)),
                      pl.BlockSpec((K, 128), lambda i: (0, 0))],
            out_specs=pl.BlockSpec((tm, 128), lambda i: (i, 0))),
        compiler_params=pltpu.CompilerParams(
            dimension_semantics=("parallel",)),
    )(a, w_pad)
    return out[:, :1]


# ----------------------------------------------------------------------------
# JAX glue (layout / patch extraction / parameter setup)
# ----------------------------------------------------------------------------
def im2col(x, k, stride, pad):
    """x: (N, H, W, C) -> bf16 patches (N*OH*OW, k*k*C) in (kh, kw, cin) order."""
    N, H, W, C = x.shape
    if pad:
        x = jnp.pad(x, ((0, 0), (pad, pad), (pad, pad), (0, 0)))
    OH = (H + 2 * pad - k) // stride + 1
    OW = (W + 2 * pad - k) // stride + 1
    cols = []
    for i in range(k):
        for j in range(k):
            cols.append(x[:, i:i + stride * OH:stride,
                          j:j + stride * OW:stride, :])
    patches = jnp.stack(cols, axis=3)  # (N, OH, OW, k*k, C)
    return (patches.reshape(N * OH * OW, k * k * C).astype(jnp.bfloat16),
            (N, OH, OW))


def init_params(key, channels):
    k1, k2, k3, k4 = jax.random.split(key, 4)

    def w(k, cin, cout):  # HWIO, DCGAN-style deterministic init
        return 0.02 * jax.random.normal(k, (4, 4, cin, cout), jnp.float32)

    return {
        "w1": w(k1, channels, 128),
        "w2": w(k2, 128, 256),
        "w3": w(k3, 256, 512),
        "w4": w(k4, 512, 1),
        "g2": jnp.ones((256,), jnp.float32),
        "b2": jnp.zeros((256,), jnp.float32),
        "g3": jnp.ones((512,), jnp.float32),
        "b3": jnp.zeros((512,), jnp.float32),
    }


def discriminator_forward(img_nchw, params):
    n = img_nchw.shape[0]
    x = jnp.transpose(img_nchw, (0, 2, 3, 1)).astype(jnp.float32)  # NCHW -> NHWC

    # Conv(ch,128,4,2,1) + LeakyReLU. Pad Cin to a multiple of 8 so K = 16*Cin
    # is a multiple of 128 (clean (8,128) tiles, better MXU cadence).
    cin = x.shape[-1]
    cin_p = -(-cin // 8) * 8
    w1 = params["w1"]
    if cin_p != cin:
        x = jnp.pad(x, ((0, 0), (0, 0), (0, 0), (0, cin_p - cin)))
        w1 = jnp.pad(w1, ((0, 0), (0, 0), (0, cin_p - cin), (0, 0)))
    p, (N, OH, OW) = im2col(x, 4, 2, 1)
    y = conv_matmul(p, w1.reshape(-1, 128).astype(jnp.bfloat16),
                    activation="leaky", out_dtype=jnp.bfloat16)
    x = y.reshape(N, OH, OW, 128)

    # Conv(128,256,4,2,1) + BatchNorm + LeakyReLU (stats fused in matmul epilogue)
    p, (N, OH, OW) = im2col(x, 4, 2, 1)
    y, s, sq = conv_matmul(p, params["w2"].reshape(-1, 256).astype(jnp.bfloat16),
                           compute_stats=True)
    y = batchnorm_leaky_apply(y, s, sq, params["g2"], params["b2"])
    x = y.reshape(N, OH, OW, 256)

    # Conv(256,512,4,2,1) + BatchNorm + LeakyReLU
    p, (N, OH, OW) = im2col(x, 4, 2, 1)
    y, s, sq = conv_matmul(p, params["w3"].reshape(-1, 512).astype(jnp.bfloat16),
                           compute_stats=True)
    y = batchnorm_leaky_apply(y, s, sq, params["g3"], params["b3"])
    x = y.reshape(N, OH, OW, 512)

    # Conv(512,1,4,1,0) + Sigmoid (lane-dense padded head)
    p, _ = im2col(x, 4, 1, 0)
    out = final_conv_sigmoid(p, params["w4"].reshape(-1, 1))
    return out.reshape(n, -1)  # matches output.view(img.size(0), -1)


def reference_forward(img_nchw, params):
    """Pure-JAX f32 reference for correctness checking."""
    x = img_nchw.astype(jnp.float32)

    def conv(x, w, stride, pad):
        return jax.lax.conv_general_dilated(
            x, w, (stride, stride), [(pad, pad), (pad, pad)],
            dimension_numbers=("NCHW", "HWIO", "NCHW"),
            precision=jax.lax.Precision.HIGHEST)

    def leaky(v):
        return jnp.where(v > 0, v, LEAKY_SLOPE * v)

    def bn(v, g, b):
        mean = jnp.mean(v, axis=(0, 2, 3), keepdims=True)
        var = jnp.var(v, axis=(0, 2, 3), keepdims=True)
        return (g[None, :, None, None] * (v - mean)
                * jax.lax.rsqrt(var + BN_EPS) + b[None, :, None, None])

    x = leaky(conv(x, params["w1"], 2, 1))
    x = leaky(bn(conv(x, params["w2"], 2, 1), params["g2"], params["b2"]))
    x = leaky(bn(conv(x, params["w3"], 2, 1), params["g3"], params["b3"]))
    x = jax.nn.sigmoid(conv(x, params["w4"], 1, 0))
    return x.reshape(img_nchw.shape[0], -1)


if __name__ == "__main__":
    key = jax.random.PRNGKey(0)
    pkey, xkey = jax.random.split(key)
    batch, channels, hw = 2, 3, 32  # 32x32 -> 16 -> 8 -> 4 -> 1 (final 4x4 valid conv)
    params = init_params(pkey, channels)
    img = jax.random.normal(xkey, (batch, channels, hw, hw), jnp.float32)

    fwd = jax.jit(discriminator_forward)
    out = jax.block_until_ready(fwd(img, params))

    ref = reference_forward(img, params)
    assert out.shape == (batch, 1), out.shape
    # bf16 matmul inputs with f32 accumulation -> slightly looser tolerance than f32.
    assert jnp.allclose(out, ref, rtol=1e-2, atol=1e-2), (out, ref)
    print("KERNEL_OK")
</pallas_src>

<mosaic_0001>
module attributes {stable_mosaic.version = 11 : i64} {
  func.func @_conv_matmul_kernel(%arg0: i32, %arg1: i32, %arg2: i32, %arg3: memref<512x128xbf16, #tpu.memory_space<vmem>>, %arg4: memref<128x128xbf16, #tpu.memory_space<vmem>>, %arg5: memref<512x128xbf16, #tpu.memory_space<vmem>>, %arg6: memref<512x128xf32, #tpu.memory_space<vmem>>) attributes {dimension_semantics = [#tpu.dimension_semantics<parallel>, #tpu.dimension_semantics<parallel>, #tpu.dimension_semantics<arbitrary>], iteration_bounds = array<i64: 1, 1, 1>, scalar_prefetch = 0 : i64, scratch_operands = 1 : i64, tpu.core_type = #tpu.core_type<tc>, window_params = [{transform_indices = @transform_0, window_bounds = array<i64: 512, 128>}, {transform_indices = @transform_1, window_bounds = array<i64: 128, 128>}, {transform_indices = @transform_2, window_bounds = array<i64: 512, 128>}]} {
    %c0_i32 = arith.constant 0 : i32
    %0 = arith.cmpi eq, %arg2, %c0_i32 : i32
    %1 = arith.extui %0 : i1 to i32
    %c0_i32_0 = arith.constant 0 : i32
    %2 = arith.cmpi ne, %1, %c0_i32_0 : i32
    scf.if %2 {
      %cst_10 = arith.constant 0.000000e+00 : f32
      %12 = vector.broadcast %cst_10 : f32 to vector<512x128xf32>
      %c0_11 = arith.constant 0 : index
      %c0_12 = arith.constant 0 : index
      %13 = vector.load %arg6[%c0_11, %c0_12] : memref<512x128xf32, #tpu.memory_space<vmem>>, vector<512x128xf32>
      tpu.vector_store %arg6[%c0_11, %c0_12], %12 {strides = array<i32>} : memref<512x128xf32, #tpu.memory_space<vmem>>, vector<512x128xf32>,
    } else {
    }
    %c0 = arith.constant 0 : index
    %c0_1 = arith.constant 0 : index
    %3 = vector.load %arg6[%c0, %c0_1] : memref<512x128xf32, #tpu.memory_space<vmem>>, vector<512x128xf32>
    %c0_2 = arith.constant 0 : index
    %c0_3 = arith.constant 0 : index
    %4 = vector.load %arg3[%c0_2, %c0_3] : memref<512x128xbf16, #tpu.memory_space<vmem>>, vector<512x128xbf16>
    %c0_4 = arith.constant 0 : index
    %c0_5 = arith.constant 0 : index
    %5 = vector.load %arg4[%c0_4, %c0_5] : memref<128x128xbf16, #tpu.memory_space<vmem>>, vector<128x128xbf16>
    %cst = arith.constant dense<0.000000e+00> : vector<512x128xf32>
    %6 = tpu.matmul %4, %5, %cst {dimension_numbers = #tpu.dot_dimension_numbers<[1], [0], [0], [1], [0, 0, 1, 1], [], []>} : vector<512x128xbf16>, vector<128x128xbf16>, vector<512x128xf32> -> vector<512x128xf32>
    %7 = arith.addf %3, %6 : vector<512x128xf32>
    %c0_6 = arith.constant 0 : index
    %c0_7 = arith.constant 0 : index
    %8 = vector.load %arg6[%c0_6, %c0_7] : memref<512x128xf32, #tpu.memory_space<vmem>>, vector<512x128xf32>
    tpu.vector_store %arg6[%c0_6, %c0_7], %7 {strides = array<i32>} : memref<512x128xf32, #tpu.memory_space<vmem>>, vector<512x128xf32>,
    %c0_i32_8 = arith.constant 0 : i32
    %9 = arith.cmpi eq, %arg2, %c0_i32_8 : i32
    %10 = arith.extui %9 : i1 to i32
    %c0_i32_9 = arith.constant 0 : i32
    %11 = arith.cmpi ne, %10, %c0_i32_9 : i32
    scf.if %11 {
      %c0_10 = arith.constant 0 : index
      %c0_11 = arith.constant 0 : index
      %12 = vector.load %arg6[%c0_10, %c0_11] : memref<512x128xf32, #tpu.memory_space<vmem>>, vector<512x128xf32>
      %cst_12 = arith.constant 0.000000e+00 : f32
      %13 = vector.broadcast %cst_12 : f32 to vector<512x128xf32>
      %14 = arith.cmpf ogt, %12, %13 : vector<512x128xf32>
      %cst_13 = arith.constant 2.000000e-01 : f32
      %15 = vector.broadcast %cst_13 : f32 to vector<512x128xf32>
      %16 = arith.mulf %15, %12 : vector<512x128xf32>
      %17 = arith.select %14, %12, %16 : vector<512x128xi1>, vector<512x128xf32>
      %18 = arith.truncf %17 : vector<512x128xf32> to vector<512x128xbf16>
      %c0_14 = arith.constant 0 : index
      %c0_15 = arith.constant 0 : index
      %19 = vector.load %arg5[%c0_14, %c0_15] : memref<512x128xbf16, #tpu.memory_space<vmem>>, vector<512x128xbf16>
      tpu.vector_store %arg5[%c0_14, %c0_15], %18 {strides = array<i32>} : memref<512x128xbf16, #tpu.memory_space<vmem>>, vector<512x128xbf16>,
    } else {
    }
    return
  }
  func.func @transform_0(%arg0: i32, %arg1: i32, %arg2: i32) -> (i32, i32) {
    %c0_i32 = arith.constant 0 : i32
    return %arg0, %arg2 : i32, i32
  }
  func.func @transform_1(%arg0: i32, %arg1: i32, %arg2: i32) -> (i32, i32) {
    %c0_i32 = arith.constant 0 : i32
    return %arg2, %arg1 : i32, i32
  }
  func.func @transform_2(%arg0: i32, %arg1: i32, %arg2: i32) -> (i32, i32) {
    %c0_i32 = arith.constant 0 : i32
    return %arg0, %arg1 : i32, i32
  }
}

module attributes {stable_mosaic.version = 11 : i64} {
  func.func @_bn_apply_leaky_kernel(%arg0: i32, %arg1: memref<128x256xf32, #tpu.memory_space<vmem>>, %arg2: memref<1x256xf32, #tpu.memory_space<vmem>>, %arg3: memref<1x256xf32, #tpu.memory_space<vmem>>, %arg4: memref<128x256xf32, #tpu.memory_space<vmem>>) attributes {dimension_semantics = [#tpu.dimension_semantics<parallel>], iteration_bounds = array<i64: 1>, scalar_prefetch = 0 : i64, scratch_operands = 0 : i64, tpu.core_type = #tpu.core_type<tc>, window_params = [{transform_indices = @transform_0, window_bounds = array<i64: 128, 256>}, {pipeline_mode = #tpu.pipeline_mode<synchronous>, transform_indices = @transform_1, window_bounds = array<i64: 1, 256>}, {pipeline_mode = #tpu.pipeline_mode<synchronous>, transform_indices = @transform_2, window_bounds = array<i64: 1, 256>}, {transform_indices = @transform_3, window_bounds = array<i64: 128, 256>}]} {
    %c0 = arith.constant 0 : index
    %c0_0 = arith.constant 0 : index
    %0 = vector.load %arg1[%c0, %c0_0] : memref<128x256xf32, #tpu.memory_space<vmem>>, vector<128x256xf32>
    %c0_1 = arith.constant 0 : index
    %c0_2 = arith.constant 0 : index
    %1 = vector.load %arg2[%c0_1, %c0_2] : memref<1x256xf32, #tpu.memory_space<vmem>>, vector<1x256xf32>
    %2 = vector.broadcast %1 : vector<1x256xf32> to vector<128x256xf32>
    %3 = arith.mulf %0, %2 : vector<128x256xf32>
    %c0_3 = arith.constant 0 : index
    %c0_4 = arith.constant 0 : index
    %4 = vector.load %arg3[%c0_3, %c0_4] : memref<1x256xf32, #tpu.memory_space<vmem>>, vector<1x256xf32>
    %5 = vector.broadcast %4 : vector<1x256xf32> to vector<128x256xf32>
    %6 = arith.addf %3, %5 : vector<128x256xf32>
    %cst = arith.constant 0.000000e+00 : f32
    %7 = vector.broadcast %cst : f32 to vector<128x256xf32>
    %8 = arith.cmpf ogt, %6, %7 : vector<128x256xf32>
    %cst_5 = arith.constant 2.000000e-01 : f32
    %9 = vector.broadcast %cst_5 : f32 to vector<128x256xf32>
    %10 = arith.mulf %9, %6 : vector<128x256xf32>
    %11 = arith.select %8, %6, %10 : vector<128x256xi1>, vector<128x256xf32>
    %c0_6 = arith.constant 0 : index
    %c0_7 = arith.constant 0 : index
    %12 = vector.load %arg4[%c0_6, %c0_7] : memref<128x256xf32, #tpu.memory_space<vmem>>, vector<128x256xf32>
    tpu.vector_store %arg4[%c0_6, %c0_7], %11 {strides = array<i32>} : memref<128x256xf32, #tpu.memory_space<vmem>>, vector<128x256xf32>,
    return
  }
  func.func @transform_0(%arg0: i32) -> (i32, i32) {
    %c0_i32 = arith.constant 0 : i32
    %c0_i32_0 = arith.constant 0 : i32
    return %arg0, %c0_i32 : i32, i32
  }
  func.func @transform_1(%arg0: i32) -> (i32, i32) {
    %c0_i32 = arith.constant 0 : i32
    %c0_i32_0 = arith.constant 0 : i32
    %c0_i32_1 = arith.constant 0 : i32
    return %c0_i32, %c0_i32_0 : i32, i32
  }
  func.func @transform_2(%arg0: i32) -> (i32, i32) {
    %c0_i32 = arith.constant 0 : i32
    %c0_i32_0 = arith.constant 0 : i32
    %c0_i32_1 = arith.constant 0 : i32
    return %c0_i32, %c0_i32_0 : i32, i32
  }
  func.func @transform_3(%arg0: i32) -> (i32, i32) {
    %c0_i32 = arith.constant 0 : i32
    %c0_i32_0 = arith.constant 0 : i32
    return %arg0, %c0_i32 : i32, i32
  }
}

module attributes {stable_mosaic.version = 11 : i64} {
  func.func @_conv_matmul_kernel(%arg0: i32, %arg1: i32, %arg2: i32, %arg3: memref<128x512xbf16, #tpu.memory_space<vmem>>, %arg4: memref<512x256xbf16, #tpu.memory_space<vmem>>, %arg5: memref<128x256xf32, #tpu.memory_space<vmem>>, %arg6: memref<1x1x256xf32, #tpu.memory_space<vmem>>, %arg7: memref<1x1x256xf32, #tpu.memory_space<vmem>>, %arg8: memref<128x256xf32, #tpu.memory_space<vmem>>) attributes {dimension_semantics = [#tpu.dimension_semantics<parallel>, #tpu.dimension_semantics<parallel>, #tpu.dimension_semantics<arbitrary>], iteration_bounds = array<i64: 1, 1, 4>, scalar_prefetch = 0 : i64, scratch_operands = 1 : i64, tpu.core_type = #tpu.core_type<tc>, window_params = [{transform_indices = @transform_0, window_bounds = array<i64: 128, 512>}, {transform_indices = @transform_1, window_bounds = array<i64: 512, 256>}, {transform_indices = @transform_2, window_bounds = array<i64: 128, 256>}, {transform_indices = @transform_3, window_bounds = array<i64: 1, 1, 256>}, {transform_indices = @transform_4, window_bounds = array<i64: 1, 1, 256>}]} {
    %c0_i32 = arith.constant 0 : i32
    %0 = arith.cmpi eq, %arg2, %c0_i32 : i32
    %1 = arith.extui %0 : i1 to i32
    %c0_i32_0 = arith.constant 0 : i32
    %2 = arith.cmpi ne, %1, %c0_i32_0 : i32
    scf.if %2 {
      %cst_9 = arith.constant 0.000000e+00 : f32
      %12 = vector.broadcast %cst_9 : f32 to vector<128x256xf32>
      %c0_10 = arith.constant 0 : index
      %c0_11 = arith.constant 0 : index
      %13 = vector.load %arg8[%c0_10, %c0_11] : memref<128x256xf32, #tpu.memory_space<vmem>>, vector<128x256xf32>
      tpu.vector_store %arg8[%c0_10, %c0_11], %12 {strides = array<i32>} : memref<128x256xf32, #tpu.memory_space<vmem>>, vector<128x256xf32>,
    } else {
    }
    %c0 = arith.constant 0 : index
    %c0_1 = arith.constant 0 : index
    %3 = vector.load %arg8[%c0, %c0_1] : memref<128x256xf32, #tpu.memory_space<vmem>>, vector<128x256xf32>
    %c0_2 = arith.constant 0 : index
    %c0_3 = arith.constant 0 : index
    %4 = vector.load %arg3[%c0_2, %c0_3] : memref<128x512xbf16, #tpu.memory_space<vmem>>, vector<128x512xbf16>
    %c0_4 = arith.constant 0 : index
    %c0_5 = arith.constant 0 : index
    %5 = vector.load %arg4[%c0_4, %c0_5] : memref<512x256xbf16, #tpu.memory_space<vmem>>, vector<512x256xbf16>
    %cst = arith.constant dense<0.000000e+00> : vector<128x256xf32>
    %6 = tpu.matmul %4, %5, %cst {dimension_numbers = #tpu.dot_dimension_numbers<[1], [0], [0], [1], [0, 0, 1, 1], [], []>} : vector<128x512xbf16>, vector<512x256xbf16>, vector<128x256xf32> -> vector<128x256xf32>
    %7 = arith.addf %3, %6 : vector<128x256xf32>
    %c0_6 = arith.constant 0 : index
    %c0_7 = arith.constant 0 : index
    %8 = vector.load %arg8[%c0_6, %c0_7] : memref<128x256xf32, #tpu.memory_space<vmem>>, vector<128x256xf32>
    tpu.vector_store %arg8[%c0_6, %c0_7], %7 {strides = array<i32>} : memref<128x256xf32, #tpu.memory_space<vmem>>, vector<128x256xf32>,
    %c3_i32 = arith.constant 3 : i32
    %9 = arith.cmpi eq, %arg2, %c3_i32 : i32
    %10 = arith.extui %9 : i1 to i32
    %c0_i32_8 = arith.constant 0 : i32
    %11 = arith.cmpi ne, %10, %c0_i32_8 : i32
    scf.if %11 {
      %c0_9 = arith.constant 0 : index
      %c0_10 = arith.constant 0 : index
      %12 = vector.load %arg8[%c0_9, %c0_10] : memref<128x256xf32, #tpu.memory_space<vmem>>, vector<128x256xf32>
      %cst_11 = arith.constant dense<0.000000e+00> : vector<256xf32>
      %13 = vector.multi_reduction <add>, %12, %cst_11 [0] : vector<128x256xf32> to vector<256xf32>
      %14 = vector.shape_cast %13 : vector<256xf32> to vector<1x256xf32>
      %15 = vector.shape_cast %14 : vector<1x256xf32> to vector<1x1x256xf32>
      %c0_12 = arith.constant 0 : index
      %c0_13 = arith.constant 0 : index
      %c0_14 = arith.constant 0 : index
      %16 = vector.load %arg6[%c0_12, %c0_13, %c0_14] : memref<1x1x256xf32, #tpu.memory_space<vmem>>, vector<1x1x256xf32>
      tpu.vector_store %arg6[%c0_12, %c0_13, %c0_14], %15 {strides = array<i32>} : memref<1x1x256xf32, #tpu.memory_space<vmem>>, vector<1x1x256xf32>,
      %17 = arith.mulf %12, %12 : vector<128x256xf32>
      %cst_15 = arith.constant dense<0.000000e+00> : vector<256xf32>
      %18 = vector.multi_reduction <add>, %17, %cst_15 [0] : vector<128x256xf32> to vector<256xf32>
      %19 = vector.shape_cast %18 : vector<256xf32> to vector<1x256xf32>
      %20 = vector.shape_cast %19 : vector<1x256xf32> to vector<1x1x256xf32>
      %c0_16 = arith.constant 0 : index
      %c0_17 = arith.constant 0 : index
      %c0_18 = arith.constant 0 : index
      %21 = vector.load %arg7[%c0_16, %c0_17, %c0_18] : memref<1x1x256xf32, #tpu.memory_space<vmem>>, vector<1x1x256xf32>
      tpu.vector_store %arg7[%c0_16, %c0_17, %c0_18], %20 {strides = array<i32>} : memref<1x1x256xf32, #tpu.memory_space<vmem>>, vector<1x1x256xf32>,
      %c0_19 = arith.constant 0 : index
      %c0_20 = arith.constant 0 : index
      %22 = vector.load %arg5[%c0_19, %c0_20] : memref<128x256xf32, #tpu.memory_space<vmem>>, vector<128x256xf32>
      tpu.vector_store %arg5[%c0_19, %c0_20], %12 {strides = array<i32>} : memref<128x256xf32, #tpu.memory_space<vmem>>, vector<128x256xf32>,
    } else {
    }
    return
  }
  func.func @transform_0(%arg0: i32, %arg1: i32, %arg2: i32) -> (i32, i32) {
    %c0_i32 = arith.constant 0 : i32
    return %arg0, %arg2 : i32, i32
  }
  func.func @transform_1(%arg0: i32, %arg1: i32, %arg2: i32) -> (i32, i32) {
    %c0_i32 = arith.constant 0 : i32
    return %arg2, %arg1 : i32, i32
  }
  func.func @transform_2(%arg0: i32, %arg1: i32, %arg2: i32) -> (i32, i32) {
    %c0_i32 = arith.constant 0 : i32
    return %arg0, %arg1 : i32, i32
  }
  func.func @transform_3(%arg0: i32, %arg1: i32, %arg2: i32) -> (i32, i32, i32) {
    %c0_i32 = arith.constant 0 : i32
    %c0_i32_0 = arith.constant 0 : i32
    return %arg0, %c0_i32, %arg1 : i32, i32, i32
  }
  func.func @transform_4(%arg0: i32, %arg1: i32, %arg2: i32) -> (i32, i32, i32) {
    %c0_i32 = arith.constant 0 : i32
    %c0_i32_0 = arith.constant 0 : i32
    return %arg0, %c0_i32, %arg1 : i32, i32, i32
  }
}

module attributes {stable_mosaic.version = 11 : i64} {
  func.func @_conv_matmul_kernel(%arg0: i32, %arg1: i32, %arg2: i32, %arg3: memref<32x512xbf16, #tpu.memory_space<vmem>>, %arg4: memref<512x512xbf16, #tpu.memory_space<vmem>>, %arg5: memref<32x512xf32, #tpu.memory_space<vmem>>, %arg6: memref<1x1x512xf32, #tpu.memory_space<vmem>>, %arg7: memref<1x1x512xf32, #tpu.memory_space<vmem>>, %arg8: memref<32x512xf32, #tpu.memory_space<vmem>>) attributes {dimension_semantics = [#tpu.dimension_semantics<parallel>, #tpu.dimension_semantics<parallel>, #tpu.dimension_semantics<arbitrary>], iteration_bounds = array<i64: 1, 1, 8>, scalar_prefetch = 0 : i64, scratch_operands = 1 : i64, tpu.core_type = #tpu.core_type<tc>, window_params = [{transform_indices = @transform_0, window_bounds = array<i64: 32, 512>}, {transform_indices = @transform_1, window_bounds = array<i64: 512, 512>}, {transform_indices = @transform_2, window_bounds = array<i64: 32, 512>}, {transform_indices = @transform_3, window_bounds = array<i64: 1, 1, 512>}, {transform_indices = @transform_4, window_bounds = array<i64: 1, 1, 512>}]} {
    %c0_i32 = arith.constant 0 : i32
    %0 = arith.cmpi eq, %arg2, %c0_i32 : i32
    %1 = arith.extui %0 : i1 to i32
    %c0_i32_0 = arith.constant 0 : i32
    %2 = arith.cmpi ne, %1, %c0_i32_0 : i32
    scf.if %2 {
      %cst_9 = arith.constant 0.000000e+00 : f32
      %12 = vector.broadcast %cst_9 : f32 to vector<32x512xf32>
      %c0_10 = arith.constant 0 : index
      %c0_11 = arith.constant 0 : index
      %13 = vector.load %arg8[%c0_10, %c0_11] : memref<32x512xf32, #tpu.memory_space<vmem>>, vector<32x512xf32>
      tpu.vector_store %arg8[%c0_10, %c0_11], %12 {strides = array<i32>} : memref<32x512xf32, #tpu.memory_space<vmem>>, vector<32x512xf32>,
    } else {
    }
    %c0 = arith.constant 0 : index
    %c0_1 = arith.constant 0 : index
    %3 = vector.load %arg8[%c0, %c0_1] : memref<32x512xf32, #tpu.memory_space<vmem>>, vector<32x512xf32>
    %c0_2 = arith.constant 0 : index
    %c0_3 = arith.constant 0 : index
    %4 = vector.load %arg3[%c0_2, %c0_3] : memref<32x512xbf16, #tpu.memory_space<vmem>>, vector<32x512xbf16>
    %c0_4 = arith.constant 0 : index
    %c0_5 = arith.constant 0 : index
    %5 = vector.load %arg4[%c0_4, %c0_5] : memref<512x512xbf16, #tpu.memory_space<vmem>>, vector<512x512xbf16>
    %cst = arith.constant dense<0.000000e+00> : vector<32x512xf32>
    %6 = tpu.matmul %4, %5, %cst {dimension_numbers = #tpu.dot_dimension_numbers<[1], [0], [0], [1], [0, 0, 1, 1], [], []>} : vector<32x512xbf16>, vector<512x512xbf16>, vector<32x512xf32> -> vector<32x512xf32>
    %7 = arith.addf %3, %6 : vector<32x512xf32>
    %c0_6 = arith.constant 0 : index
    %c0_7 = arith.constant 0 : index
    %8 = vector.load %arg8[%c0_6, %c0_7] : memref<32x512xf32, #tpu.memory_space<vmem>>, vector<32x512xf32>
    tpu.vector_store %arg8[%c0_6, %c0_7], %7 {strides = array<i32>} : memref<32x512xf32, #tpu.memory_space<vmem>>, vector<32x512xf32>,
    %c7_i32 = arith.constant 7 : i32
    %9 = arith.cmpi eq, %arg2, %c7_i32 : i32
    %10 = arith.extui %9 : i1 to i32
    %c0_i32_8 = arith.constant 0 : i32
    %11 = arith.cmpi ne, %10, %c0_i32_8 : i32
    scf.if %11 {
      %c0_9 = arith.constant 0 : index
      %c0_10 = arith.constant 0 : index
      %12 = vector.load %arg8[%c0_9, %c0_10] : memref<32x512xf32, #tpu.memory_space<vmem>>, vector<32x512xf32>
      %cst_11 = arith.constant dense<0.000000e+00> : vector<512xf32>
      %13 = vector.multi_reduction <add>, %12, %cst_11 [0] : vector<32x512xf32> to vector<512xf32>
      %14 = vector.shape_cast %13 : vector<512xf32> to vector<1x512xf32>
      %15 = vector.shape_cast %14 : vector<1x512xf32> to vector<1x1x512xf32>
      %c0_12 = arith.constant 0 : index
      %c0_13 = arith.constant 0 : index
      %c0_14 = arith.constant 0 : index
      %16 = vector.load %arg6[%c0_12, %c0_13, %c0_14] : memref<1x1x512xf32, #tpu.memory_space<vmem>>, vector<1x1x512xf32>
      tpu.vector_store %arg6[%c0_12, %c0_13, %c0_14], %15 {strides = array<i32>} : memref<1x1x512xf32, #tpu.memory_space<vmem>>, vector<1x1x512xf32>,
      %17 = arith.mulf %12, %12 : vector<32x512xf32>
      %cst_15 = arith.constant dense<0.000000e+00> : vector<512xf32>
      %18 = vector.multi_reduction <add>, %17, %cst_15 [0] : vector<32x512xf32> to vector<512xf32>
      %19 = vector.shape_cast %18 : vector<512xf32> to vector<1x512xf32>
      %20 = vector.shape_cast %19 : vector<1x512xf32> to vector<1x1x512xf32>
      %c0_16 = arith.constant 0 : index
      %c0_17 = arith.constant 0 : index
      %c0_18 = arith.constant 0 : index
      %21 = vector.load %arg7[%c0_16, %c0_17, %c0_18] : memref<1x1x512xf32, #tpu.memory_space<vmem>>, vector<1x1x512xf32>
      tpu.vector_store %arg7[%c0_16, %c0_17, %c0_18], %20 {strides = array<i32>} : memref<1x1x512xf32, #tpu.memory_space<vmem>>, vector<1x1x512xf32>,
      %c0_19 = arith.constant 0 : index
      %c0_20 = arith.constant 0 : index
      %22 = vector.load %arg5[%c0_19, %c0_20] : memref<32x512xf32, #tpu.memory_space<vmem>>, vector<32x512xf32>
      tpu.vector_store %arg5[%c0_19, %c0_20], %12 {strides = array<i32>} : memref<32x512xf32, #tpu.memory_space<vmem>>, vector<32x512xf32>,
    } else {
    }
    return
  }
  func.func @transform_0(%arg0: i32, %arg1: i32, %arg2: i32) -> (i32, i32) {
    %c0_i32 = arith.constant 0 : i32
    return %arg0, %arg2 : i32, i32
  }
  func.func @transform_1(%arg0: i32, %arg1: i32, %arg2: i32) -> (i32, i32) {
    %c0_i32 = arith.constant 0 : i32
    return %arg2, %arg1 : i32, i32
  }
  func.func @transform_2(%arg0: i32, %arg1: i32, %arg2: i32) -> (i32, i32) {
    %c0_i32 = arith.constant 0 : i32
    return %arg0, %arg1 : i32, i32
  }
  func.func @transform_3(%arg0: i32, %arg1: i32, %arg2: i32) -> (i32, i32, i32) {
    %c0_i32 = arith.constant 0 : i32
    %c0_i32_0 = arith.constant 0 : i32
    return %arg0, %c0_i32, %arg1 : i32, i32, i32
  }
  func.func @transform_4(%arg0: i32, %arg1: i32, %arg2: i32) -> (i32, i32, i32) {
    %c0_i32 = arith.constant 0 : i32
    %c0_i32_0 = arith.constant 0 : i32
    return %arg0, %c0_i32, %arg1 : i32, i32, i32
  }
}

module attributes {stable_mosaic.version = 11 : i64} {
  func.func @_bn_apply_leaky_kernel(%arg0: i32, %arg1: memref<32x512xf32, #tpu.memory_space<vmem>>, %arg2: memref<1x512xf32, #tpu.memory_space<vmem>>, %arg3: memref<1x512xf32, #tpu.memory_space<vmem>>, %arg4: memref<32x512xf32, #tpu.memory_space<vmem>>) attributes {dimension_semantics = [#tpu.dimension_semantics<parallel>], iteration_bounds = array<i64: 1>, scalar_prefetch = 0 : i64, scratch_operands = 0 : i64, tpu.core_type = #tpu.core_type<tc>, window_params = [{transform_indices = @transform_0, window_bounds = array<i64: 32, 512>}, {pipeline_mode = #tpu.pipeline_mode<synchronous>, transform_indices = @transform_1, window_bounds = array<i64: 1, 512>}, {pipeline_mode = #tpu.pipeline_mode<synchronous>, transform_indices = @transform_2, window_bounds = array<i64: 1, 512>}, {transform_indices = @transform_3, window_bounds = array<i64: 32, 512>}]} {
    %c0 = arith.constant 0 : index
    %c0_0 = arith.constant 0 : index
    %0 = vector.load %arg1[%c0, %c0_0] : memref<32x512xf32, #tpu.memory_space<vmem>>, vector<32x512xf32>
    %c0_1 = arith.constant 0 : index
    %c0_2 = arith.constant 0 : index
    %1 = vector.load %arg2[%c0_1, %c0_2] : memref<1x512xf32, #tpu.memory_space<vmem>>, vector<1x512xf32>
    %2 = vector.broadcast %1 : vector<1x512xf32> to vector<32x512xf32>
    %3 = arith.mulf %0, %2 : vector<32x512xf32>
    %c0_3 = arith.constant 0 : index
    %c0_4 = arith.constant 0 : index
    %4 = vector.load %arg3[%c0_3, %c0_4] : memref<1x512xf32, #tpu.memory_space<vmem>>, vector<1x512xf32>
    %5 = vector.broadcast %4 : vector<1x512xf32> to vector<32x512xf32>
    %6 = arith.addf %3, %5 : vector<32x512xf32>
    %cst = arith.constant 0.000000e+00 : f32
    %7 = vector.broadcast %cst : f32 to vector<32x512xf32>
    %8 = arith.cmpf ogt, %6, %7 : vector<32x512xf32>
    %cst_5 = arith.constant 2.000000e-01 : f32
    %9 = vector.broadcast %cst_5 : f32 to vector<32x512xf32>
    %10 = arith.mulf %9, %6 : vector<32x512xf32>
    %11 = arith.select %8, %6, %10 : vector<32x512xi1>, vector<32x512xf32>
    %c0_6 = arith.constant 0 : index
    %c0_7 = arith.constant 0 : index
    %12 = vector.load %arg4[%c0_6, %c0_7] : memref<32x512xf32, #tpu.memory_space<vmem>>, vector<32x512xf32>
    tpu.vector_store %arg4[%c0_6, %c0_7], %11 {strides = array<i32>} : memref<32x512xf32, #tpu.memory_space<vmem>>, vector<32x512xf32>,
    return
  }
  func.func @transform_0(%arg0: i32) -> (i32, i32) {
    %c0_i32 = arith.constant 0 : i32
    %c0_i32_0 = arith.constant 0 : i32
    return %arg0, %c0_i32 : i32, i32
  }
  func.func @transform_1(%arg0: i32) -> (i32, i32) {
    %c0_i32 = arith.constant 0 : i32
    %c0_i32_0 = arith.constant 0 : i32
    %c0_i32_1 = arith.constant 0 : i32
    return %c0_i32, %c0_i32_0 : i32, i32
  }
  func.func @transform_2(%arg0: i32) -> (i32, i32) {
    %c0_i32 = arith.constant 0 : i32
    %c0_i32_0 = arith.constant 0 : i32
    %c0_i32_1 = arith.constant 0 : i32
    return %c0_i32, %c0_i32_0 : i32, i32
  }
  func.func @transform_3(%arg0: i32) -> (i32, i32) {
    %c0_i32 = arith.constant 0 : i32
    %c0_i32_0 = arith.constant 0 : i32
    return %arg0, %c0_i32 : i32, i32
  }
}

module attributes {stable_mosaic.version = 11 : i64} {
  func.func @_final_head_kernel(%arg0: i32, %arg1: memref<2x8192xbf16, #tpu.memory_space<vmem>>, %arg2: memref<8192x128xbf16, #tpu.memory_space<vmem>>, %arg3: memref<2x128xf32, #tpu.memory_space<vmem>>) attributes {dimension_semantics = [#tpu.dimension_semantics<parallel>], iteration_bounds = array<i64: 1>, scalar_prefetch = 0 : i64, scratch_operands = 0 : i64, tpu.core_type = #tpu.core_type<tc>, window_params = [{transform_indices = @transform_0, window_bounds = array<i64: 2, 8192>}, {pipeline_mode = #tpu.pipeline_mode<synchronous>, transform_indices = @transform_1, window_bounds = array<i64: 8192, 128>}, {transform_indices = @transform_2, window_bounds = array<i64: 2, 128>}]} {
    %c0 = arith.constant 0 : index
    %c0_0 = arith.constant 0 : index
    %0 = vector.load %arg1[%c0, %c0_0] : memref<2x8192xbf16, #tpu.memory_space<vmem>>, vector<2x8192xbf16>
    %c0_1 = arith.constant 0 : index
    %c0_2 = arith.constant 0 : index
    %1 = vector.load %arg2[%c0_1, %c0_2] : memref<8192x128xbf16, #tpu.memory_space<vmem>>, vector<8192x128xbf16>
    %cst = arith.constant dense<0.000000e+00> : vector<2x128xf32>
    %2 = tpu.matmul %0, %1, %cst {dimension_numbers = #tpu.dot_dimension_numbers<[1], [0], [0], [1], [0, 0, 1, 1], [], []>} : vector<2x8192xbf16>, vector<8192x128xbf16>, vector<2x128xf32> -> vector<2x128xf32>
    %3 = arith.negf %2 : vector<2x128xf32>
    %4 = math.exp %3 : vector<2x128xf32>
    %cst_3 = arith.constant 1.000000e+00 : f32
    %5 = vector.broadcast %cst_3 : f32 to vector<2x128xf32>
    %6 = arith.addf %5, %4 : vector<2x128xf32>
    %7 = arith.divf %5, %6 : vector<2x128xf32>
    %c0_4 = arith.constant 0 : index
    %c0_5 = arith.constant 0 : index
    %8 = vector.load %arg3[%c0_4, %c0_5] : memref<2x128xf32, #tpu.memory_space<vmem>>, vector<2x128xf32>
    tpu.vector_store %arg3[%c0_4, %c0_5], %7 {strides = array<i32>} : memref<2x128xf32, #tpu.memory_space<vmem>>, vector<2x128xf32>,
    return
  }
  func.func @transform_0(%arg0: i32) -> (i32, i32) {
    %c0_i32 = arith.constant 0 : i32
    %c0_i32_0 = arith.constant 0 : i32
    return %arg0, %c0_i32 : i32, i32
  }
  func.func @transform_1(%arg0: i32) -> (i32, i32) {
    %c0_i32 = arith.constant 0 : i32
    %c0_i32_0 = arith.constant 0 : i32
    %c0_i32_1 = arith.constant 0 : i32
    return %c0_i32, %c0_i32_0 : i32, i32
  }
  func.func @transform_2(%arg0: i32) -> (i32, i32) {
    %c0_i32 = arith.constant 0 : i32
    %c0_i32_0 = arith.constant 0 : i32
    return %arg0, %c0_i32 : i32, i32
  }
}

</mosaic_0001>

<llo_original>
// kernel: discriminator_forward.6
$region0: #{discriminator_forward.6}
  #allocation0 [shape = 'u32[]', space=smem, size = 0x4, offset = 0x4, fixed_abs, tag = 'smem constant byte address 0x4 - core index']
  #allocation1 [shape = 'u32[144,128]{1,0:T(1,128)}', space=vmem, size = 0x12000, scoped, tag = 'internal scratch']
  #allocation2 [shape = 'f32[512,128]{1,0:T(8,128)}', space=vmem, size = 0x40000, scoped, tag = 'scratch operand']
  %s0 = inlined_call_operand.vmem [shape: bf16[512,128], index: 0, kind: input, shape index: {}]
  %s1 = inlined_call_operand.vmem [shape: bf16[128,128], index: 1, kind: input, shape index: {}]
  %s2 = inlined_call_operand.vmem [shape: bf16[512,128], index: 2, kind: output, shape index: {}]
  %s3 = sld [smem:[#allocation0]]
  $region26: #{discriminator_forward.6} parent=0
    _
  %s5 = ssub.s32 1, %s3
  %s6 = scalar_select 0, %s5, %s3
  // Predicated region
  $region2: #{discriminator_forward.6} parent=0 // pred_check
    _
  $region3: #{discriminator_forward.6} parent=0 // pred_check_branch
    %8 = sbr.rel (0) target = $region5
  $region4: #{discriminator_forward.6} parent=0 // pred_region
    _
  $region5: #{discriminator_forward.6} parent=0 // pred_fallthru
    _
  // Predicated region
  $region6: #{discriminator_forward.6} parent=0 // pred_check
    _
  $region7: #{discriminator_forward.6} parent=0 // pred_check_branch
    %10 = sbr.rel (0) target = $region9
  $region8: #{discriminator_forward.6} parent=0 // pred_region
    _
  $region9: #{discriminator_forward.6} parent=0 // pred_fallthru
    _
  %p12 = scmp.eq.s32.totalorder 0, 0
  // Predicated region
  $region10: #{discriminator_forward.6} parent=0 // pred_check
    %p13 = pneg %p12
  $region11: #{discriminator_forward.6} parent=0 // pred_check_branch
    %15 = sbr.rel (%p13) target = $region13
  $region12: #{discriminator_forward.6} parent=0 // pred_region
    %16 = vst [vmem:[#allocation2] sm:$0xff] 0.0
    %17 = vst [vmem:[#allocation2 + $0x8] sm:$0xff] 0.0
    %18 = vst [vmem:[#allocation2 + $0x10] sm:$0xff] 0.0
    %19 = vst [vmem:[#allocation2 + $0x18] sm:$0xff] 0.0
    %20 = vst [vmem:[#allocation2 + $0x20] sm:$0xff] 0.0
    %21 = vst [vmem:[#allocation2 + $0x28] sm:$0xff] 0.0
    %22 = vst [vmem:[#allocation2 + $0x30] sm:$0xff] 0.0
    %23 = vst [vmem:[#allocation2 + $0x38] sm:$0xff] 0.0
    %24 = vst [vmem:[#allocation2 + $0x40] sm:$0xff] 0.0
    %25 = vst [vmem:[#allocation2 + $0x48] sm:$0xff] 0.0
    %26 = vst [vmem:[#allocation2 + $0x50] sm:$0xff] 0.0
    %27 = vst [vmem:[#allocation2 + $0x58] sm:$0xff] 0.0
    %28 = vst [vmem:[#allocation2 + $0x60] sm:$0xff] 0.0
    %29 = vst [vmem:[#allocation2 + $0x68] sm:$0xff] 0.0
    %30 = vst [vmem:[#allocation2 + $0x70] sm:$0xff] 0.0
    %31 = vst [vmem:[#allocation2 + $0x78] sm:$0xff] 0.0
    %32 = vst [vmem:[#allocation2 + $0x80] sm:$0xff] 0.0
    %33 = vst [vmem:[#allocation2 + $0x88] sm:$0xff] 0.0
    %34 = vst [vmem:[#allocation2 + $0x90] sm:$0xff] 0.0
    %35 = vst [vmem:[#allocation2 + $0x98] sm:$0xff] 0.0
    %36 = vst [vmem:[#allocation2 + $0xa0] sm:$0xff] 0.0
    %37 = vst [vmem:[#allocation2 + $0xa8] sm:$0xff] 0.0
    %38 = vst [vmem:[#allocation2 + $0xb0] sm:$0xff] 0.0
    %39 = vst [vmem:[#allocation2 + $0xb8] sm:$0xff] 0.0
    %40 = vst [vmem:[#allocation2 + $0xc0] sm:$0xff] 0.0
    %41 = vst [vmem:[#allocation2 + $0xc8] sm:$0xff] 0.0
    %42 = vst [vmem:[#allocation2 + $0xd0] sm:$0xff] 0.0
    %43 = vst [vmem:[#allocation2 + $0xd8] sm:$0xff] 0.0
    %44 = vst [vmem:[#allocation2 + $0xe0] sm:$0xff] 0.0
    %45 = vst [vmem:[#allocation2 + $0xe8] sm:$0xff] 0.0
    %46 = vst [vmem:[#allocation2 + $0xf0] sm:$0xff] 0.0
    %47 = vst [vmem:[#allocation2 + $0xf8] sm:$0xff] 0.0
    %48 = vst [vmem:[#allocation2 + $0x100] sm:$0xff] 0.0
    %49 = vst [vmem:[#allocation2 + $0x108] sm:$0xff] 0.0
    %50 = vst [vmem:[#allocation2 + $0x110] sm:$0xff] 0.0
    %51 = vst [vmem:[#allocation2 + $0x118] sm:$0xff] 0.0
    %52 = vst [vmem:[#allocation2 + $0x120] sm:$0xff] 0.0
    %53 = vst [vmem:[#allocation2 + $0x128] sm:$0xff] 0.0
    %54 = vst [vmem:[#allocation2 + $0x130] sm:$0xff] 0.0
    %55 = vst [vmem:[#allocation2 + $0x138] sm:$0xff] 0.0
    %56 = vst [vmem:[#allocation2 + $0x140] sm:$0xff] 0.0
    %57 = vst [vmem:[#allocation2 + $0x148] sm:$0xff] 0.0
    %58 = vst [vmem:[#allocation2 + $0x150] sm:$0xff] 0.0
    %59 = vst [vmem:[#allocation2 + $0x158] sm:$0xff] 0.0
    %60 = vst [vmem:[#allocation2 + $0x160] sm:$0xff] 0.0
    %61 = vst [vmem:[#allocation2 + $0x168] sm:$0xff] 0.0
    %62 = vst [vmem:[#allocation2 + $0x170] sm:$0xff] 0.0
    %63 = vst [vmem:[#allocation2 + $0x178] sm:$0xff] 0.0
    %64 = vst [vmem:[#allocation2 + $0x180] sm:$0xff] 0.0
    %65 = vst [vmem:[#allocation2 + $0x188] sm:$0xff] 0.0
    %66 = vst [vmem:[#allocation2 + $0x190] sm:$0xff] 0.0
    %67 = vst [vmem:[#allocation2 + $0x198] sm:$0xff] 0.0
    %68 = vst [vmem:[#allocation2 + $0x1a0] sm:$0xff] 0.0
    %69 = vst [vmem:[#allocation2 + $0x1a8] sm:$0xff] 0.0
    %70 = vst [vmem:[#allocation2 + $0x1b0] sm:$0xff] 0.0
    %71 = vst [vmem:[#allocation2 + $0x1b8] sm:$0xff] 0.0
    %72 = vst [vmem:[#allocation2 + $0x1c0] sm:$0xff] 0.0
    %73 = vst [vmem:[#allocation2 + $0x1c8] sm:$0xff] 0.0
    %74 = vst [vmem:[#allocation2 + $0x1d0] sm:$0xff] 0.0
    %75 = vst [vmem:[#allocation2 + $0x1d8] sm:$0xff] 0.0
    %76 = vst [vmem:[#allocation2 + $0x1e0] sm:$0xff] 0.0
    %77 = vst [vmem:[#allocation2 + $0x1e8] sm:$0xff] 0.0
    %78 = vst [vmem:[#allocation2 + $0x1f0] sm:$0xff] 0.0
    %79 = vst [vmem:[#allocation2 + $0x1f8] sm:$0xff] 0.0
  $region13: #{discriminator_forward.6} parent=0 // pred_fallthru
    _
  %v80 = vld [vmem:[#allocation2] sm:$0xff]
  %v81 = vld [vmem:[#allocation2 + $0x8] sm:$0xff]
  %v82 = vld [vmem:[#allocation2 + $0x10] sm:$0xff]
  %v83 = vld [vmem:[#allocation2 + $0x18] sm:$0xff]
  %v84 = vld [vmem:[#allocation2 + $0x20] sm:$0xff]
  %v85 = vld [vmem:[#allocation2 + $0x28] sm:$0xff]
  %v86 = vld [vmem:[#allocation2 + $0x30] sm:$0xff]
  %v87 = vld [vmem:[#allocation2 + $0x38] sm:$0xff]
  %v88 = vld [vmem:[#allocation2 + $0x40] sm:$0xff]
  %v89 = vld [vmem:[#allocation2 + $0x48] sm:$0xff]
  %v90 = vld [vmem:[#allocation2 + $0x50] sm:$0xff]
  %v91 = vld [vmem:[#allocation2 + $0x58] sm:$0xff]
  %v92 = vld [vmem:[#allocation2 + $0x60] sm:$0xff]
  %v93 = vld [vmem:[#allocation2 + $0x68] sm:$0xff]
  %v94 = vld [vmem:[#allocation2 + $0x70] sm:$0xff]
  %v95 = vld [vmem:[#allocation2 + $0x78] sm:$0xff]
  %v96 = vld [vmem:[#allocation2 + $0x80] sm:$0xff]
  %v97 = vld [vmem:[#allocation2 + $0x88] sm:$0xff]
  %v98 = vld [vmem:[#allocation2 + $0x90] sm:$0xff]
  %v99 = vld [vmem:[#allocation2 + $0x98] sm:$0xff]
  %v100 = vld [vmem:[#allocation2 + $0xa0] sm:$0xff]
  %v101 = vld [vmem:[#allocation2 + $0xa8] sm:$0xff]
  %v102 = vld [vmem:[#allocation2 + $0xb0] sm:$0xff]
  %v103 = vld [vmem:[#allocation2 + $0xb8] sm:$0xff]
  %v104 = vld [vmem:[#allocation2 + $0xc0] sm:$0xff]
  %v105 = vld [vmem:[#allocation2 + $0xc8] sm:$0xff]
  %v106 = vld [vmem:[#allocation2 + $0xd0] sm:$0xff]
  %v107 = vld [vmem:[#allocation2 + $0xd8] sm:$0xff]
  %v108 = vld [vmem:[#allocation2 + $0xe0] sm:$0xff]
  %v109 = vld [vmem:[#allocation2 + $0xe8] sm:$0xff]
  %v110 = vld [vmem:[#allocation2 + $0xf0] sm:$0xff]
  %v111 = vld [vmem:[#allocation2 + $0xf8] sm:$0xff]
  %v112 = vld [vmem:[#allocation2 + $0x100] sm:$0xff]
  %v113 = vld [vmem:[#allocation2 + $0x108] sm:$0xff]
  %v114 = vld [vmem:[#allocation2 + $0x110] sm:$0xff]
  %v115 = vld [vmem:[#allocation2 + $0x118] sm:$0xff]
  %v116 = vld [vmem:[#allocation2 + $0x120] sm:$0xff]
  %v117 = vld [vmem:[#allocation2 + $0x128] sm:$0xff]
  %v118 = vld [vmem:[#allocation2 + $0x130] sm:$0xff]
  %v119 = vld [vmem:[#allocation2 + $0x138] sm:$0xff]
  %v120 = vld [vmem:[#allocation2 + $0x140] sm:$0xff]
  %v121 = vld [vmem:[#allocation2 + $0x148] sm:$0xff]
  %v122 = vld [vmem:[#allocation2 + $0x150] sm:$0xff]
  %v123 = vld [vmem:[#allocation2 + $0x158] sm:$0xff]
  %v124 = vld [vmem:[#allocation2 + $0x160] sm:$0xff]
  %v125 = vld [vmem:[#allocation2 + $0x168] sm:$0xff]
  %v126 = vld [vmem:[#allocation2 + $0x170] sm:$0xff]
  %v127 = vld [vmem:[#allocation2 + $0x178] sm:$0xff]
  %v128 = vld [vmem:[#allocation2 + $0x180] sm:$0xff]
  %v129 = vld [vmem:[#allocation2 + $0x188] sm:$0xff]
  %v130 = vld [vmem:[#allocation2 + $0x190] sm:$0xff]
  %v131 = vld [vmem:[#allocation2 + $0x198] sm:$0xff]
  %v132 = vld [vmem:[#allocation2 + $0x1a0] sm:$0xff]
  %v133 = vld [vmem:[#allocation2 + $0x1a8] sm:$0xff]
  %v134 = vld [vmem:[#allocation2 + $0x1b0] sm:$0xff]
  %v135 = vld [vmem:[#allocation2 + $0x1b8] sm:$0xff]
  %v136 = vld [vmem:[#allocation2 + $0x1c0] sm:$0xff]
  %v137 = vld [vmem:[#allocation2 + $0x1c8] sm:$0xff]
  %v138 = vld [vmem:[#allocation2 + $0x1d0] sm:$0xff]
  %v139 = vld [vmem:[#allocation2 + $0x1d8] sm:$0xff]
  %v140 = vld [vmem:[#allocation2 + $0x1e0] sm:$0xff]
  %v141 = vld [vmem:[#allocation2 + $0x1e8] sm:$0xff]
  %v142 = vld [vmem:[#allocation2 + $0x1f0] sm:$0xff]
  %v143 = vld [vmem:[#allocation2 + $0x1f8] sm:$0xff]
  %v144 = vld [vmem:[%s0] sm:$0xf]
  %v145 = vld [vmem:[%s0 + $0x4] sm:$0xf]
  %v146 = vld [vmem:[%s0 + $0x8] sm:$0xf]
  %v147 = vld [vmem:[%s0 + $0xc] sm:$0xf]
  %v148 = vld [vmem:[%s0 + $0x10] sm:$0xf]
  %v149 = vld [vmem:[%s0 + $0x14] sm:$0xf]
  %v150 = vld [vmem:[%s0 + $0x18] sm:$0xf]
  %v151 = vld [vmem:[%s0 + $0x1c] sm:$0xf]
  %v152 = vld [vmem:[%s0 + $0x20] sm:$0xf]
  %v153 = vld [vmem:[%s0 + $0x24] sm:$0xf]
  %v154 = vld [vmem:[%s0 + $0x28] sm:$0xf]
  %v155 = vld [vmem:[%s0 + $0x2c] sm:$0xf]
  %v156 = vld [vmem:[%s0 + $0x30] sm:$0xf]
  %v157 = vld [vmem:[%s0 + $0x34] sm:$0xf]
  %v158 = vld [vmem:[%s0 + $0x38] sm:$0xf]
  %v159 = vld [vmem:[%s0 + $0x3c] sm:$0xf]
  %v160 = vld [vmem:[%s0 + $0x40] sm:$0xf]
  %v161 = vld [vmem:[%s0 + $0x44] sm:$0xf]
  %v162 = vld [vmem:[%s0 + $0x48] sm:$0xf]
  %v163 = vld [vmem:[%s0 + $0x4c] sm:$0xf]
  %v164 = vld [vmem:[%s0 + $0x50] sm:$0xf]
  %v165 = vld [vmem:[%s0 + $0x54] sm:$0xf]
  %v166 = vld [vmem:[%s0 + $0x58] sm:$0xf]
  %v167 = vld [vmem:[%s0 + $0x5c] sm:$0xf]
  %v168 = vld [vmem:[%s0 + $0x60] sm:$0xf]
  %v169 = vld [vmem:[%s0 + $0x64] sm:$0xf]
  %v170 = vld [vmem:[%s0 + $0x68] sm:$0xf]
  %v171 = vld [vmem:[%s0 + $0x6c] sm:$0xf]
  %v172 = vld [vmem:[%s0 + $0x70] sm:$0xf]
  %v173 = vld [vmem:[%s0 + $0x74] sm:$0xf]
  %v174 = vld [vmem:[%s0 + $0x78] sm:$0xf]
  %v175 = vld [vmem:[%s0 + $0x7c] sm:$0xf]
  %v176 = vld [vmem:[%s0 + $0x80] sm:$0xf]
  %v177 = vld [vmem:[%s0 + $0x84] sm:$0xf]
  %v178 = vld [vmem:[%s0 + $0x88] sm:$0xf]
  %v179 = vld [vmem:[%s0 + $0x8c] sm:$0xf]
  %v180 = vld [vmem:[%s0 + $0x90] sm:$0xf]
  %v181 = vld [vmem:[%s0 + $0x94] sm:$0xf]
  %v182 = vld [vmem:[%s0 + $0x98] sm:$0xf]
  %v183 = vld [vmem:[%s0 + $0x9c] sm:$0xf]
  %v184 = vld [vmem:[%s0 + $0xa0] sm:$0xf]
  %v185 = vld [vmem:[%s0 + $0xa4] sm:$0xf]
  %v186 = vld [vmem:[%s0 + $0xa8] sm:$0xf]
  %v187 = vld [vmem:[%s0 + $0xac] sm:$0xf]
  %v188 = vld [vmem:[%s0 + $0xb0] sm:$0xf]
  %v189 = vld [vmem:[%s0 + $0xb4] sm:$0xf]
  %v190 = vld [vmem:[%s0 + $0xb8] sm:$0xf]
  %v191 = vld [vmem:[%s0 + $0xbc] sm:$0xf]
  %v192 = vld [vmem:[%s0 + $0xc0] sm:$0xf]
  %v193 = vld [vmem:[%s0 + $0xc4] sm:$0xf]
  %v194 = vld [vmem:[%s0 + $0xc8] sm:$0xf]
  %v195 = vld [vmem:[%s0 + $0xcc] sm:$0xf]
  %v196 = vld [vmem:[%s0 + $0xd0] sm:$0xf]
  %v197 = vld [vmem:[%s0 + $0xd4] sm:$0xf]
  %v198 = vld [vmem:[%s0 + $0xd8] sm:$0xf]
  %v199 = vld [vmem:[%s0 + $0xdc] sm:$0xf]
  %v200 = vld [vmem:[%s0 + $0xe0] sm:$0xf]
  %v201 = vld [vmem:[%s0 + $0xe4] sm:$0xf]
  %v202 = vld [vmem:[%s0 + $0xe8] sm:$0xf]
  %v203 = vld [vmem:[%s0 + $0xec] sm:$0xf]
  %v204 = vld [vmem:[%s0 + $0xf0] sm:$0xf]
  %v205 = vld [vmem:[%s0 + $0xf4] sm:$0xf]
  %v206 = vld [vmem:[%s0 + $0xf8] sm:$0xf]
  %v207 = vld [vmem:[%s0 + $0xfc] sm:$0xf]
  %v208 = vld [vmem:[%s1] sm:$0xf]
  %v209 = vld [vmem:[%s1 + $0x4] sm:$0xf]
  %v210 = vld [vmem:[%s1 + $0x8] sm:$0xf]
  %v211 = vld [vmem:[%s1 + $0xc] sm:$0xf]
  %v212 = vld [vmem:[%s1 + $0x10] sm:$0xf]
  %v213 = vld [vmem:[%s1 + $0x14] sm:$0xf]
  %v214 = vld [vmem:[%s1 + $0x18] sm:$0xf]
  %v215 = vld [vmem:[%s1 + $0x1c] sm:$0xf]
  %v216 = vld [vmem:[%s1 + $0x20] sm:$0xf]
  %v217 = vld [vmem:[%s1 + $0x24] sm:$0xf]
  %v218 = vld [vmem:[%s1 + $0x28] sm:$0xf]
  %v219 = vld [vmem:[%s1 + $0x2c] sm:$0xf]
  %v220 = vld [vmem:[%s1 + $0x30] sm:$0xf]
  %v221 = vld [vmem:[%s1 + $0x34] sm:$0xf]
  %v222 = vld [vmem:[%s1 + $0x38] sm:$0xf]
  %v223 = vld [vmem:[%s1 + $0x3c] sm:$0xf]
  %v288 = vunpack.c.l.b16 %v144
  %v289 = vunpack.c.l.b16 %v145
  %v290 = vunpack.c.l.b16 %v146
  %v291 = vunpack.c.l.b16 %v147
  %v292 = vunpack.c.l.b16 %v148
  %v293 = vunpack.c.l.b16 %v149
  %v294 = vunpack.c.l.b16 %v150
  %v295 = vunpack.c.l.b16 %v151
  %v296 = vunpack.c.l.b16 %v152
  %v297 = vunpack.c.l.b16 %v153
  %v298 = vunpack.c.l.b16 %v154
  %v299 = vunpack.c.l.b16 %v155
  %v300 = vunpack.c.l.b16 %v156
  %v301 = vunpack.c.l.b16 %v157
  %v302 = vunpack.c.l.b16 %v158
  %v303 = vunpack.c.l.b16 %v159
  %v304 = vunpack.c.l.b16 %v160
  %v305 = vunpack.c.l.b16 %v161
  %v306 = vunpack.c.l.b16 %v162
  %v307 = vunpack.c.l.b16 %v163
  %v308 = vunpack.c.l.b16 %v164
  %v309 = vunpack.c.l.b16 %v165
  %v310 = vunpack.c.l.b16 %v166
  %v311 = vunpack.c.l.b16 %v167
  %v312 = vunpack.c.l.b16 %v168
  %v313 = vunpack.c.l.b16 %v169
  %v314 = vunpack.c.l.b16 %v170
  %v315 = vunpack.c.l.b16 %v171
  %v316 = vunpack.c.l.b16 %v172
  %v317 = vunpack.c.l.b16 %v173
  %v318 = vunpack.c.l.b16 %v174
  %v319 = vunpack.c.l.b16 %v175
  %v320 = vunpack.c.l.b16 %v176
  %v321 = vunpack.c.l.b16 %v177
  %v322 = vunpack.c.l.b16 %v178
  %v323 = vunpack.c.l.b16 %v179
  %v324 = vunpack.c.l.b16 %v180
  %v325 = vunpack.c.l.b16 %v181
  %v326 = vunpack.c.l.b16 %v182
  %v327 = vunpack.c.l.b16 %v183
  %v328 = vunpack.c.l.b16 %v184
  %v329 = vunpack.c.l.b16 %v185
  %v330 = vunpack.c.l.b16 %v186
  %v331 = vunpack.c.l.b16 %v187
  %v332 = vunpack.c.l.b16 %v188
  %v333 = vunpack.c.l.b16 %v189
  %v334 = vunpack.c.l.b16 %v190
  %v335 = vunpack.c.l.b16 %v191
  %v336 = vunpack.c.l.b16 %v192
  %v337 = vunpack.c.l.b16 %v193
  %v338 = vunpack.c.l.b16 %v194
  %v339 = vunpack.c.l.b16 %v195
  %v340 = vunpack.c.l.b16 %v196
  %v341 = vunpack.c.l.b16 %v197
  %v342 = vunpack.c.l.b16 %v198
  %v343 = vunpack.c.l.b16 %v199
  %v344 = vunpack.c.l.b16 %v200
  %v345 = vunpack.c.l.b16 %v201
  %v346 = vunpack.c.l.b16 %v202
  %v347 = vunpack.c.l.b16 %v203
  %v348 = vunpack.c.l.b16 %v204
  %v349 = vunpack.c.l.b16 %v205
  %v350 = vunpack.c.l.b16 %v206
  %v351 = vunpack.c.l.b16 %v207
  %v352 = vpack.c.b16 %v289, %v288
  %v353 = vpack.c.b16 %v291, %v290
  %v354 = vpack.c.b16 %v293, %v292
  %v355 = vpack.c.b16 %v295, %v294
  %v356 = vpack.c.b16 %v297, %v296
  %v357 = vpack.c.b16 %v299, %v298
  %v358 = vpack.c.b16 %v301, %v300
  %v359 = vpack.c.b16 %v303, %v302
  %v360 = vpack.c.b16 %v305, %v304
  %v361 = vpack.c.b16 %v307, %v306
  %v362 = vpack.c.b16 %v309, %v308
  %v363 = vpack.c.b16 %v311, %v310
  %v364 = vpack.c.b16 %v313, %v312
  %v365 = vpack.c.b16 %v315, %v314
  %v366 = vpack.c.b16 %v317, %v316
  %v367 = vpack.c.b16 %v319, %v318
  %v368 = vpack.c.b16 %v321, %v320
  %v369 = vpack.c.b16 %v323, %v322
  %v370 = vpack.c.b16 %v325, %v324
  %v371 = vpack.c.b16 %v327, %v326
  %v372 = vpack.c.b16 %v329, %v328
  %v373 = vpack.c.b16 %v331, %v330
  %v374 = vpack.c.b16 %v333, %v332
  %v375 = vpack.c.b16 %v335, %v334
  %v376 = vpack.c.b16 %v337, %v336
  %v377 = vpack.c.b16 %v339, %v338
  %v378 = vpack.c.b16 %v341, %v340
  %v379 = vpack.c.b16 %v343, %v342
  %v380 = vpack.c.b16 %v345, %v344
  %v381 = vpack.c.b16 %v347, %v346
  %v382 = vpack.c.b16 %v349, %v348
  %v383 = vpack.c.b16 %v351, %v350
  %v432 = vunpack.c.l.b16 %v208
  %v433 = vunpack.c.l.b16 %v209
  %v434 = vunpack.c.l.b16 %v210
  %v435 = vunpack.c.l.b16 %v211
  %v436 = vunpack.c.l.b16 %v212
  %v437 = vunpack.c.l.b16 %v213
  %v438 = vunpack.c.l.b16 %v214
  %v439 = vunpack.c.l.b16 %v215
  %v440 = vunpack.c.l.b16 %v216
  %v441 = vunpack.c.l.b16 %v217
  %v442 = vunpack.c.l.b16 %v218
  %v443 = vunpack.c.l.b16 %v219
  %v444 = vunpack.c.l.b16 %v220
  %v445 = vunpack.c.l.b16 %v221
  %v446 = vunpack.c.l.b16 %v222
  %v447 = vunpack.c.l.b16 %v223
  %v448 = vpack.c.b16 %v433, %v432
  %v449 = vpack.c.b16 %v435, %v434
  %v450 = vpack.c.b16 %v437, %v436
  %v451 = vpack.c.b16 %v439, %v438
  %v452 = vpack.c.b16 %v441, %v440
  %v453 = vpack.c.b16 %v443, %v442
  %v454 = vpack.c.b16 %v445, %v444
  %v455 = vpack.c.b16 %v447, %v446
  %464 = vmatprep.subr.bf16.mxu0 0
  %465 = vmatpush1.bf16.msra.mxu0 %v448
  %466 = vmatprep.subr.bf16.mxu0 0
  %467 = vmatpush1.bf16.msra.mxu0 %v449
  %468 = vmatprep.subr.bf16.mxu0 0
  %469 = vmatpush1.bf16.msra.mxu0 %v450
  %470 = vmatprep.subr.bf16.mxu0 0
  %471 = vmatpush1.bf16.msra.mxu0 %v451
  %472 = vmatprep.subr.bf16.mxu0 0
  %473 = vmatpush1.bf16.msra.mxu0 %v452
  %474 = vmatprep.subr.bf16.mxu0 0
  %475 = vmatpush1.bf16.msra.mxu0 %v453
  %476 = vmatprep.subr.bf16.mxu0 0
  %477 = vmatpush1.bf16.msra.mxu0 %v454
  %478 = vmatprep.subr.bf16.mxu0 0
  %479 = vmatpush1.bf16.msra.mxu0 %v455
  %480 = vmatprep.subr.bf16.mxu0 0
  %481 = vmatpush1.bf16.msra.mxu0 0
  %482 = vmatprep.subr.bf16.mxu0 0
  %483 = vmatpush1.bf16.msra.mxu0 0
  %484 = vmatprep.subr.bf16.mxu0 0
  %485 = vmatpush1.bf16.msra.mxu0 0
  %486 = vmatprep.subr.bf16.mxu0 0
  %487 = vmatpush1.bf16.msra.mxu0 0
  %488 = vmatprep.subr.bf16.mxu0 0
  %489 = vmatpush1.bf16.msra.mxu0 0
  %490 = vmatprep.subr.bf16.mxu0 0
  %491 = vmatpush1.bf16.msra.mxu0 0
  %492 = vmatprep.subr.bf16.mxu0 0
  %493 = vmatpush1.bf16.msra.mxu0 0
  %494 = vmatprep.subr.bf16.mxu0 0
  %495 = vmatpush1.bf16.msra.mxu0 0
  %496 = vmatprep.mubr.bf16.mxu0 0
  %497 = vmatmul.mubr.bf16.gmra.mrb[0].mxu0 %v352
  %v498 = vpop.f32.mrb[0].mxu0
  %v499 = vadd.f32 0.0, %v498
  %v500 = vpop.f32.mrb[0].mxu0
  %v501 = vpop.f32.mrb[0].mxu0
  %v502 = vadd.f32 0.0, %v501
  %v503 = vpop.f32.mrb[0].mxu0
  %504 = vmatprep.mubr.bf16.mxu0 0
  %505 = vmatmul.mubr.bf16.gmra.mrb[0].mxu0 %v353
  %v506 = vpop.f32.mrb[0].mxu0
  %v507 = vadd.f32 0.0, %v506
  %v508 = vpop.f32.mrb[0].mxu0
  %v509 = vpop.f32.mrb[0].mxu0
  %v510 = vadd.f32 0.0, %v509
  %v511 = vpop.f32.mrb[0].mxu0
  %512 = vmatprep.mubr.bf16.mxu0 0
  %513 = vmatmul.mubr.bf16.gmra.mrb[0].mxu0 %v354
  %v514 = vpop.f32.mrb[0].mxu0
  %v515 = vadd.f32 0.0, %v514
  %v516 = vpop.f32.mrb[0].mxu0
  %v517 = vpop.f32.mrb[0].mxu0
  %v518 = vadd.f32 0.0, %v517
  %v519 = vpop.f32.mrb[0].mxu0
  %520 = vmatprep.mubr.bf16.mxu0 0
  %521 = vmatmul.mubr.bf16.gmra.mrb[0].mxu0 %v355
  %v522 = vpop.f32.mrb[0].mxu0
  %v523 = vadd.f32 0.0, %v522
  %v524 = vpop.f32.mrb[0].mxu0
  %v525 = vpop.f32.mrb[0].mxu0
  %v526 = vadd.f32 0.0, %v525
  %v527 = vpop.f32.mrb[0].mxu0
  %528 = vmatprep.mubr.bf16.mxu0 0
  %529 = vmatmul.mubr.bf16.gmra.mrb[0].mxu0 %v356
  %v530 = vpop.f32.mrb[0].mxu0
  %v531 = vadd.f32 0.0, %v530
  %v532 = vpop.f32.mrb[0].mxu0
  %v533 = vpop.f32.mrb[0].mxu0
  %v534 = vadd.f32 0.0, %v533
  %v535 = vpop.f32.mrb[0].mxu0
  %536 = vmatprep.mubr.bf16.mxu0 0
  %537 = vmatmul.mubr.bf16.gmra.mrb[0].mxu0 %v357
  %v538 = vpop.f32.mrb[0].mxu0
  %v539 = vadd.f32 0.0, %v538
  %v540 = vpop.f32.mrb[0].mxu0
  %v541 = vpop.f32.mrb[0].mxu0
  %v542 = vadd.f32 0.0, %v541
  %v543 = vpop.f32.mrb[0].mxu0
  %544 = vmatprep.mubr.bf16.mxu0 0
  %545 = vmatmul.mubr.bf16.gmra.mrb[0].mxu0 %v358
  %v546 = vpop.f32.mrb[0].mxu0
  %v547 = vadd.f32 0.0, %v546
  %v548 = vpop.f32.mrb[0].mxu0
  %v549 = vpop.f32.mrb[0].mxu0
  %v550 = vadd.f32 0.0, %v549
  %v551 = vpop.f32.mrb[0].mxu0
  %552 = vmatprep.mubr.bf16.mxu0 0
  %553 = vmatmul.mubr.bf16.gmra.mrb[0].mxu0 %v359
  %v554 = vpop.f32.mrb[0].mxu0
  %v555 = vadd.f32 0.0, %v554
  %v556 = vpop.f32.mrb[0].mxu0
  %v557 = vpop.f32.mrb[0].mxu0
  %v558 = vadd.f32 0.0, %v557
  %v559 = vpop.f32.mrb[0].mxu0
  %560 = vmatprep.mubr.bf16.mxu0 0
  %561 = vmatmul.mubr.bf16.gmra.mrb[0].mxu0 %v360
  %v562 = vpop.f32.mrb[0].mxu0
  %v563 = vadd.f32 0.0, %v562
  %v564 = vpop.f32.mrb[0].mxu0
  %v565 = vpop.f32.mrb[0].mxu0
  %v566 = vadd.f32 0.0, %v565
  %v567 = vpop.f32.mrb[0].mxu0
  %568 = vmatprep.mubr.bf16.mxu0 0
  %569 = vmatmul.mubr.bf16.gmra.mrb[0].mxu0 %v361
  %v570 = vpop.f32.mrb[0].mxu0
  %v571 = vadd.f32 0.0, %v570
  %v572 = vpop.f32.mrb[0].mxu0
  %v573 = vpop.f32.mrb[0].mxu0
  %v574 = vadd.f32 0.0, %v573
  %v575 = vpop.f32.mrb[0].mxu0
  %576 = vmatprep.mubr.bf16.mxu0 0
  %577 = vmatmul.mubr.bf16.gmra.mrb[0].mxu0 %v362
  %v578 = vpop.f32.mrb[0].mxu0
  %v579 = vadd.f32 0.0, %v578
  %v580 = vpop.f32.mrb[0].mxu0
  %v581 = vpop.f32.mrb[0].mxu0
  %v582 = vadd.f32 0.0, %v581
  %v583 = vpop.f32.mrb[0].mxu0
  %584 = vmatprep.mubr.bf16.mxu0 0
  %585 = vmatmul.mubr.bf16.gmra.mrb[0].mxu0 %v363
  %v586 = vpop.f32.mrb[0].mxu0
  %v587 = vadd.f32 0.0, %v586
  %v588 = vpop.f32.mrb[0].mxu0
  %v589 = vpop.f32.mrb[0].mxu0
  %v590 = vadd.f32 0.0, %v589
  %v591 = vpop.f32.mrb[0].mxu0
  %592 = vmatprep.mubr.bf16.mxu0 0
  %593 = vmatmul.mubr.bf16.gmra.mrb[0].mxu0 %v364
  %v594 = vpop.f32.mrb[0].mxu0
  %v595 = vadd.f32 0.0, %v594
  %v596 = vpop.f32.mrb[0].mxu0
  %v597 = vpop.f32.mrb[0].mxu0
  %v598 = vadd.f32 0.0, %v597
  %v599 = vpop.f32.mrb[0].mxu0
  %600 = vmatprep.mubr.bf16.mxu0 0
  %601 = vmatmul.mubr.bf16.gmra.mrb[0].mxu0 %v365
  %v602 = vpop.f32.mrb[0].mxu0
  %v603 = vadd.f32 0.0, %v602
  %v604 = vpop.f32.mrb[0].mxu0
  %v605 = vpop.f32.mrb[0].mxu0
  %v606 = vadd.f32 0.0, %v605
  %v607 = vpop.f32.mrb[0].mxu0
  %608 = vmatprep.mubr.bf16.mxu0 0
  %609 = vmatmul.mubr.bf16.gmra.mrb[0].mxu0 %v366
  %v610 = vpop.f32.mrb[0].mxu0
  %v611 = vadd.f32 0.0, %v610
  %v612 = vpop.f32.mrb[0].mxu0
  %v613 = vpop.f32.mrb[0].mxu0
  %v614 = vadd.f32 0.0, %v613
  %v615 = vpop.f32.mrb[0].mxu0
  %616 = vmatprep.mubr.bf16.mxu0 0
  %617 = vmatmul.mubr.bf16.gmra.mrb[0].mxu0 %v367
  %v618 = vpop.f32.mrb[0].mxu0
  %v619 = vadd.f32 0.0, %v618
  %v620 = vpop.f32.mrb[0].mxu0
  %v621 = vpop.f32.mrb[0].mxu0
  %v622 = vadd.f32 0.0, %v621
  %v623 = vpop.f32.mrb[0].mxu0
  %624 = vmatprep.mubr.bf16.mxu0 0
  %625 = vmatmul.mubr.bf16.gmra.mrb[0].mxu0 %v368
  %v626 = vpop.f32.mrb[0].mxu0
  %v627 = vadd.f32 0.0, %v626
  %v628 = vpop.f32.mrb[0].mxu0
  %v629 = vpop.f32.mrb[0].mxu0
  %v630 = vadd.f32 0.0, %v629
  %v631 = vpop.f32.mrb[0].mxu0
  %632 = vmatprep.mubr.bf16.mxu0 0
  %633 = vmatmul.mubr.bf16.gmra.mrb[0].mxu0 %v369
  %v634 = vpop.f32.mrb[0].mxu0
  %v635 = vadd.f32 0.0, %v634
  %v636 = vpop.f32.mrb[0].mxu0
  %v637 = vpop.f32.mrb[0].mxu0
  %v638 = vadd.f32 0.0, %v637
  %v639 = vpop.f32.mrb[0].mxu0
  %640 = vmatprep.mubr.bf16.mxu0 0
  %641 = vmatmul.mubr.bf16.gmra.mrb[0].mxu0 %v370
  %v642 = vpop.f32.mrb[0].mxu0
  %v643 = vadd.f32 0.0, %v642
  %v644 = vpop.f32.mrb[0].mxu0
  %v645 = vpop.f32.mrb[0].mxu0
  %v646 = vadd.f32 0.0, %v645
  %v647 = vpop.f32.mrb[0].mxu0
  %648 = vmatprep.mubr.bf16.mxu0 0
  %649 = vmatmul.mubr.bf16.gmra.mrb[0].mxu0 %v371
  %v650 = vpop.f32.mrb[0].mxu0
  %v651 = vadd.f32 0.0, %v650
  %v652 = vpop.f32.mrb[0].mxu0
  %v653 = vpop.f32.mrb[0].mxu0
  %v654 = vadd.f32 0.0, %v653
  %v655 = vpop.f32.mrb[0].mxu0
  %656 = vmatprep.mubr.bf16.mxu0 0
  %657 = vmatmul.mubr.bf16.gmra.mrb[0].mxu0 %v372
  %v658 = vpop.f32.mrb[0].mxu0
  %v659 = vadd.f32 0.0, %v658
  %v660 = vpop.f32.mrb[0].mxu0
  %v661 = vpop.f32.mrb[0].mxu0
  %v662 = vadd.f32 0.0, %v661
  %v663 = vpop.f32.mrb[0].mxu0
  %664 = vmatprep.mubr.bf16.mxu0 0
  %665 = vmatmul.mubr.bf16.gmra.mrb[0].mxu0 %v373
  %v666 = vpop.f32.mrb[0].mxu0
  %v667 = vadd.f32 0.0, %v666
  %v668 = vpop.f32.mrb[0].mxu0
  %v669 = vpop.f32.mrb[0].mxu0
  %v670 = vadd.f32 0.0, %v669
  %v671 = vpop.f32.mrb[0].mxu0
  %672 = vmatprep.mubr.bf16.mxu0 0
  %673 = vmatmul.mubr.bf16.gmra.mrb[0].mxu0 %v374
  %v674 = vpop.f32.mrb[0].mxu0
  %v675 = vadd.f32 0.0, %v674
  %v676 = vpop.f32.mrb[0].mxu0
  %v677 = vpop.f32.mrb[0].mxu0
  %v678 = vadd.f32 0.0, %v677
  %v679 = vpop.f32.mrb[0].mxu0
  %680 = vmatprep.mubr.bf16.mxu0 0
  %681 = vmatmul.mubr.bf16.gmra.mrb[0].mxu0 %v375
  %v682 = vpop.f32.mrb[0].mxu0
  %v683 = vadd.f32 0.0, %v682
  %v684 = vpop.f32.mrb[0].mxu0
  %v685 = vpop.f32.mrb[0].mxu0
  %v686 = vadd.f32 0.0, %v685
  %v687 = vpop.f32.mrb[0].mxu0
  %688 = vmatprep.mubr.bf16.mxu0 0
  %689 = vmatmul.mubr.bf16.gmra.mrb[0].mxu0 %v376
  %v690 = vpop.f32.mrb[0].mxu0
  %v691 = vadd.f32 0.0, %v690
  %v692 = vpop.f32.mrb[0].mxu0
  %v693 = vpop.f32.mrb[0].mxu0
  %v694 = vadd.f32 0.0, %v693
  %v695 = vpop.f32.mrb[0].mxu0
  %696 = vmatprep.mubr.bf16.mxu0 0
  %697 = vmatmul.mubr.bf16.gmra.mrb[0].mxu0 %v377
  %v698 = vpop.f32.mrb[0].mxu0
  %v699 = vadd.f32 0.0, %v698
  %v700 = vpop.f32.mrb[0].mxu0
  %v701 = vpop.f32.mrb[0].mxu0
  %v702 = vadd.f32 0.0, %v701
  %v703 = vpop.f32.mrb[0].mxu0
  %704 = vmatprep.mubr.bf16.mxu0 0
  %705 = vmatmul.mubr.bf16.gmra.mrb[0].mxu0 %v378
  %v706 = vpop.f32.mrb[0].mxu0
  %v707 = vadd.f32 0.0, %v706
  %v708 = vpop.f32.mrb[0].mxu0
  %v709 = vpop.f32.mrb[0].mxu0
  %v710 = vadd.f32 0.0, %v709
  %v711 = vpop.f32.mrb[0].mxu0
  %712 = vmatprep.mubr.bf16.mxu0 0
  %713 = vmatmul.mubr.bf16.gmra.mrb[0].mxu0 %v379
  %v714 = vpop.f32.mrb[0].mxu0
  %v715 = vadd.f32 0.0, %v714
  %v716 = vpop.f32.mrb[0].mxu0
  %v717 = vpop.f32.mrb[0].mxu0
  %v718 = vadd.f32 0.0, %v717
  %v719 = vpop.f32.mrb[0].mxu0
  %720 = vmatprep.mubr.bf16.mxu0 0
  %721 = vmatmul.mubr.bf16.gmra.mrb[0].mxu0 %v380
  %v722 = vpop.f32.mrb[0].mxu0
  %v723 = vadd.f32 0.0, %v722
  %v724 = vpop.f32.mrb[0].mxu0
  %v725 = vpop.f32.mrb[0].mxu0
  %v726 = vadd.f32 0.0, %v725
  %v727 = vpop.f32.mrb[0].mxu0
  %728 = vmatprep.mubr.bf16.mxu0 0
  %729 = vmatmul.mubr.bf16.gmra.mrb[0].mxu0 %v381
  %v730 = vpop.f32.mrb[0].mxu0
  %v731 = vadd.f32 0.0, %v730
  %v732 = vpop.f32.mrb[0].mxu0
  %v733 = vpop.f32.mrb[0].mxu0
  %v734 = vadd.f32 0.0, %v733
  %v735 = vpop.f32.mrb[0].mxu0
  %736 = vmatprep.mubr.bf16.mxu0 0
  %737 = vmatmul.mubr.bf16.gmra.mrb[0].mxu0 %v382
  %v738 = vpop.f32.mrb[0].mxu0
  %v739 = vadd.f32 0.0, %v738
  %v740 = vpop.f32.mrb[0].mxu0
  %v741 = vpop.f32.mrb[0].mxu0
  %v742 = vadd.f32 0.0, %v741
  %v743 = vpop.f32.mrb[0].mxu0
  %744 = vmatprep.mubr.bf16.mxu0 0
  %745 = vmatmul.mubr.bf16.gmra.mrb[0].mxu0 %v383
  %v746 = vpop.f32.mrb[0].mxu0
  %v747 = vadd.f32 0.0, %v746
  %v748 = vpop.f32.mrb[0].mxu0
  %v749 = vpop.f32.mrb[0].mxu0
  %v750 = vadd.f32 0.0, %v749
  %v751 = vpop.f32.mrb[0].mxu0
  %752 = vdwg.mxu0
  %v753 = vadd.f32 %v80, %v499
  %v754 = vadd.f32 %v81, %v502
  %v755 = vadd.f32 %v82, %v507
  %v756 = vadd.f32 %v83, %v510
  %v757 = vadd.f32 %v84, %v515
  %v758 = vadd.f32 %v85, %v518
  %v759 = vadd.f32 %v86, %v523
  %v760 = vadd.f32 %v87, %v526
  %v761 = vadd.f32 %v88, %v531
  %v762 = vadd.f32 %v89, %v534
  %v763 = vadd.f32 %v90, %v539
  %v764 = vadd.f32 %v91, %v542
  %v765 = vadd.f32 %v92, %v547
  %v766 = vadd.f32 %v93, %v550
  %v767 = vadd.f32 %v94, %v555
  %v768 = vadd.f32 %v95, %v558
  %v769 = vadd.f32 %v96, %v563
  %v770 = vadd.f32 %v97, %v566
  %v771 = vadd.f32 %v98, %v571
  %v772 = vadd.f32 %v99, %v574
  %v773 = vadd.f32 %v100, %v579
  %v774 = vadd.f32 %v101, %v582
  %v775 = vadd.f32 %v102, %v587
  %v776 = vadd.f32 %v103, %v590
  %v777 = vadd.f32 %v104, %v595
  %v778 = vadd.f32 %v105, %v598
  %v779 = vadd.f32 %v106, %v603
  %v780 = vadd.f32 %v107, %v606
  %v781 = vadd.f32 %v108, %v611
  %v782 = vadd.f32 %v109, %v614
  %v783 = vadd.f32 %v110, %v619
  %v784 = vadd.f32 %v111, %v622
  %v785 = vadd.f32 %v112, %v627
  %v786 = vadd.f32 %v113, %v630
  %v787 = vadd.f32 %v114, %v635
  %v788 = vadd.f32 %v115, %v638
  %v789 = vadd.f32 %v116, %v643
  %v790 = vadd.f32 %v117, %v646
  %v791 = vadd.f32 %v118, %v651
  %v792 = vadd.f32 %v119, %v654
  %v793 = vadd.f32 %v120, %v659
  %v794 = vadd.f32 %v121, %v662
  %v795 = vadd.f32 %v122, %v667
  %v796 = vadd.f32 %v123, %v670
  %v797 = vadd.f32 %v124, %v675
  %v798 = vadd.f32 %v125, %v678
  %v799 = vadd.f32 %v126, %v683
  %v800 = vadd.f32 %v127, %v686
  %v801 = vadd.f32 %v128, %v691
  %v802 = vadd.f32 %v129, %v694
  %v803 = vadd.f32 %v130, %v699
  %v804 = vadd.f32 %v131, %v702
  %v805 = vadd.f32 %v132, %v707
  %v806 = vadd.f32 %v133, %v710
  %v807 = vadd.f32 %v134, %v715
  %v808 = vadd.f32 %v135, %v718
  %v809 = vadd.f32 %v136, %v723
  %v810 = vadd.f32 %v137, %v726
  %v811 = vadd.f32 %v138, %v731
  %v812 = vadd.f32 %v139, %v734
  %v813 = vadd.f32 %v140, %v739
  %v814 = vadd.f32 %v141, %v742
  %v815 = vadd.f32 %v142, %v747
  %v816 = vadd.f32 %v143, %v750
  %817 = vst [vmem:[#allocation2] sm:$0xff] %v753
  %818 = vst [vmem:[#allocation2 + $0x8] sm:$0xff] %v754
  %819 = vst [vmem:[#allocation2 + $0x10] sm:$0xff] %v755
  %820 = vst [vmem:[#allocation2 + $0x18] sm:$0xff] %v756
  %821 = vst [vmem:[#allocation2 + $0x20] sm:$0xff] %v757
  %822 = vst [vmem:[#allocation2 + $0x28] sm:$0xff] %v758
  %823 = vst [vmem:[#allocation2 + $0x30] sm:$0xff] %v759
  %824 = vst [vmem:[#allocation2 + $0x38] sm:$0xff] %v760
  %825 = vst [vmem:[#allocation2 + $0x40] sm:$0xff] %v761
  %826 = vst [vmem:[#allocation2 + $0x48] sm:$0xff] %v762
  %827 = vst [vmem:[#allocation2 + $0x50] sm:$0xff] %v763
  %828 = vst [vmem:[#allocation2 + $0x58] sm:$0xff] %v764
  %829 = vst [vmem:[#allocation2 + $0x60] sm:$0xff] %v765
  %830 = vst [vmem:[#allocation2 + $0x68] sm:$0xff] %v766
  %831 = vst [vmem:[#allocation2 + $0x70] sm:$0xff] %v767
  %832 = vst [vmem:[#allocation2 + $0x78] sm:$0xff] %v768
  %833 = vst [vmem:[#allocation2 + $0x80] sm:$0xff] %v769
  %834 = vst [vmem:[#allocation2 + $0x88] sm:$0xff] %v770
  %835 = vst [vmem:[#allocation2 + $0x90] sm:$0xff] %v771
  %836 = vst [vmem:[#allocation2 + $0x98] sm:$0xff] %v772
  %837 = vst [vmem:[#allocation2 + $0xa0] sm:$0xff] %v773
  %838 = vst [vmem:[#allocation2 + $0xa8] sm:$0xff] %v774
  %839 = vst [vmem:[#allocation2 + $0xb0] sm:$0xff] %v775
  %840 = vst [vmem:[#allocation2 + $0xb8] sm:$0xff] %v776
  %841 = vst [vmem:[#allocation2 + $0xc0] sm:$0xff] %v777
  %842 = vst [vmem:[#allocation2 + $0xc8] sm:$0xff] %v778
  %843 = vst [vmem:[#allocation2 + $0xd0] sm:$0xff] %v779
  %844 = vst [vmem:[#allocation2 + $0xd8] sm:$0xff] %v780
  %845 = vst [vmem:[#allocation2 + $0xe0] sm:$0xff] %v781
  %846 = vst [vmem:[#allocation2 + $0xe8] sm:$0xff] %v782
  %847 = vst [vmem:[#allocation2 + $0xf0] sm:$0xff] %v783
  %848 = vst [vmem:[#allocation2 + $0xf8] sm:$0xff] %v784
  %849 = vst [vmem:[#allocation2 + $0x100] sm:$0xff] %v785
  %850 = vst [vmem:[#allocation2 + $0x108] sm:$0xff] %v786
  %851 = vst [vmem:[#allocation2 + $0x110] sm:$0xff] %v787
  %852 = vst [vmem:[#allocation2 + $0x118] sm:$0xff] %v788
  %853 = vst [vmem:[#allocation2 + $0x120] sm:$0xff] %v789
  %854 = vst [vmem:[#allocation2 + $0x128] sm:$0xff] %v790
  %855 = vst [vmem:[#allocation2 + $0x130] sm:$0xff] %v791
  %856 = vst [vmem:[#allocation2 + $0x138] sm:$0xff] %v792
  %857 = vst [vmem:[#allocation2 + $0x140] sm:$0xff] %v793
  %858 = vst [vmem:[#allocation2 + $0x148] sm:$0xff] %v794
  %859 = vst [vmem:[#allocation2 + $0x150] sm:$0xff] %v795
  %860 = vst [vmem:[#allocation2 + $0x158] sm:$0xff] %v796
  %861 = vst [vmem:[#allocation2 + $0x160] sm:$0xff] %v797
  %862 = vst [vmem:[#allocation2 + $0x168] sm:$0xff] %v798
  %863 = vst [vmem:[#allocation2 + $0x170] sm:$0xff] %v799
  %864 = vst [vmem:[#allocation2 + $0x178] sm:$0xff] %v800
  %865 = vst [vmem:[#allocation2 + $0x180] sm:$0xff] %v801
  %866 = vst [vmem:[#allocation2 + $0x188] sm:$0xff] %v802
  %867 = vst [vmem:[#allocation2 + $0x190] sm:$0xff] %v803
  %868 = vst [vmem:[#allocation2 + $0x198] sm:$0xff] %v804
  %869 = vst [vmem:[#allocation2 + $0x1a0] sm:$0xff] %v805
  %870 = vst [vmem:[#allocation2 + $0x1a8] sm:$0xff] %v806
  %871 = vst [vmem:[#allocation2 + $0x1b0] sm:$0xff] %v807
  %872 = vst [vmem:[#allocation2 + $0x1b8] sm:$0xff] %v808
  %873 = vst [vmem:[#allocation2 + $0x1c0] sm:$0xff] %v809
  %874 = vst [vmem:[#allocation2 + $0x1c8] sm:$0xff] %v810
  %875 = vst [vmem:[#allocation2 + $0x1d0] sm:$0xff] %v811
  %876 = vst [vmem:[#allocation2 + $0x1d8] sm:$0xff] %v812
  %877 = vst [vmem:[#allocation2 + $0x1e0] sm:$0xff] %v813
  %878 = vst [vmem:[#allocation2 + $0x1e8] sm:$0xff] %v814
  %879 = vst [vmem:[#allocation2 + $0x1f0] sm:$0xff] %v815
  %880 = vst [vmem:[#allocation2 + $0x1f8] sm:$0xff] %v816
  // Predicated region
  $region14: #{discriminator_forward.6} parent=0 // pred_check
    %p881 = pneg %p12
  $region15: #{discriminator_forward.6} parent=0 // pred_check_branch
    %883 = sbr.rel (%p881) target = $region17
  $region16: #{discriminator_forward.6} parent=0 // pred_region
    %v884 = vld [vmem:[#allocation2] sm:$0xff]
    %v885 = vld [vmem:[#allocation2 + $0x8] sm:$0xff]
    %v886 = vld [vmem:[#allocation2 + $0x10] sm:$0xff]
    %v887 = vld [vmem:[#allocation2 + $0x18] sm:$0xff]
    %v888 = vld [vmem:[#allocation2 + $0x20] sm:$0xff]
    %v889 = vld [vmem:[#allocation2 + $0x28] sm:$0xff]
    %v890 = vld [vmem:[#allocation2 + $0x30] sm:$0xff]
    %v891 = vld [vmem:[#allocation2 + $0x38] sm:$0xff]
    %v892 = vld [vmem:[#allocation2 + $0x40] sm:$0xff]
    %v893 = vld [vmem:[#allocation2 + $0x48] sm:$0xff]
    %v894 = vld [vmem:[#allocation2 + $0x50] sm:$0xff]
    %v895 = vld [vmem:[#allocation2 + $0x58] sm:$0xff]
    %v896 = vld [vmem:[#allocation2 + $0x60] sm:$0xff]
    %v897 = vld [vmem:[#allocation2 + $0x68] sm:$0xff]
    %v898 = vld [vmem:[#allocation2 + $0x70] sm:$0xff]
    %v899 = vld [vmem:[#allocation2 + $0x78] sm:$0xff]
    %v900 = vld [vmem:[#allocation2 + $0x80] sm:$0xff]
    %v901 = vld [vmem:[#allocation2 + $0x88] sm:$0xff]
    %v902 = vld [vmem:[#allocation2 + $0x90] sm:$0xff]
    %v903 = vld [vmem:[#allocation2 + $0x98] sm:$0xff]
    %v904 = vld [vmem:[#allocation2 + $0xa0] sm:$0xff]
    %v905 = vld [vmem:[#allocation2 + $0xa8] sm:$0xff]
    %v906 = vld [vmem:[#allocation2 + $0xb0] sm:$0xff]
    %v907 = vld [vmem:[#allocation2 + $0xb8] sm:$0xff]
    %v908 = vld [vmem:[#allocation2 + $0xc0] sm:$0xff]
    %v909 = vld [vmem:[#allocation2 + $0xc8] sm:$0xff]
    %v910 = vld [vmem:[#allocation2 + $0xd0] sm:$0xff]
    %v911 = vld [vmem:[#allocation2 + $0xd8] sm:$0xff]
    %v912 = vld [vmem:[#allocation2 + $0xe0] sm:$0xff]
    %v913 = vld [vmem:[#allocation2 + $0xe8] sm:$0xff]
    %v914 = vld [vmem:[#allocation2 + $0xf0] sm:$0xff]
    %v915 = vld [vmem:[#allocation2 + $0xf8] sm:$0xff]
    %v916 = vld [vmem:[#allocation2 + $0x100] sm:$0xff]
    %v917 = vld [vmem:[#allocation2 + $0x108] sm:$0xff]
    %v918 = vld [vmem:[#allocation2 + $0x110] sm:$0xff]
    %v919 = vld [vmem:[#allocation2 + $0x118] sm:$0xff]
    %v920 = vld [vmem:[#allocation2 + $0x120] sm:$0xff]
    %v921 = vld [vmem:[#allocation2 + $0x128] sm:$0xff]
    %v922 = vld [vmem:[#allocation2 + $0x130] sm:$0xff]
    %v923 = vld [vmem:[#allocation2 + $0x138] sm:$0xff]
    %v924 = vld [vmem:[#allocation2 + $0x140] sm:$0xff]
    %v925 = vld [vmem:[#allocation2 + $0x148] sm:$0xff]
    %v926 = vld [vmem:[#allocation2 + $0x150] sm:$0xff]
    %v927 = vld [vmem:[#allocation2 + $0x158] sm:$0xff]
    %v928 = vld [vmem:[#allocation2 + $0x160] sm:$0xff]
    %v929 = vld [vmem:[#allocation2 + $0x168] sm:$0xff]
    %v930 = vld [vmem:[#allocation2 + $0x170] sm:$0xff]
    %v931 = vld [vmem:[#allocation2 + $0x178] sm:$0xff]
    %v932 = vld [vmem:[#allocation2 + $0x180] sm:$0xff]
    %v933 = vld [vmem:[#allocation2 + $0x188] sm:$0xff]
    %v934 = vld [vmem:[#allocation2 + $0x190] sm:$0xff]
    %v935 = vld [vmem:[#allocation2 + $0x198] sm:$0xff]
    %v936 = vld [vmem:[#allocation2 + $0x1a0] sm:$0xff]
    %v937 = vld [vmem:[#allocation2 + $0x1a8] sm:$0xff]
    %v938 = vld [vmem:[#allocation2 + $0x1b0] sm:$0xff]
    %v939 = vld [vmem:[#allocation2 + $0x1b8] sm:$0xff]
    %v940 = vld [vmem:[#allocation2 + $0x1c0] sm:$0xff]
    %v941 = vld [vmem:[#allocation2 + $0x1c8] sm:$0xff]
    %v942 = vld [vmem:[#allocation2 + $0x1d0] sm:$0xff]
    %v943 = vld [vmem:[#allocation2 + $0x1d8] sm:$0xff]
    %v944 = vld [vmem:[#allocation2 + $0x1e0] sm:$0xff]
    %v945 = vld [vmem:[#allocation2 + $0x1e8] sm:$0xff]
    %v946 = vld [vmem:[#allocation2 + $0x1f0] sm:$0xff]
    %v947 = vld [vmem:[#allocation2 + $0x1f8] sm:$0xff]
    %vm948 = vcmp.gt.f32.partialorder %v884, 0.0
    %vm949 = vcmp.gt.f32.partialorder %v885, 0.0
    %vm950 = vcmp.gt.f32.partialorder %v886, 0.0
    %vm951 = vcmp.gt.f32.partialorder %v887, 0.0
    %vm952 = vcmp.gt.f32.partialorder %v888, 0.0
    %vm953 = vcmp.gt.f32.partialorder %v889, 0.0
    %vm954 = vcmp.gt.f32.partialorder %v890, 0.0
    %vm955 = vcmp.gt.f32.partialorder %v891, 0.0
    %vm956 = vcmp.gt.f32.partialorder %v892, 0.0
    %vm957 = vcmp.gt.f32.partialorder %v893, 0.0
    %vm958 = vcmp.gt.f32.partialorder %v894, 0.0
    %vm959 = vcmp.gt.f32.partialorder %v895, 0.0
    %vm960 = vcmp.gt.f32.partialorder %v896, 0.0
    %vm961 = vcmp.gt.f32.partialorder %v897, 0.0
    %vm962 = vcmp.gt.f32.partialorder %v898, 0.0
    %vm963 = vcmp.gt.f32.partialorder %v899, 0.0
    %vm964 = vcmp.gt.f32.partialorder %v900, 0.0
    %vm965 = vcmp.gt.f32.partialorder %v901, 0.0
    %vm966 = vcmp.gt.f32.partialorder %v902, 0.0
    %vm967 = vcmp.gt.f32.partialorder %v903, 0.0
    %vm968 = vcmp.gt.f32.partialorder %v904, 0.0
    %vm969 = vcmp.gt.f32.partialorder %v905, 0.0
    %vm970 = vcmp.gt.f32.partialorder %v906, 0.0
    %vm971 = vcmp.gt.f32.partialorder %v907, 0.0
    %vm972 = vcmp.gt.f32.partialorder %v908, 0.0
    %vm973 = vcmp.gt.f32.partialorder %v909, 0.0
    %vm974 = vcmp.gt.f32.partialorder %v910, 0.0
    %vm975 = vcmp.gt.f32.partialorder %v911, 0.0
    %vm976 = vcmp.gt.f32.partialorder %v912, 0.0
    %vm977 = vcmp.gt.f32.partialorder %v913, 0.0
    %vm978 = vcmp.gt.f32.partialorder %v914, 0.0
    %vm979 = vcmp.gt.f32.partialorder %v915, 0.0
    %vm980 = vcmp.gt.f32.partialorder %v916, 0.0
    %vm981 = vcmp.gt.f32.partialorder %v917, 0.0
    %vm982 = vcmp.gt.f32.partialorder %v918, 0.0
    %vm983 = vcmp.gt.f32.partialorder %v919, 0.0
    %vm984 = vcmp.gt.f32.partialorder %v920, 0.0
    %vm985 = vcmp.gt.f32.partialorder %v921, 0.0
    %vm986 = vcmp.gt.f32.partialorder %v922, 0.0
    %vm987 = vcmp.gt.f32.partialorder %v923, 0.0
    %vm988 = vcmp.gt.f32.partialorder %v924, 0.0
    %vm989 = vcmp.gt.f32.partialorder %v925, 0.0
    %vm990 = vcmp.gt.f32.partialorder %v926, 0.0
    %vm991 = vcmp.gt.f32.partialorder %v927, 0.0
    %vm992 = vcmp.gt.f32.partialorder %v928, 0.0
    %vm993 = vcmp.gt.f32.partialorder %v929, 0.0
    %vm994 = vcmp.gt.f32.partialorder %v930, 0.0
    %vm995 = vcmp.gt.f32.partialorder %v931, 0.0
    %vm996 = vcmp.gt.f32.partialorder %v932, 0.0
    %vm997 = vcmp.gt.f32.partialorder %v933, 0.0
    %vm998 = vcmp.gt.f32.partialorder %v934, 0.0
    %vm999 = vcmp.gt.f32.partialorder %v935, 0.0
    %vm1000 = vcmp.gt.f32.partialorder %v936, 0.0
    %vm1001 = vcmp.gt.f32.partialorder %v937, 0.0
    %vm1002 = vcmp.gt.f32.partialorder %v938, 0.0
    %vm1003 = vcmp.gt.f32.partialorder %v939, 0.0
    %vm1004 = vcmp.gt.f32.partialorder %v940, 0.0
    %vm1005 = vcmp.gt.f32.partialorder %v941, 0.0
    %vm1006 = vcmp.gt.f32.partialorder %v942, 0.0
    %vm1007 = vcmp.gt.f32.partialorder %v943, 0.0
    %vm1008 = vcmp.gt.f32.partialorder %v944, 0.0
    %vm1009 = vcmp.gt.f32.partialorder %v945, 0.0
    %vm1010 = vcmp.gt.f32.partialorder %v946, 0.0
    %vm1011 = vcmp.gt.f32.partialorder %v947, 0.0
    %v1012 = vmul.f32 %v884, 0.2
    %v1013 = vmul.f32 %v885, 0.2
    %v1014 = vmul.f32 %v886, 0.2
    %v1015 = vmul.f32 %v887, 0.2
    %v1016 = vmul.f32 %v888, 0.2
    %v1017 = vmul.f32 %v889, 0.2
    %v1018 = vmul.f32 %v890, 0.2
    %v1019 = vmul.f32 %v891, 0.2
    %v1020 = vmul.f32 %v892, 0.2
    %v1021 = vmul.f32 %v893, 0.2
    %v1022 = vmul.f32 %v894, 0.2
    %v1023 = vmul.f32 %v895, 0.2
    %v1024 = vmul.f32 %v896, 0.2
    %v1025 = vmul.f32 %v897, 0.2
    %v1026 = vmul.f32 %v898, 0.2
    %v1027 = vmul.f32 %v899, 0.2
    %v1028 = vmul.f32 %v900, 0.2
    %v1029 = vmul.f32 %v901, 0.2
    %v1030 = vmul.f32 %v902, 0.2
    %v1031 = vmul.f32 %v903, 0.2
    %v1032 = vmul.f32 %v904, 0.2
    %v1033 = vmul.f32 %v905, 0.2
    %v1034 = vmul.f32 %v906, 0.2
    %v1035 = vmul.f32 %v907, 0.2
    %v1036 = vmul.f32 %v908, 0.2
    %v1037 = vmul.f32 %v909, 0.2
    %v1038 = vmul.f32 %v910, 0.2
    %v1039 = vmul.f32 %v911, 0.2
    %v1040 = vmul.f32 %v912, 0.2
    %v1041 = vmul.f32 %v913, 0.2
    %v1042 = vmul.f32 %v914, 0.2
    %v1043 = vmul.f32 %v915, 0.2
    %v1044 = vmul.f32 %v916, 0.2
    %v1045 = vmul.f32 %v917, 0.2
    %v1046 = vmul.f32 %v918, 0.2
    %v1047 = vmul.f32 %v919, 0.2
    %v1048 = vmul.f32 %v920, 0.2
    %v1049 = vmul.f32 %v921, 0.2
    %v1050 = vmul.f32 %v922, 0.2
    %v1051 = vmul.f32 %v923, 0.2
    %v1052 = vmul.f32 %v924, 0.2
    %v1053 = vmul.f32 %v925, 0.2
    %v1054 = vmul.f32 %v926, 0.2
    %v1055 = vmul.f32 %v927, 0.2
    %v1056 = vmul.f32 %v928, 0.2
    %v1057 = vmul.f32 %v929, 0.2
    %v1058 = vmul.f32 %v930, 0.2
    %v1059 = vmul.f32 %v931, 0.2
    %v1060 = vmul.f32 %v932, 0.2
    %v1061 = vmul.f32 %v933, 0.2
    %v1062 = vmul.f32 %v934, 0.2
    %v1063 = vmul.f32 %v935, 0.2
    %v1064 = vmul.f32 %v936, 0.2
    %v1065 = vmul.f32 %v937, 0.2
    %v1066 = vmul.f32 %v938, 0.2
    %v1067 = vmul.f32 %v939, 0.2
    %v1068 = vmul.f32 %v940, 0.2
    %v1069 = vmul.f32 %v941, 0.2
    %v1070 = vmul.f32 %v942, 0.2
    %v1071 = vmul.f32 %v943, 0.2
    %v1072 = vmul.f32 %v944, 0.2
    %v1073 = vmul.f32 %v945, 0.2
    %v1074 = vmul.f32 %v946, 0.2
    %v1075 = vmul.f32 %v947, 0.2
    %v1076 = vsel %vm948, %v884, %v1012
    %v1077 = vsel %vm949, %v885, %v1013
    %v1078 = vsel %vm950, %v886, %v1014
    %v1079 = vsel %vm951, %v887, %v1015
    %v1080 = vsel %vm952, %v888, %v1016
    %v1081 = vsel %vm953, %v889, %v1017
    %v1082 = vsel %vm954, %v890, %v1018
    %v1083 = vsel %vm955, %v891, %v1019
    %v1084 = vsel %vm956, %v892, %v1020
    %v1085 = vsel %vm957, %v893, %v1021
    %v1086 = vsel %vm958, %v894, %v1022
    %v1087 = vsel %vm959, %v895, %v1023
    %v1088 = vsel %vm960, %v896, %v1024
    %v1089 = vsel %vm961, %v897, %v1025
    %v1090 = vsel %vm962, %v898, %v1026
    %v1091 = vsel %vm963, %v899, %v1027
    %v1092 = vsel %vm964, %v900, %v1028
    %v1093 = vsel %vm965, %v901, %v1029
    %v1094 = vsel %vm966, %v902, %v1030
    %v1095 = vsel %vm967, %v903, %v1031
    %v1096 = vsel %vm968, %v904, %v1032
    %v1097 = vsel %vm969, %v905, %v1033
    %v1098 = vsel %vm970, %v906, %v1034
    %v1099 = vsel %vm971, %v907, %v1035
    %v1100 = vsel %vm972, %v908, %v1036
    %v1101 = vsel %vm973, %v909, %v1037
    %v1102 = vsel %vm974, %v910, %v1038
    %v1103 = vsel %vm975, %v911, %v1039
    %v1104 = vsel %vm976, %v912, %v1040
    %v1105 = vsel %vm977, %v913, %v1041
    %v1106 = vsel %vm978, %v914, %v1042
    %v1107 = vsel %vm979, %v915, %v1043
    %v1108 = vsel %vm980, %v916, %v1044
    %v1109 = vsel %vm981, %v917, %v1045
    %v1110 = vsel %vm982, %v918, %v1046
    %v1111 = vsel %vm983, %v919, %v1047
    %v1112 = vsel %vm984, %v920, %v1048
    %v1113 = vsel %vm985, %v921, %v1049
    %v1114 = vsel %vm986, %v922, %v1050
    %v1115 = vsel %vm987, %v923, %v1051
    %v1116 = vsel %vm988, %v924, %v1052
    %v1117 = vsel %vm989, %v925, %v1053
    %v1118 = vsel %vm990, %v926, %v1054
    %v1119 = vsel %vm991, %v927, %v1055
    %v1120 = vsel %vm992, %v928, %v1056
    %v1121 = vsel %vm993, %v929, %v1057
    %v1122 = vsel %vm994, %v930, %v1058
    %v1123 = vsel %vm995, %v931, %v1059
    %v1124 = vsel %vm996, %v932, %v1060
    %v1125 = vsel %vm997, %v933, %v1061
    %v1126 = vsel %vm998, %v934, %v1062
    %v1127 = vsel %vm999, %v935, %v1063
    %v1128 = vsel %vm1000, %v936, %v1064
    %v1129 = vsel %vm1001, %v937, %v1065
    %v1130 = vsel %vm1002, %v938, %v1066
    %v1131 = vsel %vm1003, %v939, %v1067
    %v1132 = vsel %vm1004, %v940, %v1068
    %v1133 = vsel %vm1005, %v941, %v1069
    %v1134 = vsel %vm1006, %v942, %v1070
    %v1135 = vsel %vm1007, %v943, %v1071
    %v1136 = vsel %vm1008, %v944, %v1072
    %v1137 = vsel %vm1009, %v945, %v1073
    %v1138 = vsel %vm1010, %v946, %v1074
    %v1139 = vsel %vm1011, %v947, %v1075
    %v1140 = vpack.c.bf16 %v1077, %v1076
    %v1141 = vpack.c.bf16 %v1079, %v1078
    %v1142 = vpack.c.bf16 %v1081, %v1080
    %v1143 = vpack.c.bf16 %v1083, %v1082
    %v1144 = vpack.c.bf16 %v1085, %v1084
    %v1145 = vpack.c.bf16 %v1087, %v1086
    %v1146 = vpack.c.bf16 %v1089, %v1088
    %v1147 = vpack.c.bf16 %v1091, %v1090
    %v1148 = vpack.c.bf16 %v1093, %v1092
    %v1149 = vpack.c.bf16 %v1095, %v1094
    %v1150 = vpack.c.bf16 %v1097, %v1096
    %v1151 = vpack.c.bf16 %v1099, %v1098
    %v1152 = vpack.c.bf16 %v1101, %v1100
    %v1153 = vpack.c.bf16 %v1103, %v1102
    %v1154 = vpack.c.bf16 %v1105, %v1104
    %v1155 = vpack.c.bf16 %v1107, %v1106
    %v1156 = vpack.c.bf16 %v1109, %v1108
    %v1157 = vpack.c.bf16 %v1111, %v1110
    %v1158 = vpack.c.bf16 %v1113, %v1112
    %v1159 = vpack.c.bf16 %v1115, %v1114
    %v1160 = vpack.c.bf16 %v1117, %v1116
    %v1161 = vpack.c.bf16 %v1119, %v1118
    %v1162 = vpack.c.bf16 %v1121, %v1120
    %v1163 = vpack.c.bf16 %v1123, %v1122
    %v1164 = vpack.c.bf16 %v1125, %v1124
    %v1165 = vpack.c.bf16 %v1127, %v1126
    %v1166 = vpack.c.bf16 %v1129, %v1128
    %v1167 = vpack.c.bf16 %v1131, %v1130
    %v1168 = vpack.c.bf16 %v1133, %v1132
    %v1169 = vpack.c.bf16 %v1135, %v1134
    %v1170 = vpack.c.bf16 %v1137, %v1136
    %v1171 = vpack.c.bf16 %v1139, %v1138
    %v1204 = vunpack.c.l.b16 %v1140
    %v1205 = vunpack.c.h.b16 %v1140
    %v1206 = vunpack.c.l.b16 %v1141
    %v1207 = vunpack.c.h.b16 %v1141
    %v1208 = vunpack.c.l.b16 %v1142
    %v1209 = vunpack.c.h.b16 %v1142
    %v1210 = vunpack.c.l.b16 %v1143
    %v1211 = vunpack.c.h.b16 %v1143
    %v1212 = vunpack.c.l.b16 %v1144
    %v1213 = vunpack.c.h.b16 %v1144
    %v1214 = vunpack.c.l.b16 %v1145
    %v1215 = vunpack.c.h.b16 %v1145
    %v1216 = vunpack.c.l.b16 %v1146
    %v1217 = vunpack.c.h.b16 %v1146
    %v1218 = vunpack.c.l.b16 %v1147
    %v1219 = vunpack.c.h.b16 %v1147
    %v1220 = vunpack.c.l.b16 %v1148
    %v1221 = vunpack.c.h.b16 %v1148
    %v1222 = vunpack.c.l.b16 %v1149
    %v1223 = vunpack.c.h.b16 %v1149
    %v1224 = vunpack.c.l.b16 %v1150
    %v1225 = vunpack.c.h.b16 %v1150
    %v1226 = vunpack.c.l.b16 %v1151
    %v1227 = vunpack.c.h.b16 %v1151
    %v1228 = vunpack.c.l.b16 %v1152
    %v1229 = vunpack.c.h.b16 %v1152
    %v1230 = vunpack.c.l.b16 %v1153
    %v1231 = vunpack.c.h.b16 %v1153
    %v1232 = vunpack.c.l.b16 %v1154
    %v1233 = vunpack.c.h.b16 %v1154
    %v1234 = vunpack.c.l.b16 %v1155
    %v1235 = vunpack.c.h.b16 %v1155
    %v1236 = vunpack.c.l.b16 %v1156
    %v1237 = vunpack.c.h.b16 %v1156
    %v1238 = vunpack.c.l.b16 %v1157
    %v1239 = vunpack.c.h.b16 %v1157
    %v1240 = vunpack.c.l.b16 %v1158
    %v1241 = vunpack.c.h.b16 %v1158
    %v1242 = vunpack.c.l.b16 %v1159
    %v1243 = vunpack.c.h.b16 %v1159
    %v1244 = vunpack.c.l.b16 %v1160
    %v1245 = vunpack.c.h.b16 %v1160
    %v1246 = vunpack.c.l.b16 %v1161
    %v1247 = vunpack.c.h.b16 %v1161
    %v1248 = vunpack.c.l.b16 %v1162
    %v1249 = vunpack.c.h.b16 %v1162
    %v1250 = vunpack.c.l.b16 %v1163
    %v1251 = vunpack.c.h.b16 %v1163
    %v1252 = vunpack.c.l.b16 %v1164
    %v1253 = vunpack.c.h.b16 %v1164
    %v1254 = vunpack.c.l.b16 %v1165
    %v1255 = vunpack.c.h.b16 %v1165
    %v1256 = vunpack.c.l.b16 %v1166
    %v1257 = vunpack.c.h.b16 %v1166
    %v1258 = vunpack.c.l.b16 %v1167
    %v1259 = vunpack.c.h.b16 %v1167
    %v1260 = vunpack.c.l.b16 %v1168
    %v1261 = vunpack.c.h.b16 %v1168
    %v1262 = vunpack.c.l.b16 %v1169
    %v1263 = vunpack.c.h.b16 %v1169
    %v1264 = vunpack.c.l.b16 %v1170
    %v1265 = vunpack.c.h.b16 %v1170
    %v1266 = vunpack.c.l.b16 %v1171
    %v1267 = vunpack.c.h.b16 %v1171
    %v1268 = vpack.c.b16 %v1204, %v1204
    %v1269 = vpack.c.b16 %v1205, %v1205
    %v1270 = vpack.c.b16 %v1206, %v1206
    %v1271 = vpack.c.b16 %v1207, %v1207
    %v1272 = vpack.c.b16 %v1208, %v1208
    %v1273 = vpack.c.b16 %v1209, %v1209
    %v1274 = vpack.c.b16 %v1210, %v1210
    %v1275 = vpack.c.b16 %v1211, %v1211
    %v1276 = vpack.c.b16 %v1212, %v1212
    %v1277 = vpack.c.b16 %v1213, %v1213
    %v1278 = vpack.c.b16 %v1214, %v1214
    %v1279 = vpack.c.b16 %v1215, %v1215
    %v1280 = vpack.c.b16 %v1216, %v1216
    %v1281 = vpack.c.b16 %v1217, %v1217
    %v1282 = vpack.c.b16 %v1218, %v1218
    %v1283 = vpack.c.b16 %v1219, %v1219
    %v1284 = vpack.c.b16 %v1220, %v1220
    %v1285 = vpack.c.b16 %v1221, %v1221
    %v1286 = vpack.c.b16 %v1222, %v1222
    %v1287 = vpack.c.b16 %v1223, %v1223
    %v1288 = vpack.c.b16 %v1224, %v1224
    %v1289 = vpack.c.b16 %v1225, %v1225
    %v1290 = vpack.c.b16 %v1226, %v1226
    %v1291 = vpack.c.b16 %v1227, %v1227
    %v1292 = vpack.c.b16 %v1228, %v1228
    %v1293 = vpack.c.b16 %v1229, %v1229
    %v1294 = vpack.c.b16 %v1230, %v1230
    %v1295 = vpack.c.b16 %v1231, %v1231
    %v1296 = vpack.c.b16 %v1232, %v1232
    %v1297 = vpack.c.b16 %v1233, %v1233
    %v1298 = vpack.c.b16 %v1234, %v1234
    %v1299 = vpack.c.b16 %v1235, %v1235
    %v1300 = vpack.c.b16 %v1236, %v1236
    %v1301 = vpack.c.b16 %v1237, %v1237
    %v1302 = vpack.c.b16 %v1238, %v1238
    %v1303 = vpack.c.b16 %v1239, %v1239
    %v1304 = vpack.c.b16 %v1240, %v1240
    %v1305 = vpack.c.b16 %v1241, %v1241
    %v1306 = vpack.c.b16 %v1242, %v1242
    %v1307 = vpack.c.b16 %v1243, %v1243
    %v1308 = vpack.c.b16 %v1244, %v1244
    %v1309 = vpack.c.b16 %v1245, %v1245
    %v1310 = vpack.c.b16 %v1246, %v1246
    %v1311 = vpack.c.b16 %v1247, %v1247
    %v1312 = vpack.c.b16 %v1248, %v1248
    %v1313 = vpack.c.b16 %v1249, %v1249
    %v1314 = vpack.c.b16 %v1250, %v1250
    %v1315 = vpack.c.b16 %v1251, %v1251
    %v1316 = vpack.c.b16 %v1252, %v1252
    %v1317 = vpack.c.b16 %v1253, %v1253
    %v1318 = vpack.c.b16 %v1254, %v1254
    %v1319 = vpack.c.b16 %v1255, %v1255
    %v1320 = vpack.c.b16 %v1256, %v1256
    %v1321 = vpack.c.b16 %v1257, %v1257
    %v1322 = vpack.c.b16 %v1258, %v1258
    %v1323 = vpack.c.b16 %v1259, %v1259
    %v1324 = vpack.c.b16 %v1260, %v1260
    %v1325 = vpack.c.b16 %v1261, %v1261
    %v1326 = vpack.c.b16 %v1262, %v1262
    %v1327 = vpack.c.b16 %v1263, %v1263
    %v1328 = vpack.c.b16 %v1264, %v1264
    %v1329 = vpack.c.b16 %v1265, %v1265
    %v1330 = vpack.c.b16 %v1266, %v1266
    %v1331 = vpack.c.b16 %v1267, %v1267
    %1396 = vst [vmem:[%s2] sm:$0xf] %v1268
    %1397 = vst [vmem:[%s2 + $0x4] sm:$0xf] %v1269
    %1398 = vst [vmem:[%s2 + $0x8] sm:$0xf] %v1270
    %1399 = vst [vmem:[%s2 + $0xc] sm:$0xf] %v1271
    %1400 = vst [vmem:[%s2 + $0x10] sm:$0xf] %v1272
    %1401 = vst [vmem:[%s2 + $0x14] sm:$0xf] %v1273
    %1402 = vst [vmem:[%s2 + $0x18] sm:$0xf] %v1274
    %1403 = vst [vmem:[%s2 + $0x1c] sm:$0xf] %v1275
    %1404 = vst [vmem:[%s2 + $0x20] sm:$0xf] %v1276
    %1405 = vst [vmem:[%s2 + $0x24] sm:$0xf] %v1277
    %1406 = vst [vmem:[%s2 + $0x28] sm:$0xf] %v1278
    %1407 = vst [vmem:[%s2 + $0x2c] sm:$0xf] %v1279
    %1408 = vst [vmem:[%s2 + $0x30] sm:$0xf] %v1280
    %1409 = vst [vmem:[%s2 + $0x34] sm:$0xf] %v1281
    %1410 = vst [vmem:[%s2 + $0x38] sm:$0xf] %v1282
    %1411 = vst [vmem:[%s2 + $0x3c] sm:$0xf] %v1283
    %1412 = vst [vmem:[%s2 + $0x40] sm:$0xf] %v1284
    %1413 = vst [vmem:[%s2 + $0x44] sm:$0xf] %v1285
    %1414 = vst [vmem:[%s2 + $0x48] sm:$0xf] %v1286
    %1415 = vst [vmem:[%s2 + $0x4c] sm:$0xf] %v1287
    %1416 = vst [vmem:[%s2 + $0x50] sm:$0xf] %v1288
    %1417 = vst [vmem:[%s2 + $0x54] sm:$0xf] %v1289
    %1418 = vst [vmem:[%s2 + $0x58] sm:$0xf] %v1290
    %1419 = vst [vmem:[%s2 + $0x5c] sm:$0xf] %v1291
    %1420 = vst [vmem:[%s2 + $0x60] sm:$0xf] %v1292
    %1421 = vst [vmem:[%s2 + $0x64] sm:$0xf] %v1293
    %1422 = vst [vmem:[%s2 + $0x68] sm:$0xf] %v1294
    %1423 = vst [vmem:[%s2 + $0x6c] sm:$0xf] %v1295
    %1424 = vst [vmem:[%s2 + $0x70] sm:$0xf] %v1296
    %1425 = vst [vmem:[%s2 + $0x74] sm:$0xf] %v1297
    %1426 = vst [vmem:[%s2 + $0x78] sm:$0xf] %v1298
    %1427 = vst [vmem:[%s2 + $0x7c] sm:$0xf] %v1299
    %1428 = vst [vmem:[%s2 + $0x80] sm:$0xf] %v1300
    %1429 = vst [vmem:[%s2 + $0x84] sm:$0xf] %v1301
    %1430 = vst [vmem:[%s2 + $0x88] sm:$0xf] %v1302
    %1431 = vst [vmem:[%s2 + $0x8c] sm:$0xf] %v1303
    %1432 = vst [vmem:[%s2 + $0x90] sm:$0xf] %v1304
    %1433 = vst [vmem:[%s2 + $0x94] sm:$0xf] %v1305
    %1434 = vst [vmem:[%s2 + $0x98] sm:$0xf] %v1306
    %1435 = vst [vmem:[%s2 + $0x9c] sm:$0xf] %v1307
    %1436 = vst [vmem:[%s2 + $0xa0] sm:$0xf] %v1308
    %1437 = vst [vmem:[%s2 + $0xa4] sm:$0xf] %v1309
    %1438 = vst [vmem:[%s2 + $0xa8] sm:$0xf] %v1310
    %1439 = vst [vmem:[%s2 + $0xac] sm:$0xf] %v1311
    %1440 = vst [vmem:[%s2 + $0xb0] sm:$0xf] %v1312
    %1441 = vst [vmem:[%s2 + $0xb4] sm:$0xf] %v1313
    %1442 = vst [vmem:[%s2 + $0xb8] sm:$0xf] %v1314
    %1443 = vst [vmem:[%s2 + $0xbc] sm:$0xf] %v1315
    %1444 = vst [vmem:[%s2 + $0xc0] sm:$0xf] %v1316
    %1445 = vst [vmem:[%s2 + $0xc4] sm:$0xf] %v1317
    %1446 = vst [vmem:[%s2 + $0xc8] sm:$0xf] %v1318
    %1447 = vst [vmem:[%s2 + $0xcc] sm:$0xf] %v1319
    %1448 = vst [vmem:[%s2 + $0xd0] sm:$0xf] %v1320
    %1449 = vst [vmem:[%s2 + $0xd4] sm:$0xf] %v1321
    %1450 = vst [vmem:[%s2 + $0xd8] sm:$0xf] %v1322
    %1451 = vst [vmem:[%s2 + $0xdc] sm:$0xf] %v1323
    %1452 = vst [vmem:[%s2 + $0xe0] sm:$0xf] %v1324
    %1453 = vst [vmem:[%s2 + $0xe4] sm:$0xf] %v1325
    %1454 = vst [vmem:[%s2 + $0xe8] sm:$0xf] %v1326
    %1455 = vst [vmem:[%s2 + $0xec] sm:$0xf] %v1327
    %1456 = vst [vmem:[%s2 + $0xf0] sm:$0xf] %v1328
    %1457 = vst [vmem:[%s2 + $0xf4] sm:$0xf] %v1329
    %1458 = vst [vmem:[%s2 + $0xf8] sm:$0xf] %v1330
    %1459 = vst [vmem:[%s2 + $0xfc] sm:$0xf] %v1331
  $region17: #{discriminator_forward.6} parent=0 // pred_fallthru
    _
  // Predicated region
  $region18: #{discriminator_forward.6} parent=0 // pred_check
    _
  $region19: #{discriminator_forward.6} parent=0 // pred_check_branch
    %1461 = sbr.rel (0) target = $region21
  $region20: #{discriminator_forward.6} parent=0 // pred_region
    _
  $region21: #{discriminator_forward.6} parent=0 // pred_fallthru
    _
  // Predicated region
  $region22: #{discriminator_forward.6} parent=0 // pred_check
    _
  $region23: #{discriminator_forward.6} parent=0 // pred_check_branch
    %1463 = sbr.rel (0) target = $region25
  $region24: #{discriminator_forward.6} parent=0 // pred_region
    _
  $region25: #{discriminator_forward.6} parent=0 // pred_fallthru
    _

// kernel: discriminator_forward.8
$region0: #{discriminator_forward.8}
  #allocation0 [shape = 'u32[]', space=smem, size = 0x4, offset = 0x4, fixed_abs, tag = 'smem constant byte address 0x4 - core index']
  #allocation1 [shape = 'u32[144,128]{1,0:T(1,128)}', space=vmem, size = 0x12000, scoped, tag = 'internal scratch']
  %s0 = inlined_call_operand.vmem [shape: f32[128,256], index: 0, kind: input, shape index: {}]
  %s1 = inlined_call_operand.vmem [shape: f32[1,256], index: 1, kind: input, shape index: {}]
  %s2 = inlined_call_operand.vmem [shape: f32[1,256], index: 2, kind: input, shape index: {}]
  %s3 = inlined_call_operand.vmem [shape: f32[128,256], index: 3, kind: output, shape index: {}]
  %s4 = sld [smem:[#allocation0]]
  $region22: #{discriminator_forward.8} parent=0
    _
  %s6 = ssub.s32 1, %s4
  %s7 = scalar_select 0, %s6, %s4
  // Predicated region
  $region2: #{discriminator_forward.8} parent=0 // pred_check
    _
  $region3: #{discriminator_forward.8} parent=0 // pred_check_branch
    %9 = sbr.rel (0) target = $region5
  $region4: #{discriminator_forward.8} parent=0 // pred_region
    _
  $region5: #{discriminator_forward.8} parent=0 // pred_fallthru
    _
  // Predicated region
  $region6: #{discriminator_forward.8} parent=0 // pred_check
    _
  $region7: #{discriminator_forward.8} parent=0 // pred_check_branch
    %11 = sbr.rel (0) target = $region9
  $region8: #{discriminator_forward.8} parent=0 // pred_region
    _
  $region9: #{discriminator_forward.8} parent=0 // pred_fallthru
    _
  // Predicated region
  $region10: #{discriminator_forward.8} parent=0 // pred_check
    _
  $region11: #{discriminator_forward.8} parent=0 // pred_check_branch
    %13 = sbr.rel (0) target = $region13
  $region12: #{discriminator_forward.8} parent=0 // pred_region
    _
  $region13: #{discriminator_forward.8} parent=0 // pred_fallthru
    _
  %v14 = vld [vmem:[%s0] sm:$0xff]
  %v15 = vld [vmem:[%s0 + $0x8] sm:$0xff]
  %v16 = vld [vmem:[%s0 + $0x10] sm:$0xff]
  %v17 = vld [vmem:[%s0 + $0x18] sm:$0xff]
  %v18 = vld [vmem:[%s0 + $0x20] sm:$0xff]
  %v19 = vld [vmem:[%s0 + $0x28] sm:$0xff]
  %v20 = vld [vmem:[%s0 + $0x30] sm:$0xff]
  %v21 = vld [vmem:[%s0 + $0x38] sm:$0xff]
  %v22 = vld [vmem:[%s0 + $0x40] sm:$0xff]
  %v23 = vld [vmem:[%s0 + $0x48] sm:$0xff]
  %v24 = vld [vmem:[%s0 + $0x50] sm:$0xff]
  %v25 = vld [vmem:[%s0 + $0x58] sm:$0xff]
  %v26 = vld [vmem:[%s0 + $0x60] sm:$0xff]
  %v27 = vld [vmem:[%s0 + $0x68] sm:$0xff]
  %v28 = vld [vmem:[%s0 + $0x70] sm:$0xff]
  %v29 = vld [vmem:[%s0 + $0x78] sm:$0xff]
  %v30 = vld [vmem:[%s0 + $0x80] sm:$0xff]
  %v31 = vld [vmem:[%s0 + $0x88] sm:$0xff]
  %v32 = vld [vmem:[%s0 + $0x90] sm:$0xff]
  %v33 = vld [vmem:[%s0 + $0x98] sm:$0xff]
  %v34 = vld [vmem:[%s0 + $0xa0] sm:$0xff]
  %v35 = vld [vmem:[%s0 + $0xa8] sm:$0xff]
  %v36 = vld [vmem:[%s0 + $0xb0] sm:$0xff]
  %v37 = vld [vmem:[%s0 + $0xb8] sm:$0xff]
  %v38 = vld [vmem:[%s0 + $0xc0] sm:$0xff]
  %v39 = vld [vmem:[%s0 + $0xc8] sm:$0xff]
  %v40 = vld [vmem:[%s0 + $0xd0] sm:$0xff]
  %v41 = vld [vmem:[%s0 + $0xd8] sm:$0xff]
  %v42 = vld [vmem:[%s0 + $0xe0] sm:$0xff]
  %v43 = vld [vmem:[%s0 + $0xe8] sm:$0xff]
  %v44 = vld [vmem:[%s0 + $0xf0] sm:$0xff]
  %v45 = vld [vmem:[%s0 + $0xf8] sm:$0xff]
  %v46 = vld [vmem:[%s1] sm:$0x3]
  %v48 = vlaneseq
  %v49 = vshrl.u32 %v48, 7
  %v50 = vsub.s32 0, %v49
  %v51 = vrot.slane %v46, %v50
  %v52 = vlaneseq
  %v53 = vshrl.u32 %v52, 7
  %v54 = vsub.s32 1, %v53
  %v55 = vrot.slane %v46, %v54
  %v58 = vmul.f32 %v14, %v51
  %v59 = vmul.f32 %v15, %v55
  %v60 = vmul.f32 %v16, %v51
  %v61 = vmul.f32 %v17, %v55
  %v62 = vmul.f32 %v18, %v51
  %v63 = vmul.f32 %v19, %v55
  %v64 = vmul.f32 %v20, %v51
  %v65 = vmul.f32 %v21, %v55
  %v66 = vmul.f32 %v22, %v51
  %v67 = vmul.f32 %v23, %v55
  %v68 = vmul.f32 %v24, %v51
  %v69 = vmul.f32 %v25, %v55
  %v70 = vmul.f32 %v26, %v51
  %v71 = vmul.f32 %v27, %v55
  %v72 = vmul.f32 %v28, %v51
  %v73 = vmul.f32 %v29, %v55
  %v74 = vmul.f32 %v30, %v51
  %v75 = vmul.f32 %v31, %v55
  %v76 = vmul.f32 %v32, %v51
  %v77 = vmul.f32 %v33, %v55
  %v78 = vmul.f32 %v34, %v51
  %v79 = vmul.f32 %v35, %v55
  %v80 = vmul.f32 %v36, %v51
  %v81 = vmul.f32 %v37, %v55
  %v82 = vmul.f32 %v38, %v51
  %v83 = vmul.f32 %v39, %v55
  %v84 = vmul.f32 %v40, %v51
  %v85 = vmul.f32 %v41, %v55
  %v86 = vmul.f32 %v42, %v51
  %v87 = vmul.f32 %v43, %v55
  %v88 = vmul.f32 %v44, %v51
  %v89 = vmul.f32 %v45, %v55
  %v90 = vld [vmem:[%s2] sm:$0x3]
  %v92 = vlaneseq
  %v93 = vshrl.u32 %v92, 7
  %v94 = vsub.s32 0, %v93
  %v95 = vrot.slane %v90, %v94
  %v96 = vlaneseq
  %v97 = vshrl.u32 %v96, 7
  %v98 = vsub.s32 1, %v97
  %v99 = vrot.slane %v90, %v98
  %v102 = vadd.f32 %v58, %v95
  %v103 = vadd.f32 %v59, %v99
  %v104 = vadd.f32 %v60, %v95
  %v105 = vadd.f32 %v61, %v99
  %v106 = vadd.f32 %v62, %v95
  %v107 = vadd.f32 %v63, %v99
  %v108 = vadd.f32 %v64, %v95
  %v109 = vadd.f32 %v65, %v99
  %v110 = vadd.f32 %v66, %v95
  %v111 = vadd.f32 %v67, %v99
  %v112 = vadd.f32 %v68, %v95
  %v113 = vadd.f32 %v69, %v99
  %v114 = vadd.f32 %v70, %v95
  %v115 = vadd.f32 %v71, %v99
  %v116 = vadd.f32 %v72, %v95
  %v117 = vadd.f32 %v73, %v99
  %v118 = vadd.f32 %v74, %v95
  %v119 = vadd.f32 %v75, %v99
  %v120 = vadd.f32 %v76, %v95
  %v121 = vadd.f32 %v77, %v99
  %v122 = vadd.f32 %v78, %v95
  %v123 = vadd.f32 %v79, %v99
  %v124 = vadd.f32 %v80, %v95
  %v125 = vadd.f32 %v81, %v99
  %v126 = vadd.f32 %v82, %v95
  %v127 = vadd.f32 %v83, %v99
  %v128 = vadd.f32 %v84, %v95
  %v129 = vadd.f32 %v85, %v99
  %v130 = vadd.f32 %v86, %v95
  %v131 = vadd.f32 %v87, %v99
  %v132 = vadd.f32 %v88, %v95
  %v133 = vadd.f32 %v89, %v99
  %vm134 = vcmp.gt.f32.partialorder %v102, 0.0
  %vm135 = vcmp.gt.f32.partialorder %v103, 0.0
  %vm136 = vcmp.gt.f32.partialorder %v104, 0.0
  %vm137 = vcmp.gt.f32.partialorder %v105, 0.0
  %vm138 = vcmp.gt.f32.partialorder %v106, 0.0
  %vm139 = vcmp.gt.f32.partialorder %v107, 0.0
  %vm140 = vcmp.gt.f32.partialorder %v108, 0.0
  %vm141 = vcmp.gt.f32.partialorder %v109, 0.0
  %vm142 = vcmp.gt.f32.partialorder %v110, 0.0
  %vm143 = vcmp.gt.f32.partialorder %v111, 0.0
  %vm144 = vcmp.gt.f32.partialorder %v112, 0.0
  %vm145 = vcmp.gt.f32.partialorder %v113, 0.0
  %vm146 = vcmp.gt.f32.partialorder %v114, 0.0
  %vm147 = vcmp.gt.f32.partialorder %v115, 0.0
  %vm148 = vcmp.gt.f32.partialorder %v116, 0.0
  %vm149 = vcmp.gt.f32.partialorder %v117, 0.0
  %vm150 = vcmp.gt.f32.partialorder %v118, 0.0
  %vm151 = vcmp.gt.f32.partialorder %v119, 0.0
  %vm152 = vcmp.gt.f32.partialorder %v120, 0.0
  %vm153 = vcmp.gt.f32.partialorder %v121, 0.0
  %vm154 = vcmp.gt.f32.partialorder %v122, 0.0
  %vm155 = vcmp.gt.f32.partialorder %v123, 0.0
  %vm156 = vcmp.gt.f32.partialorder %v124, 0.0
  %vm157 = vcmp.gt.f32.partialorder %v125, 0.0
  %vm158 = vcmp.gt.f32.partialorder %v126, 0.0
  %vm159 = vcmp.gt.f32.partialorder %v127, 0.0
  %vm160 = vcmp.gt.f32.partialorder %v128, 0.0
  %vm161 = vcmp.gt.f32.partialorder %v129, 0.0
  %vm162 = vcmp.gt.f32.partialorder %v130, 0.0
  %vm163 = vcmp.gt.f32.partialorder %v131, 0.0
  %vm164 = vcmp.gt.f32.partialorder %v132, 0.0
  %vm165 = vcmp.gt.f32.partialorder %v133, 0.0
  %v166 = vmul.f32 %v102, 0.2
  %v167 = vmul.f32 %v103, 0.2
  %v168 = vmul.f32 %v104, 0.2
  %v169 = vmul.f32 %v105, 0.2
  %v170 = vmul.f32 %v106, 0.2
  %v171 = vmul.f32 %v107, 0.2
  %v172 = vmul.f32 %v108, 0.2
  %v173 = vmul.f32 %v109, 0.2
  %v174 = vmul.f32 %v110, 0.2
  %v175 = vmul.f32 %v111, 0.2
  %v176 = vmul.f32 %v112, 0.2
  %v177 = vmul.f32 %v113, 0.2
  %v178 = vmul.f32 %v114, 0.2
  %v179 = vmul.f32 %v115, 0.2
  %v180 = vmul.f32 %v116, 0.2
  %v181 = vmul.f32 %v117, 0.2
  %v182 = vmul.f32 %v118, 0.2
  %v183 = vmul.f32 %v119, 0.2
  %v184 = vmul.f32 %v120, 0.2
  %v185 = vmul.f32 %v121, 0.2
  %v186 = vmul.f32 %v122, 0.2
  %v187 = vmul.f32 %v123, 0.2
  %v188 = vmul.f32 %v124, 0.2
  %v189 = vmul.f32 %v125, 0.2
  %v190 = vmul.f32 %v126, 0.2
  %v191 = vmul.f32 %v127, 0.2
  %v192 = vmul.f32 %v128, 0.2
  %v193 = vmul.f32 %v129, 0.2
  %v194 = vmul.f32 %v130, 0.2
  %v195 = vmul.f32 %v131, 0.2
  %v196 = vmul.f32 %v132, 0.2
  %v197 = vmul.f32 %v133, 0.2
  %v198 = vsel %vm134, %v102, %v166
  %v199 = vsel %vm135, %v103, %v167
  %v200 = vsel %vm136, %v104, %v168
  %v201 = vsel %vm137, %v105, %v169
  %v202 = vsel %vm138, %v106, %v170
  %v203 = vsel %vm139, %v107, %v171
  %v204 = vsel %vm140, %v108, %v172
  %v205 = vsel %vm141, %v109, %v173
  %v206 = vsel %vm142, %v110, %v174
  %v207 = vsel %vm143, %v111, %v175
  %v208 = vsel %vm144, %v112, %v176
  %v209 = vsel %vm145, %v113, %v177
  %v210 = vsel %vm146, %v114, %v178
  %v211 = vsel %vm147, %v115, %v179
  %v212 = vsel %vm148, %v116, %v180
  %v213 = vsel %vm149, %v117, %v181
  %v214 = vsel %vm150, %v118, %v182
  %v215 = vsel %vm151, %v119, %v183
  %v216 = vsel %vm152, %v120, %v184
  %v217 = vsel %vm153, %v121, %v185
  %v218 = vsel %vm154, %v122, %v186
  %v219 = vsel %vm155, %v123, %v187
  %v220 = vsel %vm156, %v124, %v188
  %v221 = vsel %vm157, %v125, %v189
  %v222 = vsel %vm158, %v126, %v190
  %v223 = vsel %vm159, %v127, %v191
  %v224 = vsel %vm160, %v128, %v192
  %v225 = vsel %vm161, %v129, %v193
  %v226 = vsel %vm162, %v130, %v194
  %v227 = vsel %vm163, %v131, %v195
  %v228 = vsel %vm164, %v132, %v196
  %v229 = vsel %vm165, %v133, %v197
  %230 = vst [vmem:[%s3] sm:$0xff] %v198
  %231 = vst [vmem:[%s3 + $0x8] sm:$0xff] %v199
  %232 = vst [vmem:[%s3 + $0x10] sm:$0xff] %v200
  %233 = vst [vmem:[%s3 + $0x18] sm:$0xff] %v201
  %234 = vst [vmem:[%s3 + $0x20] sm:$0xff] %v202
  %235 = vst [vmem:[%s3 + $0x28] sm:$0xff] %v203
  %236 = vst [vmem:[%s3 + $0x30] sm:$0xff] %v204
  %237 = vst [vmem:[%s3 + $0x38] sm:$0xff] %v205
  %238 = vst [vmem:[%s3 + $0x40] sm:$0xff] %v206
  %239 = vst [vmem:[%s3 + $0x48] sm:$0xff] %v207
  %240 = vst [vmem:[%s3 + $0x50] sm:$0xff] %v208
  %241 = vst [vmem:[%s3 + $0x58] sm:$0xff] %v209
  %242 = vst [vmem:[%s3 + $0x60] sm:$0xff] %v210
  %243 = vst [vmem:[%s3 + $0x68] sm:$0xff] %v211
  %244 = vst [vmem:[%s3 + $0x70] sm:$0xff] %v212
  %245 = vst [vmem:[%s3 + $0x78] sm:$0xff] %v213
  %246 = vst [vmem:[%s3 + $0x80] sm:$0xff] %v214
  %247 = vst [vmem:[%s3 + $0x88] sm:$0xff] %v215
  %248 = vst [vmem:[%s3 + $0x90] sm:$0xff] %v216
  %249 = vst [vmem:[%s3 + $0x98] sm:$0xff] %v217
  %250 = vst [vmem:[%s3 + $0xa0] sm:$0xff] %v218
  %251 = vst [vmem:[%s3 + $0xa8] sm:$0xff] %v219
  %252 = vst [vmem:[%s3 + $0xb0] sm:$0xff] %v220
  %253 = vst [vmem:[%s3 + $0xb8] sm:$0xff] %v221
  %254 = vst [vmem:[%s3 + $0xc0] sm:$0xff] %v222
  %255 = vst [vmem:[%s3 + $0xc8] sm:$0xff] %v223
  %256 = vst [vmem:[%s3 + $0xd0] sm:$0xff] %v224
  %257 = vst [vmem:[%s3 + $0xd8] sm:$0xff] %v225
  %258 = vst [vmem:[%s3 + $0xe0] sm:$0xff] %v226
  %259 = vst [vmem:[%s3 + $0xe8] sm:$0xff] %v227
  %260 = vst [vmem:[%s3 + $0xf0] sm:$0xff] %v228
  %261 = vst [vmem:[%s3 + $0xf8] sm:$0xff] %v229
  // Predicated region
  $region14: #{discriminator_forward.8} parent=0 // pred_check
    _
  $region15: #{discriminator_forward.8} parent=0 // pred_check_branch
    %263 = sbr.rel (0) target = $region17
  $region16: #{discriminator_forward.8} parent=0 // pred_region
    _
  $region17: #{discriminator_forward.8} parent=0 // pred_fallthru
    _
  // Predicated region
  $region18: #{discriminator_forward.8} parent=0 // pred_check
    _
  $region19: #{discriminator_forward.8} parent=0 // pred_check_branch
    %265 = sbr.rel (0) target = $region21
  $region20: #{discriminator_forward.8} parent=0 // pred_region
    _
  $region21: #{discriminator_forward.8} parent=0 // pred_fallthru
    _

// kernel: discriminator_forward.7
$region0: #{discriminator_forward.7}
  #allocation0 [shape = 'u32[]', space=smem, size = 0x4, offset = 0x4, fixed_abs, tag = 'smem constant byte address 0x4 - core index']
  #allocation1 [shape = 'u32[144,128]{1,0:T(1,128)}', space=vmem, size = 0x12000, scoped, tag = 'internal scratch']
  #allocation2 [shape = 'f32[128,256]{1,0:T(8,128)}', space=vmem, size = 0x20000, scoped, tag = 'scratch operand']
  %s0 = inlined_call_operand.vmem [shape: bf16[128,2048], index: 0, kind: input, shape index: {}]
  %s1 = inlined_call_operand.vmem [shape: bf16[2048,256], index: 1, kind: input, shape index: {}]
  %s2 = inlined_call_operand.vmem [shape: f32[128,256], index: 2, kind: output, shape index: {0}]
  %s3 = inlined_call_operand.vmem [shape: f32[1,1,256], index: 3, kind: output, shape index: {1}]
  %s4 = inlined_call_operand.vmem [shape: f32[1,1,256], index: 4, kind: output, shape index: {2}]
  %5 = xla_tuple %s2, %s3, %s4
  %s6 = sld [smem:[#allocation0]]
  $region88: #{discriminator_forward.7} parent=0
    _
  %s8 = ssub.s32 1, %s6
  %s9 = scalar_select 0, %s8, %s6
  $region1: #{discriminator_forward.7} parent=0
    #allocation3 [shape = 'u8[262144]{0}', space=vmem, size = 0x40000, scoped, tag = 'input window, operand 0']
    loop: start=0, step=1, limit=6
    $region2: #{discriminator_forward.7} parent=1 // loop_pre_header
      _
    $region3: #{discriminator_forward.7} parent=1 // loop_header
      %s11 = sphi 0, %s15
      %p12 = scmp.ge.s32.totalorder %s11, 6
      %s18 = sphi 0, %s37
      %s19 = sphi 0, %s33
      %s20 = sphi 0, %s29
      %s21 = sphi 0, %s18
      %s22 = sphi 0, %s19
      %s23 = sphi 0, %s20
      %s24 = sphi 0, %s21
      %s25 = sphi 0, %s22
      %s26 = sphi 0, %s23
      %s42 = sphi 0, %s44
      %s45 = sphi 0, %s42
      %s46 = sphi 0, %s45
      %s62 = sphi 0, %s46
      %s70 = sphi 0, %s72
      %s73 = sphi 0, %s70
      %s74 = sphi 0, %s73
      %s90 = sphi 0, %s74
      %s98 = sphi 0, %s100
      %s101 = sphi 0, %s98
      %s102 = sphi 0, %s101
      %s118 = sphi 0, %s102
      %s126 = sphi 0, %s128
      %s129 = sphi 0, %s126
      %s130 = sphi 0, %s129
      %s146 = sphi 0, %s130
      %s154 = sphi 0, %s156
      %s157 = sphi 0, %s154
      %s158 = sphi 0, %s157
      %s174 = sphi 0, %s158
    $region4: #{discriminator_forward.7} parent=1 // loop_header_branch
      %14 = sbr.rel (%p12) target = $region8
    $region5: #{discriminator_forward.7} parent=1 // loop_body
      %s16 = ssub.s32 %s11, 1
      %s17 = ssub.s32 %s11, 2
      %s27 = sadd.s32 1, %s20
      %p28 = scmp.ge.s32.totalorder %s27, 4
      %s29 = scalar_select %p28, 0, %s27
      %s30 = sadd.s32 1, %s19
      %s31 = scalar_select %p28, %s30, %s19
      %p32 = scmp.ge.s32.totalorder %s31, 1
      %s33 = scalar_select %p32, 0, %s31
      %s34 = sadd.s32 1, %s18
      %s35 = scalar_select %p32, %s34, %s18
      %p36 = scmp.ge.s32.totalorder %s35, 1
      %s37 = scalar_select %p36, 0, %s35
      %s38 = ssub.s32 %s18, %s37
      %s39 = ssub.s32 %s20, %s29
      %s40 = sor.u32 %s38, %s39
      %p41 = scmp.eq.s32.totalorder %s40, 0
      %s43 = sadd.s32 %s42, 1
      %s44 = scalar_select %p41, %s42, %s43
      %p47 = pneg %p41
      %p48 = scmp.eq.s32.totalorder %s11, 3
      %p49 = por %p47, %p48
      %p50 = scmp.ne.s32.totalorder %s42, %s45
      %p51 = scmp.eq.s32.totalorder %s11, 0
      %p52 = por %p50, %p51
      %p53 = scmp.ne.s32.totalorder %s42, %s45
      %p54 = scmp.eq.s32.totalorder %s16, 3
      %p55 = por %p53, %p54
      %p56 = scmp.ne.s32.totalorder %s45, %s46
      %p57 = scmp.eq.s32.totalorder %s16, 0
      %p58 = por %p56, %p57
      %p59 = scmp.ne.s32.totalorder %s45, %s46
      %p60 = scmp.eq.s32.totalorder %s17, 3
      %p61 = por %p59, %p60
      %p63 = scmp.ne.s32.totalorder %s46, %s62
      %p64 = scmp.eq.s32.totalorder %s17, 0
      %p65 = por %p63, %p64
      %s66 = ssub.s32 %s20, %s29
      %s67 = ssub.s32 %s19, %s33
      %s68 = sor.u32 %s66, %s67
      %p69 = scmp.eq.s32.totalorder %s68, 0
      %s71 = sadd.s32 %s70, 1
      %s72 = scalar_select %p69, %s70, %s71
      %p75 = pneg %p69
      %p76 = scmp.eq.s32.totalorder %s11, 3
      %p77 = por %p75, %p76
      %p78 = scmp.ne.s32.totalorder %s70, %s73
      %p79 = scmp.eq.s32.totalorder %s11, 0
      %p80 = por %p78, %p79
      %p81 = scmp.ne.s32.totalorder %s70, %s73
      %p82 = scmp.eq.s32.totalorder %s16, 3
      %p83 = por %p81, %p82
      %p84 = scmp.ne.s32.totalorder %s73, %s74
      %p85 = scmp.eq.s32.totalorder %s16, 0
      %p86 = por %p84, %p85
      %p87 = scmp.ne.s32.totalorder %s73, %s74
      %p88 = scmp.eq.s32.totalorder %s17, 3
      %p89 = por %p87, %p88
      %p91 = scmp.ne.s32.totalorder %s74, %s90
      %p92 = scmp.eq.s32.totalorder %s17, 0
      %p93 = por %p91, %p92
      %s94 = ssub.s32 %s18, %s37
      %s95 = ssub.s32 %s19, %s33
      %s96 = sor.u32 %s94, %s95
      %p97 = scmp.eq.s32.totalorder %s96, 0
      %s99 = sadd.s32 %s98, 1
      %s100 = scalar_select %p97, %s98, %s99
      %p103 = pneg %p97
      %p104 = scmp.eq.s32.totalorder %s11, 3
      %p105 = por %p103, %p104
      %p106 = scmp.ne.s32.totalorder %s98, %s101
      %p107 = scmp.eq.s32.totalorder %s11, 0
      %p108 = por %p106, %p107
      %p109 = scmp.ne.s32.totalorder %s98, %s101
      %p110 = scmp.eq.s32.totalorder %s16, 3
      %p111 = por %p109, %p110
      %p112 = scmp.ne.s32.totalorder %s101, %s102
      %p113 = scmp.eq.s32.totalorder %s16, 0
      %p114 = por %p112, %p113
      %p115 = scmp.ne.s32.totalorder %s101, %s102
      %p116 = scmp.eq.s32.totalorder %s17, 3
      %p117 = por %p115, %p116
      %p119 = scmp.ne.s32.totalorder %s102, %s118
      %p120 = scmp.eq.s32.totalorder %s17, 0
      %p121 = por %p119, %p120
      %s122 = ssub.s32 %s18, %s37
      %s123 = ssub.s32 %s19, %s33
      %s124 = sor.u32 %s122, %s123
      %p125 = scmp.eq.s32.totalorder %s124, 0
      %s127 = sadd.s32 %s126, 1
      %s128 = scalar_select %p125, %s126, %s127
      %p131 = pneg %p125
      %p132 = scmp.eq.s32.totalorder %s11, 3
      %p133 = por %p131, %p132
      %p134 = scmp.ne.s32.totalorder %s126, %s129
      %p135 = scmp.eq.s32.totalorder %s11, 0
      %p136 = por %p134, %p135
      %p137 = scmp.ne.s32.totalorder %s126, %s129
      %p138 = scmp.eq.s32.totalorder %s16, 3
      %p139 = por %p137, %p138
      %p140 = scmp.ne.s32.totalorder %s129, %s130
      %p141 = scmp.eq.s32.totalorder %s16, 0
      %p142 = por %p140, %p141
      %p143 = scmp.ne.s32.totalorder %s129, %s130
      %p144 = scmp.eq.s32.totalorder %s17, 3
      %p145 = por %p143, %p144
      %p147 = scmp.ne.s32.totalorder %s130, %s146
      %p148 = scmp.eq.s32.totalorder %s17, 0
      %p149 = por %p147, %p148
      %s150 = ssub.s32 %s18, %s37
      %s151 = ssub.s32 %s19, %s33
      %s152 = sor.u32 %s150, %s151
      %p153 = scmp.eq.s32.totalorder %s152, 0
      %s155 = sadd.s32 %s154, 1
      %s156 = scalar_select %p153, %s154, %s155
      %p159 = pneg %p153
      %p160 = scmp.eq.s32.totalorder %s11, 3
      %p161 = por %p159, %p160
      %p162 = scmp.ne.s32.totalorder %s154, %s157
      %p163 = scmp.eq.s32.totalorder %s11, 0
      %p164 = por %p162, %p163
      %p165 = scmp.ne.s32.totalorder %s154, %s157
      %p166 = scmp.eq.s32.totalorder %s16, 3
      %p167 = por %p165, %p166
      %p168 = scmp.ne.s32.totalorder %s157, %s158
      %p169 = scmp.eq.s32.totalorder %s16, 0
      %p170 = por %p168, %p169
      %p171 = scmp.ne.s32.totalorder %s157, %s158
      %p172 = scmp.eq.s32.totalorder %s17, 3
      %p173 = por %p171, %p172
      %p175 = scmp.ne.s32.totalorder %s158, %s174
      %p176 = scmp.eq.s32.totalorder %s17, 0
      %p177 = por %p175, %p176
      %p178 = scmp.le.s32.totalorder 1, %s11
      %p179 = scmp.lt.s32.totalorder %s11, 5
      %p180 = pnand %p178, %p179
      %p181 = pneg %p180
      // Predicated region
      $region9: #{discriminator_forward.7} parent=5 // pred_check
        _
      $region10: #{discriminator_forward.7} parent=5 // pred_check_branch
        %183 = sbr.rel (%p180) target = $region12
      $region11: #{discriminator_forward.7} parent=5 // pred_region
        %s184 = ssub.s32 %s11, 1
      $region12: #{discriminator_forward.7} parent=5 // pred_fallthru
        _
      %p185 = scmp.lt.s32.totalorder %s11, 4
      // Predicated region
      $region13: #{discriminator_forward.7} parent=5 // pred_check
        %p186 = pneg %p185
      $region14: #{discriminator_forward.7} parent=5 // pred_check_branch
        %188 = sbr.rel (%p186) target = $region16
      $region15: #{discriminator_forward.7} parent=5 // pred_region
        // Predicated region
        $region17: #{discriminator_forward.7} parent=15 // pred_check
          %p189 = pneg %p52
        $region18: #{discriminator_forward.7} parent=15 // pred_check_branch
          %191 = sbr.rel (%p189) target = $region20
        $region19: #{discriminator_forward.7} parent=15 // pred_region
          %s192 = sand.u32 %s42, 1
          %s193 = sand.u32 %s42, 1
          %s194 = smul.addr %s193, 256
          %s195 = scalar_lea.vmem [#allocation3], %s194
          %s196 = smul.u32 16, %s18
          %s197 = smul.u32 4, %s20
          %s198 = smul.addr %s196, 16
          %s199 = sadd.s32 %s197, %s198
          %s200 = smul.addr %s199, 4
          %s201 = scalar_lea.vmem %s0, %s200
          // Predicated region
          $region21: #{discriminator_forward.7} parent=19 // pred_check
            _
          $region22: #{discriminator_forward.7} parent=19 // pred_check_branch
            %203 = sbr.rel (0) target = $region24
          $region23: #{discriminator_forward.7} parent=19 // pred_region
            // Predicated region
            $region25: #{discriminator_forward.7} parent=23 // pred_check
              _
            $region26: #{discriminator_forward.7} parent=23 // pred_check_branch
              %205 = sbr.rel (0) target = $region28
            $region27: #{discriminator_forward.7} parent=23 // pred_region
              loop: start=0, step=1, limit=1
              $region29: #{discriminator_forward.7} parent=27 // loop_pre_header
                _
              $region30: #{discriminator_forward.7} parent=27 // loop_header
                %s207 = sphi 0, %s211
                %p208 = scmp.ge.s32.totalorder %s207, 1
                %s212 = sphi %s201, %s201
                %s213 = sphi %s195, %s195
              $region31: #{discriminator_forward.7} parent=27 // loop_header_branch
                %210 = sbr.rel (%p208) target = $region35
              $region32: #{discriminator_forward.7} parent=27 // loop_body
                %v214 = vld [vmem:[%s212] sm:$0xff]
                %215 = vst [vmem:[%s213] sm:$0xff] %v214
                %v216 = vld [vmem:[%s212 + $0x8] sm:$0xff]
                %217 = vst [vmem:[%s213 + $0x8] sm:$0xff] %v216
                %v218 = vld [vmem:[%s212 + $0x40] sm:$0xff]
                %219 = vst [vmem:[%s213 + $0x10] sm:$0xff] %v218
                %v220 = vld [vmem:[%s212 + $0x48] sm:$0xff]
                %221 = vst [vmem:[%s213 + $0x18] sm:$0xff] %v220
                %v222 = vld [vmem:[%s212 + $0x80] sm:$0xff]
                %223 = vst [vmem:[%s213 + $0x20] sm:$0xff] %v222
                %v224 = vld [vmem:[%s212 + $0x88] sm:$0xff]
                %225 = vst [vmem:[%s213 + $0x28] sm:$0xff] %v224
                %v226 = vld [vmem:[%s212 + $0xc0] sm:$0xff]
                %227 = vst [vmem:[%s213 + $0x30] sm:$0xff] %v226
                %v228 = vld [vmem:[%s212 + $0xc8] sm:$0xff]
                %229 = vst [vmem:[%s213 + $0x38] sm:$0xff] %v228
                %v230 = vld [vmem:[%s212 + $0x100] sm:$0xff]
                %231 = vst [vmem:[%s213 + $0x40] sm:$0xff] %v230
                %v232 = vld [vmem:[%s212 + $0x108] sm:$0xff]
                %233 = vst [vmem:[%s213 + $0x48] sm:$0xff] %v232
                %v234 = vld [vmem:[%s212 + $0x140] sm:$0xff]
                %235 = vst [vmem:[%s213 + $0x50] sm:$0xff] %v234
                %v236 = vld [vmem:[%s212 + $0x148] sm:$0xff]
                %237 = vst [vmem:[%s213 + $0x58] sm:$0xff] %v236
                %v238 = vld [vmem:[%s212 + $0x180] sm:$0xff]
                %239 = vst [vmem:[%s213 + $0x60] sm:$0xff] %v238
                %v240 = vld [vmem:[%s212 + $0x188] sm:$0xff]
                %241 = vst [vmem:[%s213 + $0x68] sm:$0xff] %v240
                %v242 = vld [vmem:[%s212 + $0x1c0] sm:$0xff]
                %243 = vst [vmem:[%s213 + $0x70] sm:$0xff] %v242
                %v244 = vld [vmem:[%s212 + $0x1c8] sm:$0xff]
                %245 = vst [vmem:[%s213 + $0x78] sm:$0xff] %v244
                %v246 = vld [vmem:[%s212 + $0x200] sm:$0xff]
                %247 = vst [vmem:[%s213 + $0x80] sm:$0xff] %v246
                %v248 = vld [vmem:[%s212 + $0x208] sm:$0xff]
                %249 = vst [vmem:[%s213 + $0x88] sm:$0xff] %v248
                %v250 = vld [vmem:[%s212 + $0x240] sm:$0xff]
                %251 = vst [vmem:[%s213 + $0x90] sm:$0xff] %v250
                %v252 = vld [vmem:[%s212 + $0x248] sm:$0xff]
                %253 = vst [vmem:[%s213 + $0x98] sm:$0xff] %v252
                %v254 = vld [vmem:[%s212 + $0x280] sm:$0xff]
                %255 = vst [vmem:[%s213 + $0xa0] sm:$0xff] %v254
                %v256 = vld [vmem:[%s212 + $0x288] sm:$0xff]
                %257 = vst [vmem:[%s213 + $0xa8] sm:$0xff] %v256
                %v258 = vld [vmem:[%s212 + $0x2c0] sm:$0xff]
                %259 = vst [vmem:[%s213 + $0xb0] sm:$0xff] %v258
                %v260 = vld [vmem:[%s212 + $0x2c8] sm:$0xff]
                %261 = vst [vmem:[%s213 + $0xb8] sm:$0xff] %v260
                %v262 = vld [vmem:[%s212 + $0x300] sm:$0xff]
                %263 = vst [vmem:[%s213 + $0xc0] sm:$0xff] %v262
                %v264 = vld [vmem:[%s212 + $0x308] sm:$0xff]
                %265 = vst [vmem:[%s213 + $0xc8] sm:$0xff] %v264
                %v266 = vld [vmem:[%s212 + $0x340] sm:$0xff]
                %267 = vst [vmem:[%s213 + $0xd0] sm:$0xff] %v266
                %v268 = vld [vmem:[%s212 + $0x348] sm:$0xff]
                %269 = vst [vmem:[%s213 + $0xd8] sm:$0xff] %v268
                %v270 = vld [vmem:[%s212 + $0x380] sm:$0xff]
                %271 = vst [vmem:[%s213 + $0xe0] sm:$0xff] %v270
                %v272 = vld [vmem:[%s212 + $0x388] sm:$0xff]
                %273 = vst [vmem:[%s213 + $0xe8] sm:$0xff] %v272
                %v274 = vld [vmem:[%s212 + $0x3c0] sm:$0xff]
                %275 = vst [vmem:[%s213 + $0xf0] sm:$0xff] %v274
                %v276 = vld [vmem:[%s212 + $0x3c8] sm:$0xff]
                %277 = vst [vmem:[%s213 + $0xf8] sm:$0xff] %v276
              $region33: #{discriminator_forward.7} parent=27 // loop_footer
                %s211 = sadd.s32 1, %s207
              $region34: #{discriminator_forward.7} parent=27 // loop_footer_branch
                %206 = sbr.rel target = $region30
              $region35: #{discriminator_forward.7} parent=27 // loop_exit
                _
            $region28: #{discriminator_forward.7} parent=23 // pred_fallthru
              _
            // Predicated region
            $region36: #{discriminator_forward.7} parent=23 // pred_check
              _
            $region37: #{discriminator_forward.7} parent=23 // pred_check_branch
              %279 = sbr.rel target = $region39
            $region38: #{discriminator_forward.7} parent=23 // pred_region
              _
            $region39: #{discriminator_forward.7} parent=23 // pred_fallthru
              _
          $region24: #{discriminator_forward.7} parent=19 // pred_fallthru
            _
          %280 = vnop
        $region20: #{discriminator_forward.7} parent=15 // pred_fallthru
          _
        // Predicated region
        $region40: #{discriminator_forward.7} parent=15 // pred_check
          %p281 = pneg %p80
        $region41: #{discriminator_forward.7} parent=15 // pred_check_branch
          %283 = sbr.rel (%p281) target = $region43
        $region42: #{discriminator_forward.7} parent=15 // pred_region
          %s284 = smul.u32 64, %s20
          %s285 = smul.u32 2, %s19
          %p286 = scmp.lt.s32.totalorder %s284, 255
          %s287 = scalar_select %p286, %s284, 255
          %p288 = scmp.lt.s32.totalorder %s285, 1
          %s289 = scalar_select %p288, %s285, 1
          %s290 = smul.addr %s287, 2
          %s291 = sadd.s32 %s289, %s290
          %s292 = smul.addr %s291, 4
          %s293 = scalar_lea.vmem %s1, %s292
          %s294 = smul.u32 64, %s20
          %s295 = smul.u32 2, %s19
        $region43: #{discriminator_forward.7} parent=15 // pred_fallthru
          _
      $region16: #{discriminator_forward.7} parent=5 // pred_fallthru
        _
      %p296 = scmp.le.s32.totalorder 1, %s11
      %p297 = scmp.lt.s32.totalorder %s11, 5
      %p298 = pnand %p296, %p297
      %p299 = pneg %p298
      // Predicated region
      $region44: #{discriminator_forward.7} parent=5 // pred_check
        _
      $region45: #{discriminator_forward.7} parent=5 // pred_check_branch
        %301 = sbr.rel (%p298) target = $region47
      $region46: #{discriminator_forward.7} parent=5 // pred_region
        %s302 = ssub.s32 %s11, 1
        %s303 = sand.u32 %s45, 1
        %s304 = sand.u32 %s45, 1
        %s305 = smul.addr %s304, 256
        %s306 = scalar_lea.vmem [#allocation3], %s305
        // Predicated region
        $region48: #{discriminator_forward.7} parent=46 // pred_check
          %p307 = pneg %p58
        $region49: #{discriminator_forward.7} parent=46 // pred_check_branch
          %309 = sbr.rel (%p307) target = $region51
        $region50: #{discriminator_forward.7} parent=46 // pred_region
          _
        $region51: #{discriminator_forward.7} parent=46 // pred_fallthru
          _
        %s310 = sand.u32 %s45, 1
        %s311 = sand.u32 %s45, 1
        %s312 = smul.addr %s311, 256
        %s313 = scalar_lea.vmem [#allocation3], %s312
        %p314 = pneg %p58
        %p315 = pneg %p55
        %s316 = smul.u32 64, %s23
        %s317 = smul.u32 2, %s22
        %p318 = scmp.lt.s32.totalorder %s316, 255
        %s319 = scalar_select %p318, %s316, 255
        %p320 = scmp.lt.s32.totalorder %s317, 1
        %s321 = scalar_select %p320, %s317, 1
        %s322 = smul.addr %s319, 2
        %s323 = sadd.s32 %s321, %s322
        %s324 = smul.addr %s323, 4
        %s325 = scalar_lea.vmem %s1, %s324
        %p326 = pneg %p86
        %p327 = pneg %p83
        %p328 = pneg %p114
        %p329 = pneg %p111
        %s330 = smul.u32 16, %s21
        %s331 = smul.u32 2, %s22
        %p332 = scmp.lt.s32.totalorder %s330, 15
        %s333 = scalar_select %p332, %s330, 15
        %p334 = scmp.lt.s32.totalorder %s331, 1
        %s335 = scalar_select %p334, %s331, 1
        %s336 = smul.addr %s333, 2
        %s337 = sadd.s32 %s335, %s336
        %s338 = smul.addr %s337, 8
        %s339 = scalar_lea.vmem %s2, %s338
        %p340 = pneg %p142
        %p341 = pneg %p139
        %s342 = smul.u32 2, %s22
        %p343 = scmp.lt.s32.totalorder %s21, 0
        %s344 = scalar_select %p343, %s21, 0
        %p345 = scmp.lt.s32.totalorder %s342, 1
        %s346 = scalar_select %p345, %s342, 1
        %s347 = smul.addr %s344, 2
        %s348 = sadd.s32 %s346, %s347
        %s349 = scalar_lea.vmem %s3, %s348
        %p350 = pneg %p170
        %p351 = pneg %p167
        %s352 = smul.u32 2, %s22
        %p353 = scmp.lt.s32.totalorder %s21, 0
        %s354 = scalar_select %p353, %s21, 0
        %p355 = scmp.lt.s32.totalorder %s352, 1
        %s356 = scalar_select %p355, %s352, 1
        %s357 = smul.addr %s354, 2
        %s358 = sadd.s32 %s356, %s357
        %s359 = scalar_lea.vmem %s4, %s358
        %s360 = smul.u32 16, %s21
        %s361 = smul.u32 4, %s23
        %s362 = smul.u32 64, %s23
        %s363 = smul.u32 2, %s22
        %p364 = scmp.lt.s32.totalorder %s362, 255
        %s365 = scalar_select %p364, %s362, 255
        %p366 = scmp.lt.s32.totalorder %s363, 1
        %s367 = scalar_select %p366, %s363, 1
        %s368 = smul.addr %s365, 2
        %s369 = sadd.s32 %s367, %s368
        %s370 = smul.addr %s369, 4
        %s371 = scalar_lea.vmem %s1, %s370
        %s372 = smul.u32 64, %s23
        %s373 = smul.u32 2, %s22
        %s374 = smul.u32 16, %s21
        %s375 = smul.u32 2, %s22
        %p376 = scmp.lt.s32.totalorder %s374, 15
        %s377 = scalar_select %p376, %s374, 15
        %p378 = scmp.lt.s32.totalorder %s375, 1
        %s379 = scalar_select %p378, %s375, 1
        %s380 = smul.addr %s377, 2
        %s381 = sadd.s32 %s379, %s380
        %s382 = smul.addr %s381, 8
        %s383 = scalar_lea.vmem %s2, %s382
        %s384 = smul.u32 16, %s21
        %s385 = smul.u32 2, %s22
        %s386 = smul.u32 2, %s22
        %p387 = scmp.lt.s32.totalorder %s21, 0
        %s388 = scalar_select %p387, %s21, 0
        %p389 = scmp.lt.s32.totalorder %s386, 1
        %s390 = scalar_select %p389, %s386, 1
        %s391 = smul.addr %s388, 2
        %s392 = sadd.s32 %s390, %s391
        %s393 = scalar_lea.vmem %s3, %s392
        %s394 = smul.u32 2, %s22
        %s395 = smul.u32 2, %s22
        %p396 = scmp.lt.s32.totalorder %s21, 0
        %s397 = scalar_select %p396, %s21, 0
        %p398 = scmp.lt.s32.totalorder %s395, 1
        %s399 = scalar_select %p398, %s395, 1
        %s400 = smul.addr %s397, 2
        %s401 = sadd.s32 %s399, %s400
        %s402 = scalar_lea.vmem %s4, %s401
        %s403 = smul.u32 2, %s22
        %p404 = scmp.eq.s32.totalorder %s23, 0
        // Predicated region
        $region52: #{discriminator_forward.7} parent=46 // pred_check
          %p405 = pneg %p404
        $region53: #{discriminator_forward.7} parent=46 // pred_check_branch
          %407 = sbr.rel (%p405) target = $region55
        $region54: #{discriminator_forward.7} parent=46 // pred_region
          %408 = vst [vmem:[#allocation2] sm:$0xff] 0.0
          %409 = vst [vmem:[#allocation2 + $0x8] sm:$0xff] 0.0
          %410 = vst [vmem:[#allocation2 + $0x10] sm:$0xff] 0.0
          %411 = vst [vmem:[#allocation2 + $0x18] sm:$0xff] 0.0
          %412 = vst [vmem:[#allocation2 + $0x20] sm:$0xff] 0.0
          %413 = vst [vmem:[#allocation2 + $0x28] sm:$0xff] 0.0
          %414 = vst [vmem:[#allocation2 + $0x30] sm:$0xff] 0.0
          %415 = vst [vmem:[#allocation2 + $0x38] sm:$0xff] 0.0
          %416 = vst [vmem:[#allocation2 + $0x40] sm:$0xff] 0.0
          %417 = vst [vmem:[#allocation2 + $0x48] sm:$0xff] 0.0
          %418 = vst [vmem:[#allocation2 + $0x50] sm:$0xff] 0.0
          %419 = vst [vmem:[#allocation2 + $0x58] sm:$0xff] 0.0
          %420 = vst [vmem:[#allocation2 + $0x60] sm:$0xff] 0.0
          %421 = vst [vmem:[#allocation2 + $0x68] sm:$0xff] 0.0
          %422 = vst [vmem:[#allocation2 + $0x70] sm:$0xff] 0.0
          %423 = vst [vmem:[#allocation2 + $0x78] sm:$0xff] 0.0
          %424 = vst [vmem:[#allocation2 + $0x80] sm:$0xff] 0.0
          %425 = vst [vmem:[#allocation2 + $0x88] sm:$0xff] 0.0
          %426 = vst [vmem:[#allocation2 + $0x90] sm:$0xff] 0.0
          %427 = vst [vmem:[#allocation2 + $0x98] sm:$0xff] 0.0
          %428 = vst [vmem:[#allocation2 + $0xa0] sm:$0xff] 0.0
          %429 = vst [vmem:[#allocation2 + $0xa8] sm:$0xff] 0.0
          %430 = vst [vmem:[#allocation2 + $0xb0] sm:$0xff] 0.0
          %431 = vst [vmem:[#allocation2 + $0xb8] sm:$0xff] 0.0
          %432 = vst [vmem:[#allocation2 + $0xc0] sm:$0xff] 0.0
          %433 = vst [vmem:[#allocation2 + $0xc8] sm:$0xff] 0.0
          %434 = vst [vmem:[#allocation2 + $0xd0] sm:$0xff] 0.0
          %435 = vst [vmem:[#allocation2 + $0xd8] sm:$0xff] 0.0
          %436 = vst [vmem:[#allocation2 + $0xe0] sm:$0xff] 0.0
          %437 = vst [vmem:[#allocation2 + $0xe8] sm:$0xff] 0.0
          %438 = vst [vmem:[#allocation2 + $0xf0] sm:$0xff] 0.0
          %439 = vst [vmem:[#allocation2 + $0xf8] sm:$0xff] 0.0
        $region55: #{discriminator_forward.7} parent=46 // pred_fallthru
          _
        %v440 = vld [vmem:[#allocation2] sm:$0xff]
        %v441 = vld [vmem:[#allocation2 + $0x8] sm:$0xff]
        %v442 = vld [vmem:[#allocation2 + $0x10] sm:$0xff]
        %v443 = vld [vmem:[#allocation2 + $0x18] sm:$0xff]
        %v444 = vld [vmem:[#allocation2 + $0x20] sm:$0xff]
        %v445 = vld [vmem:[#allocation2 + $0x28] sm:$0xff]
        %v446 = vld [vmem:[#allocation2 + $0x30] sm:$0xff]
        %v447 = vld [vmem:[#allocation2 + $0x38] sm:$0xff]
        %v448 = vld [vmem:[#allocation2 + $0x40] sm:$0xff]
        %v449 = vld [vmem:[#allocation2 + $0x48] sm:$0xff]
        %v450 = vld [vmem:[#allocation2 + $0x50] sm:$0xff]
        %v451 = vld [vmem:[#allocation2 + $0x58] sm:$0xff]
        %v452 = vld [vmem:[#allocation2 + $0x60] sm:$0xff]
        %v453 = vld [vmem:[#allocation2 + $0x68] sm:$0xff]
        %v454 = vld [vmem:[#allocation2 + $0x70] sm:$0xff]
        %v455 = vld [vmem:[#allocation2 + $0x78] sm:$0xff]
        %v456 = vld [vmem:[#allocation2 + $0x80] sm:$0xff]
        %v457 = vld [vmem:[#allocation2 + $0x88] sm:$0xff]
        %v458 = vld [vmem:[#allocation2 + $0x90] sm:$0xff]
        %v459 = vld [vmem:[#allocation2 + $0x98] sm:$0xff]
        %v460 = vld [vmem:[#allocation2 + $0xa0] sm:$0xff]
        %v461 = vld [vmem:[#allocation2 + $0xa8] sm:$0xff]
        %v462 = vld [vmem:[#allocation2 + $0xb0] sm:$0xff]
        %v463 = vld [vmem:[#allocation2 + $0xb8] sm:$0xff]
        %v464 = vld [vmem:[#allocation2 + $0xc0] sm:$0xff]
        %v465 = vld [vmem:[#allocation2 + $0xc8] sm:$0xff]
        %v466 = vld [vmem:[#allocation2 + $0xd0] sm:$0xff]
        %v467 = vld [vmem:[#allocation2 + $0xd8] sm:$0xff]
        %v468 = vld [vmem:[#allocation2 + $0xe0] sm:$0xff]
        %v469 = vld [vmem:[#allocation2 + $0xe8] sm:$0xff]
        %v470 = vld [vmem:[#allocation2 + $0xf0] sm:$0xff]
        %v471 = vld [vmem:[#allocation2 + $0xf8] sm:$0xff]
        %v472 = vld [vmem:[%s306] sm:$0xff]
        %v473 = vld [vmem:[%s306 + $0x8] sm:$0xff]
        %v474 = vld [vmem:[%s306 + $0x10] sm:$0xff]
        %v475 = vld [vmem:[%s306 + $0x18] sm:$0xff]
        %v476 = vld [vmem:[%s306 + $0x20] sm:$0xff]
        %v477 = vld [vmem:[%s306 + $0x28] sm:$0xff]
        %v478 = vld [vmem:[%s306 + $0x30] sm:$0xff]
        %v479 = vld [vmem:[%s306 + $0x38] sm:$0xff]
        %v480 = vld [vmem:[%s306 + $0x40] sm:$0xff]
        %v481 = vld [vmem:[%s306 + $0x48] sm:$0xff]
        %v482 = vld [vmem:[%s306 + $0x50] sm:$0xff]
        %v483 = vld [vmem:[%s306 + $0x58] sm:$0xff]
        %v484 = vld [vmem:[%s306 + $0x60] sm:$0xff]
        %v485 = vld [vmem:[%s306 + $0x68] sm:$0xff]
        %v486 = vld [vmem:[%s306 + $0x70] sm:$0xff]
        %v487 = vld [vmem:[%s306 + $0x78] sm:$0xff]
        %v488 = vld [vmem:[%s306 + $0x80] sm:$0xff]
        %v489 = vld [vmem:[%s306 + $0x88] sm:$0xff]
        %v490 = vld [vmem:[%s306 + $0x90] sm:$0xff]
        %v491 = vld [vmem:[%s306 + $0x98] sm:$0xff]
        %v492 = vld [vmem:[%s306 + $0xa0] sm:$0xff]
        %v493 = vld [vmem:[%s306 + $0xa8] sm:$0xff]
        %v494 = vld [vmem:[%s306 + $0xb0] sm:$0xff]
        %v495 = vld [vmem:[%s306 + $0xb8] sm:$0xff]
        %v496 = vld [vmem:[%s306 + $0xc0] sm:$0xff]
        %v497 = vld [vmem:[%s306 + $0xc8] sm:$0xff]
        %v498 = vld [vmem:[%s306 + $0xd0] sm:$0xff]
        %v499 = vld [vmem:[%s306 + $0xd8] sm:$0xff]
        %v500 = vld [vmem:[%s306 + $0xe0] sm:$0xff]
        %v501 = vld [vmem:[%s306 + $0xe8] sm:$0xff]
        %v502 = vld [vmem:[%s306 + $0xf0] sm:$0xff]
        %v503 = vld [vmem:[%s306 + $0xf8] sm:$0xff]
        %v504 = vld [vmem:[%s371] sm:$0xff]
        %v505 = vld [vmem:[%s371 + $0x8] sm:$0xff]
        %v506 = vld [vmem:[%s371 + $0x10] sm:$0xff]
        %v507 = vld [vmem:[%s371 + $0x18] sm:$0xff]
        %v508 = vld [vmem:[%s371 + $0x20] sm:$0xff]
        %v509 = vld [vmem:[%s371 + $0x28] sm:$0xff]
        %v510 = vld [vmem:[%s371 + $0x30] sm:$0xff]
        %v511 = vld [vmem:[%s371 + $0x38] sm:$0xff]
        %v512 = vld [vmem:[%s371 + $0x40] sm:$0xff]
        %v513 = vld [vmem:[%s371 + $0x48] sm:$0xff]
        %v514 = vld [vmem:[%s371 + $0x50] sm:$0xff]
        %v515 = vld [vmem:[%s371 + $0x58] sm:$0xff]
        %v516 = vld [vmem:[%s371 + $0x60] sm:$0xff]
        %v517 = vld [vmem:[%s371 + $0x68] sm:$0xff]
        %v518 = vld [vmem:[%s371 + $0x70] sm:$0xff]
        %v519 = vld [vmem:[%s371 + $0x78] sm:$0xff]
        %v520 = vld [vmem:[%s371 + $0x80] sm:$0xff]
        %v521 = vld [vmem:[%s371 + $0x88] sm:$0xff]
        %v522 = vld [vmem:[%s371 + $0x90] sm:$0xff]
        %v523 = vld [vmem:[%s371 + $0x98] sm:$0xff]
        %v524 = vld [vmem:[%s371 + $0xa0] sm:$0xff]
        %v525 = vld [vmem:[%s371 + $0xa8] sm:$0xff]
        %v526 = vld [vmem:[%s371 + $0xb0] sm:$0xff]
        %v527 = vld [vmem:[%s371 + $0xb8] sm:$0xff]
        %v528 = vld [vmem:[%s371 + $0xc0] sm:$0xff]
        %v529 = vld [vmem:[%s371 + $0xc8] sm:$0xff]
        %v530 = vld [vmem:[%s371 + $0xd0] sm:$0xff]
        %v531 = vld [vmem:[%s371 + $0xd8] sm:$0xff]
        %v532 = vld [vmem:[%s371 + $0xe0] sm:$0xff]
        %v533 = vld [vmem:[%s371 + $0xe8] sm:$0xff]
        %v534 = vld [vmem:[%s371 + $0xf0] sm:$0xff]
        %v535 = vld [vmem:[%s371 + $0xf8] sm:$0xff]
        %v536 = vld [vmem:[%s371 + $0x100] sm:$0xff]
        %v537 = vld [vmem:[%s371 + $0x108] sm:$0xff]
        %v538 = vld [vmem:[%s371 + $0x110] sm:$0xff]
        %v539 = vld [vmem:[%s371 + $0x118] sm:$0xff]
        %v540 = vld [vmem:[%s371 + $0x120] sm:$0xff]
        %v541 = vld [vmem:[%s371 + $0x128] sm:$0xff]
        %v542 = vld [vmem:[%s371 + $0x130] sm:$0xff]
        %v543 = vld [vmem:[%s371 + $0x138] sm:$0xff]
        %v544 = vld [vmem:[%s371 + $0x140] sm:$0xff]
        %v545 = vld [vmem:[%s371 + $0x148] sm:$0xff]
        %v546 = vld [vmem:[%s371 + $0x150] sm:$0xff]
        %v547 = vld [vmem:[%s371 + $0x158] sm:$0xff]
        %v548 = vld [vmem:[%s371 + $0x160] sm:$0xff]
        %v549 = vld [vmem:[%s371 + $0x168] sm:$0xff]
        %v550 = vld [vmem:[%s371 + $0x170] sm:$0xff]
        %v551 = vld [vmem:[%s371 + $0x178] sm:$0xff]
        %v552 = vld [vmem:[%s371 + $0x180] sm:$0xff]
        %v553 = vld [vmem:[%s371 + $0x188] sm:$0xff]
        %v554 = vld [vmem:[%s371 + $0x190] sm:$0xff]
        %v555 = vld [vmem:[%s371 + $0x198] sm:$0xff]
        %v556 = vld [vmem:[%s371 + $0x1a0] sm:$0xff]
        %v557 = vld [vmem:[%s371 + $0x1a8] sm:$0xff]
        %v558 = vld [vmem:[%s371 + $0x1b0] sm:$0xff]
        %v559 = vld [vmem:[%s371 + $0x1b8] sm:$0xff]
        %v560 = vld [vmem:[%s371 + $0x1c0] sm:$0xff]
        %v561 = vld [vmem:[%s371 + $0x1c8] sm:$0xff]
        %v562 = vld [vmem:[%s371 + $0x1d0] sm:$0xff]
        %v563 = vld [vmem:[%s371 + $0x1d8] sm:$0xff]
        %v564 = vld [vmem:[%s371 + $0x1e0] sm:$0xff]
        %v565 = vld [vmem:[%s371 + $0x1e8] sm:$0xff]
        %v566 = vld [vmem:[%s371 + $0x1f0] sm:$0xff]
        %v567 = vld [vmem:[%s371 + $0x1f8] sm:$0xff]
        %v600 = vunpack.c.l.b16 %v472
        %v601 = vunpack.c.h.b16 %v472
        %v602 = vunpack.c.l.b16 %v473
        %v603 = vunpack.c.h.b16 %v473
        %v604 = vunpack.c.l.b16 %v474
        %v605 = vunpack.c.h.b16 %v474
        %v606 = vunpack.c.l.b16 %v475
        %v607 = vunpack.c.h.b16 %v475
        %v608 = vunpack.c.l.b16 %v476
        %v609 = vunpack.c.h.b16 %v476
        %v610 = vunpack.c.l.b16 %v477
        %v611 = vunpack.c.h.b16 %v477
        %v612 = vunpack.c.l.b16 %v478
        %v613 = vunpack.c.h.b16 %v478
        %v614 = vunpack.c.l.b16 %v479
        %v615 = vunpack.c.h.b16 %v479
        %v616 = vunpack.c.l.b16 %v480
        %v617 = vunpack.c.h.b16 %v480
        %v618 = vunpack.c.l.b16 %v481
        %v619 = vunpack.c.h.b16 %v481
        %v620 = vunpack.c.l.b16 %v482
        %v621 = vunpack.c.h.b16 %v482
        %v622 = vunpack.c.l.b16 %v483
        %v623 = vunpack.c.h.b16 %v483
        %v624 = vunpack.c.l.b16 %v484
        %v625 = vunpack.c.h.b16 %v484
        %v626 = vunpack.c.l.b16 %v485
        %v627 = vunpack.c.h.b16 %v485
        %v628 = vunpack.c.l.b16 %v486
        %v629 = vunpack.c.h.b16 %v486
        %v630 = vunpack.c.l.b16 %v487
        %v631 = vunpack.c.h.b16 %v487
        %v632 = vunpack.c.l.b16 %v488
        %v633 = vunpack.c.h.b16 %v488
        %v634 = vunpack.c.l.b16 %v489
        %v635 = vunpack.c.h.b16 %v489
        %v636 = vunpack.c.l.b16 %v490
        %v637 = vunpack.c.h.b16 %v490
        %v638 = vunpack.c.l.b16 %v491
        %v639 = vunpack.c.h.b16 %v491
        %v640 = vunpack.c.l.b16 %v492
        %v641 = vunpack.c.h.b16 %v492
        %v642 = vunpack.c.l.b16 %v493
        %v643 = vunpack.c.h.b16 %v493
        %v644 = vunpack.c.l.b16 %v494
        %v645 = vunpack.c.h.b16 %v494
        %v646 = vunpack.c.l.b16 %v495
        %v647 = vunpack.c.h.b16 %v495
        %v648 = vunpack.c.l.b16 %v496
        %v649 = vunpack.c.h.b16 %v496
        %v650 = vunpack.c.l.b16 %v497
        %v651 = vunpack.c.h.b16 %v497
        %v652 = vunpack.c.l.b16 %v498
        %v653 = vunpack.c.h.b16 %v498
        %v654 = vunpack.c.l.b16 %v499
        %v655 = vunpack.c.h.b16 %v499
        %v656 = vunpack.c.l.b16 %v500
        %v657 = vunpack.c.h.b16 %v500
        %v658 = vunpack.c.l.b16 %v501
        %v659 = vunpack.c.h.b16 %v501
        %v660 = vunpack.c.l.b16 %v502
        %v661 = vunpack.c.h.b16 %v502
        %v662 = vunpack.c.l.b16 %v503
        %v663 = vunpack.c.h.b16 %v503
        %v664 = vpack.c.b16 %v604, %v600
        %v665 = vpack.c.b16 %v605, %v601
        %v666 = vpack.c.b16 %v606, %v602
        %v667 = vpack.c.b16 %v607, %v603
        %v668 = vpack.c.b16 %v612, %v608
        %v669 = vpack.c.b16 %v613, %v609
        %v670 = vpack.c.b16 %v614, %v610
        %v671 = vpack.c.b16 %v615, %v611
        %v672 = vpack.c.b16 %v620, %v616
        %v673 = vpack.c.b16 %v621, %v617
        %v674 = vpack.c.b16 %v622, %v618
        %v675 = vpack.c.b16 %v623, %v619
        %v676 = vpack.c.b16 %v628, %v624
        %v677 = vpack.c.b16 %v629, %v625
        %v678 = vpack.c.b16 %v630, %v626
        %v679 = vpack.c.b16 %v631, %v627
        %v680 = vpack.c.b16 %v636, %v632
        %v681 = vpack.c.b16 %v637, %v633
        %v682 = vpack.c.b16 %v638, %v634
        %v683 = vpack.c.b16 %v639, %v635
        %v684 = vpack.c.b16 %v644, %v640
        %v685 = vpack.c.b16 %v645, %v641
        %v686 = vpack.c.b16 %v646, %v642
        %v687 = vpack.c.b16 %v647, %v643
        %v688 = vpack.c.b16 %v652, %v648
        %v689 = vpack.c.b16 %v653, %v649
        %v690 = vpack.c.b16 %v654, %v650
        %v691 = vpack.c.b16 %v655, %v651
        %v692 = vpack.c.b16 %v660, %v656
        %v693 = vpack.c.b16 %v661, %v657
        %v694 = vpack.c.b16 %v662, %v658
        %v695 = vpack.c.b16 %v663, %v659
        %v792 = vunpack.c.l.b16 %v504
        %v793 = vunpack.c.h.b16 %v504
        %v794 = vunpack.c.l.b16 %v505
        %v795 = vunpack.c.h.b16 %v505
        %v796 = vunpack.c.l.b16 %v506
        %v797 = vunpack.c.h.b16 %v506
        %v798 = vunpack.c.l.b16 %v507
        %v799 = vunpack.c.h.b16 %v507
        %v800 = vunpack.c.l.b16 %v508
        %v801 = vunpack.c.h.b16 %v508
        %v802 = vunpack.c.l.b16 %v509
        %v803 = vunpack.c.h.b16 %v509
        %v804 = vunpack.c.l.b16 %v510
        %v805 = vunpack.c.h.b16 %v510
        %v806 = vunpack.c.l.b16 %v511
        %v807 = vunpack.c.h.b16 %v511
        %v808 = vunpack.c.l.b16 %v512
        %v809 = vunpack.c.h.b16 %v512
        %v810 = vunpack.c.l.b16 %v513
        %v811 = vunpack.c.h.b16 %v513
        %v812 = vunpack.c.l.b16 %v514
        %v813 = vunpack.c.h.b16 %v514
        %v814 = vunpack.c.l.b16 %v515
        %v815 = vunpack.c.h.b16 %v515
        %v816 = vunpack.c.l.b16 %v516
        %v817 = vunpack.c.h.b16 %v516
        %v818 = vunpack.c.l.b16 %v517
        %v819 = vunpack.c.h.b16 %v517
        %v820 = vunpack.c.l.b16 %v518
        %v821 = vunpack.c.h.b16 %v518
        %v822 = vunpack.c.l.b16 %v519
        %v823 = vunpack.c.h.b16 %v519
        %v824 = vunpack.c.l.b16 %v520
        %v825 = vunpack.c.h.b16 %v520
        %v826 = vunpack.c.l.b16 %v521
        %v827 = vunpack.c.h.b16 %v521
        %v828 = vunpack.c.l.b16 %v522
        %v829 = vunpack.c.h.b16 %v522
        %v830 = vunpack.c.l.b16 %v523
        %v831 = vunpack.c.h.b16 %v523
        %v832 = vunpack.c.l.b16 %v524
        %v833 = vunpack.c.h.b16 %v524
        %v834 = vunpack.c.l.b16 %v525
        %v835 = vunpack.c.h.b16 %v525
        %v836 = vunpack.c.l.b16 %v526
        %v837 = vunpack.c.h.b16 %v526
        %v838 = vunpack.c.l.b16 %v527
        %v839 = vunpack.c.h.b16 %v527
        %v840 = vunpack.c.l.b16 %v528
        %v841 = vunpack.c.h.b16 %v528
        %v842 = vunpack.c.l.b16 %v529
        %v843 = vunpack.c.h.b16 %v529
        %v844 = vunpack.c.l.b16 %v530
        %v845 = vunpack.c.h.b16 %v530
        %v846 = vunpack.c.l.b16 %v531
        %v847 = vunpack.c.h.b16 %v531
        %v848 = vunpack.c.l.b16 %v532
        %v849 = vunpack.c.h.b16 %v532
        %v850 = vunpack.c.l.b16 %v533
        %v851 = vunpack.c.h.b16 %v533
        %v852 = vunpack.c.l.b16 %v534
        %v853 = vunpack.c.h.b16 %v534
        %v854 = vunpack.c.l.b16 %v535
        %v855 = vunpack.c.h.b16 %v535
        %v856 = vunpack.c.l.b16 %v536
        %v857 = vunpack.c.h.b16 %v536
        %v858 = vunpack.c.l.b16 %v537
        %v859 = vunpack.c.h.b16 %v537
        %v860 = vunpack.c.l.b16 %v538
        %v861 = vunpack.c.h.b16 %v538
        %v862 = vunpack.c.l.b16 %v539
        %v863 = vunpack.c.h.b16 %v539
        %v864 = vunpack.c.l.b16 %v540
        %v865 = vunpack.c.h.b16 %v540
        %v866 = vunpack.c.l.b16 %v541
        %v867 = vunpack.c.h.b16 %v541
        %v868 = vunpack.c.l.b16 %v542
        %v869 = vunpack.c.h.b16 %v542
        %v870 = vunpack.c.l.b16 %v543
        %v871 = vunpack.c.h.b16 %v543
        %v872 = vunpack.c.l.b16 %v544
        %v873 = vunpack.c.h.b16 %v544
        %v874 = vunpack.c.l.b16 %v545
        %v875 = vunpack.c.h.b16 %v545
        %v876 = vunpack.c.l.b16 %v546
        %v877 = vunpack.c.h.b16 %v546
        %v878 = vunpack.c.l.b16 %v547
        %v879 = vunpack.c.h.b16 %v547
        %v880 = vunpack.c.l.b16 %v548
        %v881 = vunpack.c.h.b16 %v548
        %v882 = vunpack.c.l.b16 %v549
        %v883 = vunpack.c.h.b16 %v549
        %v884 = vunpack.c.l.b16 %v550
        %v885 = vunpack.c.h.b16 %v550
        %v886 = vunpack.c.l.b16 %v551
        %v887 = vunpack.c.h.b16 %v551
        %v888 = vunpack.c.l.b16 %v552
        %v889 = vunpack.c.h.b16 %v552
        %v890 = vunpack.c.l.b16 %v553
        %v891 = vunpack.c.h.b16 %v553
        %v892 = vunpack.c.l.b16 %v554
        %v893 = vunpack.c.h.b16 %v554
        %v894 = vunpack.c.l.b16 %v555
        %v895 = vunpack.c.h.b16 %v555
        %v896 = vunpack.c.l.b16 %v556
        %v897 = vunpack.c.h.b16 %v556
        %v898 = vunpack.c.l.b16 %v557
        %v899 = vunpack.c.h.b16 %v557
        %v900 = vunpack.c.l.b16 %v558
        %v901 = vunpack.c.h.b16 %v558
        %v902 = vunpack.c.l.b16 %v559
        %v903 = vunpack.c.h.b16 %v559
        %v904 = vunpack.c.l.b16 %v560
        %v905 = vunpack.c.h.b16 %v560
        %v906 = vunpack.c.l.b16 %v561
        %v907 = vunpack.c.h.b16 %v561
        %v908 = vunpack.c.l.b16 %v562
        %v909 = vunpack.c.h.b16 %v562
        %v910 = vunpack.c.l.b16 %v563
        %v911 = vunpack.c.h.b16 %v563
        %v912 = vunpack.c.l.b16 %v564
        %v913 = vunpack.c.h.b16 %v564
        %v914 = vunpack.c.l.b16 %v565
        %v915 = vunpack.c.h.b16 %v565
        %v916 = vunpack.c.l.b16 %v566
        %v917 = vunpack.c.h.b16 %v566
        %v918 = vunpack.c.l.b16 %v567
        %v919 = vunpack.c.h.b16 %v567
        %v920 = vpack.c.b16 %v794, %v792
        %v921 = vpack.c.b16 %v795, %v793
        %v922 = vpack.c.b16 %v798, %v796
        %v923 = vpack.c.b16 %v799, %v797
        %v924 = vpack.c.b16 %v802, %v800
        %v925 = vpack.c.b16 %v803, %v801
        %v926 = vpack.c.b16 %v806, %v804
        %v927 = vpack.c.b16 %v807, %v805
        %v928 = vpack.c.b16 %v810, %v808
        %v929 = vpack.c.b16 %v811, %v809
        %v930 = vpack.c.b16 %v814, %v812
        %v931 = vpack.c.b16 %v815, %v813
        %v932 = vpack.c.b16 %v818, %v816
        %v933 = vpack.c.b16 %v819, %v817
        %v934 = vpack.c.b16 %v822, %v820
        %v935 = vpack.c.b16 %v823, %v821
        %v936 = vpack.c.b16 %v826, %v824
        %v937 = vpack.c.b16 %v827, %v825
        %v938 = vpack.c.b16 %v830, %v828
        %v939 = vpack.c.b16 %v831, %v829
        %v940 = vpack.c.b16 %v834, %v832
        %v941 = vpack.c.b16 %v835, %v833
        %v942 = vpack.c.b16 %v838, %v836
        %v943 = vpack.c.b16 %v839, %v837
        %v944 = vpack.c.b16 %v842, %v840
        %v945 = vpack.c.b16 %v843, %v841
        %v946 = vpack.c.b16 %v846, %v844
        %v947 = vpack.c.b16 %v847, %v845
        %v948 = vpack.c.b16 %v850, %v848
        %v949 = vpack.c.b16 %v851, %v849
        %v950 = vpack.c.b16 %v854, %v852
        %v951 = vpack.c.b16 %v855, %v853
        %v952 = vpack.c.b16 %v858, %v856
        %v953 = vpack.c.b16 %v859, %v857
        %v954 = vpack.c.b16 %v862, %v860
        %v955 = vpack.c.b16 %v863, %v861
        %v956 = vpack.c.b16 %v866, %v864
        %v957 = vpack.c.b16 %v867, %v865
        %v958 = vpack.c.b16 %v870, %v868
        %v959 = vpack.c.b16 %v871, %v869
        %v960 = vpack.c.b16 %v874, %v872
        %v961 = vpack.c.b16 %v875, %v873
        %v962 = vpack.c.b16 %v878, %v876
        %v963 = vpack.c.b16 %v879, %v877
        %v964 = vpack.c.b16 %v882, %v880
        %v965 = vpack.c.b16 %v883, %v881
        %v966 = vpack.c.b16 %v886, %v884
        %v967 = vpack.c.b16 %v887, %v885
        %v968 = vpack.c.b16 %v890, %v888
        %v969 = vpack.c.b16 %v891, %v889
        %v970 = vpack.c.b16 %v894, %v892
        %v971 = vpack.c.b16 %v895, %v893
        %v972 = vpack.c.b16 %v898, %v896
        %v973 = vpack.c.b16 %v899, %v897
        %v974 = vpack.c.b16 %v902, %v900
        %v975 = vpack.c.b16 %v903, %v901
        %v976 = vpack.c.b16 %v906, %v904
        %v977 = vpack.c.b16 %v907, %v905
        %v978 = vpack.c.b16 %v910, %v908
        %v979 = vpack.c.b16 %v911, %v909
        %v980 = vpack.c.b16 %v914, %v912
        %v981 = vpack.c.b16 %v915, %v913
        %v982 = vpack.c.b16 %v918, %v916
        %v983 = vpack.c.b16 %v919, %v917
        %1048 = vmatprep.subr.bf16.mxu0 %v921
        %1049 = vmatpush1.bf16.msra.mxu0 %v920
        %1050 = vmatprep.subr.bf16.mxu0 %v923
        %1051 = vmatpush1.bf16.msra.mxu0 %v922
        %1052 = vmatprep.subr.bf16.mxu0 %v925
        %1053 = vmatpush1.bf16.msra.mxu0 %v924
        %1054 = vmatprep.subr.bf16.mxu0 %v927
        %1055 = vmatpush1.bf16.msra.mxu0 %v926
        %1056 = vmatprep.subr.bf16.mxu0 %v929
        %1057 = vmatpush1.bf16.msra.mxu0 %v928
        %1058 = vmatprep.subr.bf16.mxu0 %v931
        %1059 = vmatpush1.bf16.msra.mxu0 %v930
        %1060 = vmatprep.subr.bf16.mxu0 %v933
        %1061 = vmatpush1.bf16.msra.mxu0 %v932
        %1062 = vmatprep.subr.bf16.mxu0 %v935
        %1063 = vmatpush1.bf16.msra.mxu0 %v934
        %1064 = vmatprep.subr.bf16.mxu0 %v937
        %1065 = vmatpush1.bf16.msra.mxu0 %v936
        %1066 = vmatprep.subr.bf16.mxu0 %v939
        %1067 = vmatpush1.bf16.msra.mxu0 %v938
        %1068 = vmatprep.subr.bf16.mxu0 %v941
        %1069 = vmatpush1.bf16.msra.mxu0 %v940
        %1070 = vmatprep.subr.bf16.mxu0 %v943
        %1071 = vmatpush1.bf16.msra.mxu0 %v942
        %1072 = vmatprep.subr.bf16.mxu0 %v945
        %1073 = vmatpush1.bf16.msra.mxu0 %v944
        %1074 = vmatprep.subr.bf16.mxu0 %v947
        %1075 = vmatpush1.bf16.msra.mxu0 %v946
        %1076 = vmatprep.subr.bf16.mxu0 %v949
        %1077 = vmatpush1.bf16.msra.mxu0 %v948
        %1078 = vmatprep.subr.bf16.mxu0 %v951
        %1079 = vmatpush1.bf16.msra.mxu0 %v950
        %1080 = vmatprep.mubr.bf16.mxu0 %v665
        %1081 = vmatmul.mubr.bf16.gmra.mrb[0].mxu0 %v664
        %v1082 = vpop.f32.mrb[0].mxu0
        %v1083 = vadd.f32 0.0, %v1082
        %v1084 = vpop.f32.mrb[0].mxu0
        %v1085 = vadd.f32 0.0, %v1084
        %v1086 = vpop.f32.mrb[0].mxu0
        %v1087 = vadd.f32 0.0, %v1086
        %v1088 = vpop.f32.mrb[0].mxu0
        %v1089 = vadd.f32 0.0, %v1088
        %1090 = vmatprep.mubr.bf16.mxu0 %v669
        %1091 = vmatmul.mubr.bf16.gmra.mrb[0].mxu0 %v668
        %v1092 = vpop.f32.mrb[0].mxu0
        %v1093 = vadd.f32 0.0, %v1092
        %v1094 = vpop.f32.mrb[0].mxu0
        %v1095 = vadd.f32 0.0, %v1094
        %v1096 = vpop.f32.mrb[0].mxu0
        %v1097 = vadd.f32 0.0, %v1096
        %v1098 = vpop.f32.mrb[0].mxu0
        %v1099 = vadd.f32 0.0, %v1098
        %1100 = vmatprep.mubr.bf16.mxu0 %v673
        %1101 = vmatmul.mubr.bf16.gmra.mrb[0].mxu0 %v672
        %v1102 = vpop.f32.mrb[0].mxu0
        %v1103 = vadd.f32 0.0, %v1102
        %v1104 = vpop.f32.mrb[0].mxu0
        %v1105 = vadd.f32 0.0, %v1104
        %v1106 = vpop.f32.mrb[0].mxu0
        %v1107 = vadd.f32 0.0, %v1106
        %v1108 = vpop.f32.mrb[0].mxu0
        %v1109 = vadd.f32 0.0, %v1108
        %1110 = vmatprep.mubr.bf16.mxu0 %v677
        %1111 = vmatmul.mubr.bf16.gmra.mrb[0].mxu0 %v676
        %v1112 = vpop.f32.mrb[0].mxu0
        %v1113 = vadd.f32 0.0, %v1112
        %v1114 = vpop.f32.mrb[0].mxu0
        %v1115 = vadd.f32 0.0, %v1114
        %v1116 = vpop.f32.mrb[0].mxu0
        %v1117 = vadd.f32 0.0, %v1116
        %v1118 = vpop.f32.mrb[0].mxu0
        %v1119 = vadd.f32 0.0, %v1118
        %1120 = vmatprep.mubr.bf16.mxu0 %v681
        %1121 = vmatmul.mubr.bf16.gmra.mrb[0].mxu0 %v680
        %v1122 = vpop.f32.mrb[0].mxu0
        %v1123 = vadd.f32 0.0, %v1122
        %v1124 = vpop.f32.mrb[0].mxu0
        %v1125 = vadd.f32 0.0, %v1124
        %v1126 = vpop.f32.mrb[0].mxu0
        %v1127 = vadd.f32 0.0, %v1126
        %v1128 = vpop.f32.mrb[0].mxu0
        %v1129 = vadd.f32 0.0, %v1128
        %1130 = vmatprep.mubr.bf16.mxu0 %v685
        %1131 = vmatmul.mubr.bf16.gmra.mrb[0].mxu0 %v684
        %v1132 = vpop.f32.mrb[0].mxu0
        %v1133 = vadd.f32 0.0, %v1132
        %v1134 = vpop.f32.mrb[0].mxu0
        %v1135 = vadd.f32 0.0, %v1134
        %v1136 = vpop.f32.mrb[0].mxu0
        %v1137 = vadd.f32 0.0, %v1136
        %v1138 = vpop.f32.mrb[0].mxu0
        %v1139 = vadd.f32 0.0, %v1138
        %1140 = vmatprep.mubr.bf16.mxu0 %v689
        %1141 = vmatmul.mubr.bf16.gmra.mrb[0].mxu0 %v688
        %v1142 = vpop.f32.mrb[0].mxu0
        %v1143 = vadd.f32 0.0, %v1142
        %v1144 = vpop.f32.mrb[0].mxu0
        %v1145 = vadd.f32 0.0, %v1144
        %v1146 = vpop.f32.mrb[0].mxu0
        %v1147 = vadd.f32 0.0, %v1146
        %v1148 = vpop.f32.mrb[0].mxu0
        %v1149 = vadd.f32 0.0, %v1148
        %1150 = vmatprep.mubr.bf16.mxu0 %v693
        %1151 = vmatmul.mubr.bf16.gmra.mrb[0].mxu0 %v692
        %v1152 = vpop.f32.mrb[0].mxu0
        %v1153 = vadd.f32 0.0, %v1152
        %v1154 = vpop.f32.mrb[0].mxu0
        %v1155 = vadd.f32 0.0, %v1154
        %v1156 = vpop.f32.mrb[0].mxu0
        %v1157 = vadd.f32 0.0, %v1156
        %v1158 = vpop.f32.mrb[0].mxu0
        %v1159 = vadd.f32 0.0, %v1158
        %1160 = vdwg.mxu0
        %1161 = vmatprep.subr.bf16.mxu0 %v953
        %1162 = vmatpush1.bf16.msra.mxu0 %v952
        %1163 = vmatprep.subr.bf16.mxu0 %v955
        %1164 = vmatpush1.bf16.msra.mxu0 %v954
        %1165 = vmatprep.subr.bf16.mxu0 %v957
        %1166 = vmatpush1.bf16.msra.mxu0 %v956
        %1167 = vmatprep.subr.bf16.mxu0 %v959
        %1168 = vmatpush1.bf16.msra.mxu0 %v958
        %1169 = vmatprep.subr.bf16.mxu0 %v961
        %1170 = vmatpush1.bf16.msra.mxu0 %v960
        %1171 = vmatprep.subr.bf16.mxu0 %v963
        %1172 = vmatpush1.bf16.msra.mxu0 %v962
        %1173 = vmatprep.subr.bf16.mxu0 %v965
        %1174 = vmatpush1.bf16.msra.mxu0 %v964
        %1175 = vmatprep.subr.bf16.mxu0 %v967
        %1176 = vmatpush1.bf16.msra.mxu0 %v966
        %1177 = vmatprep.subr.bf16.mxu0 %v969
        %1178 = vmatpush1.bf16.msra.mxu0 %v968
        %1179 = vmatprep.subr.bf16.mxu0 %v971
        %1180 = vmatpush1.bf16.msra.mxu0 %v970
        %1181 = vmatprep.subr.bf16.mxu0 %v973
        %1182 = vmatpush1.bf16.msra.mxu0 %v972
        %1183 = vmatprep.subr.bf16.mxu0 %v975
        %1184 = vmatpush1.bf16.msra.mxu0 %v974
        %1185 = vmatprep.subr.bf16.mxu0 %v977
        %1186 = vmatpush1.bf16.msra.mxu0 %v976
        %1187 = vmatprep.subr.bf16.mxu0 %v979
        %1188 = vmatpush1.bf16.msra.mxu0 %v978
        %1189 = vmatprep.subr.bf16.mxu0 %v981
        %1190 = vmatpush1.bf16.msra.mxu0 %v980
        %1191 = vmatprep.subr.bf16.mxu0 %v983
        %1192 = vmatpush1.bf16.msra.mxu0 %v982
        %1193 = vmatprep.mubr.bf16.mxu0 %v667
        %1194 = vmatmul.mubr.bf16.gmra.mrb[0].mxu0 %v666
        %v1195 = vpop.f32.mrb[0].mxu0
        %v1196 = vadd.f32 %v1083, %v1195
        %v1197 = vpop.f32.mrb[0].mxu0
        %v1198 = vadd.f32 %v1085, %v1197
        %v1199 = vpop.f32.mrb[0].mxu0
        %v1200 = vadd.f32 %v1087, %v1199
        %v1201 = vpop.f32.mrb[0].mxu0
        %v1202 = vadd.f32 %v1089, %v1201
        %1203 = vmatprep.mubr.bf16.mxu0 %v671
        %1204 = vmatmul.mubr.bf16.gmra.mrb[0].mxu0 %v670
        %v1205 = vpop.f32.mrb[0].mxu0
        %v1206 = vadd.f32 %v1093, %v1205
        %v1207 = vpop.f32.mrb[0].mxu0
        %v1208 = vadd.f32 %v1095, %v1207
        %v1209 = vpop.f32.mrb[0].mxu0
        %v1210 = vadd.f32 %v1097, %v1209
        %v1211 = vpop.f32.mrb[0].mxu0
        %v1212 = vadd.f32 %v1099, %v1211
        %1213 = vmatprep.mubr.bf16.mxu0 %v675
        %1214 = vmatmul.mubr.bf16.gmra.mrb[0].mxu0 %v674
        %v1215 = vpop.f32.mrb[0].mxu0
        %v1216 = vadd.f32 %v1103, %v1215
        %v1217 = vpop.f32.mrb[0].mxu0
        %v1218 = vadd.f32 %v1105, %v1217
        %v1219 = vpop.f32.mrb[0].mxu0
        %v1220 = vadd.f32 %v1107, %v1219
        %v1221 = vpop.f32.mrb[0].mxu0
        %v1222 = vadd.f32 %v1109, %v1221
        %1223 = vmatprep.mubr.bf16.mxu0 %v679
        %1224 = vmatmul.mubr.bf16.gmra.mrb[0].mxu0 %v678
        %v1225 = vpop.f32.mrb[0].mxu0
        %v1226 = vadd.f32 %v1113, %v1225
        %v1227 = vpop.f32.mrb[0].mxu0
        %v1228 = vadd.f32 %v1115, %v1227
        %v1229 = vpop.f32.mrb[0].mxu0
        %v1230 = vadd.f32 %v1117, %v1229
        %v1231 = vpop.f32.mrb[0].mxu0
        %v1232 = vadd.f32 %v1119, %v1231
        %1233 = vmatprep.mubr.bf16.mxu0 %v683
        %1234 = vmatmul.mubr.bf16.gmra.mrb[0].mxu0 %v682
        %v1235 = vpop.f32.mrb[0].mxu0
        %v1236 = vadd.f32 %v1123, %v1235
        %v1237 = vpop.f32.mrb[0].mxu0
        %v1238 = vadd.f32 %v1125, %v1237
        %v1239 = vpop.f32.mrb[0].mxu0
        %v1240 = vadd.f32 %v1127, %v1239
        %v1241 = vpop.f32.mrb[0].mxu0
        %v1242 = vadd.f32 %v1129, %v1241
        %1243 = vmatprep.mubr.bf16.mxu0 %v687
        %1244 = vmatmul.mubr.bf16.gmra.mrb[0].mxu0 %v686
        %v1245 = vpop.f32.mrb[0].mxu0
        %v1246 = vadd.f32 %v1133, %v1245
        %v1247 = vpop.f32.mrb[0].mxu0
        %v1248 = vadd.f32 %v1135, %v1247
        %v1249 = vpop.f32.mrb[0].mxu0
        %v1250 = vadd.f32 %v1137, %v1249
        %v1251 = vpop.f32.mrb[0].mxu0
        %v1252 = vadd.f32 %v1139, %v1251
        %1253 = vmatprep.mubr.bf16.mxu0 %v691
        %1254 = vmatmul.mubr.bf16.gmra.mrb[0].mxu0 %v690
        %v1255 = vpop.f32.mrb[0].mxu0
        %v1256 = vadd.f32 %v1143, %v1255
        %v1257 = vpop.f32.mrb[0].mxu0
        %v1258 = vadd.f32 %v1145, %v1257
        %v1259 = vpop.f32.mrb[0].mxu0
        %v1260 = vadd.f32 %v1147, %v1259
        %v1261 = vpop.f32.mrb[0].mxu0
        %v1262 = vadd.f32 %v1149, %v1261
        %1263 = vmatprep.mubr.bf16.mxu0 %v695
        %1264 = vmatmul.mubr.bf16.gmra.mrb[0].mxu0 %v694
        %v1265 = vpop.f32.mrb[0].mxu0
        %v1266 = vadd.f32 %v1153, %v1265
        %v1267 = vpop.f32.mrb[0].mxu0
        %v1268 = vadd.f32 %v1155, %v1267
        %v1269 = vpop.f32.mrb[0].mxu0
        %v1270 = vadd.f32 %v1157, %v1269
        %v1271 = vpop.f32.mrb[0].mxu0
        %v1272 = vadd.f32 %v1159, %v1271
        %1273 = vdwg.mxu0
        %v1274 = vadd.f32 %v440, %v1196
        %v1275 = vadd.f32 %v441, %v1198
        %v1276 = vadd.f32 %v442, %v1200
        %v1277 = vadd.f32 %v443, %v1202
        %v1278 = vadd.f32 %v444, %v1206
        %v1279 = vadd.f32 %v445, %v1208
        %v1280 = vadd.f32 %v446, %v1210
        %v1281 = vadd.f32 %v447, %v1212
        %v1282 = vadd.f32 %v448, %v1216
        %v1283 = vadd.f32 %v449, %v1218
        %v1284 = vadd.f32 %v450, %v1220
        %v1285 = vadd.f32 %v451, %v1222
        %v1286 = vadd.f32 %v452, %v1226
        %v1287 = vadd.f32 %v453, %v1228
        %v1288 = vadd.f32 %v454, %v1230
        %v1289 = vadd.f32 %v455, %v1232
        %v1290 = vadd.f32 %v456, %v1236
        %v1291 = vadd.f32 %v457, %v1238
        %v1292 = vadd.f32 %v458, %v1240
        %v1293 = vadd.f32 %v459, %v1242
        %v1294 = vadd.f32 %v460, %v1246
        %v1295 = vadd.f32 %v461, %v1248
        %v1296 = vadd.f32 %v462, %v1250
        %v1297 = vadd.f32 %v463, %v1252
        %v1298 = vadd.f32 %v464, %v1256
        %v1299 = vadd.f32 %v465, %v1258
        %v1300 = vadd.f32 %v466, %v1260
        %v1301 = vadd.f32 %v467, %v1262
        %v1302 = vadd.f32 %v468, %v1266
        %v1303 = vadd.f32 %v469, %v1268
        %v1304 = vadd.f32 %v470, %v1270
        %v1305 = vadd.f32 %v471, %v1272
        %1306 = vst [vmem:[#allocation2] sm:$0xff] %v1274
        %1307 = vst [vmem:[#allocation2 + $0x8] sm:$0xff] %v1275
        %1308 = vst [vmem:[#allocation2 + $0x10] sm:$0xff] %v1276
        %1309 = vst [vmem:[#allocation2 + $0x18] sm:$0xff] %v1277
        %1310 = vst [vmem:[#allocation2 + $0x20] sm:$0xff] %v1278
        %1311 = vst [vmem:[#allocation2 + $0x28] sm:$0xff] %v1279
        %1312 = vst [vmem:[#allocation2 + $0x30] sm:$0xff] %v1280
        %1313 = vst [vmem:[#allocation2 + $0x38] sm:$0xff] %v1281
        %1314 = vst [vmem:[#allocation2 + $0x40] sm:$0xff] %v1282
        %1315 = vst [vmem:[#allocation2 + $0x48] sm:$0xff] %v1283
        %1316 = vst [vmem:[#allocation2 + $0x50] sm:$0xff] %v1284
        %1317 = vst [vmem:[#allocation2 + $0x58] sm:$0xff] %v1285
        %1318 = vst [vmem:[#allocation2 + $0x60] sm:$0xff] %v1286
        %1319 = vst [vmem:[#allocation2 + $0x68] sm:$0xff] %v1287
        %1320 = vst [vmem:[#allocation2 + $0x70] sm:$0xff] %v1288
        %1321 = vst [vmem:[#allocation2 + $0x78] sm:$0xff] %v1289
        %1322 = vst [vmem:[#allocation2 + $0x80] sm:$0xff] %v1290
        %1323 = vst [vmem:[#allocation2 + $0x88] sm:$0xff] %v1291
        %1324 = vst [vmem:[#allocation2 + $0x90] sm:$0xff] %v1292
        %1325 = vst [vmem:[#allocation2 + $0x98] sm:$0xff] %v1293
        %1326 = vst [vmem:[#allocation2 + $0xa0] sm:$0xff] %v1294
        %1327 = vst [vmem:[#allocation2 + $0xa8] sm:$0xff] %v1295
        %1328 = vst [vmem:[#allocation2 + $0xb0] sm:$0xff] %v1296
        %1329 = vst [vmem:[#allocation2 + $0xb8] sm:$0xff] %v1297
        %1330 = vst [vmem:[#allocation2 + $0xc0] sm:$0xff] %v1298
        %1331 = vst [vmem:[#allocation2 + $0xc8] sm:$0xff] %v1299
        %1332 = vst [vmem:[#allocation2 + $0xd0] sm:$0xff] %v1300
        %1333 = vst [vmem:[#allocation2 + $0xd8] sm:$0xff] %v1301
        %1334 = vst [vmem:[#allocation2 + $0xe0] sm:$0xff] %v1302
        %1335 = vst [vmem:[#allocation2 + $0xe8] sm:$0xff] %v1303
        %1336 = vst [vmem:[#allocation2 + $0xf0] sm:$0xff] %v1304
        %1337 = vst [vmem:[#allocation2 + $0xf8] sm:$0xff] %v1305
        %p1338 = scmp.eq.s32.totalorder %s23, 3
        // Predicated region
        $region56: #{discriminator_forward.7} parent=46 // pred_check
          %p1339 = pneg %p1338
        $region57: #{discriminator_forward.7} parent=46 // pred_check_branch
          %1341 = sbr.rel (%p1339) target = $region59
        $region58: #{discriminator_forward.7} parent=46 // pred_region
          %v1342 = vld [vmem:[#allocation2] sm:$0xff]
          %v1343 = vld [vmem:[#allocation2 + $0x8] sm:$0xff]
          %v1344 = vld [vmem:[#allocation2 + $0x10] sm:$0xff]
          %v1345 = vld [vmem:[#allocation2 + $0x18] sm:$0xff]
          %v1346 = vld [vmem:[#allocation2 + $0x20] sm:$0xff]
          %v1347 = vld [vmem:[#allocation2 + $0x28] sm:$0xff]
          %v1348 = vld [vmem:[#allocation2 + $0x30] sm:$0xff]
          %v1349 = vld [vmem:[#allocation2 + $0x38] sm:$0xff]
          %v1350 = vld [vmem:[#allocation2 + $0x40] sm:$0xff]
          %v1351 = vld [vmem:[#allocation2 + $0x48] sm:$0xff]
          %v1352 = vld [vmem:[#allocation2 + $0x50] sm:$0xff]
          %v1353 = vld [vmem:[#allocation2 + $0x58] sm:$0xff]
          %v1354 = vld [vmem:[#allocation2 + $0x60] sm:$0xff]
          %v1355 = vld [vmem:[#allocation2 + $0x68] sm:$0xff]
          %v1356 = vld [vmem:[#allocation2 + $0x70] sm:$0xff]
          %v1357 = vld [vmem:[#allocation2 + $0x78] sm:$0xff]
          %v1358 = vld [vmem:[#allocation2 + $0x80] sm:$0xff]
          %v1359 = vld [vmem:[#allocation2 + $0x88] sm:$0xff]
          %v1360 = vld [vmem:[#allocation2 + $0x90] sm:$0xff]
          %v1361 = vld [vmem:[#allocation2 + $0x98] sm:$0xff]
          %v1362 = vld [vmem:[#allocation2 + $0xa0] sm:$0xff]
          %v1363 = vld [vmem:[#allocation2 + $0xa8] sm:$0xff]
          %v1364 = vld [vmem:[#allocation2 + $0xb0] sm:$0xff]
          %v1365 = vld [vmem:[#allocation2 + $0xb8] sm:$0xff]
          %v1366 = vld [vmem:[#allocation2 + $0xc0] sm:$0xff]
          %v1367 = vld [vmem:[#allocation2 + $0xc8] sm:$0xff]
          %v1368 = vld [vmem:[#allocation2 + $0xd0] sm:$0xff]
          %v1369 = vld [vmem:[#allocation2 + $0xd8] sm:$0xff]
          %v1370 = vld [vmem:[#allocation2 + $0xe0] sm:$0xff]
          %v1371 = vld [vmem:[#allocation2 + $0xe8] sm:$0xff]
          %v1372 = vld [vmem:[#allocation2 + $0xf0] sm:$0xff]
          %v1373 = vld [vmem:[#allocation2 + $0xf8] sm:$0xff]
          %v1374 = vadd.f32 %v1342, %v1344
          %v1375 = vadd.f32 %v1374, %v1346
          %v1376 = vadd.f32 %v1375, %v1348
          %v1377 = vadd.f32 %v1376, %v1350
          %v1378 = vadd.f32 %v1377, %v1352
          %v1379 = vadd.f32 %v1378, %v1354
          %v1380 = vadd.f32 %v1379, %v1356
          %v1381 = vadd.f32 %v1380, %v1358
          %v1382 = vadd.f32 %v1381, %v1360
          %v1383 = vadd.f32 %v1382, %v1362
          %v1384 = vadd.f32 %v1383, %v1364
          %v1385 = vadd.f32 %v1384, %v1366
          %v1386 = vadd.f32 %v1385, %v1368
          %v1387 = vadd.f32 %v1386, %v1370
          %v1388 = vadd.f32 %v1387, %v1372
          %v1389 = vrot.slane %v1388, 4
          %v1390 = vadd.f32 %v1388, %v1389
          %v1391 = vrot.slane %v1390, 2
          %v1392 = vadd.f32 %v1390, %v1391
          %v1393 = vrot.slane %v1392, 1
          %v1394 = vadd.f32 %v1392, %v1393
          %v1395 = vadd.f32 %v1343, %v1345
          %v1396 = vadd.f32 %v1395, %v1347
          %v1397 = vadd.f32 %v1396, %v1349
          %v1398 = vadd.f32 %v1397, %v1351
          %v1399 = vadd.f32 %v1398, %v1353
          %v1400 = vadd.f32 %v1399, %v1355
          %v1401 = vadd.f32 %v1400, %v1357
          %v1402 = vadd.f32 %v1401, %v1359
          %v1403 = vadd.f32 %v1402, %v1361
          %v1404 = vadd.f32 %v1403, %v1363
          %v1405 = vadd.f32 %v1404, %v1365
          %v1406 = vadd.f32 %v1405, %v1367
          %v1407 = vadd.f32 %v1406, %v1369
          %v1408 = vadd.f32 %v1407, %v1371
          %v1409 = vadd.f32 %v1408, %v1373
          %v1410 = vrot.slane %v1409, 4
          %v1411 = vadd.f32 %v1409, %v1410
          %v1412 = vrot.slane %v1411, 2
          %v1413 = vadd.f32 %v1411, %v1412
          %v1414 = vrot.slane %v1413, 1
          %v1415 = vadd.f32 %v1413, %v1414
          %v1418 = vcombine.low %v1394, %v1415
          %v1420 = vunpack.c.l.s4 1966171168
          %v1421 = vunpack.c.0.s8 %v1420
          %v1422 = vlaneseq
          %v1423 = vshrl.u32 %v1422, 7
          %v1424 = vsub.s32 %v1421, %v1423
          %v1425 = vrot.slane %v1418, %v1424
          %v1427 = vunpack.c.l.s4 1966171168
          %v1428 = vunpack.c.0.s8 %v1427
          %v1429 = vlaneseq
          %v1430 = vshrl.u32 %v1429, 7
          %v1431 = vsub.s32 %v1428, %v1430
          %v1432 = vrot.slane %v1425, %v1431
          %v1434 = vlaneseq
          %vm1435 = vcmp.ge.s32.totalorder %v1434, 0
          %vm1436 = vcmp.lt.s32.totalorder %v1434, 256
          %vm1437 = vmand %vm1435, %vm1436
          %1438 = vst.msk [vmem:[%s393] sm:$0x3] %vm1437, %v1432
          %v1439 = vmul.f32 %v1342, %v1342
          %v1440 = vmul.f32 %v1343, %v1343
          %v1441 = vmul.f32 %v1344, %v1344
          %v1442 = vmul.f32 %v1345, %v1345
          %v1443 = vmul.f32 %v1346, %v1346
          %v1444 = vmul.f32 %v1347, %v1347
          %v1445 = vmul.f32 %v1348, %v1348
          %v1446 = vmul.f32 %v1349, %v1349
          %v1447 = vmul.f32 %v1350, %v1350
          %v1448 = vmul.f32 %v1351, %v1351
          %v1449 = vmul.f32 %v1352, %v1352
          %v1450 = vmul.f32 %v1353, %v1353
          %v1451 = vmul.f32 %v1354, %v1354
          %v1452 = vmul.f32 %v1355, %v1355
          %v1453 = vmul.f32 %v1356, %v1356
          %v1454 = vmul.f32 %v1357, %v1357
          %v1455 = vmul.f32 %v1358, %v1358
          %v1456 = vmul.f32 %v1359, %v1359
          %v1457 = vmul.f32 %v1360, %v1360
          %v1458 = vmul.f32 %v1361, %v1361
          %v1459 = vmul.f32 %v1362, %v1362
          %v1460 = vmul.f32 %v1363, %v1363
          %v1461 = vmul.f32 %v1364, %v1364
          %v1462 = vmul.f32 %v1365, %v1365
          %v1463 = vmul.f32 %v1366, %v1366
          %v1464 = vmul.f32 %v1367, %v1367
          %v1465 = vmul.f32 %v1368, %v1368
          %v1466 = vmul.f32 %v1369, %v1369
          %v1467 = vmul.f32 %v1370, %v1370
          %v1468 = vmul.f32 %v1371, %v1371
          %v1469 = vmul.f32 %v1372, %v1372
          %v1470 = vmul.f32 %v1373, %v1373
          %v1471 = vadd.f32 %v1439, %v1441
          %v1472 = vadd.f32 %v1471, %v1443
          %v1473 = vadd.f32 %v1472, %v1445
          %v1474 = vadd.f32 %v1473, %v1447
          %v1475 = vadd.f32 %v1474, %v1449
          %v1476 = vadd.f32 %v1475, %v1451
          %v1477 = vadd.f32 %v1476, %v1453
          %v1478 = vadd.f32 %v1477, %v1455
          %v1479 = vadd.f32 %v1478, %v1457
          %v1480 = vadd.f32 %v1479, %v1459
          %v1481 = vadd.f32 %v1480, %v1461
          %v1482 = vadd.f32 %v1481, %v1463
          %v1483 = vadd.f32 %v1482, %v1465
          %v1484 = vadd.f32 %v1483, %v1467
          %v1485 = vadd.f32 %v1484, %v1469
          %v1486 = vrot.slane %v1485, 4
          %v1487 = vadd.f32 %v1485, %v1486
          %v1488 = vrot.slane %v1487, 2
          %v1489 = vadd.f32 %v1487, %v1488
          %v1490 = vrot.slane %v1489, 1
          %v1491 = vadd.f32 %v1489, %v1490
          %v1492 = vadd.f32 %v1440, %v1442
          %v1493 = vadd.f32 %v1492, %v1444
          %v1494 = vadd.f32 %v1493, %v1446
          %v1495 = vadd.f32 %v1494, %v1448
          %v1496 = vadd.f32 %v1495, %v1450
          %v1497 = vadd.f32 %v1496, %v1452
          %v1498 = vadd.f32 %v1497, %v1454
          %v1499 = vadd.f32 %v1498, %v1456
          %v1500 = vadd.f32 %v1499, %v1458
          %v1501 = vadd.f32 %v1500, %v1460
          %v1502 = vadd.f32 %v1501, %v1462
          %v1503 = vadd.f32 %v1502, %v1464
          %v1504 = vadd.f32 %v1503, %v1466
          %v1505 = vadd.f32 %v1504, %v1468
          %v1506 = vadd.f32 %v1505, %v1470
          %v1507 = vrot.slane %v1506, 4
          %v1508 = vadd.f32 %v1506, %v1507
          %v1509 = vrot.slane %v1508, 2
          %v1510 = vadd.f32 %v1508, %v1509
          %v1511 = vrot.slane %v1510, 1
          %v1512 = vadd.f32 %v1510, %v1511
          %v1515 = vcombine.low %v1491, %v1512
          %v1517 = vunpack.c.l.s4 1966171168
          %v1518 = vunpack.c.0.s8 %v1517
          %v1519 = vlaneseq
          %v1520 = vshrl.u32 %v1519, 7
          %v1521 = vsub.s32 %v1518, %v1520
          %v1522 = vrot.slane %v1515, %v1521
          %v1524 = vunpack.c.l.s4 1966171168
          %v1525 = vunpack.c.0.s8 %v1524
          %v1526 = vlaneseq
          %v1527 = vshrl.u32 %v1526, 7
          %v1528 = vsub.s32 %v1525, %v1527
          %v1529 = vrot.slane %v1522, %v1528
          %1531 = vst.msk [vmem:[%s402] sm:$0x3] %vm1437, %v1529
          %1532 = vst [vmem:[%s383] sm:$0xff] %v1342
          %1533 = vst [vmem:[%s383 + $0x8] sm:$0xff] %v1343
          %1534 = vst [vmem:[%s383 + $0x10] sm:$0xff] %v1344
          %1535 = vst [vmem:[%s383 + $0x18] sm:$0xff] %v1345
          %1536 = vst [vmem:[%s383 + $0x20] sm:$0xff] %v1346
          %1537 = vst [vmem:[%s383 + $0x28] sm:$0xff] %v1347
          %1538 = vst [vmem:[%s383 + $0x30] sm:$0xff] %v1348
          %1539 = vst [vmem:[%s383 + $0x38] sm:$0xff] %v1349
          %1540 = vst [vmem:[%s383 + $0x40] sm:$0xff] %v1350
          %1541 = vst [vmem:[%s383 + $0x48] sm:$0xff] %v1351
          %1542 = vst [vmem:[%s383 + $0x50] sm:$0xff] %v1352
          %1543 = vst [vmem:[%s383 + $0x58] sm:$0xff] %v1353
          %1544 = vst [vmem:[%s383 + $0x60] sm:$0xff] %v1354
          %1545 = vst [vmem:[%s383 + $0x68] sm:$0xff] %v1355
          %1546 = vst [vmem:[%s383 + $0x70] sm:$0xff] %v1356
          %1547 = vst [vmem:[%s383 + $0x78] sm:$0xff] %v1357
          %1548 = vst [vmem:[%s383 + $0x80] sm:$0xff] %v1358
          %1549 = vst [vmem:[%s383 + $0x88] sm:$0xff] %v1359
          %1550 = vst [vmem:[%s383 + $0x90] sm:$0xff] %v1360
          %1551 = vst [vmem:[%s383 + $0x98] sm:$0xff] %v1361
          %1552 = vst [vmem:[%s383 + $0xa0] sm:$0xff] %v1362
          %1553 = vst [vmem:[%s383 + $0xa8] sm:$0xff] %v1363
          %1554 = vst [vmem:[%s383 + $0xb0] sm:$0xff] %v1364
          %1555 = vst [vmem:[%s383 + $0xb8] sm:$0xff] %v1365
          %1556 = vst [vmem:[%s383 + $0xc0] sm:$0xff] %v1366
          %1557 = vst [vmem:[%s383 + $0xc8] sm:$0xff] %v1367
          %1558 = vst [vmem:[%s383 + $0xd0] sm:$0xff] %v1368
          %1559 = vst [vmem:[%s383 + $0xd8] sm:$0xff] %v1369
          %1560 = vst [vmem:[%s383 + $0xe0] sm:$0xff] %v1370
          %1561 = vst [vmem:[%s383 + $0xe8] sm:$0xff] %v1371
          %1562 = vst [vmem:[%s383 + $0xf0] sm:$0xff] %v1372
          %1563 = vst [vmem:[%s383 + $0xf8] sm:$0xff] %v1373
        $region59: #{discriminator_forward.7} parent=46 // pred_fallthru
          _
        %s1564 = smul.u32 16, %s21
        %s1565 = smul.u32 2, %s22
        %p1566 = scmp.lt.s32.totalorder %s1564, 15
        %s1567 = scalar_select %p1566, %s1564, 15
        %p1568 = scmp.lt.s32.totalorder %s1565, 1
        %s1569 = scalar_select %p1568, %s1565, 1
        %s1570 = smul.addr %s1567, 2
        %s1571 = sadd.s32 %s1569, %s1570
        %s1572 = smul.addr %s1571, 8
        %s1573 = scalar_lea.vmem %s2, %s1572
        %s1574 = smul.u32 2, %s22
        %p1575 = scmp.lt.s32.totalorder %s21, 0
        %s1576 = scalar_select %p1575, %s21, 0
        %p1577 = scmp.lt.s32.totalorder %s1574, 1
        %s1578 = scalar_select %p1577, %s1574, 1
        %s1579 = smul.addr %s1576, 2
        %s1580 = sadd.s32 %s1578, %s1579
        %s1581 = scalar_lea.vmem %s3, %s1580
        %s1582 = smul.u32 2, %s22
        %p1583 = scmp.lt.s32.totalorder %s21, 0
        %s1584 = scalar_select %p1583, %s21, 0
        %p1585 = scmp.lt.s32.totalorder %s1582, 1
        %s1586 = scalar_select %p1585, %s1582, 1
        %s1587 = smul.addr %s1584, 2
        %s1588 = sadd.s32 %s1586, %s1587
        %s1589 = scalar_lea.vmem %s4, %s1588
        // Predicated region
        $region60: #{discriminator_forward.7} parent=46 // pred_check
          %p1590 = pneg %p111
        $region61: #{discriminator_forward.7} parent=46 // pred_check_branch
          %1592 = sbr.rel (%p1590) target = $region63
        $region62: #{discriminator_forward.7} parent=46 // pred_region
          %s1593 = smul.u32 16, %s21
          %s1594 = smul.u32 2, %s22
        $region63: #{discriminator_forward.7} parent=46 // pred_fallthru
          _
        // Predicated region
        $region64: #{discriminator_forward.7} parent=46 // pred_check
          %p1595 = pneg %p139
        $region65: #{discriminator_forward.7} parent=46 // pred_check_branch
          %1597 = sbr.rel (%p1595) target = $region67
        $region66: #{discriminator_forward.7} parent=46 // pred_region
          %s1598 = smul.u32 2, %s22
        $region67: #{discriminator_forward.7} parent=46 // pred_fallthru
          _
        // Predicated region
        $region68: #{discriminator_forward.7} parent=46 // pred_check
          %p1599 = pneg %p167
        $region69: #{discriminator_forward.7} parent=46 // pred_check_branch
          %1601 = sbr.rel (%p1599) target = $region71
        $region70: #{discriminator_forward.7} parent=46 // pred_region
          %s1602 = smul.u32 2, %s22
        $region71: #{discriminator_forward.7} parent=46 // pred_fallthru
          _
        // Predicated region
        $region72: #{discriminator_forward.7} parent=46 // pred_check
          %p1603 = pneg %p111
        $region73: #{discriminator_forward.7} parent=46 // pred_check_branch
          %1605 = sbr.rel (%p1603) target = $region75
        $region74: #{discriminator_forward.7} parent=46 // pred_region
          %s1606 = smul.u32 16, %s21
          %s1607 = smul.u32 2, %s22
          %p1608 = scmp.lt.s32.totalorder %s1606, 15
          %s1609 = scalar_select %p1608, %s1606, 15
          %p1610 = scmp.lt.s32.totalorder %s1607, 1
          %s1611 = scalar_select %p1610, %s1607, 1
          %s1612 = smul.addr %s1609, 2
          %s1613 = sadd.s32 %s1611, %s1612
          %s1614 = smul.addr %s1613, 8
          %s1615 = scalar_lea.vmem %s2, %s1614
        $region75: #{discriminator_forward.7} parent=46 // pred_fallthru
          _
        // Predicated region
        $region76: #{discriminator_forward.7} parent=46 // pred_check
          %p1616 = pneg %p139
        $region77: #{discriminator_forward.7} parent=46 // pred_check_branch
          %1618 = sbr.rel (%p1616) target = $region79
        $region78: #{discriminator_forward.7} parent=46 // pred_region
          %s1619 = smul.u32 2, %s22
          %p1620 = scmp.lt.s32.totalorder %s21, 0
          %s1621 = scalar_select %p1620, %s21, 0
          %p1622 = scmp.lt.s32.totalorder %s1619, 1
          %s1623 = scalar_select %p1622, %s1619, 1
          %s1624 = smul.addr %s1621, 2
          %s1625 = sadd.s32 %s1623, %s1624
          %s1626 = scalar_lea.vmem %s3, %s1625
        $region79: #{discriminator_forward.7} parent=46 // pred_fallthru
          _
        // Predicated region
        $region80: #{discriminator_forward.7} parent=46 // pred_check
          %p1627 = pneg %p167
        $region81: #{discriminator_forward.7} parent=46 // pred_check_branch
          %1629 = sbr.rel (%p1627) target = $region83
        $region82: #{discriminator_forward.7} parent=46 // pred_region
          %s1630 = smul.u32 2, %s22
          %p1631 = scmp.lt.s32.totalorder %s21, 0
          %s1632 = scalar_select %p1631, %s21, 0
          %p1633 = scmp.lt.s32.totalorder %s1630, 1
          %s1634 = scalar_select %p1633, %s1630, 1
          %s1635 = smul.addr %s1632, 2
          %s1636 = sadd.s32 %s1634, %s1635
          %s1637 = scalar_lea.vmem %s4, %s1636
        $region83: #{discriminator_forward.7} parent=46 // pred_fallthru
          _
      $region47: #{discriminator_forward.7} parent=5 // pred_fallthru
        _
      %p1638 = scmp.le.s32.totalorder 2, %s11
      // Predicated region
      $region84: #{discriminator_forward.7} parent=5 // pred_check
        %p1639 = pneg %p1638
      $region85: #{discriminator_forward.7} parent=5 // pred_check_branch
        %1641 = sbr.rel (%p1639) target = $region87
      $region86: #{discriminator_forward.7} parent=5 // pred_region
        %s1642 = ssub.s32 %s11, 2
      $region87: #{discriminator_forward.7} parent=5 // pred_fallthru
        _
    $region6: #{discriminator_forward.7} parent=1 // loop_footer
      %s15 = sadd.s32 1, %s11
    $region7: #{discriminator_forward.7} parent=1 // loop_footer_branch
      %10 = sbr.rel target = $region3
    $region8: #{discriminator_forward.7} parent=1 // loop_exit
      _

// kernel: discriminator_forward.9
$region0: #{discriminator_forward.9}
  #allocation0 [shape = 'u32[]', space=smem, size = 0x4, offset = 0x4, fixed_abs, tag = 'smem constant byte address 0x4 - core index']
  #allocation1 [shape = 'u32[144,128]{1,0:T(1,128)}', space=vmem, size = 0x12000, scoped, tag = 'internal scratch']
  #allocation2 [shape = 'f32[32,512]{1,0:T(8,128)}', space=vmem, size = 0x10000, scoped, tag = 'scratch operand']
  %s0 = inlined_call_operand.vmem [shape: bf16[32,4096], index: 0, kind: input, shape index: {}]
  %s1 = inlined_call_operand.vmem [shape: bf16[4096,512], index: 1, kind: input, shape index: {}]
  %s2 = inlined_call_operand.vmem [shape: f32[32,512], index: 2, kind: output, shape index: {0}]
  %s3 = inlined_call_operand.vmem [shape: f32[1,1,512], index: 3, kind: output, shape index: {1}]
  %s4 = inlined_call_operand.vmem [shape: f32[1,1,512], index: 4, kind: output, shape index: {2}]
  %5 = xla_tuple %s2, %s3, %s4
  %s6 = sld [smem:[#allocation0]]
  $region88: #{discriminator_forward.9} parent=0
    _
  %s8 = ssub.s32 1, %s6
  %s9 = scalar_select 0, %s8, %s6
  $region1: #{discriminator_forward.9} parent=0
    #allocation3 [shape = 'u8[65536]{0}', space=vmem, size = 0x10000, scoped, tag = 'input window, operand 0']
    loop: start=0, step=1, limit=10
    $region2: #{discriminator_forward.9} parent=1 // loop_pre_header
      _
    $region3: #{discriminator_forward.9} parent=1 // loop_header
      %s11 = sphi 0, %s15
      %p12 = scmp.ge.s32.totalorder %s11, 10
      %s18 = sphi 0, %s37
      %s19 = sphi 0, %s33
      %s20 = sphi 0, %s29
      %s21 = sphi 0, %s18
      %s22 = sphi 0, %s19
      %s23 = sphi 0, %s20
      %s24 = sphi 0, %s21
      %s25 = sphi 0, %s22
      %s26 = sphi 0, %s23
      %s42 = sphi 0, %s44
      %s45 = sphi 0, %s42
      %s46 = sphi 0, %s45
      %s62 = sphi 0, %s46
      %s70 = sphi 0, %s72
      %s73 = sphi 0, %s70
      %s74 = sphi 0, %s73
      %s90 = sphi 0, %s74
      %s98 = sphi 0, %s100
      %s101 = sphi 0, %s98
      %s102 = sphi 0, %s101
      %s118 = sphi 0, %s102
      %s126 = sphi 0, %s128
      %s129 = sphi 0, %s126
      %s130 = sphi 0, %s129
      %s146 = sphi 0, %s130
      %s154 = sphi 0, %s156
      %s157 = sphi 0, %s154
      %s158 = sphi 0, %s157
      %s174 = sphi 0, %s158
    $region4: #{discriminator_forward.9} parent=1 // loop_header_branch
      %14 = sbr.rel (%p12) target = $region8
    $region5: #{discriminator_forward.9} parent=1 // loop_body
      %s16 = ssub.s32 %s11, 1
      %s17 = ssub.s32 %s11, 2
      %s27 = sadd.s32 1, %s20
      %p28 = scmp.ge.s32.totalorder %s27, 8
      %s29 = scalar_select %p28, 0, %s27
      %s30 = sadd.s32 1, %s19
      %s31 = scalar_select %p28, %s30, %s19
      %p32 = scmp.ge.s32.totalorder %s31, 1
      %s33 = scalar_select %p32, 0, %s31
      %s34 = sadd.s32 1, %s18
      %s35 = scalar_select %p32, %s34, %s18
      %p36 = scmp.ge.s32.totalorder %s35, 1
      %s37 = scalar_select %p36, 0, %s35
      %s38 = ssub.s32 %s18, %s37
      %s39 = ssub.s32 %s20, %s29
      %s40 = sor.u32 %s38, %s39
      %p41 = scmp.eq.s32.totalorder %s40, 0
      %s43 = sadd.s32 %s42, 1
      %s44 = scalar_select %p41, %s42, %s43
      %p47 = pneg %p41
      %p48 = scmp.eq.s32.totalorder %s11, 7
      %p49 = por %p47, %p48
      %p50 = scmp.ne.s32.totalorder %s42, %s45
      %p51 = scmp.eq.s32.totalorder %s11, 0
      %p52 = por %p50, %p51
      %p53 = scmp.ne.s32.totalorder %s42, %s45
      %p54 = scmp.eq.s32.totalorder %s16, 7
      %p55 = por %p53, %p54
      %p56 = scmp.ne.s32.totalorder %s45, %s46
      %p57 = scmp.eq.s32.totalorder %s16, 0
      %p58 = por %p56, %p57
      %p59 = scmp.ne.s32.totalorder %s45, %s46
      %p60 = scmp.eq.s32.totalorder %s17, 7
      %p61 = por %p59, %p60
      %p63 = scmp.ne.s32.totalorder %s46, %s62
      %p64 = scmp.eq.s32.totalorder %s17, 0
      %p65 = por %p63, %p64
      %s66 = ssub.s32 %s20, %s29
      %s67 = ssub.s32 %s19, %s33
      %s68 = sor.u32 %s66, %s67
      %p69 = scmp.eq.s32.totalorder %s68, 0
      %s71 = sadd.s32 %s70, 1
      %s72 = scalar_select %p69, %s70, %s71
      %p75 = pneg %p69
      %p76 = scmp.eq.s32.totalorder %s11, 7
      %p77 = por %p75, %p76
      %p78 = scmp.ne.s32.totalorder %s70, %s73
      %p79 = scmp.eq.s32.totalorder %s11, 0
      %p80 = por %p78, %p79
      %p81 = scmp.ne.s32.totalorder %s70, %s73
      %p82 = scmp.eq.s32.totalorder %s16, 7
      %p83 = por %p81, %p82
      %p84 = scmp.ne.s32.totalorder %s73, %s74
      %p85 = scmp.eq.s32.totalorder %s16, 0
      %p86 = por %p84, %p85
      %p87 = scmp.ne.s32.totalorder %s73, %s74
      %p88 = scmp.eq.s32.totalorder %s17, 7
      %p89 = por %p87, %p88
      %p91 = scmp.ne.s32.totalorder %s74, %s90
      %p92 = scmp.eq.s32.totalorder %s17, 0
      %p93 = por %p91, %p92
      %s94 = ssub.s32 %s18, %s37
      %s95 = ssub.s32 %s19, %s33
      %s96 = sor.u32 %s94, %s95
      %p97 = scmp.eq.s32.totalorder %s96, 0
      %s99 = sadd.s32 %s98, 1
      %s100 = scalar_select %p97, %s98, %s99
      %p103 = pneg %p97
      %p104 = scmp.eq.s32.totalorder %s11, 7
      %p105 = por %p103, %p104
      %p106 = scmp.ne.s32.totalorder %s98, %s101
      %p107 = scmp.eq.s32.totalorder %s11, 0
      %p108 = por %p106, %p107
      %p109 = scmp.ne.s32.totalorder %s98, %s101
      %p110 = scmp.eq.s32.totalorder %s16, 7
      %p111 = por %p109, %p110
      %p112 = scmp.ne.s32.totalorder %s101, %s102
      %p113 = scmp.eq.s32.totalorder %s16, 0
      %p114 = por %p112, %p113
      %p115 = scmp.ne.s32.totalorder %s101, %s102
      %p116 = scmp.eq.s32.totalorder %s17, 7
      %p117 = por %p115, %p116
      %p119 = scmp.ne.s32.totalorder %s102, %s118
      %p120 = scmp.eq.s32.totalorder %s17, 0
      %p121 = por %p119, %p120
      %s122 = ssub.s32 %s18, %s37
      %s123 = ssub.s32 %s19, %s33
      %s124 = sor.u32 %s122, %s123
      %p125 = scmp.eq.s32.totalorder %s124, 0
      %s127 = sadd.s32 %s126, 1
      %s128 = scalar_select %p125, %s126, %s127
      %p131 = pneg %p125
      %p132 = scmp.eq.s32.totalorder %s11, 7
      %p133 = por %p131, %p132
      %p134 = scmp.ne.s32.totalorder %s126, %s129
      %p135 = scmp.eq.s32.totalorder %s11, 0
      %p136 = por %p134, %p135
      %p137 = scmp.ne.s32.totalorder %s126, %s129
      %p138 = scmp.eq.s32.totalorder %s16, 7
      %p139 = por %p137, %p138
      %p140 = scmp.ne.s32.totalorder %s129, %s130
      %p141 = scmp.eq.s32.totalorder %s16, 0
      %p142 = por %p140, %p141
      %p143 = scmp.ne.s32.totalorder %s129, %s130
      %p144 = scmp.eq.s32.totalorder %s17, 7
      %p145 = por %p143, %p144
      %p147 = scmp.ne.s32.totalorder %s130, %s146
      %p148 = scmp.eq.s32.totalorder %s17, 0
      %p149 = por %p147, %p148
      %s150 = ssub.s32 %s18, %s37
      %s151 = ssub.s32 %s19, %s33
      %s152 = sor.u32 %s150, %s151
      %p153 = scmp.eq.s32.totalorder %s152, 0
      %s155 = sadd.s32 %s154, 1
      %s156 = scalar_select %p153, %s154, %s155
      %p159 = pneg %p153
      %p160 = scmp.eq.s32.totalorder %s11, 7
      %p161 = por %p159, %p160
      %p162 = scmp.ne.s32.totalorder %s154, %s157
      %p163 = scmp.eq.s32.totalorder %s11, 0
      %p164 = por %p162, %p163
      %p165 = scmp.ne.s32.totalorder %s154, %s157
      %p166 = scmp.eq.s32.totalorder %s16, 7
      %p167 = por %p165, %p166
      %p168 = scmp.ne.s32.totalorder %s157, %s158
      %p169 = scmp.eq.s32.totalorder %s16, 0
      %p170 = por %p168, %p169
      %p171 = scmp.ne.s32.totalorder %s157, %s158
      %p172 = scmp.eq.s32.totalorder %s17, 7
      %p173 = por %p171, %p172
      %p175 = scmp.ne.s32.totalorder %s158, %s174
      %p176 = scmp.eq.s32.totalorder %s17, 0
      %p177 = por %p175, %p176
      %p178 = scmp.le.s32.totalorder 1, %s11
      %p179 = scmp.lt.s32.totalorder %s11, 9
      %p180 = pnand %p178, %p179
      %p181 = pneg %p180
      // Predicated region
      $region9: #{discriminator_forward.9} parent=5 // pred_check
        _
      $region10: #{discriminator_forward.9} parent=5 // pred_check_branch
        %183 = sbr.rel (%p180) target = $region12
      $region11: #{discriminator_forward.9} parent=5 // pred_region
        %s184 = ssub.s32 %s11, 1
      $region12: #{discriminator_forward.9} parent=5 // pred_fallthru
        _
      %p185 = scmp.lt.s32.totalorder %s11, 8
      // Predicated region
      $region13: #{discriminator_forward.9} parent=5 // pred_check
        %p186 = pneg %p185
      $region14: #{discriminator_forward.9} parent=5 // pred_check_branch
        %188 = sbr.rel (%p186) target = $region16
      $region15: #{discriminator_forward.9} parent=5 // pred_region
        // Predicated region
        $region17: #{discriminator_forward.9} parent=15 // pred_check
          %p189 = pneg %p52
        $region18: #{discriminator_forward.9} parent=15 // pred_check_branch
          %191 = sbr.rel (%p189) target = $region20
        $region19: #{discriminator_forward.9} parent=15 // pred_region
          %s192 = sand.u32 %s42, 1
          %s193 = sand.u32 %s42, 1
          %s194 = smul.addr %s193, 64
          %s195 = scalar_lea.vmem [#allocation3], %s194
          %s196 = smul.u32 4, %s18
          %s197 = smul.u32 4, %s20
          %s198 = smul.addr %s196, 32
          %s199 = sadd.s32 %s197, %s198
          %s200 = smul.addr %s199, 4
          %s201 = scalar_lea.vmem %s0, %s200
          // Predicated region
          $region21: #{discriminator_forward.9} parent=19 // pred_check
            _
          $region22: #{discriminator_forward.9} parent=19 // pred_check_branch
            %203 = sbr.rel (0) target = $region24
          $region23: #{discriminator_forward.9} parent=19 // pred_region
            // Predicated region
            $region25: #{discriminator_forward.9} parent=23 // pred_check
              _
            $region26: #{discriminator_forward.9} parent=23 // pred_check_branch
              %205 = sbr.rel (0) target = $region28
            $region27: #{discriminator_forward.9} parent=23 // pred_region
              loop: start=0, step=1, limit=1
              $region29: #{discriminator_forward.9} parent=27 // loop_pre_header
                _
              $region30: #{discriminator_forward.9} parent=27 // loop_header
                %s207 = sphi 0, %s211
                %p208 = scmp.ge.s32.totalorder %s207, 1
                %s212 = sphi %s201, %s201
                %s213 = sphi %s195, %s195
              $region31: #{discriminator_forward.9} parent=27 // loop_header_branch
                %210 = sbr.rel (%p208) target = $region35
              $region32: #{discriminator_forward.9} parent=27 // loop_body
                %v214 = vld [vmem:[%s212] sm:$0xff]
                %215 = vst [vmem:[%s213] sm:$0xff] %v214
                %v216 = vld [vmem:[%s212 + $0x8] sm:$0xff]
                %217 = vst [vmem:[%s213 + $0x8] sm:$0xff] %v216
                %v218 = vld [vmem:[%s212 + $0x80] sm:$0xff]
                %219 = vst [vmem:[%s213 + $0x10] sm:$0xff] %v218
                %v220 = vld [vmem:[%s212 + $0x88] sm:$0xff]
                %221 = vst [vmem:[%s213 + $0x18] sm:$0xff] %v220
                %v222 = vld [vmem:[%s212 + $0x100] sm:$0xff]
                %223 = vst [vmem:[%s213 + $0x20] sm:$0xff] %v222
                %v224 = vld [vmem:[%s212 + $0x108] sm:$0xff]
                %225 = vst [vmem:[%s213 + $0x28] sm:$0xff] %v224
                %v226 = vld [vmem:[%s212 + $0x180] sm:$0xff]
                %227 = vst [vmem:[%s213 + $0x30] sm:$0xff] %v226
                %v228 = vld [vmem:[%s212 + $0x188] sm:$0xff]
                %229 = vst [vmem:[%s213 + $0x38] sm:$0xff] %v228
              $region33: #{discriminator_forward.9} parent=27 // loop_footer
                %s211 = sadd.s32 1, %s207
              $region34: #{discriminator_forward.9} parent=27 // loop_footer_branch
                %206 = sbr.rel target = $region30
              $region35: #{discriminator_forward.9} parent=27 // loop_exit
                _
            $region28: #{discriminator_forward.9} parent=23 // pred_fallthru
              _
            // Predicated region
            $region36: #{discriminator_forward.9} parent=23 // pred_check
              _
            $region37: #{discriminator_forward.9} parent=23 // pred_check_branch
              %231 = sbr.rel target = $region39
            $region38: #{discriminator_forward.9} parent=23 // pred_region
              _
            $region39: #{discriminator_forward.9} parent=23 // pred_fallthru
              _
          $region24: #{discriminator_forward.9} parent=19 // pred_fallthru
            _
          %232 = vnop
        $region20: #{discriminator_forward.9} parent=15 // pred_fallthru
          _
        // Predicated region
        $region40: #{discriminator_forward.9} parent=15 // pred_check
          %p233 = pneg %p80
        $region41: #{discriminator_forward.9} parent=15 // pred_check_branch
          %235 = sbr.rel (%p233) target = $region43
        $region42: #{discriminator_forward.9} parent=15 // pred_region
          %s236 = smul.u32 64, %s20
          %s237 = smul.u32 4, %s19
          %p238 = scmp.lt.s32.totalorder %s236, 511
          %s239 = scalar_select %p238, %s236, 511
          %p240 = scmp.lt.s32.totalorder %s237, 3
          %s241 = scalar_select %p240, %s237, 3
          %s242 = smul.addr %s239, 4
          %s243 = sadd.s32 %s241, %s242
          %s244 = smul.addr %s243, 4
          %s245 = scalar_lea.vmem %s1, %s244
          %s246 = smul.u32 64, %s20
          %s247 = smul.u32 4, %s19
        $region43: #{discriminator_forward.9} parent=15 // pred_fallthru
          _
      $region16: #{discriminator_forward.9} parent=5 // pred_fallthru
        _
      %p248 = scmp.le.s32.totalorder 1, %s11
      %p249 = scmp.lt.s32.totalorder %s11, 9
      %p250 = pnand %p248, %p249
      %p251 = pneg %p250
      // Predicated region
      $region44: #{discriminator_forward.9} parent=5 // pred_check
        _
      $region45: #{discriminator_forward.9} parent=5 // pred_check_branch
        %253 = sbr.rel (%p250) target = $region47
      $region46: #{discriminator_forward.9} parent=5 // pred_region
        %s254 = ssub.s32 %s11, 1
        %s255 = sand.u32 %s45, 1
        %s256 = sand.u32 %s45, 1
        %s257 = smul.addr %s256, 64
        %s258 = scalar_lea.vmem [#allocation3], %s257
        // Predicated region
        $region48: #{discriminator_forward.9} parent=46 // pred_check
          %p259 = pneg %p58
        $region49: #{discriminator_forward.9} parent=46 // pred_check_branch
          %261 = sbr.rel (%p259) target = $region51
        $region50: #{discriminator_forward.9} parent=46 // pred_region
          _
        $region51: #{discriminator_forward.9} parent=46 // pred_fallthru
          _
        %s262 = sand.u32 %s45, 1
        %s263 = sand.u32 %s45, 1
        %s264 = smul.addr %s263, 64
        %s265 = scalar_lea.vmem [#allocation3], %s264
        %p266 = pneg %p58
        %p267 = pneg %p55
        %s268 = smul.u32 64, %s23
        %s269 = smul.u32 4, %s22
        %p270 = scmp.lt.s32.totalorder %s268, 511
        %s271 = scalar_select %p270, %s268, 511
        %p272 = scmp.lt.s32.totalorder %s269, 3
        %s273 = scalar_select %p272, %s269, 3
        %s274 = smul.addr %s271, 4
        %s275 = sadd.s32 %s273, %s274
        %s276 = smul.addr %s275, 4
        %s277 = scalar_lea.vmem %s1, %s276
        %p278 = pneg %p86
        %p279 = pneg %p83
        %p280 = pneg %p114
        %p281 = pneg %p111
        %s282 = smul.u32 4, %s21
        %s283 = smul.u32 4, %s22
        %p284 = scmp.lt.s32.totalorder %s282, 3
        %s285 = scalar_select %p284, %s282, 3
        %p286 = scmp.lt.s32.totalorder %s283, 3
        %s287 = scalar_select %p286, %s283, 3
        %s288 = smul.addr %s285, 4
        %s289 = sadd.s32 %s287, %s288
        %s290 = smul.addr %s289, 8
        %s291 = scalar_lea.vmem %s2, %s290
        %p292 = pneg %p142
        %p293 = pneg %p139
        %s294 = smul.u32 4, %s22
        %p295 = scmp.lt.s32.totalorder %s21, 0
        %s296 = scalar_select %p295, %s21, 0
        %p297 = scmp.lt.s32.totalorder %s294, 3
        %s298 = scalar_select %p297, %s294, 3
        %s299 = smul.addr %s296, 4
        %s300 = sadd.s32 %s298, %s299
        %s301 = scalar_lea.vmem %s3, %s300
        %p302 = pneg %p170
        %p303 = pneg %p167
        %s304 = smul.u32 4, %s22
        %p305 = scmp.lt.s32.totalorder %s21, 0
        %s306 = scalar_select %p305, %s21, 0
        %p307 = scmp.lt.s32.totalorder %s304, 3
        %s308 = scalar_select %p307, %s304, 3
        %s309 = smul.addr %s306, 4
        %s310 = sadd.s32 %s308, %s309
        %s311 = scalar_lea.vmem %s4, %s310
        %s312 = smul.u32 4, %s21
        %s313 = smul.u32 4, %s23
        %s314 = smul.u32 64, %s23
        %s315 = smul.u32 4, %s22
        %p316 = scmp.lt.s32.totalorder %s314, 511
        %s317 = scalar_select %p316, %s314, 511
        %p318 = scmp.lt.s32.totalorder %s315, 3
        %s319 = scalar_select %p318, %s315, 3
        %s320 = smul.addr %s317, 4
        %s321 = sadd.s32 %s319, %s320
        %s322 = smul.addr %s321, 4
        %s323 = scalar_lea.vmem %s1, %s322
        %s324 = smul.u32 64, %s23
        %s325 = smul.u32 4, %s22
        %s326 = smul.u32 4, %s21
        %s327 = smul.u32 4, %s22
        %p328 = scmp.lt.s32.totalorder %s326, 3
        %s329 = scalar_select %p328, %s326, 3
        %p330 = scmp.lt.s32.totalorder %s327, 3
        %s331 = scalar_select %p330, %s327, 3
        %s332 = smul.addr %s329, 4
        %s333 = sadd.s32 %s331, %s332
        %s334 = smul.addr %s333, 8
        %s335 = scalar_lea.vmem %s2, %s334
        %s336 = smul.u32 4, %s21
        %s337 = smul.u32 4, %s22
        %s338 = smul.u32 4, %s22
        %p339 = scmp.lt.s32.totalorder %s21, 0
        %s340 = scalar_select %p339, %s21, 0
        %p341 = scmp.lt.s32.totalorder %s338, 3
        %s342 = scalar_select %p341, %s338, 3
        %s343 = smul.addr %s340, 4
        %s344 = sadd.s32 %s342, %s343
        %s345 = scalar_lea.vmem %s3, %s344
        %s346 = smul.u32 4, %s22
        %s347 = smul.u32 4, %s22
        %p348 = scmp.lt.s32.totalorder %s21, 0
        %s349 = scalar_select %p348, %s21, 0
        %p350 = scmp.lt.s32.totalorder %s347, 3
        %s351 = scalar_select %p350, %s347, 3
        %s352 = smul.addr %s349, 4
        %s353 = sadd.s32 %s351, %s352
        %s354 = scalar_lea.vmem %s4, %s353
        %s355 = smul.u32 4, %s22
        %p356 = scmp.eq.s32.totalorder %s23, 0
        // Predicated region
        $region52: #{discriminator_forward.9} parent=46 // pred_check
          %p357 = pneg %p356
        $region53: #{discriminator_forward.9} parent=46 // pred_check_branch
          %359 = sbr.rel (%p357) target = $region55
        $region54: #{discriminator_forward.9} parent=46 // pred_region
          %360 = vst [vmem:[#allocation2] sm:$0xff] 0.0
          %361 = vst [vmem:[#allocation2 + $0x8] sm:$0xff] 0.0
          %362 = vst [vmem:[#allocation2 + $0x10] sm:$0xff] 0.0
          %363 = vst [vmem:[#allocation2 + $0x18] sm:$0xff] 0.0
          %364 = vst [vmem:[#allocation2 + $0x20] sm:$0xff] 0.0
          %365 = vst [vmem:[#allocation2 + $0x28] sm:$0xff] 0.0
          %366 = vst [vmem:[#allocation2 + $0x30] sm:$0xff] 0.0
          %367 = vst [vmem:[#allocation2 + $0x38] sm:$0xff] 0.0
          %368 = vst [vmem:[#allocation2 + $0x40] sm:$0xff] 0.0
          %369 = vst [vmem:[#allocation2 + $0x48] sm:$0xff] 0.0
          %370 = vst [vmem:[#allocation2 + $0x50] sm:$0xff] 0.0
          %371 = vst [vmem:[#allocation2 + $0x58] sm:$0xff] 0.0
          %372 = vst [vmem:[#allocation2 + $0x60] sm:$0xff] 0.0
          %373 = vst [vmem:[#allocation2 + $0x68] sm:$0xff] 0.0
          %374 = vst [vmem:[#allocation2 + $0x70] sm:$0xff] 0.0
          %375 = vst [vmem:[#allocation2 + $0x78] sm:$0xff] 0.0
        $region55: #{discriminator_forward.9} parent=46 // pred_fallthru
          _
        %v376 = vld [vmem:[#allocation2] sm:$0xff]
        %v377 = vld [vmem:[#allocation2 + $0x8] sm:$0xff]
        %v378 = vld [vmem:[#allocation2 + $0x10] sm:$0xff]
        %v379 = vld [vmem:[#allocation2 + $0x18] sm:$0xff]
        %v380 = vld [vmem:[#allocation2 + $0x20] sm:$0xff]
        %v381 = vld [vmem:[#allocation2 + $0x28] sm:$0xff]
        %v382 = vld [vmem:[#allocation2 + $0x30] sm:$0xff]
        %v383 = vld [vmem:[#allocation2 + $0x38] sm:$0xff]
        %v384 = vld [vmem:[#allocation2 + $0x40] sm:$0xff]
        %v385 = vld [vmem:[#allocation2 + $0x48] sm:$0xff]
        %v386 = vld [vmem:[#allocation2 + $0x50] sm:$0xff]
        %v387 = vld [vmem:[#allocation2 + $0x58] sm:$0xff]
        %v388 = vld [vmem:[#allocation2 + $0x60] sm:$0xff]
        %v389 = vld [vmem:[#allocation2 + $0x68] sm:$0xff]
        %v390 = vld [vmem:[#allocation2 + $0x70] sm:$0xff]
        %v391 = vld [vmem:[#allocation2 + $0x78] sm:$0xff]
        %v392 = vld [vmem:[%s258] sm:$0xff]
        %v393 = vld [vmem:[%s258 + $0x8] sm:$0xff]
        %v394 = vld [vmem:[%s258 + $0x10] sm:$0xff]
        %v395 = vld [vmem:[%s258 + $0x18] sm:$0xff]
        %v396 = vld [vmem:[%s258 + $0x20] sm:$0xff]
        %v397 = vld [vmem:[%s258 + $0x28] sm:$0xff]
        %v398 = vld [vmem:[%s258 + $0x30] sm:$0xff]
        %v399 = vld [vmem:[%s258 + $0x38] sm:$0xff]
        %v400 = vld [vmem:[%s323] sm:$0xff]
        %v401 = vld [vmem:[%s323 + $0x8] sm:$0xff]
        %v402 = vld [vmem:[%s323 + $0x10] sm:$0xff]
        %v403 = vld [vmem:[%s323 + $0x18] sm:$0xff]
        %v404 = vld [vmem:[%s323 + $0x20] sm:$0xff]
        %v405 = vld [vmem:[%s323 + $0x28] sm:$0xff]
        %v406 = vld [vmem:[%s323 + $0x30] sm:$0xff]
        %v407 = vld [vmem:[%s323 + $0x38] sm:$0xff]
        %v408 = vld [vmem:[%s323 + $0x40] sm:$0xff]
        %v409 = vld [vmem:[%s323 + $0x48] sm:$0xff]
        %v410 = vld [vmem:[%s323 + $0x50] sm:$0xff]
        %v411 = vld [vmem:[%s323 + $0x58] sm:$0xff]
        %v412 = vld [vmem:[%s323 + $0x60] sm:$0xff]
        %v413 = vld [vmem:[%s323 + $0x68] sm:$0xff]
        %v414 = vld [vmem:[%s323 + $0x70] sm:$0xff]
        %v415 = vld [vmem:[%s323 + $0x78] sm:$0xff]
        %v416 = vld [vmem:[%s323 + $0x80] sm:$0xff]
        %v417 = vld [vmem:[%s323 + $0x88] sm:$0xff]
        %v418 = vld [vmem:[%s323 + $0x90] sm:$0xff]
        %v419 = vld [vmem:[%s323 + $0x98] sm:$0xff]
        %v420 = vld [vmem:[%s323 + $0xa0] sm:$0xff]
        %v421 = vld [vmem:[%s323 + $0xa8] sm:$0xff]
        %v422 = vld [vmem:[%s323 + $0xb0] sm:$0xff]
        %v423 = vld [vmem:[%s323 + $0xb8] sm:$0xff]
        %v424 = vld [vmem:[%s323 + $0xc0] sm:$0xff]
        %v425 = vld [vmem:[%s323 + $0xc8] sm:$0xff]
        %v426 = vld [vmem:[%s323 + $0xd0] sm:$0xff]
        %v427 = vld [vmem:[%s323 + $0xd8] sm:$0xff]
        %v428 = vld [vmem:[%s323 + $0xe0] sm:$0xff]
        %v429 = vld [vmem:[%s323 + $0xe8] sm:$0xff]
        %v430 = vld [vmem:[%s323 + $0xf0] sm:$0xff]
        %v431 = vld [vmem:[%s323 + $0xf8] sm:$0xff]
        %v432 = vld [vmem:[%s323 + $0x100] sm:$0xff]
        %v433 = vld [vmem:[%s323 + $0x108] sm:$0xff]
        %v434 = vld [vmem:[%s323 + $0x110] sm:$0xff]
        %v435 = vld [vmem:[%s323 + $0x118] sm:$0xff]
        %v436 = vld [vmem:[%s323 + $0x120] sm:$0xff]
        %v437 = vld [vmem:[%s323 + $0x128] sm:$0xff]
        %v438 = vld [vmem:[%s323 + $0x130] sm:$0xff]
        %v439 = vld [vmem:[%s323 + $0x138] sm:$0xff]
        %v440 = vld [vmem:[%s323 + $0x140] sm:$0xff]
        %v441 = vld [vmem:[%s323 + $0x148] sm:$0xff]
        %v442 = vld [vmem:[%s323 + $0x150] sm:$0xff]
        %v443 = vld [vmem:[%s323 + $0x158] sm:$0xff]
        %v444 = vld [vmem:[%s323 + $0x160] sm:$0xff]
        %v445 = vld [vmem:[%s323 + $0x168] sm:$0xff]
        %v446 = vld [vmem:[%s323 + $0x170] sm:$0xff]
        %v447 = vld [vmem:[%s323 + $0x178] sm:$0xff]
        %v448 = vld [vmem:[%s323 + $0x180] sm:$0xff]
        %v449 = vld [vmem:[%s323 + $0x188] sm:$0xff]
        %v450 = vld [vmem:[%s323 + $0x190] sm:$0xff]
        %v451 = vld [vmem:[%s323 + $0x198] sm:$0xff]
        %v452 = vld [vmem:[%s323 + $0x1a0] sm:$0xff]
        %v453 = vld [vmem:[%s323 + $0x1a8] sm:$0xff]
        %v454 = vld [vmem:[%s323 + $0x1b0] sm:$0xff]
        %v455 = vld [vmem:[%s323 + $0x1b8] sm:$0xff]
        %v456 = vld [vmem:[%s323 + $0x1c0] sm:$0xff]
        %v457 = vld [vmem:[%s323 + $0x1c8] sm:$0xff]
        %v458 = vld [vmem:[%s323 + $0x1d0] sm:$0xff]
        %v459 = vld [vmem:[%s323 + $0x1d8] sm:$0xff]
        %v460 = vld [vmem:[%s323 + $0x1e0] sm:$0xff]
        %v461 = vld [vmem:[%s323 + $0x1e8] sm:$0xff]
        %v462 = vld [vmem:[%s323 + $0x1f0] sm:$0xff]
        %v463 = vld [vmem:[%s323 + $0x1f8] sm:$0xff]
        %v464 = vld [vmem:[%s323 + $0x200] sm:$0xff]
        %v465 = vld [vmem:[%s323 + $0x208] sm:$0xff]
        %v466 = vld [vmem:[%s323 + $0x210] sm:$0xff]
        %v467 = vld [vmem:[%s323 + $0x218] sm:$0xff]
        %v468 = vld [vmem:[%s323 + $0x220] sm:$0xff]
        %v469 = vld [vmem:[%s323 + $0x228] sm:$0xff]
        %v470 = vld [vmem:[%s323 + $0x230] sm:$0xff]
        %v471 = vld [vmem:[%s323 + $0x238] sm:$0xff]
        %v472 = vld [vmem:[%s323 + $0x240] sm:$0xff]
        %v473 = vld [vmem:[%s323 + $0x248] sm:$0xff]
        %v474 = vld [vmem:[%s323 + $0x250] sm:$0xff]
        %v475 = vld [vmem:[%s323 + $0x258] sm:$0xff]
        %v476 = vld [vmem:[%s323 + $0x260] sm:$0xff]
        %v477 = vld [vmem:[%s323 + $0x268] sm:$0xff]
        %v478 = vld [vmem:[%s323 + $0x270] sm:$0xff]
        %v479 = vld [vmem:[%s323 + $0x278] sm:$0xff]
        %v480 = vld [vmem:[%s323 + $0x280] sm:$0xff]
        %v481 = vld [vmem:[%s323 + $0x288] sm:$0xff]
        %v482 = vld [vmem:[%s323 + $0x290] sm:$0xff]
        %v483 = vld [vmem:[%s323 + $0x298] sm:$0xff]
        %v484 = vld [vmem:[%s323 + $0x2a0] sm:$0xff]
        %v485 = vld [vmem:[%s323 + $0x2a8] sm:$0xff]
        %v486 = vld [vmem:[%s323 + $0x2b0] sm:$0xff]
        %v487 = vld [vmem:[%s323 + $0x2b8] sm:$0xff]
        %v488 = vld [vmem:[%s323 + $0x2c0] sm:$0xff]
        %v489 = vld [vmem:[%s323 + $0x2c8] sm:$0xff]
        %v490 = vld [vmem:[%s323 + $0x2d0] sm:$0xff]
        %v491 = vld [vmem:[%s323 + $0x2d8] sm:$0xff]
        %v492 = vld [vmem:[%s323 + $0x2e0] sm:$0xff]
        %v493 = vld [vmem:[%s323 + $0x2e8] sm:$0xff]
        %v494 = vld [vmem:[%s323 + $0x2f0] sm:$0xff]
        %v495 = vld [vmem:[%s323 + $0x2f8] sm:$0xff]
        %v496 = vld [vmem:[%s323 + $0x300] sm:$0xff]
        %v497 = vld [vmem:[%s323 + $0x308] sm:$0xff]
        %v498 = vld [vmem:[%s323 + $0x310] sm:$0xff]
        %v499 = vld [vmem:[%s323 + $0x318] sm:$0xff]
        %v500 = vld [vmem:[%s323 + $0x320] sm:$0xff]
        %v501 = vld [vmem:[%s323 + $0x328] sm:$0xff]
        %v502 = vld [vmem:[%s323 + $0x330] sm:$0xff]
        %v503 = vld [vmem:[%s323 + $0x338] sm:$0xff]
        %v504 = vld [vmem:[%s323 + $0x340] sm:$0xff]
        %v505 = vld [vmem:[%s323 + $0x348] sm:$0xff]
        %v506 = vld [vmem:[%s323 + $0x350] sm:$0xff]
        %v507 = vld [vmem:[%s323 + $0x358] sm:$0xff]
        %v508 = vld [vmem:[%s323 + $0x360] sm:$0xff]
        %v509 = vld [vmem:[%s323 + $0x368] sm:$0xff]
        %v510 = vld [vmem:[%s323 + $0x370] sm:$0xff]
        %v511 = vld [vmem:[%s323 + $0x378] sm:$0xff]
        %v512 = vld [vmem:[%s323 + $0x380] sm:$0xff]
        %v513 = vld [vmem:[%s323 + $0x388] sm:$0xff]
        %v514 = vld [vmem:[%s323 + $0x390] sm:$0xff]
        %v515 = vld [vmem:[%s323 + $0x398] sm:$0xff]
        %v516 = vld [vmem:[%s323 + $0x3a0] sm:$0xff]
        %v517 = vld [vmem:[%s323 + $0x3a8] sm:$0xff]
        %v518 = vld [vmem:[%s323 + $0x3b0] sm:$0xff]
        %v519 = vld [vmem:[%s323 + $0x3b8] sm:$0xff]
        %v520 = vld [vmem:[%s323 + $0x3c0] sm:$0xff]
        %v521 = vld [vmem:[%s323 + $0x3c8] sm:$0xff]
        %v522 = vld [vmem:[%s323 + $0x3d0] sm:$0xff]
        %v523 = vld [vmem:[%s323 + $0x3d8] sm:$0xff]
        %v524 = vld [vmem:[%s323 + $0x3e0] sm:$0xff]
        %v525 = vld [vmem:[%s323 + $0x3e8] sm:$0xff]
        %v526 = vld [vmem:[%s323 + $0x3f0] sm:$0xff]
        %v527 = vld [vmem:[%s323 + $0x3f8] sm:$0xff]
        %v536 = vunpack.c.l.b16 %v392
        %v537 = vunpack.c.h.b16 %v392
        %v538 = vunpack.c.l.b16 %v393
        %v539 = vunpack.c.h.b16 %v393
        %v540 = vunpack.c.l.b16 %v394
        %v541 = vunpack.c.h.b16 %v394
        %v542 = vunpack.c.l.b16 %v395
        %v543 = vunpack.c.h.b16 %v395
        %v544 = vunpack.c.l.b16 %v396
        %v545 = vunpack.c.h.b16 %v396
        %v546 = vunpack.c.l.b16 %v397
        %v547 = vunpack.c.h.b16 %v397
        %v548 = vunpack.c.l.b16 %v398
        %v549 = vunpack.c.h.b16 %v398
        %v550 = vunpack.c.l.b16 %v399
        %v551 = vunpack.c.h.b16 %v399
        %v552 = vpack.c.b16 %v540, %v536
        %v553 = vpack.c.b16 %v541, %v537
        %v554 = vpack.c.b16 %v542, %v538
        %v555 = vpack.c.b16 %v543, %v539
        %v556 = vpack.c.b16 %v548, %v544
        %v557 = vpack.c.b16 %v549, %v545
        %v558 = vpack.c.b16 %v550, %v546
        %v559 = vpack.c.b16 %v551, %v547
        %v696 = vunpack.c.l.b16 %v400
        %v697 = vunpack.c.h.b16 %v400
        %v698 = vunpack.c.l.b16 %v401
        %v699 = vunpack.c.h.b16 %v401
        %v700 = vunpack.c.l.b16 %v402
        %v701 = vunpack.c.h.b16 %v402
        %v702 = vunpack.c.l.b16 %v403
        %v703 = vunpack.c.h.b16 %v403
        %v704 = vunpack.c.l.b16 %v404
        %v705 = vunpack.c.h.b16 %v404
        %v706 = vunpack.c.l.b16 %v405
        %v707 = vunpack.c.h.b16 %v405
        %v708 = vunpack.c.l.b16 %v406
        %v709 = vunpack.c.h.b16 %v406
        %v710 = vunpack.c.l.b16 %v407
        %v711 = vunpack.c.h.b16 %v407
        %v712 = vunpack.c.l.b16 %v408
        %v713 = vunpack.c.h.b16 %v408
        %v714 = vunpack.c.l.b16 %v409
        %v715 = vunpack.c.h.b16 %v409
        %v716 = vunpack.c.l.b16 %v410
        %v717 = vunpack.c.h.b16 %v410
        %v718 = vunpack.c.l.b16 %v411
        %v719 = vunpack.c.h.b16 %v411
        %v720 = vunpack.c.l.b16 %v412
        %v721 = vunpack.c.h.b16 %v412
        %v722 = vunpack.c.l.b16 %v413
        %v723 = vunpack.c.h.b16 %v413
        %v724 = vunpack.c.l.b16 %v414
        %v725 = vunpack.c.h.b16 %v414
        %v726 = vunpack.c.l.b16 %v415
        %v727 = vunpack.c.h.b16 %v415
        %v728 = vunpack.c.l.b16 %v416
        %v729 = vunpack.c.h.b16 %v416
        %v730 = vunpack.c.l.b16 %v417
        %v731 = vunpack.c.h.b16 %v417
        %v732 = vunpack.c.l.b16 %v418
        %v733 = vunpack.c.h.b16 %v418
        %v734 = vunpack.c.l.b16 %v419
        %v735 = vunpack.c.h.b16 %v419
        %v736 = vunpack.c.l.b16 %v420
        %v737 = vunpack.c.h.b16 %v420
        %v738 = vunpack.c.l.b16 %v421
        %v739 = vunpack.c.h.b16 %v421
        %v740 = vunpack.c.l.b16 %v422
        %v741 = vunpack.c.h.b16 %v422
        %v742 = vunpack.c.l.b16 %v423
        %v743 = vunpack.c.h.b16 %v423
        %v744 = vunpack.c.l.b16 %v424
        %v745 = vunpack.c.h.b16 %v424
        %v746 = vunpack.c.l.b16 %v425
        %v747 = vunpack.c.h.b16 %v425
        %v748 = vunpack.c.l.b16 %v426
        %v749 = vunpack.c.h.b16 %v426
        %v750 = vunpack.c.l.b16 %v427
        %v751 = vunpack.c.h.b16 %v427
        %v752 = vunpack.c.l.b16 %v428
        %v753 = vunpack.c.h.b16 %v428
        %v754 = vunpack.c.l.b16 %v429
        %v755 = vunpack.c.h.b16 %v429
        %v756 = vunpack.c.l.b16 %v430
        %v757 = vunpack.c.h.b16 %v430
        %v758 = vunpack.c.l.b16 %v431
        %v759 = vunpack.c.h.b16 %v431
        %v760 = vunpack.c.l.b16 %v432
        %v761 = vunpack.c.h.b16 %v432
        %v762 = vunpack.c.l.b16 %v433
        %v763 = vunpack.c.h.b16 %v433
        %v764 = vunpack.c.l.b16 %v434
        %v765 = vunpack.c.h.b16 %v434
        %v766 = vunpack.c.l.b16 %v435
        %v767 = vunpack.c.h.b16 %v435
        %v768 = vunpack.c.l.b16 %v436
        %v769 = vunpack.c.h.b16 %v436
        %v770 = vunpack.c.l.b16 %v437
        %v771 = vunpack.c.h.b16 %v437
        %v772 = vunpack.c.l.b16 %v438
        %v773 = vunpack.c.h.b16 %v438
        %v774 = vunpack.c.l.b16 %v439
        %v775 = vunpack.c.h.b16 %v439
        %v776 = vunpack.c.l.b16 %v440
        %v777 = vunpack.c.h.b16 %v440
        %v778 = vunpack.c.l.b16 %v441
        %v779 = vunpack.c.h.b16 %v441
        %v780 = vunpack.c.l.b16 %v442
        %v781 = vunpack.c.h.b16 %v442
        %v782 = vunpack.c.l.b16 %v443
        %v783 = vunpack.c.h.b16 %v443
        %v784 = vunpack.c.l.b16 %v444
        %v785 = vunpack.c.h.b16 %v444
        %v786 = vunpack.c.l.b16 %v445
        %v787 = vunpack.c.h.b16 %v445
        %v788 = vunpack.c.l.b16 %v446
        %v789 = vunpack.c.h.b16 %v446
        %v790 = vunpack.c.l.b16 %v447
        %v791 = vunpack.c.h.b16 %v447
        %v792 = vunpack.c.l.b16 %v448
        %v793 = vunpack.c.h.b16 %v448
        %v794 = vunpack.c.l.b16 %v449
        %v795 = vunpack.c.h.b16 %v449
        %v796 = vunpack.c.l.b16 %v450
        %v797 = vunpack.c.h.b16 %v450
        %v798 = vunpack.c.l.b16 %v451
        %v799 = vunpack.c.h.b16 %v451
        %v800 = vunpack.c.l.b16 %v452
        %v801 = vunpack.c.h.b16 %v452
        %v802 = vunpack.c.l.b16 %v453
        %v803 = vunpack.c.h.b16 %v453
        %v804 = vunpack.c.l.b16 %v454
        %v805 = vunpack.c.h.b16 %v454
        %v806 = vunpack.c.l.b16 %v455
        %v807 = vunpack.c.h.b16 %v455
        %v808 = vunpack.c.l.b16 %v456
        %v809 = vunpack.c.h.b16 %v456
        %v810 = vunpack.c.l.b16 %v457
        %v811 = vunpack.c.h.b16 %v457
        %v812 = vunpack.c.l.b16 %v458
        %v813 = vunpack.c.h.b16 %v458
        %v814 = vunpack.c.l.b16 %v459
        %v815 = vunpack.c.h.b16 %v459
        %v816 = vunpack.c.l.b16 %v460
        %v817 = vunpack.c.h.b16 %v460
        %v818 = vunpack.c.l.b16 %v461
        %v819 = vunpack.c.h.b16 %v461
        %v820 = vunpack.c.l.b16 %v462
        %v821 = vunpack.c.h.b16 %v462
        %v822 = vunpack.c.l.b16 %v463
        %v823 = vunpack.c.h.b16 %v463
        %v824 = vunpack.c.l.b16 %v464
        %v825 = vunpack.c.h.b16 %v464
        %v826 = vunpack.c.l.b16 %v465
        %v827 = vunpack.c.h.b16 %v465
        %v828 = vunpack.c.l.b16 %v466
        %v829 = vunpack.c.h.b16 %v466
        %v830 = vunpack.c.l.b16 %v467
        %v831 = vunpack.c.h.b16 %v467
        %v832 = vunpack.c.l.b16 %v468
        %v833 = vunpack.c.h.b16 %v468
        %v834 = vunpack.c.l.b16 %v469
        %v835 = vunpack.c.h.b16 %v469
        %v836 = vunpack.c.l.b16 %v470
        %v837 = vunpack.c.h.b16 %v470
        %v838 = vunpack.c.l.b16 %v471
        %v839 = vunpack.c.h.b16 %v471
        %v840 = vunpack.c.l.b16 %v472
        %v841 = vunpack.c.h.b16 %v472
        %v842 = vunpack.c.l.b16 %v473
        %v843 = vunpack.c.h.b16 %v473
        %v844 = vunpack.c.l.b16 %v474
        %v845 = vunpack.c.h.b16 %v474
        %v846 = vunpack.c.l.b16 %v475
        %v847 = vunpack.c.h.b16 %v475
        %v848 = vunpack.c.l.b16 %v476
        %v849 = vunpack.c.h.b16 %v476
        %v850 = vunpack.c.l.b16 %v477
        %v851 = vunpack.c.h.b16 %v477
        %v852 = vunpack.c.l.b16 %v478
        %v853 = vunpack.c.h.b16 %v478
        %v854 = vunpack.c.l.b16 %v479
        %v855 = vunpack.c.h.b16 %v479
        %v856 = vunpack.c.l.b16 %v480
        %v857 = vunpack.c.h.b16 %v480
        %v858 = vunpack.c.l.b16 %v481
        %v859 = vunpack.c.h.b16 %v481
        %v860 = vunpack.c.l.b16 %v482
        %v861 = vunpack.c.h.b16 %v482
        %v862 = vunpack.c.l.b16 %v483
        %v863 = vunpack.c.h.b16 %v483
        %v864 = vunpack.c.l.b16 %v484
        %v865 = vunpack.c.h.b16 %v484
        %v866 = vunpack.c.l.b16 %v485
        %v867 = vunpack.c.h.b16 %v485
        %v868 = vunpack.c.l.b16 %v486
        %v869 = vunpack.c.h.b16 %v486
        %v870 = vunpack.c.l.b16 %v487
        %v871 = vunpack.c.h.b16 %v487
        %v872 = vunpack.c.l.b16 %v488
        %v873 = vunpack.c.h.b16 %v488
        %v874 = vunpack.c.l.b16 %v489
        %v875 = vunpack.c.h.b16 %v489
        %v876 = vunpack.c.l.b16 %v490
        %v877 = vunpack.c.h.b16 %v490
        %v878 = vunpack.c.l.b16 %v491
        %v879 = vunpack.c.h.b16 %v491
        %v880 = vunpack.c.l.b16 %v492
        %v881 = vunpack.c.h.b16 %v492
        %v882 = vunpack.c.l.b16 %v493
        %v883 = vunpack.c.h.b16 %v493
        %v884 = vunpack.c.l.b16 %v494
        %v885 = vunpack.c.h.b16 %v494
        %v886 = vunpack.c.l.b16 %v495
        %v887 = vunpack.c.h.b16 %v495
        %v888 = vunpack.c.l.b16 %v496
        %v889 = vunpack.c.h.b16 %v496
        %v890 = vunpack.c.l.b16 %v497
        %v891 = vunpack.c.h.b16 %v497
        %v892 = vunpack.c.l.b16 %v498
        %v893 = vunpack.c.h.b16 %v498
        %v894 = vunpack.c.l.b16 %v499
        %v895 = vunpack.c.h.b16 %v499
        %v896 = vunpack.c.l.b16 %v500
        %v897 = vunpack.c.h.b16 %v500
        %v898 = vunpack.c.l.b16 %v501
        %v899 = vunpack.c.h.b16 %v501
        %v900 = vunpack.c.l.b16 %v502
        %v901 = vunpack.c.h.b16 %v502
        %v902 = vunpack.c.l.b16 %v503
        %v903 = vunpack.c.h.b16 %v503
        %v904 = vunpack.c.l.b16 %v504
        %v905 = vunpack.c.h.b16 %v504
        %v906 = vunpack.c.l.b16 %v505
        %v907 = vunpack.c.h.b16 %v505
        %v908 = vunpack.c.l.b16 %v506
        %v909 = vunpack.c.h.b16 %v506
        %v910 = vunpack.c.l.b16 %v507
        %v911 = vunpack.c.h.b16 %v507
        %v912 = vunpack.c.l.b16 %v508
        %v913 = vunpack.c.h.b16 %v508
        %v914 = vunpack.c.l.b16 %v509
        %v915 = vunpack.c.h.b16 %v509
        %v916 = vunpack.c.l.b16 %v510
        %v917 = vunpack.c.h.b16 %v510
        %v918 = vunpack.c.l.b16 %v511
        %v919 = vunpack.c.h.b16 %v511
        %v920 = vunpack.c.l.b16 %v512
        %v921 = vunpack.c.h.b16 %v512
        %v922 = vunpack.c.l.b16 %v513
        %v923 = vunpack.c.h.b16 %v513
        %v924 = vunpack.c.l.b16 %v514
        %v925 = vunpack.c.h.b16 %v514
        %v926 = vunpack.c.l.b16 %v515
        %v927 = vunpack.c.h.b16 %v515
        %v928 = vunpack.c.l.b16 %v516
        %v929 = vunpack.c.h.b16 %v516
        %v930 = vunpack.c.l.b16 %v517
        %v931 = vunpack.c.h.b16 %v517
        %v932 = vunpack.c.l.b16 %v518
        %v933 = vunpack.c.h.b16 %v518
        %v934 = vunpack.c.l.b16 %v519
        %v935 = vunpack.c.h.b16 %v519
        %v936 = vunpack.c.l.b16 %v520
        %v937 = vunpack.c.h.b16 %v520
        %v938 = vunpack.c.l.b16 %v521
        %v939 = vunpack.c.h.b16 %v521
        %v940 = vunpack.c.l.b16 %v522
        %v941 = vunpack.c.h.b16 %v522
        %v942 = vunpack.c.l.b16 %v523
        %v943 = vunpack.c.h.b16 %v523
        %v944 = vunpack.c.l.b16 %v524
        %v945 = vunpack.c.h.b16 %v524
        %v946 = vunpack.c.l.b16 %v525
        %v947 = vunpack.c.h.b16 %v525
        %v948 = vunpack.c.l.b16 %v526
        %v949 = vunpack.c.h.b16 %v526
        %v950 = vunpack.c.l.b16 %v527
        %v951 = vunpack.c.h.b16 %v527
        %v952 = vpack.c.b16 %v700, %v696
        %v953 = vpack.c.b16 %v701, %v697
        %v954 = vpack.c.b16 %v702, %v698
        %v955 = vpack.c.b16 %v703, %v699
        %v956 = vpack.c.b16 %v708, %v704
        %v957 = vpack.c.b16 %v709, %v705
        %v958 = vpack.c.b16 %v710, %v706
        %v959 = vpack.c.b16 %v711, %v707
        %v960 = vpack.c.b16 %v716, %v712
        %v961 = vpack.c.b16 %v717, %v713
        %v962 = vpack.c.b16 %v718, %v714
        %v963 = vpack.c.b16 %v719, %v715
        %v964 = vpack.c.b16 %v724, %v720
        %v965 = vpack.c.b16 %v725, %v721
        %v966 = vpack.c.b16 %v726, %v722
        %v967 = vpack.c.b16 %v727, %v723
        %v968 = vpack.c.b16 %v732, %v728
        %v969 = vpack.c.b16 %v733, %v729
        %v970 = vpack.c.b16 %v734, %v730
        %v971 = vpack.c.b16 %v735, %v731
        %v972 = vpack.c.b16 %v740, %v736
        %v973 = vpack.c.b16 %v741, %v737
        %v974 = vpack.c.b16 %v742, %v738
        %v975 = vpack.c.b16 %v743, %v739
        %v976 = vpack.c.b16 %v748, %v744
        %v977 = vpack.c.b16 %v749, %v745
        %v978 = vpack.c.b16 %v750, %v746
        %v979 = vpack.c.b16 %v751, %v747
        %v980 = vpack.c.b16 %v756, %v752
        %v981 = vpack.c.b16 %v757, %v753
        %v982 = vpack.c.b16 %v758, %v754
        %v983 = vpack.c.b16 %v759, %v755
        %v984 = vpack.c.b16 %v764, %v760
        %v985 = vpack.c.b16 %v765, %v761
        %v986 = vpack.c.b16 %v766, %v762
        %v987 = vpack.c.b16 %v767, %v763
        %v988 = vpack.c.b16 %v772, %v768
        %v989 = vpack.c.b16 %v773, %v769
        %v990 = vpack.c.b16 %v774, %v770
        %v991 = vpack.c.b16 %v775, %v771
        %v992 = vpack.c.b16 %v780, %v776
        %v993 = vpack.c.b16 %v781, %v777
        %v994 = vpack.c.b16 %v782, %v778
        %v995 = vpack.c.b16 %v783, %v779
        %v996 = vpack.c.b16 %v788, %v784
        %v997 = vpack.c.b16 %v789, %v785
        %v998 = vpack.c.b16 %v790, %v786
        %v999 = vpack.c.b16 %v791, %v787
        %v1000 = vpack.c.b16 %v796, %v792
        %v1001 = vpack.c.b16 %v797, %v793
        %v1002 = vpack.c.b16 %v798, %v794
        %v1003 = vpack.c.b16 %v799, %v795
        %v1004 = vpack.c.b16 %v804, %v800
        %v1005 = vpack.c.b16 %v805, %v801
        %v1006 = vpack.c.b16 %v806, %v802
        %v1007 = vpack.c.b16 %v807, %v803
        %v1008 = vpack.c.b16 %v812, %v808
        %v1009 = vpack.c.b16 %v813, %v809
        %v1010 = vpack.c.b16 %v814, %v810
        %v1011 = vpack.c.b16 %v815, %v811
        %v1012 = vpack.c.b16 %v820, %v816
        %v1013 = vpack.c.b16 %v821, %v817
        %v1014 = vpack.c.b16 %v822, %v818
        %v1015 = vpack.c.b16 %v823, %v819
        %v1016 = vpack.c.b16 %v828, %v824
        %v1017 = vpack.c.b16 %v829, %v825
        %v1018 = vpack.c.b16 %v830, %v826
        %v1019 = vpack.c.b16 %v831, %v827
        %v1020 = vpack.c.b16 %v836, %v832
        %v1021 = vpack.c.b16 %v837, %v833
        %v1022 = vpack.c.b16 %v838, %v834
        %v1023 = vpack.c.b16 %v839, %v835
        %v1024 = vpack.c.b16 %v844, %v840
        %v1025 = vpack.c.b16 %v845, %v841
        %v1026 = vpack.c.b16 %v846, %v842
        %v1027 = vpack.c.b16 %v847, %v843
        %v1028 = vpack.c.b16 %v852, %v848
        %v1029 = vpack.c.b16 %v853, %v849
        %v1030 = vpack.c.b16 %v854, %v850
        %v1031 = vpack.c.b16 %v855, %v851
        %v1032 = vpack.c.b16 %v860, %v856
        %v1033 = vpack.c.b16 %v861, %v857
        %v1034 = vpack.c.b16 %v862, %v858
        %v1035 = vpack.c.b16 %v863, %v859
        %v1036 = vpack.c.b16 %v868, %v864
        %v1037 = vpack.c.b16 %v869, %v865
        %v1038 = vpack.c.b16 %v870, %v866
        %v1039 = vpack.c.b16 %v871, %v867
        %v1040 = vpack.c.b16 %v876, %v872
        %v1041 = vpack.c.b16 %v877, %v873
        %v1042 = vpack.c.b16 %v878, %v874
        %v1043 = vpack.c.b16 %v879, %v875
        %v1044 = vpack.c.b16 %v884, %v880
        %v1045 = vpack.c.b16 %v885, %v881
        %v1046 = vpack.c.b16 %v886, %v882
        %v1047 = vpack.c.b16 %v887, %v883
        %v1048 = vpack.c.b16 %v892, %v888
        %v1049 = vpack.c.b16 %v893, %v889
        %v1050 = vpack.c.b16 %v894, %v890
        %v1051 = vpack.c.b16 %v895, %v891
        %v1052 = vpack.c.b16 %v900, %v896
        %v1053 = vpack.c.b16 %v901, %v897
        %v1054 = vpack.c.b16 %v902, %v898
        %v1055 = vpack.c.b16 %v903, %v899
        %v1056 = vpack.c.b16 %v908, %v904
        %v1057 = vpack.c.b16 %v909, %v905
        %v1058 = vpack.c.b16 %v910, %v906
        %v1059 = vpack.c.b16 %v911, %v907
        %v1060 = vpack.c.b16 %v916, %v912
        %v1061 = vpack.c.b16 %v917, %v913
        %v1062 = vpack.c.b16 %v918, %v914
        %v1063 = vpack.c.b16 %v919, %v915
        %v1064 = vpack.c.b16 %v924, %v920
        %v1065 = vpack.c.b16 %v925, %v921
        %v1066 = vpack.c.b16 %v926, %v922
        %v1067 = vpack.c.b16 %v927, %v923
        %v1068 = vpack.c.b16 %v932, %v928
        %v1069 = vpack.c.b16 %v933, %v929
        %v1070 = vpack.c.b16 %v934, %v930
        %v1071 = vpack.c.b16 %v935, %v931
        %v1072 = vpack.c.b16 %v940, %v936
        %v1073 = vpack.c.b16 %v941, %v937
        %v1074 = vpack.c.b16 %v942, %v938
        %v1075 = vpack.c.b16 %v943, %v939
        %v1076 = vpack.c.b16 %v948, %v944
        %v1077 = vpack.c.b16 %v949, %v945
        %v1078 = vpack.c.b16 %v950, %v946
        %v1079 = vpack.c.b16 %v951, %v947
        %1208 = vmatprep.subr.bf16.mxu0 %v953
        %1209 = vmatpush1.bf16.msra.mxu0 %v952
        %1210 = vmatprep.subr.bf16.mxu0 %v957
        %1211 = vmatpush1.bf16.msra.mxu0 %v956
        %1212 = vmatprep.subr.bf16.mxu0 %v961
        %1213 = vmatpush1.bf16.msra.mxu0 %v960
        %1214 = vmatprep.subr.bf16.mxu0 %v965
        %1215 = vmatpush1.bf16.msra.mxu0 %v964
        %1216 = vmatprep.subr.bf16.mxu0 %v969
        %1217 = vmatpush1.bf16.msra.mxu0 %v968
        %1218 = vmatprep.subr.bf16.mxu0 %v973
        %1219 = vmatpush1.bf16.msra.mxu0 %v972
        %1220 = vmatprep.subr.bf16.mxu0 %v977
        %1221 = vmatpush1.bf16.msra.mxu0 %v976
        %1222 = vmatprep.subr.bf16.mxu0 %v981
        %1223 = vmatpush1.bf16.msra.mxu0 %v980
        %1224 = vmatprep.subr.bf16.mxu0 %v985
        %1225 = vmatpush1.bf16.msra.mxu0 %v984
        %1226 = vmatprep.subr.bf16.mxu0 %v989
        %1227 = vmatpush1.bf16.msra.mxu0 %v988
        %1228 = vmatprep.subr.bf16.mxu0 %v993
        %1229 = vmatpush1.bf16.msra.mxu0 %v992
        %1230 = vmatprep.subr.bf16.mxu0 %v997
        %1231 = vmatpush1.bf16.msra.mxu0 %v996
        %1232 = vmatprep.subr.bf16.mxu0 %v1001
        %1233 = vmatpush1.bf16.msra.mxu0 %v1000
        %1234 = vmatprep.subr.bf16.mxu0 %v1005
        %1235 = vmatpush1.bf16.msra.mxu0 %v1004
        %1236 = vmatprep.subr.bf16.mxu0 %v1009
        %1237 = vmatpush1.bf16.msra.mxu0 %v1008
        %1238 = vmatprep.subr.bf16.mxu0 %v1013
        %1239 = vmatpush1.bf16.msra.mxu0 %v1012
        %1240 = vmatprep.mubr.bf16.mxu0 %v553
        %1241 = vmatmul.mubr.bf16.gmra.mrb[0].mxu0 %v552
        %v1242 = vpop.f32.mrb[0].mxu0
        %v1243 = vadd.f32 0.0, %v1242
        %v1244 = vpop.f32.mrb[0].mxu0
        %v1245 = vadd.f32 0.0, %v1244
        %v1246 = vpop.f32.mrb[0].mxu0
        %v1247 = vadd.f32 0.0, %v1246
        %v1248 = vpop.f32.mrb[0].mxu0
        %v1249 = vadd.f32 0.0, %v1248
        %1250 = vmatprep.mubr.bf16.mxu0 %v557
        %1251 = vmatmul.mubr.bf16.gmra.mrb[0].mxu0 %v556
        %v1252 = vpop.f32.mrb[0].mxu0
        %v1253 = vadd.f32 0.0, %v1252
        %v1254 = vpop.f32.mrb[0].mxu0
        %v1255 = vadd.f32 0.0, %v1254
        %v1256 = vpop.f32.mrb[0].mxu0
        %v1257 = vadd.f32 0.0, %v1256
        %v1258 = vpop.f32.mrb[0].mxu0
        %v1259 = vadd.f32 0.0, %v1258
        %1260 = vdwg.mxu0
        %1261 = vmatprep.subr.bf16.mxu0 %v1017
        %1262 = vmatpush1.bf16.msra.mxu0 %v1016
        %1263 = vmatprep.subr.bf16.mxu0 %v1021
        %1264 = vmatpush1.bf16.msra.mxu0 %v1020
        %1265 = vmatprep.subr.bf16.mxu0 %v1025
        %1266 = vmatpush1.bf16.msra.mxu0 %v1024
        %1267 = vmatprep.subr.bf16.mxu0 %v1029
        %1268 = vmatpush1.bf16.msra.mxu0 %v1028
        %1269 = vmatprep.subr.bf16.mxu0 %v1033
        %1270 = vmatpush1.bf16.msra.mxu0 %v1032
        %1271 = vmatprep.subr.bf16.mxu0 %v1037
        %1272 = vmatpush1.bf16.msra.mxu0 %v1036
        %1273 = vmatprep.subr.bf16.mxu0 %v1041
        %1274 = vmatpush1.bf16.msra.mxu0 %v1040
        %1275 = vmatprep.subr.bf16.mxu0 %v1045
        %1276 = vmatpush1.bf16.msra.mxu0 %v1044
        %1277 = vmatprep.subr.bf16.mxu0 %v1049
        %1278 = vmatpush1.bf16.msra.mxu0 %v1048
        %1279 = vmatprep.subr.bf16.mxu0 %v1053
        %1280 = vmatpush1.bf16.msra.mxu0 %v1052
        %1281 = vmatprep.subr.bf16.mxu0 %v1057
        %1282 = vmatpush1.bf16.msra.mxu0 %v1056
        %1283 = vmatprep.subr.bf16.mxu0 %v1061
        %1284 = vmatpush1.bf16.msra.mxu0 %v1060
        %1285 = vmatprep.subr.bf16.mxu0 %v1065
        %1286 = vmatpush1.bf16.msra.mxu0 %v1064
        %1287 = vmatprep.subr.bf16.mxu0 %v1069
        %1288 = vmatpush1.bf16.msra.mxu0 %v1068
        %1289 = vmatprep.subr.bf16.mxu0 %v1073
        %1290 = vmatpush1.bf16.msra.mxu0 %v1072
        %1291 = vmatprep.subr.bf16.mxu0 %v1077
        %1292 = vmatpush1.bf16.msra.mxu0 %v1076
        %1293 = vmatprep.mubr.bf16.mxu0 %v555
        %1294 = vmatmul.mubr.bf16.gmra.mrb[0].mxu0 %v554
        %v1295 = vpop.f32.mrb[0].mxu0
        %v1296 = vadd.f32 %v1243, %v1295
        %v1297 = vpop.f32.mrb[0].mxu0
        %v1298 = vadd.f32 %v1245, %v1297
        %v1299 = vpop.f32.mrb[0].mxu0
        %v1300 = vadd.f32 %v1247, %v1299
        %v1301 = vpop.f32.mrb[0].mxu0
        %v1302 = vadd.f32 %v1249, %v1301
        %1303 = vmatprep.mubr.bf16.mxu0 %v559
        %1304 = vmatmul.mubr.bf16.gmra.mrb[0].mxu0 %v558
        %v1305 = vpop.f32.mrb[0].mxu0
        %v1306 = vadd.f32 %v1253, %v1305
        %v1307 = vpop.f32.mrb[0].mxu0
        %v1308 = vadd.f32 %v1255, %v1307
        %v1309 = vpop.f32.mrb[0].mxu0
        %v1310 = vadd.f32 %v1257, %v1309
        %v1311 = vpop.f32.mrb[0].mxu0
        %v1312 = vadd.f32 %v1259, %v1311
        %1313 = vdwg.mxu0
        %1314 = vmatprep.subr.bf16.mxu0 %v955
        %1315 = vmatpush1.bf16.msra.mxu0 %v954
        %1316 = vmatprep.subr.bf16.mxu0 %v959
        %1317 = vmatpush1.bf16.msra.mxu0 %v958
        %1318 = vmatprep.subr.bf16.mxu0 %v963
        %1319 = vmatpush1.bf16.msra.mxu0 %v962
        %1320 = vmatprep.subr.bf16.mxu0 %v967
        %1321 = vmatpush1.bf16.msra.mxu0 %v966
        %1322 = vmatprep.subr.bf16.mxu0 %v971
        %1323 = vmatpush1.bf16.msra.mxu0 %v970
        %1324 = vmatprep.subr.bf16.mxu0 %v975
        %1325 = vmatpush1.bf16.msra.mxu0 %v974
        %1326 = vmatprep.subr.bf16.mxu0 %v979
        %1327 = vmatpush1.bf16.msra.mxu0 %v978
        %1328 = vmatprep.subr.bf16.mxu0 %v983
        %1329 = vmatpush1.bf16.msra.mxu0 %v982
        %1330 = vmatprep.subr.bf16.mxu0 %v987
        %1331 = vmatpush1.bf16.msra.mxu0 %v986
        %1332 = vmatprep.subr.bf16.mxu0 %v991
        %1333 = vmatpush1.bf16.msra.mxu0 %v990
        %1334 = vmatprep.subr.bf16.mxu0 %v995
        %1335 = vmatpush1.bf16.msra.mxu0 %v994
        %1336 = vmatprep.subr.bf16.mxu0 %v999
        %1337 = vmatpush1.bf16.msra.mxu0 %v998
        %1338 = vmatprep.subr.bf16.mxu0 %v1003
        %1339 = vmatpush1.bf16.msra.mxu0 %v1002
        %1340 = vmatprep.subr.bf16.mxu0 %v1007
        %1341 = vmatpush1.bf16.msra.mxu0 %v1006
        %1342 = vmatprep.subr.bf16.mxu0 %v1011
        %1343 = vmatpush1.bf16.msra.mxu0 %v1010
        %1344 = vmatprep.subr.bf16.mxu0 %v1015
        %1345 = vmatpush1.bf16.msra.mxu0 %v1014
        %1346 = vmatprep.mubr.bf16.mxu0 %v553
        %1347 = vmatmul.mubr.bf16.gmra.mrb[0].mxu0 %v552
        %v1348 = vpop.f32.mrb[0].mxu0
        %v1349 = vadd.f32 0.0, %v1348
        %v1350 = vpop.f32.mrb[0].mxu0
        %v1351 = vadd.f32 0.0, %v1350
        %v1352 = vpop.f32.mrb[0].mxu0
        %v1353 = vadd.f32 0.0, %v1352
        %v1354 = vpop.f32.mrb[0].mxu0
        %v1355 = vadd.f32 0.0, %v1354
        %1356 = vmatprep.mubr.bf16.mxu0 %v557
        %1357 = vmatmul.mubr.bf16.gmra.mrb[0].mxu0 %v556
        %v1358 = vpop.f32.mrb[0].mxu0
        %v1359 = vadd.f32 0.0, %v1358
        %v1360 = vpop.f32.mrb[0].mxu0
        %v1361 = vadd.f32 0.0, %v1360
        %v1362 = vpop.f32.mrb[0].mxu0
        %v1363 = vadd.f32 0.0, %v1362
        %v1364 = vpop.f32.mrb[0].mxu0
        %v1365 = vadd.f32 0.0, %v1364
        %1366 = vdwg.mxu0
        %1367 = vmatprep.subr.bf16.mxu0 %v1019
        %1368 = vmatpush1.bf16.msra.mxu0 %v1018
        %1369 = vmatprep.subr.bf16.mxu0 %v1023
        %1370 = vmatpush1.bf16.msra.mxu0 %v1022
        %1371 = vmatprep.subr.bf16.mxu0 %v1027
        %1372 = vmatpush1.bf16.msra.mxu0 %v1026
        %1373 = vmatprep.subr.bf16.mxu0 %v1031
        %1374 = vmatpush1.bf16.msra.mxu0 %v1030
        %1375 = vmatprep.subr.bf16.mxu0 %v1035
        %1376 = vmatpush1.bf16.msra.mxu0 %v1034
        %1377 = vmatprep.subr.bf16.mxu0 %v1039
        %1378 = vmatpush1.bf16.msra.mxu0 %v1038
        %1379 = vmatprep.subr.bf16.mxu0 %v1043
        %1380 = vmatpush1.bf16.msra.mxu0 %v1042
        %1381 = vmatprep.subr.bf16.mxu0 %v1047
        %1382 = vmatpush1.bf16.msra.mxu0 %v1046
        %1383 = vmatprep.subr.bf16.mxu0 %v1051
        %1384 = vmatpush1.bf16.msra.mxu0 %v1050
        %1385 = vmatprep.subr.bf16.mxu0 %v1055
        %1386 = vmatpush1.bf16.msra.mxu0 %v1054
        %1387 = vmatprep.subr.bf16.mxu0 %v1059
        %1388 = vmatpush1.bf16.msra.mxu0 %v1058
        %1389 = vmatprep.subr.bf16.mxu0 %v1063
        %1390 = vmatpush1.bf16.msra.mxu0 %v1062
        %1391 = vmatprep.subr.bf16.mxu0 %v1067
        %1392 = vmatpush1.bf16.msra.mxu0 %v1066
        %1393 = vmatprep.subr.bf16.mxu0 %v1071
        %1394 = vmatpush1.bf16.msra.mxu0 %v1070
        %1395 = vmatprep.subr.bf16.mxu0 %v1075
        %1396 = vmatpush1.bf16.msra.mxu0 %v1074
        %1397 = vmatprep.subr.bf16.mxu0 %v1079
        %1398 = vmatpush1.bf16.msra.mxu0 %v1078
        %1399 = vmatprep.mubr.bf16.mxu0 %v555
        %1400 = vmatmul.mubr.bf16.gmra.mrb[0].mxu0 %v554
        %v1401 = vpop.f32.mrb[0].mxu0
        %v1402 = vadd.f32 %v1349, %v1401
        %v1403 = vpop.f32.mrb[0].mxu0
        %v1404 = vadd.f32 %v1351, %v1403
        %v1405 = vpop.f32.mrb[0].mxu0
        %v1406 = vadd.f32 %v1353, %v1405
        %v1407 = vpop.f32.mrb[0].mxu0
        %v1408 = vadd.f32 %v1355, %v1407
        %1409 = vmatprep.mubr.bf16.mxu0 %v559
        %1410 = vmatmul.mubr.bf16.gmra.mrb[0].mxu0 %v558
        %v1411 = vpop.f32.mrb[0].mxu0
        %v1412 = vadd.f32 %v1359, %v1411
        %v1413 = vpop.f32.mrb[0].mxu0
        %v1414 = vadd.f32 %v1361, %v1413
        %v1415 = vpop.f32.mrb[0].mxu0
        %v1416 = vadd.f32 %v1363, %v1415
        %v1417 = vpop.f32.mrb[0].mxu0
        %v1418 = vadd.f32 %v1365, %v1417
        %1419 = vdwg.mxu0
        %v1420 = vadd.f32 %v376, %v1296
        %v1421 = vadd.f32 %v377, %v1298
        %v1422 = vadd.f32 %v378, %v1402
        %v1423 = vadd.f32 %v379, %v1404
        %v1424 = vadd.f32 %v380, %v1300
        %v1425 = vadd.f32 %v381, %v1302
        %v1426 = vadd.f32 %v382, %v1406
        %v1427 = vadd.f32 %v383, %v1408
        %v1428 = vadd.f32 %v384, %v1306
        %v1429 = vadd.f32 %v385, %v1308
        %v1430 = vadd.f32 %v386, %v1412
        %v1431 = vadd.f32 %v387, %v1414
        %v1432 = vadd.f32 %v388, %v1310
        %v1433 = vadd.f32 %v389, %v1312
        %v1434 = vadd.f32 %v390, %v1416
        %v1435 = vadd.f32 %v391, %v1418
        %1436 = vst [vmem:[#allocation2] sm:$0xff] %v1420
        %1437 = vst [vmem:[#allocation2 + $0x8] sm:$0xff] %v1421
        %1438 = vst [vmem:[#allocation2 + $0x10] sm:$0xff] %v1422
        %1439 = vst [vmem:[#allocation2 + $0x18] sm:$0xff] %v1423
        %1440 = vst [vmem:[#allocation2 + $0x20] sm:$0xff] %v1424
        %1441 = vst [vmem:[#allocation2 + $0x28] sm:$0xff] %v1425
        %1442 = vst [vmem:[#allocation2 + $0x30] sm:$0xff] %v1426
        %1443 = vst [vmem:[#allocation2 + $0x38] sm:$0xff] %v1427
        %1444 = vst [vmem:[#allocation2 + $0x40] sm:$0xff] %v1428
        %1445 = vst [vmem:[#allocation2 + $0x48] sm:$0xff] %v1429
        %1446 = vst [vmem:[#allocation2 + $0x50] sm:$0xff] %v1430
        %1447 = vst [vmem:[#allocation2 + $0x58] sm:$0xff] %v1431
        %1448 = vst [vmem:[#allocation2 + $0x60] sm:$0xff] %v1432
        %1449 = vst [vmem:[#allocation2 + $0x68] sm:$0xff] %v1433
        %1450 = vst [vmem:[#allocation2 + $0x70] sm:$0xff] %v1434
        %1451 = vst [vmem:[#allocation2 + $0x78] sm:$0xff] %v1435
        %p1452 = scmp.eq.s32.totalorder %s23, 7
        // Predicated region
        $region56: #{discriminator_forward.9} parent=46 // pred_check
          %p1453 = pneg %p1452
        $region57: #{discriminator_forward.9} parent=46 // pred_check_branch
          %1455 = sbr.rel (%p1453) target = $region59
        $region58: #{discriminator_forward.9} parent=46 // pred_region
          %v1456 = vld [vmem:[#allocation2] sm:$0xff]
          %v1457 = vld [vmem:[#allocation2 + $0x8] sm:$0xff]
          %v1458 = vld [vmem:[#allocation2 + $0x10] sm:$0xff]
          %v1459 = vld [vmem:[#allocation2 + $0x18] sm:$0xff]
          %v1460 = vld [vmem:[#allocation2 + $0x20] sm:$0xff]
          %v1461 = vld [vmem:[#allocation2 + $0x28] sm:$0xff]
          %v1462 = vld [vmem:[#allocation2 + $0x30] sm:$0xff]
          %v1463 = vld [vmem:[#allocation2 + $0x38] sm:$0xff]
          %v1464 = vld [vmem:[#allocation2 + $0x40] sm:$0xff]
          %v1465 = vld [vmem:[#allocation2 + $0x48] sm:$0xff]
          %v1466 = vld [vmem:[#allocation2 + $0x50] sm:$0xff]
          %v1467 = vld [vmem:[#allocation2 + $0x58] sm:$0xff]
          %v1468 = vld [vmem:[#allocation2 + $0x60] sm:$0xff]
          %v1469 = vld [vmem:[#allocation2 + $0x68] sm:$0xff]
          %v1470 = vld [vmem:[#allocation2 + $0x70] sm:$0xff]
          %v1471 = vld [vmem:[#allocation2 + $0x78] sm:$0xff]
          %v1472 = vadd.f32 %v1456, %v1460
          %v1473 = vadd.f32 %v1472, %v1464
          %v1474 = vadd.f32 %v1473, %v1468
          %v1475 = vrot.slane %v1474, 4
          %v1476 = vadd.f32 %v1474, %v1475
          %v1477 = vrot.slane %v1476, 2
          %v1478 = vadd.f32 %v1476, %v1477
          %v1479 = vrot.slane %v1478, 1
          %v1480 = vadd.f32 %v1478, %v1479
          %v1481 = vadd.f32 %v1457, %v1461
          %v1482 = vadd.f32 %v1481, %v1465
          %v1483 = vadd.f32 %v1482, %v1469
          %v1484 = vrot.slane %v1483, 4
          %v1485 = vadd.f32 %v1483, %v1484
          %v1486 = vrot.slane %v1485, 2
          %v1487 = vadd.f32 %v1485, %v1486
          %v1488 = vrot.slane %v1487, 1
          %v1489 = vadd.f32 %v1487, %v1488
          %v1490 = vadd.f32 %v1458, %v1462
          %v1491 = vadd.f32 %v1490, %v1466
          %v1492 = vadd.f32 %v1491, %v1470
          %v1493 = vrot.slane %v1492, 4
          %v1494 = vadd.f32 %v1492, %v1493
          %v1495 = vrot.slane %v1494, 2
          %v1496 = vadd.f32 %v1494, %v1495
          %v1497 = vrot.slane %v1496, 1
          %v1498 = vadd.f32 %v1496, %v1497
          %v1499 = vadd.f32 %v1459, %v1463
          %v1500 = vadd.f32 %v1499, %v1467
          %v1501 = vadd.f32 %v1500, %v1471
          %v1502 = vrot.slane %v1501, 4
          %v1503 = vadd.f32 %v1501, %v1502
          %v1504 = vrot.slane %v1503, 2
          %v1505 = vadd.f32 %v1503, %v1504
          %v1506 = vrot.slane %v1505, 1
          %v1507 = vadd.f32 %v1505, %v1506
          %v1512 = vcombine.low %v1480, %v1489
          %v1513 = vcombine.low %v1498, %v1507
          %v1515 = vunpack.c.l.s4 1966171168
          %v1516 = vunpack.c.0.s8 %v1515
          %v1517 = vlaneseq
          %v1518 = vshrl.u32 %v1517, 7
          %v1519 = vsub.s32 %v1516, %v1518
          %v1520 = vrot.slane %v1512, %v1519
          %v1522 = vunpack.c.l.s4 1966171168
          %v1523 = vunpack.c.0.s8 %v1522
          %v1524 = vlaneseq
          %v1525 = vshrl.u32 %v1524, 7
          %v1526 = vsub.s32 %v1523, %v1525
          %v1527 = vrot.slane %v1513, %v1526
          %v1528 = vcombine.low %v1520, %v1527
          %v1530 = vunpack.c.l.s4 1966171168
          %v1531 = vunpack.c.0.s8 %v1530
          %v1532 = vlaneseq
          %v1533 = vshrl.u32 %v1532, 7
          %v1534 = vsub.s32 %v1531, %v1533
          %v1535 = vrot.slane %v1528, %v1534
          %v1537 = vlaneseq
          %vm1538 = vcmp.ge.s32.totalorder %v1537, 0
          %vm1539 = vcmp.lt.s32.totalorder %v1537, 512
          %vm1540 = vmand %vm1538, %vm1539
          %1541 = vst.msk [vmem:[%s345] sm:$0xf] %vm1540, %v1535
          %v1542 = vmul.f32 %v1456, %v1456
          %v1543 = vmul.f32 %v1457, %v1457
          %v1544 = vmul.f32 %v1458, %v1458
          %v1545 = vmul.f32 %v1459, %v1459
          %v1546 = vmul.f32 %v1460, %v1460
          %v1547 = vmul.f32 %v1461, %v1461
          %v1548 = vmul.f32 %v1462, %v1462
          %v1549 = vmul.f32 %v1463, %v1463
          %v1550 = vmul.f32 %v1464, %v1464
          %v1551 = vmul.f32 %v1465, %v1465
          %v1552 = vmul.f32 %v1466, %v1466
          %v1553 = vmul.f32 %v1467, %v1467
          %v1554 = vmul.f32 %v1468, %v1468
          %v1555 = vmul.f32 %v1469, %v1469
          %v1556 = vmul.f32 %v1470, %v1470
          %v1557 = vmul.f32 %v1471, %v1471
          %v1558 = vadd.f32 %v1542, %v1546
          %v1559 = vadd.f32 %v1558, %v1550
          %v1560 = vadd.f32 %v1559, %v1554
          %v1561 = vrot.slane %v1560, 4
          %v1562 = vadd.f32 %v1560, %v1561
          %v1563 = vrot.slane %v1562, 2
          %v1564 = vadd.f32 %v1562, %v1563
          %v1565 = vrot.slane %v1564, 1
          %v1566 = vadd.f32 %v1564, %v1565
          %v1567 = vadd.f32 %v1543, %v1547
          %v1568 = vadd.f32 %v1567, %v1551
          %v1569 = vadd.f32 %v1568, %v1555
          %v1570 = vrot.slane %v1569, 4
          %v1571 = vadd.f32 %v1569, %v1570
          %v1572 = vrot.slane %v1571, 2
          %v1573 = vadd.f32 %v1571, %v1572
          %v1574 = vrot.slane %v1573, 1
          %v1575 = vadd.f32 %v1573, %v1574
          %v1576 = vadd.f32 %v1544, %v1548
          %v1577 = vadd.f32 %v1576, %v1552
          %v1578 = vadd.f32 %v1577, %v1556
          %v1579 = vrot.slane %v1578, 4
          %v1580 = vadd.f32 %v1578, %v1579
          %v1581 = vrot.slane %v1580, 2
          %v1582 = vadd.f32 %v1580, %v1581
          %v1583 = vrot.slane %v1582, 1
          %v1584 = vadd.f32 %v1582, %v1583
          %v1585 = vadd.f32 %v1545, %v1549
          %v1586 = vadd.f32 %v1585, %v1553
          %v1587 = vadd.f32 %v1586, %v1557
          %v1588 = vrot.slane %v1587, 4
          %v1589 = vadd.f32 %v1587, %v1588
          %v1590 = vrot.slane %v1589, 2
          %v1591 = vadd.f32 %v1589, %v1590
          %v1592 = vrot.slane %v1591, 1
          %v1593 = vadd.f32 %v1591, %v1592
          %v1598 = vcombine.low %v1566, %v1575
          %v1599 = vcombine.low %v1584, %v1593
          %v1601 = vunpack.c.l.s4 1966171168
          %v1602 = vunpack.c.0.s8 %v1601
          %v1603 = vlaneseq
          %v1604 = vshrl.u32 %v1603, 7
          %v1605 = vsub.s32 %v1602, %v1604
          %v1606 = vrot.slane %v1598, %v1605
          %v1608 = vunpack.c.l.s4 1966171168
          %v1609 = vunpack.c.0.s8 %v1608
          %v1610 = vlaneseq
          %v1611 = vshrl.u32 %v1610, 7
          %v1612 = vsub.s32 %v1609, %v1611
          %v1613 = vrot.slane %v1599, %v1612
          %v1614 = vcombine.low %v1606, %v1613
          %v1616 = vunpack.c.l.s4 1966171168
          %v1617 = vunpack.c.0.s8 %v1616
          %v1618 = vlaneseq
          %v1619 = vshrl.u32 %v1618, 7
          %v1620 = vsub.s32 %v1617, %v1619
          %v1621 = vrot.slane %v1614, %v1620
          %1623 = vst.msk [vmem:[%s354] sm:$0xf] %vm1540, %v1621
          %1624 = vst [vmem:[%s335] sm:$0xff] %v1456
          %1625 = vst [vmem:[%s335 + $0x8] sm:$0xff] %v1457
          %1626 = vst [vmem:[%s335 + $0x10] sm:$0xff] %v1458
          %1627 = vst [vmem:[%s335 + $0x18] sm:$0xff] %v1459
          %1628 = vst [vmem:[%s335 + $0x20] sm:$0xff] %v1460
          %1629 = vst [vmem:[%s335 + $0x28] sm:$0xff] %v1461
          %1630 = vst [vmem:[%s335 + $0x30] sm:$0xff] %v1462
          %1631 = vst [vmem:[%s335 + $0x38] sm:$0xff] %v1463
          %1632 = vst [vmem:[%s335 + $0x40] sm:$0xff] %v1464
          %1633 = vst [vmem:[%s335 + $0x48] sm:$0xff] %v1465
          %1634 = vst [vmem:[%s335 + $0x50] sm:$0xff] %v1466
          %1635 = vst [vmem:[%s335 + $0x58] sm:$0xff] %v1467
          %1636 = vst [vmem:[%s335 + $0x60] sm:$0xff] %v1468
          %1637 = vst [vmem:[%s335 + $0x68] sm:$0xff] %v1469
          %1638 = vst [vmem:[%s335 + $0x70] sm:$0xff] %v1470
          %1639 = vst [vmem:[%s335 + $0x78] sm:$0xff] %v1471
        $region59: #{discriminator_forward.9} parent=46 // pred_fallthru
          _
        %s1640 = smul.u32 4, %s21
        %s1641 = smul.u32 4, %s22
        %p1642 = scmp.lt.s32.totalorder %s1640, 3
        %s1643 = scalar_select %p1642, %s1640, 3
        %p1644 = scmp.lt.s32.totalorder %s1641, 3
        %s1645 = scalar_select %p1644, %s1641, 3
        %s1646 = smul.addr %s1643, 4
        %s1647 = sadd.s32 %s1645, %s1646
        %s1648 = smul.addr %s1647, 8
        %s1649 = scalar_lea.vmem %s2, %s1648
        %s1650 = smul.u32 4, %s22
        %p1651 = scmp.lt.s32.totalorder %s21, 0
        %s1652 = scalar_select %p1651, %s21, 0
        %p1653 = scmp.lt.s32.totalorder %s1650, 3
        %s1654 = scalar_select %p1653, %s1650, 3
        %s1655 = smul.addr %s1652, 4
        %s1656 = sadd.s32 %s1654, %s1655
        %s1657 = scalar_lea.vmem %s3, %s1656
        %s1658 = smul.u32 4, %s22
        %p1659 = scmp.lt.s32.totalorder %s21, 0
        %s1660 = scalar_select %p1659, %s21, 0
        %p1661 = scmp.lt.s32.totalorder %s1658, 3
        %s1662 = scalar_select %p1661, %s1658, 3
        %s1663 = smul.addr %s1660, 4
        %s1664 = sadd.s32 %s1662, %s1663
        %s1665 = scalar_lea.vmem %s4, %s1664
        // Predicated region
        $region60: #{discriminator_forward.9} parent=46 // pred_check
          %p1666 = pneg %p111
        $region61: #{discriminator_forward.9} parent=46 // pred_check_branch
          %1668 = sbr.rel (%p1666) target = $region63
        $region62: #{discriminator_forward.9} parent=46 // pred_region
          %s1669 = smul.u32 4, %s21
          %s1670 = smul.u32 4, %s22
        $region63: #{discriminator_forward.9} parent=46 // pred_fallthru
          _
        // Predicated region
        $region64: #{discriminator_forward.9} parent=46 // pred_check
          %p1671 = pneg %p139
        $region65: #{discriminator_forward.9} parent=46 // pred_check_branch
          %1673 = sbr.rel (%p1671) target = $region67
        $region66: #{discriminator_forward.9} parent=46 // pred_region
          %s1674 = smul.u32 4, %s22
        $region67: #{discriminator_forward.9} parent=46 // pred_fallthru
          _
        // Predicated region
        $region68: #{discriminator_forward.9} parent=46 // pred_check
          %p1675 = pneg %p167
        $region69: #{discriminator_forward.9} parent=46 // pred_check_branch
          %1677 = sbr.rel (%p1675) target = $region71
        $region70: #{discriminator_forward.9} parent=46 // pred_region
          %s1678 = smul.u32 4, %s22
        $region71: #{discriminator_forward.9} parent=46 // pred_fallthru
          _
        // Predicated region
        $region72: #{discriminator_forward.9} parent=46 // pred_check
          %p1679 = pneg %p111
        $region73: #{discriminator_forward.9} parent=46 // pred_check_branch
          %1681 = sbr.rel (%p1679) target = $region75
        $region74: #{discriminator_forward.9} parent=46 // pred_region
          %s1682 = smul.u32 4, %s21
          %s1683 = smul.u32 4, %s22
          %p1684 = scmp.lt.s32.totalorder %s1682, 3
          %s1685 = scalar_select %p1684, %s1682, 3
          %p1686 = scmp.lt.s32.totalorder %s1683, 3
          %s1687 = scalar_select %p1686, %s1683, 3
          %s1688 = smul.addr %s1685, 4
          %s1689 = sadd.s32 %s1687, %s1688
          %s1690 = smul.addr %s1689, 8
          %s1691 = scalar_lea.vmem %s2, %s1690
        $region75: #{discriminator_forward.9} parent=46 // pred_fallthru
          _
        // Predicated region
        $region76: #{discriminator_forward.9} parent=46 // pred_check
          %p1692 = pneg %p139
        $region77: #{discriminator_forward.9} parent=46 // pred_check_branch
          %1694 = sbr.rel (%p1692) target = $region79
        $region78: #{discriminator_forward.9} parent=46 // pred_region
          %s1695 = smul.u32 4, %s22
          %p1696 = scmp.lt.s32.totalorder %s21, 0
          %s1697 = scalar_select %p1696, %s21, 0
          %p1698 = scmp.lt.s32.totalorder %s1695, 3
          %s1699 = scalar_select %p1698, %s1695, 3
          %s1700 = smul.addr %s1697, 4
          %s1701 = sadd.s32 %s1699, %s1700
          %s1702 = scalar_lea.vmem %s3, %s1701
        $region79: #{discriminator_forward.9} parent=46 // pred_fallthru
          _
        // Predicated region
        $region80: #{discriminator_forward.9} parent=46 // pred_check
          %p1703 = pneg %p167
        $region81: #{discriminator_forward.9} parent=46 // pred_check_branch
          %1705 = sbr.rel (%p1703) target = $region83
        $region82: #{discriminator_forward.9} parent=46 // pred_region
          %s1706 = smul.u32 4, %s22
          %p1707 = scmp.lt.s32.totalorder %s21, 0
          %s1708 = scalar_select %p1707, %s21, 0
          %p1709 = scmp.lt.s32.totalorder %s1706, 3
          %s1710 = scalar_select %p1709, %s1706, 3
          %s1711 = smul.addr %s1708, 4
          %s1712 = sadd.s32 %s1710, %s1711
          %s1713 = scalar_lea.vmem %s4, %s1712
        $region83: #{discriminator_forward.9} parent=46 // pred_fallthru
          _
      $region47: #{discriminator_forward.9} parent=5 // pred_fallthru
        _
      %p1714 = scmp.le.s32.totalorder 2, %s11
      // Predicated region
      $region84: #{discriminator_forward.9} parent=5 // pred_check
        %p1715 = pneg %p1714
      $region85: #{discriminator_forward.9} parent=5 // pred_check_branch
        %1717 = sbr.rel (%p1715) target = $region87
      $region86: #{discriminator_forward.9} parent=5 // pred_region
        %s1718 = ssub.s32 %s11, 2
      $region87: #{discriminator_forward.9} parent=5 // pred_fallthru
        _
    $region6: #{discriminator_forward.9} parent=1 // loop_footer
      %s15 = sadd.s32 1, %s11
    $region7: #{discriminator_forward.9} parent=1 // loop_footer_branch
      %10 = sbr.rel target = $region3
    $region8: #{discriminator_forward.9} parent=1 // loop_exit
      _

// kernel: discriminator_forward.10
$region0: #{discriminator_forward.10}
  #allocation0 [shape = 'u32[]', space=smem, size = 0x4, offset = 0x4, fixed_abs, tag = 'smem constant byte address 0x4 - core index']
  #allocation1 [shape = 'u32[144,128]{1,0:T(1,128)}', space=vmem, size = 0x12000, scoped, tag = 'internal scratch']
  %s0 = inlined_call_operand.vmem [shape: f32[32,512], index: 0, kind: input, shape index: {}]
  %s1 = inlined_call_operand.vmem [shape: f32[1,512], index: 1, kind: input, shape index: {}]
  %s2 = inlined_call_operand.vmem [shape: f32[1,512], index: 2, kind: input, shape index: {}]
  %s3 = inlined_call_operand.vmem [shape: f32[32,512], index: 3, kind: output, shape index: {}]
  %s4 = sld [smem:[#allocation0]]
  $region22: #{discriminator_forward.10} parent=0
    _
  %s6 = ssub.s32 1, %s4
  %s7 = scalar_select 0, %s6, %s4
  // Predicated region
  $region2: #{discriminator_forward.10} parent=0 // pred_check
    _
  $region3: #{discriminator_forward.10} parent=0 // pred_check_branch
    %9 = sbr.rel (0) target = $region5
  $region4: #{discriminator_forward.10} parent=0 // pred_region
    _
  $region5: #{discriminator_forward.10} parent=0 // pred_fallthru
    _
  // Predicated region
  $region6: #{discriminator_forward.10} parent=0 // pred_check
    _
  $region7: #{discriminator_forward.10} parent=0 // pred_check_branch
    %11 = sbr.rel (0) target = $region9
  $region8: #{discriminator_forward.10} parent=0 // pred_region
    _
  $region9: #{discriminator_forward.10} parent=0 // pred_fallthru
    _
  // Predicated region
  $region10: #{discriminator_forward.10} parent=0 // pred_check
    _
  $region11: #{discriminator_forward.10} parent=0 // pred_check_branch
    %13 = sbr.rel (0) target = $region13
  $region12: #{discriminator_forward.10} parent=0 // pred_region
    _
  $region13: #{discriminator_forward.10} parent=0 // pred_fallthru
    _
  %v14 = vld [vmem:[%s0] sm:$0xff]
  %v15 = vld [vmem:[%s0 + $0x8] sm:$0xff]
  %v16 = vld [vmem:[%s0 + $0x10] sm:$0xff]
  %v17 = vld [vmem:[%s0 + $0x18] sm:$0xff]
  %v18 = vld [vmem:[%s0 + $0x20] sm:$0xff]
  %v19 = vld [vmem:[%s0 + $0x28] sm:$0xff]
  %v20 = vld [vmem:[%s0 + $0x30] sm:$0xff]
  %v21 = vld [vmem:[%s0 + $0x38] sm:$0xff]
  %v22 = vld [vmem:[%s0 + $0x40] sm:$0xff]
  %v23 = vld [vmem:[%s0 + $0x48] sm:$0xff]
  %v24 = vld [vmem:[%s0 + $0x50] sm:$0xff]
  %v25 = vld [vmem:[%s0 + $0x58] sm:$0xff]
  %v26 = vld [vmem:[%s0 + $0x60] sm:$0xff]
  %v27 = vld [vmem:[%s0 + $0x68] sm:$0xff]
  %v28 = vld [vmem:[%s0 + $0x70] sm:$0xff]
  %v29 = vld [vmem:[%s0 + $0x78] sm:$0xff]
  %v30 = vld [vmem:[%s1] sm:$0xf]
  %v32 = vlaneseq
  %v33 = vshrl.u32 %v32, 7
  %v34 = vsub.s32 0, %v33
  %v35 = vrot.slane %v30, %v34
  %v36 = vlaneseq
  %v37 = vshrl.u32 %v36, 7
  %v38 = vsub.s32 1, %v37
  %v39 = vrot.slane %v30, %v38
  %v40 = vlaneseq
  %v41 = vshrl.u32 %v40, 7
  %v42 = vsub.s32 2, %v41
  %v43 = vrot.slane %v30, %v42
  %v44 = vlaneseq
  %v45 = vshrl.u32 %v44, 7
  %v46 = vsub.s32 3, %v45
  %v47 = vrot.slane %v30, %v46
  %v52 = vmul.f32 %v14, %v35
  %v53 = vmul.f32 %v15, %v39
  %v54 = vmul.f32 %v16, %v43
  %v55 = vmul.f32 %v17, %v47
  %v56 = vmul.f32 %v18, %v35
  %v57 = vmul.f32 %v19, %v39
  %v58 = vmul.f32 %v20, %v43
  %v59 = vmul.f32 %v21, %v47
  %v60 = vmul.f32 %v22, %v35
  %v61 = vmul.f32 %v23, %v39
  %v62 = vmul.f32 %v24, %v43
  %v63 = vmul.f32 %v25, %v47
  %v64 = vmul.f32 %v26, %v35
  %v65 = vmul.f32 %v27, %v39
  %v66 = vmul.f32 %v28, %v43
  %v67 = vmul.f32 %v29, %v47
  %v68 = vld [vmem:[%s2] sm:$0xf]
  %v70 = vlaneseq
  %v71 = vshrl.u32 %v70, 7
  %v72 = vsub.s32 0, %v71
  %v73 = vrot.slane %v68, %v72
  %v74 = vlaneseq
  %v75 = vshrl.u32 %v74, 7
  %v76 = vsub.s32 1, %v75
  %v77 = vrot.slane %v68, %v76
  %v78 = vlaneseq
  %v79 = vshrl.u32 %v78, 7
  %v80 = vsub.s32 2, %v79
  %v81 = vrot.slane %v68, %v80
  %v82 = vlaneseq
  %v83 = vshrl.u32 %v82, 7
  %v84 = vsub.s32 3, %v83
  %v85 = vrot.slane %v68, %v84
  %v90 = vadd.f32 %v52, %v73
  %v91 = vadd.f32 %v53, %v77
  %v92 = vadd.f32 %v54, %v81
  %v93 = vadd.f32 %v55, %v85
  %v94 = vadd.f32 %v56, %v73
  %v95 = vadd.f32 %v57, %v77
  %v96 = vadd.f32 %v58, %v81
  %v97 = vadd.f32 %v59, %v85
  %v98 = vadd.f32 %v60, %v73
  %v99 = vadd.f32 %v61, %v77
  %v100 = vadd.f32 %v62, %v81
  %v101 = vadd.f32 %v63, %v85
  %v102 = vadd.f32 %v64, %v73
  %v103 = vadd.f32 %v65, %v77
  %v104 = vadd.f32 %v66, %v81
  %v105 = vadd.f32 %v67, %v85
  %vm106 = vcmp.gt.f32.partialorder %v90, 0.0
  %vm107 = vcmp.gt.f32.partialorder %v91, 0.0
  %vm108 = vcmp.gt.f32.partialorder %v92, 0.0
  %vm109 = vcmp.gt.f32.partialorder %v93, 0.0
  %vm110 = vcmp.gt.f32.partialorder %v94, 0.0
  %vm111 = vcmp.gt.f32.partialorder %v95, 0.0
  %vm112 = vcmp.gt.f32.partialorder %v96, 0.0
  %vm113 = vcmp.gt.f32.partialorder %v97, 0.0
  %vm114 = vcmp.gt.f32.partialorder %v98, 0.0
  %vm115 = vcmp.gt.f32.partialorder %v99, 0.0
  %vm116 = vcmp.gt.f32.partialorder %v100, 0.0
  %vm117 = vcmp.gt.f32.partialorder %v101, 0.0
  %vm118 = vcmp.gt.f32.partialorder %v102, 0.0
  %vm119 = vcmp.gt.f32.partialorder %v103, 0.0
  %vm120 = vcmp.gt.f32.partialorder %v104, 0.0
  %vm121 = vcmp.gt.f32.partialorder %v105, 0.0
  %v122 = vmul.f32 %v90, 0.2
  %v123 = vmul.f32 %v91, 0.2
  %v124 = vmul.f32 %v92, 0.2
  %v125 = vmul.f32 %v93, 0.2
  %v126 = vmul.f32 %v94, 0.2
  %v127 = vmul.f32 %v95, 0.2
  %v128 = vmul.f32 %v96, 0.2
  %v129 = vmul.f32 %v97, 0.2
  %v130 = vmul.f32 %v98, 0.2
  %v131 = vmul.f32 %v99, 0.2
  %v132 = vmul.f32 %v100, 0.2
  %v133 = vmul.f32 %v101, 0.2
  %v134 = vmul.f32 %v102, 0.2
  %v135 = vmul.f32 %v103, 0.2
  %v136 = vmul.f32 %v104, 0.2
  %v137 = vmul.f32 %v105, 0.2
  %v138 = vsel %vm106, %v90, %v122
  %v139 = vsel %vm107, %v91, %v123
  %v140 = vsel %vm108, %v92, %v124
  %v141 = vsel %vm109, %v93, %v125
  %v142 = vsel %vm110, %v94, %v126
  %v143 = vsel %vm111, %v95, %v127
  %v144 = vsel %vm112, %v96, %v128
  %v145 = vsel %vm113, %v97, %v129
  %v146 = vsel %vm114, %v98, %v130
  %v147 = vsel %vm115, %v99, %v131
  %v148 = vsel %vm116, %v100, %v132
  %v149 = vsel %vm117, %v101, %v133
  %v150 = vsel %vm118, %v102, %v134
  %v151 = vsel %vm119, %v103, %v135
  %v152 = vsel %vm120, %v104, %v136
  %v153 = vsel %vm121, %v105, %v137
  %154 = vst [vmem:[%s3] sm:$0xff] %v138
  %155 = vst [vmem:[%s3 + $0x8] sm:$0xff] %v139
  %156 = vst [vmem:[%s3 + $0x10] sm:$0xff] %v140
  %157 = vst [vmem:[%s3 + $0x18] sm:$0xff] %v141
  %158 = vst [vmem:[%s3 + $0x20] sm:$0xff] %v142
  %159 = vst [vmem:[%s3 + $0x28] sm:$0xff] %v143
  %160 = vst [vmem:[%s3 + $0x30] sm:$0xff] %v144
  %161 = vst [vmem:[%s3 + $0x38] sm:$0xff] %v145
  %162 = vst [vmem:[%s3 + $0x40] sm:$0xff] %v146
  %163 = vst [vmem:[%s3 + $0x48] sm:$0xff] %v147
  %164 = vst [vmem:[%s3 + $0x50] sm:$0xff] %v148
  %165 = vst [vmem:[%s3 + $0x58] sm:$0xff] %v149
  %166 = vst [vmem:[%s3 + $0x60] sm:$0xff] %v150
  %167 = vst [vmem:[%s3 + $0x68] sm:$0xff] %v151
  %168 = vst [vmem:[%s3 + $0x70] sm:$0xff] %v152
  %169 = vst [vmem:[%s3 + $0x78] sm:$0xff] %v153
  // Predicated region
  $region14: #{discriminator_forward.10} parent=0 // pred_check
    _
  $region15: #{discriminator_forward.10} parent=0 // pred_check_branch
    %171 = sbr.rel (0) target = $region17
  $region16: #{discriminator_forward.10} parent=0 // pred_region
    _
  $region17: #{discriminator_forward.10} parent=0 // pred_fallthru
    _
  // Predicated region
  $region18: #{discriminator_forward.10} parent=0 // pred_check
    _
  $region19: #{discriminator_forward.10} parent=0 // pred_check_branch
    %173 = sbr.rel (0) target = $region21
  $region20: #{discriminator_forward.10} parent=0 // pred_region
    _
  $region21: #{discriminator_forward.10} parent=0 // pred_fallthru
    _

// kernel: discriminator_forward.11
$region0: #{discriminator_forward.11}
  #allocation0 [shape = 'u32[]', space=smem, size = 0x4, offset = 0x4, fixed_abs, tag = 'smem constant byte address 0x4 - core index']
  #allocation1 [shape = 'u32[144,128]{1,0:T(1,128)}', space=vmem, size = 0x12000, scoped, tag = 'internal scratch']
  %s0 = inlined_call_operand.vmem [shape: bf16[2,8192], index: 0, kind: input, shape index: {}]
  %s1 = inlined_call_operand.vmem [shape: bf16[8192,128], index: 1, kind: input, shape index: {}]
  %s2 = inlined_call_operand.vmem [shape: f32[2,128], index: 2, kind: output, shape index: {}]
  %s3 = sld [smem:[#allocation0]]
  $region18: #{discriminator_forward.11} parent=0
    _
  %s5 = ssub.s32 1, %s3
  %s6 = scalar_select 0, %s5, %s3
  // Predicated region
  $region2: #{discriminator_forward.11} parent=0 // pred_check
    _
  $region3: #{discriminator_forward.11} parent=0 // pred_check_branch
    %8 = sbr.rel (0) target = $region5
  $region4: #{discriminator_forward.11} parent=0 // pred_region
    _
  $region5: #{discriminator_forward.11} parent=0 // pred_fallthru
    _
  // Predicated region
  $region6: #{discriminator_forward.11} parent=0 // pred_check
    _
  $region7: #{discriminator_forward.11} parent=0 // pred_check_branch
    %10 = sbr.rel (0) target = $region9
  $region8: #{discriminator_forward.11} parent=0 // pred_region
    _
  $region9: #{discriminator_forward.11} parent=0 // pred_fallthru
    _
  %v12 = vld [vmem:[%s0] sm:$0xff]
  %v13 = vld [vmem:[%s0 + $0x8] sm:$0xff]
  %v14 = vld [vmem:[%s0 + $0x10] sm:$0xff]
  %v15 = vld [vmem:[%s0 + $0x18] sm:$0xff]
  %v16 = vld [vmem:[%s0 + $0x20] sm:$0xff]
  %v17 = vld [vmem:[%s0 + $0x28] sm:$0xff]
  %v18 = vld [vmem:[%s0 + $0x30] sm:$0xff]
  %v19 = vld [vmem:[%s0 + $0x38] sm:$0xff]
  %v20 = vld [vmem:[%s1] sm:$0xf]
  %v21 = vld [vmem:[%s1 + $0x4] sm:$0xf]
  %v22 = vld [vmem:[%s1 + $0x8] sm:$0xf]
  %v23 = vld [vmem:[%s1 + $0xc] sm:$0xf]
  %v24 = vld [vmem:[%s1 + $0x10] sm:$0xf]
  %v25 = vld [vmem:[%s1 + $0x14] sm:$0xf]
  %v26 = vld [vmem:[%s1 + $0x18] sm:$0xf]
  %v27 = vld [vmem:[%s1 + $0x1c] sm:$0xf]
  %v28 = vld [vmem:[%s1 + $0x20] sm:$0xf]
  %v29 = vld [vmem:[%s1 + $0x24] sm:$0xf]
  %v30 = vld [vmem:[%s1 + $0x28] sm:$0xf]
  %v31 = vld [vmem:[%s1 + $0x2c] sm:$0xf]
  %v32 = vld [vmem:[%s1 + $0x30] sm:$0xf]
  %v33 = vld [vmem:[%s1 + $0x34] sm:$0xf]
  %v34 = vld [vmem:[%s1 + $0x38] sm:$0xf]
  %v35 = vld [vmem:[%s1 + $0x3c] sm:$0xf]
  %v36 = vld [vmem:[%s1 + $0x40] sm:$0xf]
  %v37 = vld [vmem:[%s1 + $0x44] sm:$0xf]
  %v38 = vld [vmem:[%s1 + $0x48] sm:$0xf]
  %v39 = vld [vmem:[%s1 + $0x4c] sm:$0xf]
  %v40 = vld [vmem:[%s1 + $0x50] sm:$0xf]
  %v41 = vld [vmem:[%s1 + $0x54] sm:$0xf]
  %v42 = vld [vmem:[%s1 + $0x58] sm:$0xf]
  %v43 = vld [vmem:[%s1 + $0x5c] sm:$0xf]
  %v44 = vld [vmem:[%s1 + $0x60] sm:$0xf]
  %v45 = vld [vmem:[%s1 + $0x64] sm:$0xf]
  %v46 = vld [vmem:[%s1 + $0x68] sm:$0xf]
  %v47 = vld [vmem:[%s1 + $0x6c] sm:$0xf]
  %v48 = vld [vmem:[%s1 + $0x70] sm:$0xf]
  %v49 = vld [vmem:[%s1 + $0x74] sm:$0xf]
  %v50 = vld [vmem:[%s1 + $0x78] sm:$0xf]
  %v51 = vld [vmem:[%s1 + $0x7c] sm:$0xf]
  %v52 = vld [vmem:[%s1 + $0x80] sm:$0xf]
  %v53 = vld [vmem:[%s1 + $0x84] sm:$0xf]
  %v54 = vld [vmem:[%s1 + $0x88] sm:$0xf]
  %v55 = vld [vmem:[%s1 + $0x8c] sm:$0xf]
  %v56 = vld [vmem:[%s1 + $0x90] sm:$0xf]
  %v57 = vld [vmem:[%s1 + $0x94] sm:$0xf]
  %v58 = vld [vmem:[%s1 + $0x98] sm:$0xf]
  %v59 = vld [vmem:[%s1 + $0x9c] sm:$0xf]
  %v60 = vld [vmem:[%s1 + $0xa0] sm:$0xf]
  %v61 = vld [vmem:[%s1 + $0xa4] sm:$0xf]
  %v62 = vld [vmem:[%s1 + $0xa8] sm:$0xf]
  %v63 = vld [vmem:[%s1 + $0xac] sm:$0xf]
  %v64 = vld [vmem:[%s1 + $0xb0] sm:$0xf]
  %v65 = vld [vmem:[%s1 + $0xb4] sm:$0xf]
  %v66 = vld [vmem:[%s1 + $0xb8] sm:$0xf]
  %v67 = vld [vmem:[%s1 + $0xbc] sm:$0xf]
  %v68 = vld [vmem:[%s1 + $0xc0] sm:$0xf]
  %v69 = vld [vmem:[%s1 + $0xc4] sm:$0xf]
  %v70 = vld [vmem:[%s1 + $0xc8] sm:$0xf]
  %v71 = vld [vmem:[%s1 + $0xcc] sm:$0xf]
  %v72 = vld [vmem:[%s1 + $0xd0] sm:$0xf]
  %v73 = vld [vmem:[%s1 + $0xd4] sm:$0xf]
  %v74 = vld [vmem:[%s1 + $0xd8] sm:$0xf]
  %v75 = vld [vmem:[%s1 + $0xdc] sm:$0xf]
  %v76 = vld [vmem:[%s1 + $0xe0] sm:$0xf]
  %v77 = vld [vmem:[%s1 + $0xe4] sm:$0xf]
  %v78 = vld [vmem:[%s1 + $0xe8] sm:$0xf]
  %v79 = vld [vmem:[%s1 + $0xec] sm:$0xf]
  %v80 = vld [vmem:[%s1 + $0xf0] sm:$0xf]
  %v81 = vld [vmem:[%s1 + $0xf4] sm:$0xf]
  %v82 = vld [vmem:[%s1 + $0xf8] sm:$0xf]
  %v83 = vld [vmem:[%s1 + $0xfc] sm:$0xf]
  %v84 = vld [vmem:[%s1 + $0x100] sm:$0xf]
  %v85 = vld [vmem:[%s1 + $0x104] sm:$0xf]
  %v86 = vld [vmem:[%s1 + $0x108] sm:$0xf]
  %v87 = vld [vmem:[%s1 + $0x10c] sm:$0xf]
  %v88 = vld [vmem:[%s1 + $0x110] sm:$0xf]
  %v89 = vld [vmem:[%s1 + $0x114] sm:$0xf]
  %v90 = vld [vmem:[%s1 + $0x118] sm:$0xf]
  %v91 = vld [vmem:[%s1 + $0x11c] sm:$0xf]
  %v92 = vld [vmem:[%s1 + $0x120] sm:$0xf]
  %v93 = vld [vmem:[%s1 + $0x124] sm:$0xf]
  %v94 = vld [vmem:[%s1 + $0x128] sm:$0xf]
  %v95 = vld [vmem:[%s1 + $0x12c] sm:$0xf]
  %v96 = vld [vmem:[%s1 + $0x130] sm:$0xf]
  %v97 = vld [vmem:[%s1 + $0x134] sm:$0xf]
  %v98 = vld [vmem:[%s1 + $0x138] sm:$0xf]
  %v99 = vld [vmem:[%s1 + $0x13c] sm:$0xf]
  %v100 = vld [vmem:[%s1 + $0x140] sm:$0xf]
  %v101 = vld [vmem:[%s1 + $0x144] sm:$0xf]
  %v102 = vld [vmem:[%s1 + $0x148] sm:$0xf]
  %v103 = vld [vmem:[%s1 + $0x14c] sm:$0xf]
  %v104 = vld [vmem:[%s1 + $0x150] sm:$0xf]
  %v105 = vld [vmem:[%s1 + $0x154] sm:$0xf]
  %v106 = vld [vmem:[%s1 + $0x158] sm:$0xf]
  %v107 = vld [vmem:[%s1 + $0x15c] sm:$0xf]
  %v108 = vld [vmem:[%s1 + $0x160] sm:$0xf]
  %v109 = vld [vmem:[%s1 + $0x164] sm:$0xf]
  %v110 = vld [vmem:[%s1 + $0x168] sm:$0xf]
  %v111 = vld [vmem:[%s1 + $0x16c] sm:$0xf]
  %v112 = vld [vmem:[%s1 + $0x170] sm:$0xf]
  %v113 = vld [vmem:[%s1 + $0x174] sm:$0xf]
  %v114 = vld [vmem:[%s1 + $0x178] sm:$0xf]
  %v115 = vld [vmem:[%s1 + $0x17c] sm:$0xf]
  %v116 = vld [vmem:[%s1 + $0x180] sm:$0xf]
  %v117 = vld [vmem:[%s1 + $0x184] sm:$0xf]
  %v118 = vld [vmem:[%s1 + $0x188] sm:$0xf]
  %v119 = vld [vmem:[%s1 + $0x18c] sm:$0xf]
  %v120 = vld [vmem:[%s1 + $0x190] sm:$0xf]
  %v121 = vld [vmem:[%s1 + $0x194] sm:$0xf]
  %v122 = vld [vmem:[%s1 + $0x198] sm:$0xf]
  %v123 = vld [vmem:[%s1 + $0x19c] sm:$0xf]
  %v124 = vld [vmem:[%s1 + $0x1a0] sm:$0xf]
  %v125 = vld [vmem:[%s1 + $0x1a4] sm:$0xf]
  %v126 = vld [vmem:[%s1 + $0x1a8] sm:$0xf]
  %v127 = vld [vmem:[%s1 + $0x1ac] sm:$0xf]
  %v128 = vld [vmem:[%s1 + $0x1b0] sm:$0xf]
  %v129 = vld [vmem:[%s1 + $0x1b4] sm:$0xf]
  %v130 = vld [vmem:[%s1 + $0x1b8] sm:$0xf]
  %v131 = vld [vmem:[%s1 + $0x1bc] sm:$0xf]
  %v132 = vld [vmem:[%s1 + $0x1c0] sm:$0xf]
  %v133 = vld [vmem:[%s1 + $0x1c4] sm:$0xf]
  %v134 = vld [vmem:[%s1 + $0x1c8] sm:$0xf]
  %v135 = vld [vmem:[%s1 + $0x1cc] sm:$0xf]
  %v136 = vld [vmem:[%s1 + $0x1d0] sm:$0xf]
  %v137 = vld [vmem:[%s1 + $0x1d4] sm:$0xf]
  %v138 = vld [vmem:[%s1 + $0x1d8] sm:$0xf]
  %v139 = vld [vmem:[%s1 + $0x1dc] sm:$0xf]
  %v140 = vld [vmem:[%s1 + $0x1e0] sm:$0xf]
  %v141 = vld [vmem:[%s1 + $0x1e4] sm:$0xf]
  %v142 = vld [vmem:[%s1 + $0x1e8] sm:$0xf]
  %v143 = vld [vmem:[%s1 + $0x1ec] sm:$0xf]
  %v144 = vld [vmem:[%s1 + $0x1f0] sm:$0xf]
  %v145 = vld [vmem:[%s1 + $0x1f4] sm:$0xf]
  %v146 = vld [vmem:[%s1 + $0x1f8] sm:$0xf]
  %v147 = vld [vmem:[%s1 + $0x1fc] sm:$0xf]
  %v148 = vld [vmem:[%s1 + $0x200] sm:$0xf]
  %v149 = vld [vmem:[%s1 + $0x204] sm:$0xf]
  %v150 = vld [vmem:[%s1 + $0x208] sm:$0xf]
  %v151 = vld [vmem:[%s1 + $0x20c] sm:$0xf]
  %v152 = vld [vmem:[%s1 + $0x210] sm:$0xf]
  %v153 = vld [vmem:[%s1 + $0x214] sm:$0xf]
  %v154 = vld [vmem:[%s1 + $0x218] sm:$0xf]
  %v155 = vld [vmem:[%s1 + $0x21c] sm:$0xf]
  %v156 = vld [vmem:[%s1 + $0x220] sm:$0xf]
  %v157 = vld [vmem:[%s1 + $0x224] sm:$0xf]
  %v158 = vld [vmem:[%s1 + $0x228] sm:$0xf]
  %v159 = vld [vmem:[%s1 + $0x22c] sm:$0xf]
  %v160 = vld [vmem:[%s1 + $0x230] sm:$0xf]
  %v161 = vld [vmem:[%s1 + $0x234] sm:$0xf]
  %v162 = vld [vmem:[%s1 + $0x238] sm:$0xf]
  %v163 = vld [vmem:[%s1 + $0x23c] sm:$0xf]
  %v164 = vld [vmem:[%s1 + $0x240] sm:$0xf]
  %v165 = vld [vmem:[%s1 + $0x244] sm:$0xf]
  %v166 = vld [vmem:[%s1 + $0x248] sm:$0xf]
  %v167 = vld [vmem:[%s1 + $0x24c] sm:$0xf]
  %v168 = vld [vmem:[%s1 + $0x250] sm:$0xf]
  %v169 = vld [vmem:[%s1 + $0x254] sm:$0xf]
  %v170 = vld [vmem:[%s1 + $0x258] sm:$0xf]
  %v171 = vld [vmem:[%s1 + $0x25c] sm:$0xf]
  %v172 = vld [vmem:[%s1 + $0x260] sm:$0xf]
  %v173 = vld [vmem:[%s1 + $0x264] sm:$0xf]
  %v174 = vld [vmem:[%s1 + $0x268] sm:$0xf]
  %v175 = vld [vmem:[%s1 + $0x26c] sm:$0xf]
  %v176 = vld [vmem:[%s1 + $0x270] sm:$0xf]
  %v177 = vld [vmem:[%s1 + $0x274] sm:$0xf]
  %v178 = vld [vmem:[%s1 + $0x278] sm:$0xf]
  %v179 = vld [vmem:[%s1 + $0x27c] sm:$0xf]
  %v180 = vld [vmem:[%s1 + $0x280] sm:$0xf]
  %v181 = vld [vmem:[%s1 + $0x284] sm:$0xf]
  %v182 = vld [vmem:[%s1 + $0x288] sm:$0xf]
  %v183 = vld [vmem:[%s1 + $0x28c] sm:$0xf]
  %v184 = vld [vmem:[%s1 + $0x290] sm:$0xf]
  %v185 = vld [vmem:[%s1 + $0x294] sm:$0xf]
  %v186 = vld [vmem:[%s1 + $0x298] sm:$0xf]
  %v187 = vld [vmem:[%s1 + $0x29c] sm:$0xf]
  %v188 = vld [vmem:[%s1 + $0x2a0] sm:$0xf]
  %v189 = vld [vmem:[%s1 + $0x2a4] sm:$0xf]
  %v190 = vld [vmem:[%s1 + $0x2a8] sm:$0xf]
  %v191 = vld [vmem:[%s1 + $0x2ac] sm:$0xf]
  %v192 = vld [vmem:[%s1 + $0x2b0] sm:$0xf]
  %v193 = vld [vmem:[%s1 + $0x2b4] sm:$0xf]
  %v194 = vld [vmem:[%s1 + $0x2b8] sm:$0xf]
  %v195 = vld [vmem:[%s1 + $0x2bc] sm:$0xf]
  %v196 = vld [vmem:[%s1 + $0x2c0] sm:$0xf]
  %v197 = vld [vmem:[%s1 + $0x2c4] sm:$0xf]
  %v198 = vld [vmem:[%s1 + $0x2c8] sm:$0xf]
  %v199 = vld [vmem:[%s1 + $0x2cc] sm:$0xf]
  %v200 = vld [vmem:[%s1 + $0x2d0] sm:$0xf]
  %v201 = vld [vmem:[%s1 + $0x2d4] sm:$0xf]
  %v202 = vld [vmem:[%s1 + $0x2d8] sm:$0xf]
  %v203 = vld [vmem:[%s1 + $0x2dc] sm:$0xf]
  %v204 = vld [vmem:[%s1 + $0x2e0] sm:$0xf]
  %v205 = vld [vmem:[%s1 + $0x2e4] sm:$0xf]
  %v206 = vld [vmem:[%s1 + $0x2e8] sm:$0xf]
  %v207 = vld [vmem:[%s1 + $0x2ec] sm:$0xf]
  %v208 = vld [vmem:[%s1 + $0x2f0] sm:$0xf]
  %v209 = vld [vmem:[%s1 + $0x2f4] sm:$0xf]
  %v210 = vld [vmem:[%s1 + $0x2f8] sm:$0xf]
  %v211 = vld [vmem:[%s1 + $0x2fc] sm:$0xf]
  %v212 = vld [vmem:[%s1 + $0x300] sm:$0xf]
  %v213 = vld [vmem:[%s1 + $0x304] sm:$0xf]
  %v214 = vld [vmem:[%s1 + $0x308] sm:$0xf]
  %v215 = vld [vmem:[%s1 + $0x30c] sm:$0xf]
  %v216 = vld [vmem:[%s1 + $0x310] sm:$0xf]
  %v217 = vld [vmem:[%s1 + $0x314] sm:$0xf]
  %v218 = vld [vmem:[%s1 + $0x318] sm:$0xf]
  %v219 = vld [vmem:[%s1 + $0x31c] sm:$0xf]
  %v220 = vld [vmem:[%s1 + $0x320] sm:$0xf]
  %v221 = vld [vmem:[%s1 + $0x324] sm:$0xf]
  %v222 = vld [vmem:[%s1 + $0x328] sm:$0xf]
  %v223 = vld [vmem:[%s1 + $0x32c] sm:$0xf]
  %v224 = vld [vmem:[%s1 + $0x330] sm:$0xf]
  %v225 = vld [vmem:[%s1 + $0x334] sm:$0xf]
  %v226 = vld [vmem:[%s1 + $0x338] sm:$0xf]
  %v227 = vld [vmem:[%s1 + $0x33c] sm:$0xf]
  %v228 = vld [vmem:[%s1 + $0x340] sm:$0xf]
  %v229 = vld [vmem:[%s1 + $0x344] sm:$0xf]
  %v230 = vld [vmem:[%s1 + $0x348] sm:$0xf]
  %v231 = vld [vmem:[%s1 + $0x34c] sm:$0xf]
  %v232 = vld [vmem:[%s1 + $0x350] sm:$0xf]
  %v233 = vld [vmem:[%s1 + $0x354] sm:$0xf]
  %v234 = vld [vmem:[%s1 + $0x358] sm:$0xf]
  %v235 = vld [vmem:[%s1 + $0x35c] sm:$0xf]
  %v236 = vld [vmem:[%s1 + $0x360] sm:$0xf]
  %v237 = vld [vmem:[%s1 + $0x364] sm:$0xf]
  %v238 = vld [vmem:[%s1 + $0x368] sm:$0xf]
  %v239 = vld [vmem:[%s1 + $0x36c] sm:$0xf]
  %v240 = vld [vmem:[%s1 + $0x370] sm:$0xf]
  %v241 = vld [vmem:[%s1 + $0x374] sm:$0xf]
  %v242 = vld [vmem:[%s1 + $0x378] sm:$0xf]
  %v243 = vld [vmem:[%s1 + $0x37c] sm:$0xf]
  %v244 = vld [vmem:[%s1 + $0x380] sm:$0xf]
  %v245 = vld [vmem:[%s1 + $0x384] sm:$0xf]
  %v246 = vld [vmem:[%s1 + $0x388] sm:$0xf]
  %v247 = vld [vmem:[%s1 + $0x38c] sm:$0xf]
  %v248 = vld [vmem:[%s1 + $0x390] sm:$0xf]
  %v249 = vld [vmem:[%s1 + $0x394] sm:$0xf]
  %v250 = vld [vmem:[%s1 + $0x398] sm:$0xf]
  %v251 = vld [vmem:[%s1 + $0x39c] sm:$0xf]
  %v252 = vld [vmem:[%s1 + $0x3a0] sm:$0xf]
  %v253 = vld [vmem:[%s1 + $0x3a4] sm:$0xf]
  %v254 = vld [vmem:[%s1 + $0x3a8] sm:$0xf]
  %v255 = vld [vmem:[%s1 + $0x3ac] sm:$0xf]
  %v256 = vld [vmem:[%s1 + $0x3b0] sm:$0xf]
  %v257 = vld [vmem:[%s1 + $0x3b4] sm:$0xf]
  %v258 = vld [vmem:[%s1 + $0x3b8] sm:$0xf]
  %v259 = vld [vmem:[%s1 + $0x3bc] sm:$0xf]
  %v260 = vld [vmem:[%s1 + $0x3c0] sm:$0xf]
  %v261 = vld [vmem:[%s1 + $0x3c4] sm:$0xf]
  %v262 = vld [vmem:[%s1 + $0x3c8] sm:$0xf]
  %v263 = vld [vmem:[%s1 + $0x3cc] sm:$0xf]
  %v264 = vld [vmem:[%s1 + $0x3d0] sm:$0xf]
  %v265 = vld [vmem:[%s1 + $0x3d4] sm:$0xf]
  %v266 = vld [vmem:[%s1 + $0x3d8] sm:$0xf]
  %v267 = vld [vmem:[%s1 + $0x3dc] sm:$0xf]
  %v268 = vld [vmem:[%s1 + $0x3e0] sm:$0xf]
  %v269 = vld [vmem:[%s1 + $0x3e4] sm:$0xf]
  %v270 = vld [vmem:[%s1 + $0x3e8] sm:$0xf]
  %v271 = vld [vmem:[%s1 + $0x3ec] sm:$0xf]
  %v272 = vld [vmem:[%s1 + $0x3f0] sm:$0xf]
  %v273 = vld [vmem:[%s1 + $0x3f4] sm:$0xf]
  %v274 = vld [vmem:[%s1 + $0x3f8] sm:$0xf]
  %v275 = vld [vmem:[%s1 + $0x3fc] sm:$0xf]
  %v276 = vld [vmem:[%s1 + $0x400] sm:$0xf]
  %v277 = vld [vmem:[%s1 + $0x404] sm:$0xf]
  %v278 = vld [vmem:[%s1 + $0x408] sm:$0xf]
  %v279 = vld [vmem:[%s1 + $0x40c] sm:$0xf]
  %v280 = vld [vmem:[%s1 + $0x410] sm:$0xf]
  %v281 = vld [vmem:[%s1 + $0x414] sm:$0xf]
  %v282 = vld [vmem:[%s1 + $0x418] sm:$0xf]
  %v283 = vld [vmem:[%s1 + $0x41c] sm:$0xf]
  %v284 = vld [vmem:[%s1 + $0x420] sm:$0xf]
  %v285 = vld [vmem:[%s1 + $0x424] sm:$0xf]
  %v286 = vld [vmem:[%s1 + $0x428] sm:$0xf]
  %v287 = vld [vmem:[%s1 + $0x42c] sm:$0xf]
  %v288 = vld [vmem:[%s1 + $0x430] sm:$0xf]
  %v289 = vld [vmem:[%s1 + $0x434] sm:$0xf]
  %v290 = vld [vmem:[%s1 + $0x438] sm:$0xf]
  %v291 = vld [vmem:[%s1 + $0x43c] sm:$0xf]
  %v292 = vld [vmem:[%s1 + $0x440] sm:$0xf]
  %v293 = vld [vmem:[%s1 + $0x444] sm:$0xf]
  %v294 = vld [vmem:[%s1 + $0x448] sm:$0xf]
  %v295 = vld [vmem:[%s1 + $0x44c] sm:$0xf]
  %v296 = vld [vmem:[%s1 + $0x450] sm:$0xf]
  %v297 = vld [vmem:[%s1 + $0x454] sm:$0xf]
  %v298 = vld [vmem:[%s1 + $0x458] sm:$0xf]
  %v299 = vld [vmem:[%s1 + $0x45c] sm:$0xf]
  %v300 = vld [vmem:[%s1 + $0x460] sm:$0xf]
  %v301 = vld [vmem:[%s1 + $0x464] sm:$0xf]
  %v302 = vld [vmem:[%s1 + $0x468] sm:$0xf]
  %v303 = vld [vmem:[%s1 + $0x46c] sm:$0xf]
  %v304 = vld [vmem:[%s1 + $0x470] sm:$0xf]
  %v305 = vld [vmem:[%s1 + $0x474] sm:$0xf]
  %v306 = vld [vmem:[%s1 + $0x478] sm:$0xf]
  %v307 = vld [vmem:[%s1 + $0x47c] sm:$0xf]
  %v308 = vld [vmem:[%s1 + $0x480] sm:$0xf]
  %v309 = vld [vmem:[%s1 + $0x484] sm:$0xf]
  %v310 = vld [vmem:[%s1 + $0x488] sm:$0xf]
  %v311 = vld [vmem:[%s1 + $0x48c] sm:$0xf]
  %v312 = vld [vmem:[%s1 + $0x490] sm:$0xf]
  %v313 = vld [vmem:[%s1 + $0x494] sm:$0xf]
  %v314 = vld [vmem:[%s1 + $0x498] sm:$0xf]
  %v315 = vld [vmem:[%s1 + $0x49c] sm:$0xf]
  %v316 = vld [vmem:[%s1 + $0x4a0] sm:$0xf]
  %v317 = vld [vmem:[%s1 + $0x4a4] sm:$0xf]
  %v318 = vld [vmem:[%s1 + $0x4a8] sm:$0xf]
  %v319 = vld [vmem:[%s1 + $0x4ac] sm:$0xf]
  %v320 = vld [vmem:[%s1 + $0x4b0] sm:$0xf]
  %v321 = vld [vmem:[%s1 + $0x4b4] sm:$0xf]
  %v322 = vld [vmem:[%s1 + $0x4b8] sm:$0xf]
  %v323 = vld [vmem:[%s1 + $0x4bc] sm:$0xf]
  %v324 = vld [vmem:[%s1 + $0x4c0] sm:$0xf]
  %v325 = vld [vmem:[%s1 + $0x4c4] sm:$0xf]
  %v326 = vld [vmem:[%s1 + $0x4c8] sm:$0xf]
  %v327 = vld [vmem:[%s1 + $0x4cc] sm:$0xf]
  %v328 = vld [vmem:[%s1 + $0x4d0] sm:$0xf]
  %v329 = vld [vmem:[%s1 + $0x4d4] sm:$0xf]
  %v330 = vld [vmem:[%s1 + $0x4d8] sm:$0xf]
  %v331 = vld [vmem:[%s1 + $0x4dc] sm:$0xf]
  %v332 = vld [vmem:[%s1 + $0x4e0] sm:$0xf]
  %v333 = vld [vmem:[%s1 + $0x4e4] sm:$0xf]
  %v334 = vld [vmem:[%s1 + $0x4e8] sm:$0xf]
  %v335 = vld [vmem:[%s1 + $0x4ec] sm:$0xf]
  %v336 = vld [vmem:[%s1 + $0x4f0] sm:$0xf]
  %v337 = vld [vmem:[%s1 + $0x4f4] sm:$0xf]
  %v338 = vld [vmem:[%s1 + $0x4f8] sm:$0xf]
  %v339 = vld [vmem:[%s1 + $0x4fc] sm:$0xf]
  %v340 = vld [vmem:[%s1 + $0x500] sm:$0xf]
  %v341 = vld [vmem:[%s1 + $0x504] sm:$0xf]
  %v342 = vld [vmem:[%s1 + $0x508] sm:$0xf]
  %v343 = vld [vmem:[%s1 + $0x50c] sm:$0xf]
  %v344 = vld [vmem:[%s1 + $0x510] sm:$0xf]
  %v345 = vld [vmem:[%s1 + $0x514] sm:$0xf]
  %v346 = vld [vmem:[%s1 + $0x518] sm:$0xf]
  %v347 = vld [vmem:[%s1 + $0x51c] sm:$0xf]
  %v348 = vld [vmem:[%s1 + $0x520] sm:$0xf]
  %v349 = vld [vmem:[%s1 + $0x524] sm:$0xf]
  %v350 = vld [vmem:[%s1 + $0x528] sm:$0xf]
  %v351 = vld [vmem:[%s1 + $0x52c] sm:$0xf]
  %v352 = vld [vmem:[%s1 + $0x530] sm:$0xf]
  %v353 = vld [vmem:[%s1 + $0x534] sm:$0xf]
  %v354 = vld [vmem:[%s1 + $0x538] sm:$0xf]
  %v355 = vld [vmem:[%s1 + $0x53c] sm:$0xf]
  %v356 = vld [vmem:[%s1 + $0x540] sm:$0xf]
  %v357 = vld [vmem:[%s1 + $0x544] sm:$0xf]
  %v358 = vld [vmem:[%s1 + $0x548] sm:$0xf]
  %v359 = vld [vmem:[%s1 + $0x54c] sm:$0xf]
  %v360 = vld [vmem:[%s1 + $0x550] sm:$0xf]
  %v361 = vld [vmem:[%s1 + $0x554] sm:$0xf]
  %v362 = vld [vmem:[%s1 + $0x558] sm:$0xf]
  %v363 = vld [vmem:[%s1 + $0x55c] sm:$0xf]
  %v364 = vld [vmem:[%s1 + $0x560] sm:$0xf]
  %v365 = vld [vmem:[%s1 + $0x564] sm:$0xf]
  %v366 = vld [vmem:[%s1 + $0x568] sm:$0xf]
  %v367 = vld [vmem:[%s1 + $0x56c] sm:$0xf]
  %v368 = vld [vmem:[%s1 + $0x570] sm:$0xf]
  %v369 = vld [vmem:[%s1 + $0x574] sm:$0xf]
  %v370 = vld [vmem:[%s1 + $0x578] sm:$0xf]
  %v371 = vld [vmem:[%s1 + $0x57c] sm:$0xf]
  %v372 = vld [vmem:[%s1 + $0x580] sm:$0xf]
  %v373 = vld [vmem:[%s1 + $0x584] sm:$0xf]
  %v374 = vld [vmem:[%s1 + $0x588] sm:$0xf]
  %v375 = vld [vmem:[%s1 + $0x58c] sm:$0xf]
  %v376 = vld [vmem:[%s1 + $0x590] sm:$0xf]
  %v377 = vld [vmem:[%s1 + $0x594] sm:$0xf]
  %v378 = vld [vmem:[%s1 + $0x598] sm:$0xf]
  %v379 = vld [vmem:[%s1 + $0x59c] sm:$0xf]
  %v380 = vld [vmem:[%s1 + $0x5a0] sm:$0xf]
  %v381 = vld [vmem:[%s1 + $0x5a4] sm:$0xf]
  %v382 = vld [vmem:[%s1 + $0x5a8] sm:$0xf]
  %v383 = vld [vmem:[%s1 + $0x5ac] sm:$0xf]
  %v384 = vld [vmem:[%s1 + $0x5b0] sm:$0xf]
  %v385 = vld [vmem:[%s1 + $0x5b4] sm:$0xf]
  %v386 = vld [vmem:[%s1 + $0x5b8] sm:$0xf]
  %v387 = vld [vmem:[%s1 + $0x5bc] sm:$0xf]
  %v388 = vld [vmem:[%s1 + $0x5c0] sm:$0xf]
  %v389 = vld [vmem:[%s1 + $0x5c4] sm:$0xf]
  %v390 = vld [vmem:[%s1 + $0x5c8] sm:$0xf]
  %v391 = vld [vmem:[%s1 + $0x5cc] sm:$0xf]
  %v392 = vld [vmem:[%s1 + $0x5d0] sm:$0xf]
  %v393 = vld [vmem:[%s1 + $0x5d4] sm:$0xf]
  %v394 = vld [vmem:[%s1 + $0x5d8] sm:$0xf]
  %v395 = vld [vmem:[%s1 + $0x5dc] sm:$0xf]
  %v396 = vld [vmem:[%s1 + $0x5e0] sm:$0xf]
  %v397 = vld [vmem:[%s1 + $0x5e4] sm:$0xf]
  %v398 = vld [vmem:[%s1 + $0x5e8] sm:$0xf]
  %v399 = vld [vmem:[%s1 + $0x5ec] sm:$0xf]
  %v400 = vld [vmem:[%s1 + $0x5f0] sm:$0xf]
  %v401 = vld [vmem:[%s1 + $0x5f4] sm:$0xf]
  %v402 = vld [vmem:[%s1 + $0x5f8] sm:$0xf]
  %v403 = vld [vmem:[%s1 + $0x5fc] sm:$0xf]
  %v404 = vld [vmem:[%s1 + $0x600] sm:$0xf]
  %v405 = vld [vmem:[%s1 + $0x604] sm:$0xf]
  %v406 = vld [vmem:[%s1 + $0x608] sm:$0xf]
  %v407 = vld [vmem:[%s1 + $0x60c] sm:$0xf]
  %v408 = vld [vmem:[%s1 + $0x610] sm:$0xf]
  %v409 = vld [vmem:[%s1 + $0x614] sm:$0xf]
  %v410 = vld [vmem:[%s1 + $0x618] sm:$0xf]
  %v411 = vld [vmem:[%s1 + $0x61c] sm:$0xf]
  %v412 = vld [vmem:[%s1 + $0x620] sm:$0xf]
  %v413 = vld [vmem:[%s1 + $0x624] sm:$0xf]
  %v414 = vld [vmem:[%s1 + $0x628] sm:$0xf]
  %v415 = vld [vmem:[%s1 + $0x62c] sm:$0xf]
  %v416 = vld [vmem:[%s1 + $0x630] sm:$0xf]
  %v417 = vld [vmem:[%s1 + $0x634] sm:$0xf]
  %v418 = vld [vmem:[%s1 + $0x638] sm:$0xf]
  %v419 = vld [vmem:[%s1 + $0x63c] sm:$0xf]
  %v420 = vld [vmem:[%s1 + $0x640] sm:$0xf]
  %v421 = vld [vmem:[%s1 + $0x644] sm:$0xf]
  %v422 = vld [vmem:[%s1 + $0x648] sm:$0xf]
  %v423 = vld [vmem:[%s1 + $0x64c] sm:$0xf]
  %v424 = vld [vmem:[%s1 + $0x650] sm:$0xf]
  %v425 = vld [vmem:[%s1 + $0x654] sm:$0xf]
  %v426 = vld [vmem:[%s1 + $0x658] sm:$0xf]
  %v427 = vld [vmem:[%s1 + $0x65c] sm:$0xf]
  %v428 = vld [vmem:[%s1 + $0x660] sm:$0xf]
  %v429 = vld [vmem:[%s1 + $0x664] sm:$0xf]
  %v430 = vld [vmem:[%s1 + $0x668] sm:$0xf]
  %v431 = vld [vmem:[%s1 + $0x66c] sm:$0xf]
  %v432 = vld [vmem:[%s1 + $0x670] sm:$0xf]
  %v433 = vld [vmem:[%s1 + $0x674] sm:$0xf]
  %v434 = vld [vmem:[%s1 + $0x678] sm:$0xf]
  %v435 = vld [vmem:[%s1 + $0x67c] sm:$0xf]
  %v436 = vld [vmem:[%s1 + $0x680] sm:$0xf]
  %v437 = vld [vmem:[%s1 + $0x684] sm:$0xf]
  %v438 = vld [vmem:[%s1 + $0x688] sm:$0xf]
  %v439 = vld [vmem:[%s1 + $0x68c] sm:$0xf]
  %v440 = vld [vmem:[%s1 + $0x690] sm:$0xf]
  %v441 = vld [vmem:[%s1 + $0x694] sm:$0xf]
  %v442 = vld [vmem:[%s1 + $0x698] sm:$0xf]
  %v443 = vld [vmem:[%s1 + $0x69c] sm:$0xf]
  %v444 = vld [vmem:[%s1 + $0x6a0] sm:$0xf]
  %v445 = vld [vmem:[%s1 + $0x6a4] sm:$0xf]
  %v446 = vld [vmem:[%s1 + $0x6a8] sm:$0xf]
  %v447 = vld [vmem:[%s1 + $0x6ac] sm:$0xf]
  %v448 = vld [vmem:[%s1 + $0x6b0] sm:$0xf]
  %v449 = vld [vmem:[%s1 + $0x6b4] sm:$0xf]
  %v450 = vld [vmem:[%s1 + $0x6b8] sm:$0xf]
  %v451 = vld [vmem:[%s1 + $0x6bc] sm:$0xf]
  %v452 = vld [vmem:[%s1 + $0x6c0] sm:$0xf]
  %v453 = vld [vmem:[%s1 + $0x6c4] sm:$0xf]
  %v454 = vld [vmem:[%s1 + $0x6c8] sm:$0xf]
  %v455 = vld [vmem:[%s1 + $0x6cc] sm:$0xf]
  %v456 = vld [vmem:[%s1 + $0x6d0] sm:$0xf]
  %v457 = vld [vmem:[%s1 + $0x6d4] sm:$0xf]
  %v458 = vld [vmem:[%s1 + $0x6d8] sm:$0xf]
  %v459 = vld [vmem:[%s1 + $0x6dc] sm:$0xf]
  %v460 = vld [vmem:[%s1 + $0x6e0] sm:$0xf]
  %v461 = vld [vmem:[%s1 + $0x6e4] sm:$0xf]
  %v462 = vld [vmem:[%s1 + $0x6e8] sm:$0xf]
  %v463 = vld [vmem:[%s1 + $0x6ec] sm:$0xf]
  %v464 = vld [vmem:[%s1 + $0x6f0] sm:$0xf]
  %v465 = vld [vmem:[%s1 + $0x6f4] sm:$0xf]
  %v466 = vld [vmem:[%s1 + $0x6f8] sm:$0xf]
  %v467 = vld [vmem:[%s1 + $0x6fc] sm:$0xf]
  %v468 = vld [vmem:[%s1 + $0x700] sm:$0xf]
  %v469 = vld [vmem:[%s1 + $0x704] sm:$0xf]
  %v470 = vld [vmem:[%s1 + $0x708] sm:$0xf]
  %v471 = vld [vmem:[%s1 + $0x70c] sm:$0xf]
  %v472 = vld [vmem:[%s1 + $0x710] sm:$0xf]
  %v473 = vld [vmem:[%s1 + $0x714] sm:$0xf]
  %v474 = vld [vmem:[%s1 + $0x718] sm:$0xf]
  %v475 = vld [vmem:[%s1 + $0x71c] sm:$0xf]
  %v476 = vld [vmem:[%s1 + $0x720] sm:$0xf]
  %v477 = vld [vmem:[%s1 + $0x724] sm:$0xf]
  %v478 = vld [vmem:[%s1 + $0x728] sm:$0xf]
  %v479 = vld [vmem:[%s1 + $0x72c] sm:$0xf]
  %v480 = vld [vmem:[%s1 + $0x730] sm:$0xf]
  %v481 = vld [vmem:[%s1 + $0x734] sm:$0xf]
  %v482 = vld [vmem:[%s1 + $0x738] sm:$0xf]
  %v483 = vld [vmem:[%s1 + $0x73c] sm:$0xf]
  %v484 = vld [vmem:[%s1 + $0x740] sm:$0xf]
  %v485 = vld [vmem:[%s1 + $0x744] sm:$0xf]
  %v486 = vld [vmem:[%s1 + $0x748] sm:$0xf]
  %v487 = vld [vmem:[%s1 + $0x74c] sm:$0xf]
  %v488 = vld [vmem:[%s1 + $0x750] sm:$0xf]
  %v489 = vld [vmem:[%s1 + $0x754] sm:$0xf]
  %v490 = vld [vmem:[%s1 + $0x758] sm:$0xf]
  %v491 = vld [vmem:[%s1 + $0x75c] sm:$0xf]
  %v492 = vld [vmem:[%s1 + $0x760] sm:$0xf]
  %v493 = vld [vmem:[%s1 + $0x764] sm:$0xf]
  %v494 = vld [vmem:[%s1 + $0x768] sm:$0xf]
  %v495 = vld [vmem:[%s1 + $0x76c] sm:$0xf]
  %v496 = vld [vmem:[%s1 + $0x770] sm:$0xf]
  %v497 = vld [vmem:[%s1 + $0x774] sm:$0xf]
  %v498 = vld [vmem:[%s1 + $0x778] sm:$0xf]
  %v499 = vld [vmem:[%s1 + $0x77c] sm:$0xf]
  %v500 = vld [vmem:[%s1 + $0x780] sm:$0xf]
  %v501 = vld [vmem:[%s1 + $0x784] sm:$0xf]
  %v502 = vld [vmem:[%s1 + $0x788] sm:$0xf]
  %v503 = vld [vmem:[%s1 + $0x78c] sm:$0xf]
  %v504 = vld [vmem:[%s1 + $0x790] sm:$0xf]
  %v505 = vld [vmem:[%s1 + $0x794] sm:$0xf]
  %v506 = vld [vmem:[%s1 + $0x798] sm:$0xf]
  %v507 = vld [vmem:[%s1 + $0x79c] sm:$0xf]
  %v508 = vld [vmem:[%s1 + $0x7a0] sm:$0xf]
  %v509 = vld [vmem:[%s1 + $0x7a4] sm:$0xf]
  %v510 = vld [vmem:[%s1 + $0x7a8] sm:$0xf]
  %v511 = vld [vmem:[%s1 + $0x7ac] sm:$0xf]
  %v512 = vld [vmem:[%s1 + $0x7b0] sm:$0xf]
  %v513 = vld [vmem:[%s1 + $0x7b4] sm:$0xf]
  %v514 = vld [vmem:[%s1 + $0x7b8] sm:$0xf]
  %v515 = vld [vmem:[%s1 + $0x7bc] sm:$0xf]
  %v516 = vld [vmem:[%s1 + $0x7c0] sm:$0xf]
  %v517 = vld [vmem:[%s1 + $0x7c4] sm:$0xf]
  %v518 = vld [vmem:[%s1 + $0x7c8] sm:$0xf]
  %v519 = vld [vmem:[%s1 + $0x7cc] sm:$0xf]
  %v520 = vld [vmem:[%s1 + $0x7d0] sm:$0xf]
  %v521 = vld [vmem:[%s1 + $0x7d4] sm:$0xf]
  %v522 = vld [vmem:[%s1 + $0x7d8] sm:$0xf]
  %v523 = vld [vmem:[%s1 + $0x7dc] sm:$0xf]
  %v524 = vld [vmem:[%s1 + $0x7e0] sm:$0xf]
  %v525 = vld [vmem:[%s1 + $0x7e4] sm:$0xf]
  %v526 = vld [vmem:[%s1 + $0x7e8] sm:$0xf]
  %v527 = vld [vmem:[%s1 + $0x7ec] sm:$0xf]
  %v528 = vld [vmem:[%s1 + $0x7f0] sm:$0xf]
  %v529 = vld [vmem:[%s1 + $0x7f4] sm:$0xf]
  %v530 = vld [vmem:[%s1 + $0x7f8] sm:$0xf]
  %v531 = vld [vmem:[%s1 + $0x7fc] sm:$0xf]
  %v532 = vld [vmem:[%s1 + $0x800] sm:$0xf]
  %v533 = vld [vmem:[%s1 + $0x804] sm:$0xf]
  %v534 = vld [vmem:[%s1 + $0x808] sm:$0xf]
  %v535 = vld [vmem:[%s1 + $0x80c] sm:$0xf]
  %v536 = vld [vmem:[%s1 + $0x810] sm:$0xf]
  %v537 = vld [vmem:[%s1 + $0x814] sm:$0xf]
  %v538 = vld [vmem:[%s1 + $0x818] sm:$0xf]
  %v539 = vld [vmem:[%s1 + $0x81c] sm:$0xf]
  %v540 = vld [vmem:[%s1 + $0x820] sm:$0xf]
  %v541 = vld [vmem:[%s1 + $0x824] sm:$0xf]
  %v542 = vld [vmem:[%s1 + $0x828] sm:$0xf]
  %v543 = vld [vmem:[%s1 + $0x82c] sm:$0xf]
  %v544 = vld [vmem:[%s1 + $0x830] sm:$0xf]
  %v545 = vld [vmem:[%s1 + $0x834] sm:$0xf]
  %v546 = vld [vmem:[%s1 + $0x838] sm:$0xf]
  %v547 = vld [vmem:[%s1 + $0x83c] sm:$0xf]
  %v548 = vld [vmem:[%s1 + $0x840] sm:$0xf]
  %v549 = vld [vmem:[%s1 + $0x844] sm:$0xf]
  %v550 = vld [vmem:[%s1 + $0x848] sm:$0xf]
  %v551 = vld [vmem:[%s1 + $0x84c] sm:$0xf]
  %v552 = vld [vmem:[%s1 + $0x850] sm:$0xf]
  %v553 = vld [vmem:[%s1 + $0x854] sm:$0xf]
  %v554 = vld [vmem:[%s1 + $0x858] sm:$0xf]
  %v555 = vld [vmem:[%s1 + $0x85c] sm:$0xf]
  %v556 = vld [vmem:[%s1 + $0x860] sm:$0xf]
  %v557 = vld [vmem:[%s1 + $0x864] sm:$0xf]
  %v558 = vld [vmem:[%s1 + $0x868] sm:$0xf]
  %v559 = vld [vmem:[%s1 + $0x86c] sm:$0xf]
  %v560 = vld [vmem:[%s1 + $0x870] sm:$0xf]
  %v561 = vld [vmem:[%s1 + $0x874] sm:$0xf]
  %v562 = vld [vmem:[%s1 + $0x878] sm:$0xf]
  %v563 = vld [vmem:[%s1 + $0x87c] sm:$0xf]
  %v564 = vld [vmem:[%s1 + $0x880] sm:$0xf]
  %v565 = vld [vmem:[%s1 + $0x884] sm:$0xf]
  %v566 = vld [vmem:[%s1 + $0x888] sm:$0xf]
  %v567 = vld [vmem:[%s1 + $0x88c] sm:$0xf]
  %v568 = vld [vmem:[%s1 + $0x890] sm:$0xf]
  %v569 = vld [vmem:[%s1 + $0x894] sm:$0xf]
  %v570 = vld [vmem:[%s1 + $0x898] sm:$0xf]
  %v571 = vld [vmem:[%s1 + $0x89c] sm:$0xf]
  %v572 = vld [vmem:[%s1 + $0x8a0] sm:$0xf]
  %v573 = vld [vmem:[%s1 + $0x8a4] sm:$0xf]
  %v574 = vld [vmem:[%s1 + $0x8a8] sm:$0xf]
  %v575 = vld [vmem:[%s1 + $0x8ac] sm:$0xf]
  %v576 = vld [vmem:[%s1 + $0x8b0] sm:$0xf]
  %v577 = vld [vmem:[%s1 + $0x8b4] sm:$0xf]
  %v578 = vld [vmem:[%s1 + $0x8b8] sm:$0xf]
  %v579 = vld [vmem:[%s1 + $0x8bc] sm:$0xf]
  %v580 = vld [vmem:[%s1 + $0x8c0] sm:$0xf]
  %v581 = vld [vmem:[%s1 + $0x8c4] sm:$0xf]
  %v582 = vld [vmem:[%s1 + $0x8c8] sm:$0xf]
  %v583 = vld [vmem:[%s1 + $0x8cc] sm:$0xf]
  %v584 = vld [vmem:[%s1 + $0x8d0] sm:$0xf]
  %v585 = vld [vmem:[%s1 + $0x8d4] sm:$0xf]
  %v586 = vld [vmem:[%s1 + $0x8d8] sm:$0xf]
  %v587 = vld [vmem:[%s1 + $0x8dc] sm:$0xf]
  %v588 = vld [vmem:[%s1 + $0x8e0] sm:$0xf]
  %v589 = vld [vmem:[%s1 + $0x8e4] sm:$0xf]
  %v590 = vld [vmem:[%s1 + $0x8e8] sm:$0xf]
  %v591 = vld [vmem:[%s1 + $0x8ec] sm:$0xf]
  %v592 = vld [vmem:[%s1 + $0x8f0] sm:$0xf]
  %v593 = vld [vmem:[%s1 + $0x8f4] sm:$0xf]
  %v594 = vld [vmem:[%s1 + $0x8f8] sm:$0xf]
  %v595 = vld [vmem:[%s1 + $0x8fc] sm:$0xf]
  %v596 = vld [vmem:[%s1 + $0x900] sm:$0xf]
  %v597 = vld [vmem:[%s1 + $0x904] sm:$0xf]
  %v598 = vld [vmem:[%s1 + $0x908] sm:$0xf]
  %v599 = vld [vmem:[%s1 + $0x90c] sm:$0xf]
  %v600 = vld [vmem:[%s1 + $0x910] sm:$0xf]
  %v601 = vld [vmem:[%s1 + $0x914] sm:$0xf]
  %v602 = vld [vmem:[%s1 + $0x918] sm:$0xf]
  %v603 = vld [vmem:[%s1 + $0x91c] sm:$0xf]
  %v604 = vld [vmem:[%s1 + $0x920] sm:$0xf]
  %v605 = vld [vmem:[%s1 + $0x924] sm:$0xf]
  %v606 = vld [vmem:[%s1 + $0x928] sm:$0xf]
  %v607 = vld [vmem:[%s1 + $0x92c] sm:$0xf]
  %v608 = vld [vmem:[%s1 + $0x930] sm:$0xf]
  %v609 = vld [vmem:[%s1 + $0x934] sm:$0xf]
  %v610 = vld [vmem:[%s1 + $0x938] sm:$0xf]
  %v611 = vld [vmem:[%s1 + $0x93c] sm:$0xf]
  %v612 = vld [vmem:[%s1 + $0x940] sm:$0xf]
  %v613 = vld [vmem:[%s1 + $0x944] sm:$0xf]
  %v614 = vld [vmem:[%s1 + $0x948] sm:$0xf]
  %v615 = vld [vmem:[%s1 + $0x94c] sm:$0xf]
  %v616 = vld [vmem:[%s1 + $0x950] sm:$0xf]
  %v617 = vld [vmem:[%s1 + $0x954] sm:$0xf]
  %v618 = vld [vmem:[%s1 + $0x958] sm:$0xf]
  %v619 = vld [vmem:[%s1 + $0x95c] sm:$0xf]
  %v620 = vld [vmem:[%s1 + $0x960] sm:$0xf]
  %v621 = vld [vmem:[%s1 + $0x964] sm:$0xf]
  %v622 = vld [vmem:[%s1 + $0x968] sm:$0xf]
  %v623 = vld [vmem:[%s1 + $0x96c] sm:$0xf]
  %v624 = vld [vmem:[%s1 + $0x970] sm:$0xf]
  %v625 = vld [vmem:[%s1 + $0x974] sm:$0xf]
  %v626 = vld [vmem:[%s1 + $0x978] sm:$0xf]
  %v627 = vld [vmem:[%s1 + $0x97c] sm:$0xf]
  %v628 = vld [vmem:[%s1 + $0x980] sm:$0xf]
  %v629 = vld [vmem:[%s1 + $0x984] sm:$0xf]
  %v630 = vld [vmem:[%s1 + $0x988] sm:$0xf]
  %v631 = vld [vmem:[%s1 + $0x98c] sm:$0xf]
  %v632 = vld [vmem:[%s1 + $0x990] sm:$0xf]
  %v633 = vld [vmem:[%s1 + $0x994] sm:$0xf]
  %v634 = vld [vmem:[%s1 + $0x998] sm:$0xf]
  %v635 = vld [vmem:[%s1 + $0x99c] sm:$0xf]
  %v636 = vld [vmem:[%s1 + $0x9a0] sm:$0xf]
  %v637 = vld [vmem:[%s1 + $0x9a4] sm:$0xf]
  %v638 = vld [vmem:[%s1 + $0x9a8] sm:$0xf]
  %v639 = vld [vmem:[%s1 + $0x9ac] sm:$0xf]
  %v640 = vld [vmem:[%s1 + $0x9b0] sm:$0xf]
  %v641 = vld [vmem:[%s1 + $0x9b4] sm:$0xf]
  %v642 = vld [vmem:[%s1 + $0x9b8] sm:$0xf]
  %v643 = vld [vmem:[%s1 + $0x9bc] sm:$0xf]
  %v644 = vld [vmem:[%s1 + $0x9c0] sm:$0xf]
  %v645 = vld [vmem:[%s1 + $0x9c4] sm:$0xf]
  %v646 = vld [vmem:[%s1 + $0x9c8] sm:$0xf]
  %v647 = vld [vmem:[%s1 + $0x9cc] sm:$0xf]
  %v648 = vld [vmem:[%s1 + $0x9d0] sm:$0xf]
  %v649 = vld [vmem:[%s1 + $0x9d4] sm:$0xf]
  %v650 = vld [vmem:[%s1 + $0x9d8] sm:$0xf]
  %v651 = vld [vmem:[%s1 + $0x9dc] sm:$0xf]
  %v652 = vld [vmem:[%s1 + $0x9e0] sm:$0xf]
  %v653 = vld [vmem:[%s1 + $0x9e4] sm:$0xf]
  %v654 = vld [vmem:[%s1 + $0x9e8] sm:$0xf]
  %v655 = vld [vmem:[%s1 + $0x9ec] sm:$0xf]
  %v656 = vld [vmem:[%s1 + $0x9f0] sm:$0xf]
  %v657 = vld [vmem:[%s1 + $0x9f4] sm:$0xf]
  %v658 = vld [vmem:[%s1 + $0x9f8] sm:$0xf]
  %v659 = vld [vmem:[%s1 + $0x9fc] sm:$0xf]
  %v660 = vld [vmem:[%s1 + $0xa00] sm:$0xf]
  %v661 = vld [vmem:[%s1 + $0xa04] sm:$0xf]
  %v662 = vld [vmem:[%s1 + $0xa08] sm:$0xf]
  %v663 = vld [vmem:[%s1 + $0xa0c] sm:$0xf]
  %v664 = vld [vmem:[%s1 + $0xa10] sm:$0xf]
  %v665 = vld [vmem:[%s1 + $0xa14] sm:$0xf]
  %v666 = vld [vmem:[%s1 + $0xa18] sm:$0xf]
  %v667 = vld [vmem:[%s1 + $0xa1c] sm:$0xf]
  %v668 = vld [vmem:[%s1 + $0xa20] sm:$0xf]
  %v669 = vld [vmem:[%s1 + $0xa24] sm:$0xf]
  %v670 = vld [vmem:[%s1 + $0xa28] sm:$0xf]
  %v671 = vld [vmem:[%s1 + $0xa2c] sm:$0xf]
  %v672 = vld [vmem:[%s1 + $0xa30] sm:$0xf]
  %v673 = vld [vmem:[%s1 + $0xa34] sm:$0xf]
  %v674 = vld [vmem:[%s1 + $0xa38] sm:$0xf]
  %v675 = vld [vmem:[%s1 + $0xa3c] sm:$0xf]
  %v676 = vld [vmem:[%s1 + $0xa40] sm:$0xf]
  %v677 = vld [vmem:[%s1 + $0xa44] sm:$0xf]
  %v678 = vld [vmem:[%s1 + $0xa48] sm:$0xf]
  %v679 = vld [vmem:[%s1 + $0xa4c] sm:$0xf]
  %v680 = vld [vmem:[%s1 + $0xa50] sm:$0xf]
  %v681 = vld [vmem:[%s1 + $0xa54] sm:$0xf]
  %v682 = vld [vmem:[%s1 + $0xa58] sm:$0xf]
  %v683 = vld [vmem:[%s1 + $0xa5c] sm:$0xf]
  %v684 = vld [vmem:[%s1 + $0xa60] sm:$0xf]
  %v685 = vld [vmem:[%s1 + $0xa64] sm:$0xf]
  %v686 = vld [vmem:[%s1 + $0xa68] sm:$0xf]
  %v687 = vld [vmem:[%s1 + $0xa6c] sm:$0xf]
  %v688 = vld [vmem:[%s1 + $0xa70] sm:$0xf]
  %v689 = vld [vmem:[%s1 + $0xa74] sm:$0xf]
  %v690 = vld [vmem:[%s1 + $0xa78] sm:$0xf]
  %v691 = vld [vmem:[%s1 + $0xa7c] sm:$0xf]
  %v692 = vld [vmem:[%s1 + $0xa80] sm:$0xf]
  %v693 = vld [vmem:[%s1 + $0xa84] sm:$0xf]
  %v694 = vld [vmem:[%s1 + $0xa88] sm:$0xf]
  %v695 = vld [vmem:[%s1 + $0xa8c] sm:$0xf]
  %v696 = vld [vmem:[%s1 + $0xa90] sm:$0xf]
  %v697 = vld [vmem:[%s1 + $0xa94] sm:$0xf]
  %v698 = vld [vmem:[%s1 + $0xa98] sm:$0xf]
  %v699 = vld [vmem:[%s1 + $0xa9c] sm:$0xf]
  %v700 = vld [vmem:[%s1 + $0xaa0] sm:$0xf]
  %v701 = vld [vmem:[%s1 + $0xaa4] sm:$0xf]
  %v702 = vld [vmem:[%s1 + $0xaa8] sm:$0xf]
  %v703 = vld [vmem:[%s1 + $0xaac] sm:$0xf]
  %v704 = vld [vmem:[%s1 + $0xab0] sm:$0xf]
  %v705 = vld [vmem:[%s1 + $0xab4] sm:$0xf]
  %v706 = vld [vmem:[%s1 + $0xab8] sm:$0xf]
  %v707 = vld [vmem:[%s1 + $0xabc] sm:$0xf]
  %v708 = vld [vmem:[%s1 + $0xac0] sm:$0xf]
  %v709 = vld [vmem:[%s1 + $0xac4] sm:$0xf]
  %v710 = vld [vmem:[%s1 + $0xac8] sm:$0xf]
  %v711 = vld [vmem:[%s1 + $0xacc] sm:$0xf]
  %v712 = vld [vmem:[%s1 + $0xad0] sm:$0xf]
  %v713 = vld [vmem:[%s1 + $0xad4] sm:$0xf]
  %v714 = vld [vmem:[%s1 + $0xad8] sm:$0xf]
  %v715 = vld [vmem:[%s1 + $0xadc] sm:$0xf]
  %v716 = vld [vmem:[%s1 + $0xae0] sm:$0xf]
  %v717 = vld [vmem:[%s1 + $0xae4] sm:$0xf]
  %v718 = vld [vmem:[%s1 + $0xae8] sm:$0xf]
  %v719 = vld [vmem:[%s1 + $0xaec] sm:$0xf]
  %v720 = vld [vmem:[%s1 + $0xaf0] sm:$0xf]
  %v721 = vld [vmem:[%s1 + $0xaf4] sm:$0xf]
  %v722 = vld [vmem:[%s1 + $0xaf8] sm:$0xf]
  %v723 = vld [vmem:[%s1 + $0xafc] sm:$0xf]
  %v724 = vld [vmem:[%s1 + $0xb00] sm:$0xf]
  %v725 = vld [vmem:[%s1 + $0xb04] sm:$0xf]
  %v726 = vld [vmem:[%s1 + $0xb08] sm:$0xf]
  %v727 = vld [vmem:[%s1 + $0xb0c] sm:$0xf]
  %v728 = vld [vmem:[%s1 + $0xb10] sm:$0xf]
  %v729 = vld [vmem:[%s1 + $0xb14] sm:$0xf]
  %v730 = vld [vmem:[%s1 + $0xb18] sm:$0xf]
  %v731 = vld [vmem:[%s1 + $0xb1c] sm:$0xf]
  %v732 = vld [vmem:[%s1 + $0xb20] sm:$0xf]
  %v733 = vld [vmem:[%s1 + $0xb24] sm:$0xf]
  %v734 = vld [vmem:[%s1 + $0xb28] sm:$0xf]
  %v735 = vld [vmem:[%s1 + $0xb2c] sm:$0xf]
  %v736 = vld [vmem:[%s1 + $0xb30] sm:$0xf]
  %v737 = vld [vmem:[%s1 + $0xb34] sm:$0xf]
  %v738 = vld [vmem:[%s1 + $0xb38] sm:$0xf]
  %v739 = vld [vmem:[%s1 + $0xb3c] sm:$0xf]
  %v740 = vld [vmem:[%s1 + $0xb40] sm:$0xf]
  %v741 = vld [vmem:[%s1 + $0xb44] sm:$0xf]
  %v742 = vld [vmem:[%s1 + $0xb48] sm:$0xf]
  %v743 = vld [vmem:[%s1 + $0xb4c] sm:$0xf]
  %v744 = vld [vmem:[%s1 + $0xb50] sm:$0xf]
  %v745 = vld [vmem:[%s1 + $0xb54] sm:$0xf]
  %v746 = vld [vmem:[%s1 + $0xb58] sm:$0xf]
  %v747 = vld [vmem:[%s1 + $0xb5c] sm:$0xf]
  %v748 = vld [vmem:[%s1 + $0xb60] sm:$0xf]
  %v749 = vld [vmem:[%s1 + $0xb64] sm:$0xf]
  %v750 = vld [vmem:[%s1 + $0xb68] sm:$0xf]
  %v751 = vld [vmem:[%s1 + $0xb6c] sm:$0xf]
  %v752 = vld [vmem:[%s1 + $0xb70] sm:$0xf]
  %v753 = vld [vmem:[%s1 + $0xb74] sm:$0xf]
  %v754 = vld [vmem:[%s1 + $0xb78] sm:$0xf]
  %v755 = vld [vmem:[%s1 + $0xb7c] sm:$0xf]
  %v756 = vld [vmem:[%s1 + $0xb80] sm:$0xf]
  %v757 = vld [vmem:[%s1 + $0xb84] sm:$0xf]
  %v758 = vld [vmem:[%s1 + $0xb88] sm:$0xf]
  %v759 = vld [vmem:[%s1 + $0xb8c] sm:$0xf]
  %v760 = vld [vmem:[%s1 + $0xb90] sm:$0xf]
  %v761 = vld [vmem:[%s1 + $0xb94] sm:$0xf]
  %v762 = vld [vmem:[%s1 + $0xb98] sm:$0xf]
  %v763 = vld [vmem:[%s1 + $0xb9c] sm:$0xf]
  %v764 = vld [vmem:[%s1 + $0xba0] sm:$0xf]
  %v765 = vld [vmem:[%s1 + $0xba4] sm:$0xf]
  %v766 = vld [vmem:[%s1 + $0xba8] sm:$0xf]
  %v767 = vld [vmem:[%s1 + $0xbac] sm:$0xf]
  %v768 = vld [vmem:[%s1 + $0xbb0] sm:$0xf]
  %v769 = vld [vmem:[%s1 + $0xbb4] sm:$0xf]
  %v770 = vld [vmem:[%s1 + $0xbb8] sm:$0xf]
  %v771 = vld [vmem:[%s1 + $0xbbc] sm:$0xf]
  %v772 = vld [vmem:[%s1 + $0xbc0] sm:$0xf]
  %v773 = vld [vmem:[%s1 + $0xbc4] sm:$0xf]
  %v774 = vld [vmem:[%s1 + $0xbc8] sm:$0xf]
  %v775 = vld [vmem:[%s1 + $0xbcc] sm:$0xf]
  %v776 = vld [vmem:[%s1 + $0xbd0] sm:$0xf]
  %v777 = vld [vmem:[%s1 + $0xbd4] sm:$0xf]
  %v778 = vld [vmem:[%s1 + $0xbd8] sm:$0xf]
  %v779 = vld [vmem:[%s1 + $0xbdc] sm:$0xf]
  %v780 = vld [vmem:[%s1 + $0xbe0] sm:$0xf]
  %v781 = vld [vmem:[%s1 + $0xbe4] sm:$0xf]
  %v782 = vld [vmem:[%s1 + $0xbe8] sm:$0xf]
  %v783 = vld [vmem:[%s1 + $0xbec] sm:$0xf]
  %v784 = vld [vmem:[%s1 + $0xbf0] sm:$0xf]
  %v785 = vld [vmem:[%s1 + $0xbf4] sm:$0xf]
  %v786 = vld [vmem:[%s1 + $0xbf8] sm:$0xf]
  %v787 = vld [vmem:[%s1 + $0xbfc] sm:$0xf]
  %v788 = vld [vmem:[%s1 + $0xc00] sm:$0xf]
  %v789 = vld [vmem:[%s1 + $0xc04] sm:$0xf]
  %v790 = vld [vmem:[%s1 + $0xc08] sm:$0xf]
  %v791 = vld [vmem:[%s1 + $0xc0c] sm:$0xf]
  %v792 = vld [vmem:[%s1 + $0xc10] sm:$0xf]
  %v793 = vld [vmem:[%s1 + $0xc14] sm:$0xf]
  %v794 = vld [vmem:[%s1 + $0xc18] sm:$0xf]
  %v795 = vld [vmem:[%s1 + $0xc1c] sm:$0xf]
  %v796 = vld [vmem:[%s1 + $0xc20] sm:$0xf]
  %v797 = vld [vmem:[%s1 + $0xc24] sm:$0xf]
  %v798 = vld [vmem:[%s1 + $0xc28] sm:$0xf]
  %v799 = vld [vmem:[%s1 + $0xc2c] sm:$0xf]
  %v800 = vld [vmem:[%s1 + $0xc30] sm:$0xf]
  %v801 = vld [vmem:[%s1 + $0xc34] sm:$0xf]
  %v802 = vld [vmem:[%s1 + $0xc38] sm:$0xf]
  %v803 = vld [vmem:[%s1 + $0xc3c] sm:$0xf]
  %v804 = vld [vmem:[%s1 + $0xc40] sm:$0xf]
  %v805 = vld [vmem:[%s1 + $0xc44] sm:$0xf]
  %v806 = vld [vmem:[%s1 + $0xc48] sm:$0xf]
  %v807 = vld [vmem:[%s1 + $0xc4c] sm:$0xf]
  %v808 = vld [vmem:[%s1 + $0xc50] sm:$0xf]
  %v809 = vld [vmem:[%s1 + $0xc54] sm:$0xf]
  %v810 = vld [vmem:[%s1 + $0xc58] sm:$0xf]
  %v811 = vld [vmem:[%s1 + $0xc5c] sm:$0xf]
  %v812 = vld [vmem:[%s1 + $0xc60] sm:$0xf]
  %v813 = vld [vmem:[%s1 + $0xc64] sm:$0xf]
  %v814 = vld [vmem:[%s1 + $0xc68] sm:$0xf]
  %v815 = vld [vmem:[%s1 + $0xc6c] sm:$0xf]
  %v816 = vld [vmem:[%s1 + $0xc70] sm:$0xf]
  %v817 = vld [vmem:[%s1 + $0xc74] sm:$0xf]
  %v818 = vld [vmem:[%s1 + $0xc78] sm:$0xf]
  %v819 = vld [vmem:[%s1 + $0xc7c] sm:$0xf]
  %v820 = vld [vmem:[%s1 + $0xc80] sm:$0xf]
  %v821 = vld [vmem:[%s1 + $0xc84] sm:$0xf]
  %v822 = vld [vmem:[%s1 + $0xc88] sm:$0xf]
  %v823 = vld [vmem:[%s1 + $0xc8c] sm:$0xf]
  %v824 = vld [vmem:[%s1 + $0xc90] sm:$0xf]
  %v825 = vld [vmem:[%s1 + $0xc94] sm:$0xf]
  %v826 = vld [vmem:[%s1 + $0xc98] sm:$0xf]
  %v827 = vld [vmem:[%s1 + $0xc9c] sm:$0xf]
  %v828 = vld [vmem:[%s1 + $0xca0] sm:$0xf]
  %v829 = vld [vmem:[%s1 + $0xca4] sm:$0xf]
  %v830 = vld [vmem:[%s1 + $0xca8] sm:$0xf]
  %v831 = vld [vmem:[%s1 + $0xcac] sm:$0xf]
  %v832 = vld [vmem:[%s1 + $0xcb0] sm:$0xf]
  %v833 = vld [vmem:[%s1 + $0xcb4] sm:$0xf]
  %v834 = vld [vmem:[%s1 + $0xcb8] sm:$0xf]
  %v835 = vld [vmem:[%s1 + $0xcbc] sm:$0xf]
  %v836 = vld [vmem:[%s1 + $0xcc0] sm:$0xf]
  %v837 = vld [vmem:[%s1 + $0xcc4] sm:$0xf]
  %v838 = vld [vmem:[%s1 + $0xcc8] sm:$0xf]
  %v839 = vld [vmem:[%s1 + $0xccc] sm:$0xf]
  %v840 = vld [vmem:[%s1 + $0xcd0] sm:$0xf]
  %v841 = vld [vmem:[%s1 + $0xcd4] sm:$0xf]
  %v842 = vld [vmem:[%s1 + $0xcd8] sm:$0xf]
  %v843 = vld [vmem:[%s1 + $0xcdc] sm:$0xf]
  %v844 = vld [vmem:[%s1 + $0xce0] sm:$0xf]
  %v845 = vld [vmem:[%s1 + $0xce4] sm:$0xf]
  %v846 = vld [vmem:[%s1 + $0xce8] sm:$0xf]
  %v847 = vld [vmem:[%s1 + $0xcec] sm:$0xf]
  %v848 = vld [vmem:[%s1 + $0xcf0] sm:$0xf]
  %v849 = vld [vmem:[%s1 + $0xcf4] sm:$0xf]
  %v850 = vld [vmem:[%s1 + $0xcf8] sm:$0xf]
  %v851 = vld [vmem:[%s1 + $0xcfc] sm:$0xf]
  %v852 = vld [vmem:[%s1 + $0xd00] sm:$0xf]
  %v853 = vld [vmem:[%s1 + $0xd04] sm:$0xf]
  %v854 = vld [vmem:[%s1 + $0xd08] sm:$0xf]
  %v855 = vld [vmem:[%s1 + $0xd0c] sm:$0xf]
  %v856 = vld [vmem:[%s1 + $0xd10] sm:$0xf]
  %v857 = vld [vmem:[%s1 + $0xd14] sm:$0xf]
  %v858 = vld [vmem:[%s1 + $0xd18] sm:$0xf]
  %v859 = vld [vmem:[%s1 + $0xd1c] sm:$0xf]
  %v860 = vld [vmem:[%s1 + $0xd20] sm:$0xf]
  %v861 = vld [vmem:[%s1 + $0xd24] sm:$0xf]
  %v862 = vld [vmem:[%s1 + $0xd28] sm:$0xf]
  %v863 = vld [vmem:[%s1 + $0xd2c] sm:$0xf]
  %v864 = vld [vmem:[%s1 + $0xd30] sm:$0xf]
  %v865 = vld [vmem:[%s1 + $0xd34] sm:$0xf]
  %v866 = vld [vmem:[%s1 + $0xd38] sm:$0xf]
  %v867 = vld [vmem:[%s1 + $0xd3c] sm:$0xf]
  %v868 = vld [vmem:[%s1 + $0xd40] sm:$0xf]
  %v869 = vld [vmem:[%s1 + $0xd44] sm:$0xf]
  %v870 = vld [vmem:[%s1 + $0xd48] sm:$0xf]
  %v871 = vld [vmem:[%s1 + $0xd4c] sm:$0xf]
  %v872 = vld [vmem:[%s1 + $0xd50] sm:$0xf]
  %v873 = vld [vmem:[%s1 + $0xd54] sm:$0xf]
  %v874 = vld [vmem:[%s1 + $0xd58] sm:$0xf]
  %v875 = vld [vmem:[%s1 + $0xd5c] sm:$0xf]
  %v876 = vld [vmem:[%s1 + $0xd60] sm:$0xf]
  %v877 = vld [vmem:[%s1 + $0xd64] sm:$0xf]
  %v878 = vld [vmem:[%s1 + $0xd68] sm:$0xf]
  %v879 = vld [vmem:[%s1 + $0xd6c] sm:$0xf]
  %v880 = vld [vmem:[%s1 + $0xd70] sm:$0xf]
  %v881 = vld [vmem:[%s1 + $0xd74] sm:$0xf]
  %v882 = vld [vmem:[%s1 + $0xd78] sm:$0xf]
  %v883 = vld [vmem:[%s1 + $0xd7c] sm:$0xf]
  %v884 = vld [vmem:[%s1 + $0xd80] sm:$0xf]
  %v885 = vld [vmem:[%s1 + $0xd84] sm:$0xf]
  %v886 = vld [vmem:[%s1 + $0xd88] sm:$0xf]
  %v887 = vld [vmem:[%s1 + $0xd8c] sm:$0xf]
  %v888 = vld [vmem:[%s1 + $0xd90] sm:$0xf]
  %v889 = vld [vmem:[%s1 + $0xd94] sm:$0xf]
  %v890 = vld [vmem:[%s1 + $0xd98] sm:$0xf]
  %v891 = vld [vmem:[%s1 + $0xd9c] sm:$0xf]
  %v892 = vld [vmem:[%s1 + $0xda0] sm:$0xf]
  %v893 = vld [vmem:[%s1 + $0xda4] sm:$0xf]
  %v894 = vld [vmem:[%s1 + $0xda8] sm:$0xf]
  %v895 = vld [vmem:[%s1 + $0xdac] sm:$0xf]
  %v896 = vld [vmem:[%s1 + $0xdb0] sm:$0xf]
  %v897 = vld [vmem:[%s1 + $0xdb4] sm:$0xf]
  %v898 = vld [vmem:[%s1 + $0xdb8] sm:$0xf]
  %v899 = vld [vmem:[%s1 + $0xdbc] sm:$0xf]
  %v900 = vld [vmem:[%s1 + $0xdc0] sm:$0xf]
  %v901 = vld [vmem:[%s1 + $0xdc4] sm:$0xf]
  %v902 = vld [vmem:[%s1 + $0xdc8] sm:$0xf]
  %v903 = vld [vmem:[%s1 + $0xdcc] sm:$0xf]
  %v904 = vld [vmem:[%s1 + $0xdd0] sm:$0xf]
  %v905 = vld [vmem:[%s1 + $0xdd4] sm:$0xf]
  %v906 = vld [vmem:[%s1 + $0xdd8] sm:$0xf]
  %v907 = vld [vmem:[%s1 + $0xddc] sm:$0xf]
  %v908 = vld [vmem:[%s1 + $0xde0] sm:$0xf]
  %v909 = vld [vmem:[%s1 + $0xde4] sm:$0xf]
  %v910 = vld [vmem:[%s1 + $0xde8] sm:$0xf]
  %v911 = vld [vmem:[%s1 + $0xdec] sm:$0xf]
  %v912 = vld [vmem:[%s1 + $0xdf0] sm:$0xf]
  %v913 = vld [vmem:[%s1 + $0xdf4] sm:$0xf]
  %v914 = vld [vmem:[%s1 + $0xdf8] sm:$0xf]
  %v915 = vld [vmem:[%s1 + $0xdfc] sm:$0xf]
  %v916 = vld [vmem:[%s1 + $0xe00] sm:$0xf]
  %v917 = vld [vmem:[%s1 + $0xe04] sm:$0xf]
  %v918 = vld [vmem:[%s1 + $0xe08] sm:$0xf]
  %v919 = vld [vmem:[%s1 + $0xe0c] sm:$0xf]
  %v920 = vld [vmem:[%s1 + $0xe10] sm:$0xf]
  %v921 = vld [vmem:[%s1 + $0xe14] sm:$0xf]
  %v922 = vld [vmem:[%s1 + $0xe18] sm:$0xf]
  %v923 = vld [vmem:[%s1 + $0xe1c] sm:$0xf]
  %v924 = vld [vmem:[%s1 + $0xe20] sm:$0xf]
  %v925 = vld [vmem:[%s1 + $0xe24] sm:$0xf]
  %v926 = vld [vmem:[%s1 + $0xe28] sm:$0xf]
  %v927 = vld [vmem:[%s1 + $0xe2c] sm:$0xf]
  %v928 = vld [vmem:[%s1 + $0xe30] sm:$0xf]
  %v929 = vld [vmem:[%s1 + $0xe34] sm:$0xf]
  %v930 = vld [vmem:[%s1 + $0xe38] sm:$0xf]
  %v931 = vld [vmem:[%s1 + $0xe3c] sm:$0xf]
  %v932 = vld [vmem:[%s1 + $0xe40] sm:$0xf]
  %v933 = vld [vmem:[%s1 + $0xe44] sm:$0xf]
  %v934 = vld [vmem:[%s1 + $0xe48] sm:$0xf]
  %v935 = vld [vmem:[%s1 + $0xe4c] sm:$0xf]
  %v936 = vld [vmem:[%s1 + $0xe50] sm:$0xf]
  %v937 = vld [vmem:[%s1 + $0xe54] sm:$0xf]
  %v938 = vld [vmem:[%s1 + $0xe58] sm:$0xf]
  %v939 = vld [vmem:[%s1 + $0xe5c] sm:$0xf]
  %v940 = vld [vmem:[%s1 + $0xe60] sm:$0xf]
  %v941 = vld [vmem:[%s1 + $0xe64] sm:$0xf]
  %v942 = vld [vmem:[%s1 + $0xe68] sm:$0xf]
  %v943 = vld [vmem:[%s1 + $0xe6c] sm:$0xf]
  %v944 = vld [vmem:[%s1 + $0xe70] sm:$0xf]
  %v945 = vld [vmem:[%s1 + $0xe74] sm:$0xf]
  %v946 = vld [vmem:[%s1 + $0xe78] sm:$0xf]
  %v947 = vld [vmem:[%s1 + $0xe7c] sm:$0xf]
  %v948 = vld [vmem:[%s1 + $0xe80] sm:$0xf]
  %v949 = vld [vmem:[%s1 + $0xe84] sm:$0xf]
  %v950 = vld [vmem:[%s1 + $0xe88] sm:$0xf]
  %v951 = vld [vmem:[%s1 + $0xe8c] sm:$0xf]
  %v952 = vld [vmem:[%s1 + $0xe90] sm:$0xf]
  %v953 = vld [vmem:[%s1 + $0xe94] sm:$0xf]
  %v954 = vld [vmem:[%s1 + $0xe98] sm:$0xf]
  %v955 = vld [vmem:[%s1 + $0xe9c] sm:$0xf]
  %v956 = vld [vmem:[%s1 + $0xea0] sm:$0xf]
  %v957 = vld [vmem:[%s1 + $0xea4] sm:$0xf]
  %v958 = vld [vmem:[%s1 + $0xea8] sm:$0xf]
  %v959 = vld [vmem:[%s1 + $0xeac] sm:$0xf]
  %v960 = vld [vmem:[%s1 + $0xeb0] sm:$0xf]
  %v961 = vld [vmem:[%s1 + $0xeb4] sm:$0xf]
  %v962 = vld [vmem:[%s1 + $0xeb8] sm:$0xf]
  %v963 = vld [vmem:[%s1 + $0xebc] sm:$0xf]
  %v964 = vld [vmem:[%s1 + $0xec0] sm:$0xf]
  %v965 = vld [vmem:[%s1 + $0xec4] sm:$0xf]
  %v966 = vld [vmem:[%s1 + $0xec8] sm:$0xf]
  %v967 = vld [vmem:[%s1 + $0xecc] sm:$0xf]
  %v968 = vld [vmem:[%s1 + $0xed0] sm:$0xf]
  %v969 = vld [vmem:[%s1 + $0xed4] sm:$0xf]
  %v970 = vld [vmem:[%s1 + $0xed8] sm:$0xf]
  %v971 = vld [vmem:[%s1 + $0xedc] sm:$0xf]
  %v972 = vld [vmem:[%s1 + $0xee0] sm:$0xf]
  %v973 = vld [vmem:[%s1 + $0xee4] sm:$0xf]
  %v974 = vld [vmem:[%s1 + $0xee8] sm:$0xf]
  %v975 = vld [vmem:[%s1 + $0xeec] sm:$0xf]
  %v976 = vld [vmem:[%s1 + $0xef0] sm:$0xf]
  %v977 = vld [vmem:[%s1 + $0xef4] sm:$0xf]
  %v978 = vld [vmem:[%s1 + $0xef8] sm:$0xf]
  %v979 = vld [vmem:[%s1 + $0xefc] sm:$0xf]
  %v980 = vld [vmem:[%s1 + $0xf00] sm:$0xf]
  %v981 = vld [vmem:[%s1 + $0xf04] sm:$0xf]
  %v982 = vld [vmem:[%s1 + $0xf08] sm:$0xf]
  %v983 = vld [vmem:[%s1 + $0xf0c] sm:$0xf]
  %v984 = vld [vmem:[%s1 + $0xf10] sm:$0xf]
  %v985 = vld [vmem:[%s1 + $0xf14] sm:$0xf]
  %v986 = vld [vmem:[%s1 + $0xf18] sm:$0xf]
  %v987 = vld [vmem:[%s1 + $0xf1c] sm:$0xf]
  %v988 = vld [vmem:[%s1 + $0xf20] sm:$0xf]
  %v989 = vld [vmem:[%s1 + $0xf24] sm:$0xf]
  %v990 = vld [vmem:[%s1 + $0xf28] sm:$0xf]
  %v991 = vld [vmem:[%s1 + $0xf2c] sm:$0xf]
  %v992 = vld [vmem:[%s1 + $0xf30] sm:$0xf]
  %v993 = vld [vmem:[%s1 + $0xf34] sm:$0xf]
  %v994 = vld [vmem:[%s1 + $0xf38] sm:$0xf]
  %v995 = vld [vmem:[%s1 + $0xf3c] sm:$0xf]
  %v996 = vld [vmem:[%s1 + $0xf40] sm:$0xf]
  %v997 = vld [vmem:[%s1 + $0xf44] sm:$0xf]
  %v998 = vld [vmem:[%s1 + $0xf48] sm:$0xf]
  %v999 = vld [vmem:[%s1 + $0xf4c] sm:$0xf]
  %v1000 = vld [vmem:[%s1 + $0xf50] sm:$0xf]
  %v1001 = vld [vmem:[%s1 + $0xf54] sm:$0xf]
  %v1002 = vld [vmem:[%s1 + $0xf58] sm:$0xf]
  %v1003 = vld [vmem:[%s1 + $0xf5c] sm:$0xf]
  %v1004 = vld [vmem:[%s1 + $0xf60] sm:$0xf]
  %v1005 = vld [vmem:[%s1 + $0xf64] sm:$0xf]
  %v1006 = vld [vmem:[%s1 + $0xf68] sm:$0xf]
  %v1007 = vld [vmem:[%s1 + $0xf6c] sm:$0xf]
  %v1008 = vld [vmem:[%s1 + $0xf70] sm:$0xf]
  %v1009 = vld [vmem:[%s1 + $0xf74] sm:$0xf]
  %v1010 = vld [vmem:[%s1 + $0xf78] sm:$0xf]
  %v1011 = vld [vmem:[%s1 + $0xf7c] sm:$0xf]
  %v1012 = vld [vmem:[%s1 + $0xf80] sm:$0xf]
  %v1013 = vld [vmem:[%s1 + $0xf84] sm:$0xf]
  %v1014 = vld [vmem:[%s1 + $0xf88] sm:$0xf]
  %v1015 = vld [vmem:[%s1 + $0xf8c] sm:$0xf]
  %v1016 = vld [vmem:[%s1 + $0xf90] sm:$0xf]
  %v1017 = vld [vmem:[%s1 + $0xf94] sm:$0xf]
  %v1018 = vld [vmem:[%s1 + $0xf98] sm:$0xf]
  %v1019 = vld [vmem:[%s1 + $0xf9c] sm:$0xf]
  %v1020 = vld [vmem:[%s1 + $0xfa0] sm:$0xf]
  %v1021 = vld [vmem:[%s1 + $0xfa4] sm:$0xf]
  %v1022 = vld [vmem:[%s1 + $0xfa8] sm:$0xf]
  %v1023 = vld [vmem:[%s1 + $0xfac] sm:$0xf]
  %v1024 = vld [vmem:[%s1 + $0xfb0] sm:$0xf]
  %v1025 = vld [vmem:[%s1 + $0xfb4] sm:$0xf]
  %v1026 = vld [vmem:[%s1 + $0xfb8] sm:$0xf]
  %v1027 = vld [vmem:[%s1 + $0xfbc] sm:$0xf]
  %v1028 = vld [vmem:[%s1 + $0xfc0] sm:$0xf]
  %v1029 = vld [vmem:[%s1 + $0xfc4] sm:$0xf]
  %v1030 = vld [vmem:[%s1 + $0xfc8] sm:$0xf]
  %v1031 = vld [vmem:[%s1 + $0xfcc] sm:$0xf]
  %v1032 = vld [vmem:[%s1 + $0xfd0] sm:$0xf]
  %v1033 = vld [vmem:[%s1 + $0xfd4] sm:$0xf]
  %v1034 = vld [vmem:[%s1 + $0xfd8] sm:$0xf]
  %v1035 = vld [vmem:[%s1 + $0xfdc] sm:$0xf]
  %v1036 = vld [vmem:[%s1 + $0xfe0] sm:$0xf]
  %v1037 = vld [vmem:[%s1 + $0xfe4] sm:$0xf]
  %v1038 = vld [vmem:[%s1 + $0xfe8] sm:$0xf]
  %v1039 = vld [vmem:[%s1 + $0xfec] sm:$0xf]
  %v1040 = vld [vmem:[%s1 + $0xff0] sm:$0xf]
  %v1041 = vld [vmem:[%s1 + $0xff4] sm:$0xf]
  %v1042 = vld [vmem:[%s1 + $0xff8] sm:$0xf]
  %v1043 = vld [vmem:[%s1 + $0xffc] sm:$0xf]
  %v1052 = vcombine.high %v12, %v12
  %v1054 = vunpack.c.l.s4 1966171168
  %v1055 = vunpack.c.0.s8 %v1054
  %v1056 = vlaneseq
  %v1057 = vshrl.u32 %v1056, 7
  %v1058 = vsub.s32 %v1055, %v1057
  %v1059 = vrot.slane %v12, %v1058
  %v1061 = vunpack.c.l.s4 1966171168
  %v1062 = vunpack.c.0.s8 %v1061
  %v1063 = vlaneseq
  %v1064 = vshrl.u32 %v1063, 7
  %v1065 = vsub.s32 %v1062, %v1064
  %v1066 = vrot.slane %v1052, %v1065
  %v1067 = vcombine.high %v1059, %v1059
  %v1068 = vcombine.high %v1066, %v1066
  %v1070 = vunpack.c.l.s4 1966171168
  %v1071 = vunpack.c.0.s8 %v1070
  %v1072 = vlaneseq
  %v1073 = vshrl.u32 %v1072, 7
  %v1074 = vsub.s32 %v1071, %v1073
  %v1075 = vrot.slane %v1059, %v1074
  %v1077 = vunpack.c.l.s4 1966171168
  %v1078 = vunpack.c.0.s8 %v1077
  %v1079 = vlaneseq
  %v1080 = vshrl.u32 %v1079, 7
  %v1081 = vsub.s32 %v1078, %v1080
  %v1082 = vrot.slane %v1066, %v1081
  %v1084 = vunpack.c.l.s4 1966171168
  %v1085 = vunpack.c.0.s8 %v1084
  %v1086 = vlaneseq
  %v1087 = vshrl.u32 %v1086, 7
  %v1088 = vsub.s32 %v1085, %v1087
  %v1089 = vrot.slane %v1067, %v1088
  %v1091 = vunpack.c.l.s4 1966171168
  %v1092 = vunpack.c.0.s8 %v1091
  %v1093 = vlaneseq
  %v1094 = vshrl.u32 %v1093, 7
  %v1095 = vsub.s32 %v1092, %v1094
  %v1096 = vrot.slane %v1068, %v1095
  %v1097 = vcombine.high %v1075, %v1075
  %v1098 = vcombine.high %v1082, %v1082
  %v1099 = vcombine.high %v1089, %v1089
  %v1100 = vcombine.high %v1096, %v1096
  %v1101 = vcombine.high %v13, %v13
  %v1103 = vunpack.c.l.s4 1966171168
  %v1104 = vunpack.c.0.s8 %v1103
  %v1105 = vlaneseq
  %v1106 = vshrl.u32 %v1105, 7
  %v1107 = vsub.s32 %v1104, %v1106
  %v1108 = vrot.slane %v13, %v1107
  %v1110 = vunpack.c.l.s4 1966171168
  %v1111 = vunpack.c.0.s8 %v1110
  %v1112 = vlaneseq
  %v1113 = vshrl.u32 %v1112, 7
  %v1114 = vsub.s32 %v1111, %v1113
  %v1115 = vrot.slane %v1101, %v1114
  %v1116 = vcombine.high %v1108, %v1108
  %v1117 = vcombine.high %v1115, %v1115
  %v1119 = vunpack.c.l.s4 1966171168
  %v1120 = vunpack.c.0.s8 %v1119
  %v1121 = vlaneseq
  %v1122 = vshrl.u32 %v1121, 7
  %v1123 = vsub.s32 %v1120, %v1122
  %v1124 = vrot.slane %v1108, %v1123
  %v1126 = vunpack.c.l.s4 1966171168
  %v1127 = vunpack.c.0.s8 %v1126
  %v1128 = vlaneseq
  %v1129 = vshrl.u32 %v1128, 7
  %v1130 = vsub.s32 %v1127, %v1129
  %v1131 = vrot.slane %v1115, %v1130
  %v1133 = vunpack.c.l.s4 1966171168
  %v1134 = vunpack.c.0.s8 %v1133
  %v1135 = vlaneseq
  %v1136 = vshrl.u32 %v1135, 7
  %v1137 = vsub.s32 %v1134, %v1136
  %v1138 = vrot.slane %v1116, %v1137
  %v1140 = vunpack.c.l.s4 1966171168
  %v1141 = vunpack.c.0.s8 %v1140
  %v1142 = vlaneseq
  %v1143 = vshrl.u32 %v1142, 7
  %v1144 = vsub.s32 %v1141, %v1143
  %v1145 = vrot.slane %v1117, %v1144
  %v1146 = vcombine.high %v1124, %v1124
  %v1147 = vcombine.high %v1131, %v1131
  %v1148 = vcombine.high %v1138, %v1138
  %v1149 = vcombine.high %v1145, %v1145
  %v1150 = vcombine.high %v14, %v14
  %v1152 = vunpack.c.l.s4 1966171168
  %v1153 = vunpack.c.0.s8 %v1152
  %v1154 = vlaneseq
  %v1155 = vshrl.u32 %v1154, 7
  %v1156 = vsub.s32 %v1153, %v1155
  %v1157 = vrot.slane %v14, %v1156
  %v1159 = vunpack.c.l.s4 1966171168
  %v1160 = vunpack.c.0.s8 %v1159
  %v1161 = vlaneseq
  %v1162 = vshrl.u32 %v1161, 7
  %v1163 = vsub.s32 %v1160, %v1162
  %v1164 = vrot.slane %v1150, %v1163
  %v1165 = vcombine.high %v1157, %v1157
  %v1166 = vcombine.high %v1164, %v1164
  %v1168 = vunpack.c.l.s4 1966171168
  %v1169 = vunpack.c.0.s8 %v1168
  %v1170 = vlaneseq
  %v1171 = vshrl.u32 %v1170, 7
  %v1172 = vsub.s32 %v1169, %v1171
  %v1173 = vrot.slane %v1157, %v1172
  %v1175 = vunpack.c.l.s4 1966171168
  %v1176 = vunpack.c.0.s8 %v1175
  %v1177 = vlaneseq
  %v1178 = vshrl.u32 %v1177, 7
  %v1179 = vsub.s32 %v1176, %v1178
  %v1180 = vrot.slane %v1164, %v1179
  %v1182 = vunpack.c.l.s4 1966171168
  %v1183 = vunpack.c.0.s8 %v1182
  %v1184 = vlaneseq
  %v1185 = vshrl.u32 %v1184, 7
  %v1186 = vsub.s32 %v1183, %v1185
  %v1187 = vrot.slane %v1165, %v1186
  %v1189 = vunpack.c.l.s4 1966171168
  %v1190 = vunpack.c.0.s8 %v1189
  %v1191 = vlaneseq
  %v1192 = vshrl.u32 %v1191, 7
  %v1193 = vsub.s32 %v1190, %v1192
  %v1194 = vrot.slane %v1166, %v1193
  %v1195 = vcombine.high %v1173, %v1173
  %v1196 = vcombine.high %v1180, %v1180
  %v1197 = vcombine.high %v1187, %v1187
  %v1198 = vcombine.high %v1194, %v1194
  %v1199 = vcombine.high %v15, %v15
  %v1201 = vunpack.c.l.s4 1966171168
  %v1202 = vunpack.c.0.s8 %v1201
  %v1203 = vlaneseq
  %v1204 = vshrl.u32 %v1203, 7
  %v1205 = vsub.s32 %v1202, %v1204
  %v1206 = vrot.slane %v15, %v1205
  %v1208 = vunpack.c.l.s4 1966171168
  %v1209 = vunpack.c.0.s8 %v1208
  %v1210 = vlaneseq
  %v1211 = vshrl.u32 %v1210, 7
  %v1212 = vsub.s32 %v1209, %v1211
  %v1213 = vrot.slane %v1199, %v1212
  %v1214 = vcombine.high %v1206, %v1206
  %v1215 = vcombine.high %v1213, %v1213
  %v1217 = vunpack.c.l.s4 1966171168
  %v1218 = vunpack.c.0.s8 %v1217
  %v1219 = vlaneseq
  %v1220 = vshrl.u32 %v1219, 7
  %v1221 = vsub.s32 %v1218, %v1220
  %v1222 = vrot.slane %v1206, %v1221
  %v1224 = vunpack.c.l.s4 1966171168
  %v1225 = vunpack.c.0.s8 %v1224
  %v1226 = vlaneseq
  %v1227 = vshrl.u32 %v1226, 7
  %v1228 = vsub.s32 %v1225, %v1227
  %v1229 = vrot.slane %v1213, %v1228
  %v1231 = vunpack.c.l.s4 1966171168
  %v1232 = vunpack.c.0.s8 %v1231
  %v1233 = vlaneseq
  %v1234 = vshrl.u32 %v1233, 7
  %v1235 = vsub.s32 %v1232, %v1234
  %v1236 = vrot.slane %v1214, %v1235
  %v1238 = vunpack.c.l.s4 1966171168
  %v1239 = vunpack.c.0.s8 %v1238
  %v1240 = vlaneseq
  %v1241 = vshrl.u32 %v1240, 7
  %v1242 = vsub.s32 %v1239, %v1241
  %v1243 = vrot.slane %v1215, %v1242
  %v1244 = vcombine.high %v1222, %v1222
  %v1245 = vcombine.high %v1229, %v1229
  %v1246 = vcombine.high %v1236, %v1236
  %v1247 = vcombine.high %v1243, %v1243
  %v1248 = vcombine.high %v16, %v16
  %v1250 = vunpack.c.l.s4 1966171168
  %v1251 = vunpack.c.0.s8 %v1250
  %v1252 = vlaneseq
  %v1253 = vshrl.u32 %v1252, 7
  %v1254 = vsub.s32 %v1251, %v1253
  %v1255 = vrot.slane %v16, %v1254
  %v1257 = vunpack.c.l.s4 1966171168
  %v1258 = vunpack.c.0.s8 %v1257
  %v1259 = vlaneseq
  %v1260 = vshrl.u32 %v1259, 7
  %v1261 = vsub.s32 %v1258, %v1260
  %v1262 = vrot.slane %v1248, %v1261
  %v1263 = vcombine.high %v1255, %v1255
  %v1264 = vcombine.high %v1262, %v1262
  %v1266 = vunpack.c.l.s4 1966171168
  %v1267 = vunpack.c.0.s8 %v1266
  %v1268 = vlaneseq
  %v1269 = vshrl.u32 %v1268, 7
  %v1270 = vsub.s32 %v1267, %v1269
  %v1271 = vrot.slane %v1255, %v1270
  %v1273 = vunpack.c.l.s4 1966171168
  %v1274 = vunpack.c.0.s8 %v1273
  %v1275 = vlaneseq
  %v1276 = vshrl.u32 %v1275, 7
  %v1277 = vsub.s32 %v1274, %v1276
  %v1278 = vrot.slane %v1262, %v1277
  %v1280 = vunpack.c.l.s4 1966171168
  %v1281 = vunpack.c.0.s8 %v1280
  %v1282 = vlaneseq
  %v1283 = vshrl.u32 %v1282, 7
  %v1284 = vsub.s32 %v1281, %v1283
  %v1285 = vrot.slane %v1263, %v1284
  %v1287 = vunpack.c.l.s4 1966171168
  %v1288 = vunpack.c.0.s8 %v1287
  %v1289 = vlaneseq
  %v1290 = vshrl.u32 %v1289, 7
  %v1291 = vsub.s32 %v1288, %v1290
  %v1292 = vrot.slane %v1264, %v1291
  %v1293 = vcombine.high %v1271, %v1271
  %v1294 = vcombine.high %v1278, %v1278
  %v1295 = vcombine.high %v1285, %v1285
  %v1296 = vcombine.high %v1292, %v1292
  %v1297 = vcombine.high %v17, %v17
  %v1299 = vunpack.c.l.s4 1966171168
  %v1300 = vunpack.c.0.s8 %v1299
  %v1301 = vlaneseq
  %v1302 = vshrl.u32 %v1301, 7
  %v1303 = vsub.s32 %v1300, %v1302
  %v1304 = vrot.slane %v17, %v1303
  %v1306 = vunpack.c.l.s4 1966171168
  %v1307 = vunpack.c.0.s8 %v1306
  %v1308 = vlaneseq
  %v1309 = vshrl.u32 %v1308, 7
  %v1310 = vsub.s32 %v1307, %v1309
  %v1311 = vrot.slane %v1297, %v1310
  %v1312 = vcombine.high %v1304, %v1304
  %v1313 = vcombine.high %v1311, %v1311
  %v1315 = vunpack.c.l.s4 1966171168
  %v1316 = vunpack.c.0.s8 %v1315
  %v1317 = vlaneseq
  %v1318 = vshrl.u32 %v1317, 7
  %v1319 = vsub.s32 %v1316, %v1318
  %v1320 = vrot.slane %v1304, %v1319
  %v1322 = vunpack.c.l.s4 1966171168
  %v1323 = vunpack.c.0.s8 %v1322
  %v1324 = vlaneseq
  %v1325 = vshrl.u32 %v1324, 7
  %v1326 = vsub.s32 %v1323, %v1325
  %v1327 = vrot.slane %v1311, %v1326
  %v1329 = vunpack.c.l.s4 1966171168
  %v1330 = vunpack.c.0.s8 %v1329
  %v1331 = vlaneseq
  %v1332 = vshrl.u32 %v1331, 7
  %v1333 = vsub.s32 %v1330, %v1332
  %v1334 = vrot.slane %v1312, %v1333
  %v1336 = vunpack.c.l.s4 1966171168
  %v1337 = vunpack.c.0.s8 %v1336
  %v1338 = vlaneseq
  %v1339 = vshrl.u32 %v1338, 7
  %v1340 = vsub.s32 %v1337, %v1339
  %v1341 = vrot.slane %v1313, %v1340
  %v1342 = vcombine.high %v1320, %v1320
  %v1343 = vcombine.high %v1327, %v1327
  %v1344 = vcombine.high %v1334, %v1334
  %v1345 = vcombine.high %v1341, %v1341
  %v1346 = vcombine.high %v18, %v18
  %v1348 = vunpack.c.l.s4 1966171168
  %v1349 = vunpack.c.0.s8 %v1348
  %v1350 = vlaneseq
  %v1351 = vshrl.u32 %v1350, 7
  %v1352 = vsub.s32 %v1349, %v1351
  %v1353 = vrot.slane %v18, %v1352
  %v1355 = vunpack.c.l.s4 1966171168
  %v1356 = vunpack.c.0.s8 %v1355
  %v1357 = vlaneseq
  %v1358 = vshrl.u32 %v1357, 7
  %v1359 = vsub.s32 %v1356, %v1358
  %v1360 = vrot.slane %v1346, %v1359
  %v1361 = vcombine.high %v1353, %v1353
  %v1362 = vcombine.high %v1360, %v1360
  %v1364 = vunpack.c.l.s4 1966171168
  %v1365 = vunpack.c.0.s8 %v1364
  %v1366 = vlaneseq
  %v1367 = vshrl.u32 %v1366, 7
  %v1368 = vsub.s32 %v1365, %v1367
  %v1369 = vrot.slane %v1353, %v1368
  %v1371 = vunpack.c.l.s4 1966171168
  %v1372 = vunpack.c.0.s8 %v1371
  %v1373 = vlaneseq
  %v1374 = vshrl.u32 %v1373, 7
  %v1375 = vsub.s32 %v1372, %v1374
  %v1376 = vrot.slane %v1360, %v1375
  %v1378 = vunpack.c.l.s4 1966171168
  %v1379 = vunpack.c.0.s8 %v1378
  %v1380 = vlaneseq
  %v1381 = vshrl.u32 %v1380, 7
  %v1382 = vsub.s32 %v1379, %v1381
  %v1383 = vrot.slane %v1361, %v1382
  %v1385 = vunpack.c.l.s4 1966171168
  %v1386 = vunpack.c.0.s8 %v1385
  %v1387 = vlaneseq
  %v1388 = vshrl.u32 %v1387, 7
  %v1389 = vsub.s32 %v1386, %v1388
  %v1390 = vrot.slane %v1362, %v1389
  %v1391 = vcombine.high %v1369, %v1369
  %v1392 = vcombine.high %v1376, %v1376
  %v1393 = vcombine.high %v1383, %v1383
  %v1394 = vcombine.high %v1390, %v1390
  %v1395 = vcombine.high %v19, %v19
  %v1397 = vunpack.c.l.s4 1966171168
  %v1398 = vunpack.c.0.s8 %v1397
  %v1399 = vlaneseq
  %v1400 = vshrl.u32 %v1399, 7
  %v1401 = vsub.s32 %v1398, %v1400
  %v1402 = vrot.slane %v19, %v1401
  %v1404 = vunpack.c.l.s4 1966171168
  %v1405 = vunpack.c.0.s8 %v1404
  %v1406 = vlaneseq
  %v1407 = vshrl.u32 %v1406, 7
  %v1408 = vsub.s32 %v1405, %v1407
  %v1409 = vrot.slane %v1395, %v1408
  %v1410 = vcombine.high %v1402, %v1402
  %v1411 = vcombine.high %v1409, %v1409
  %v1413 = vunpack.c.l.s4 1966171168
  %v1414 = vunpack.c.0.s8 %v1413
  %v1415 = vlaneseq
  %v1416 = vshrl.u32 %v1415, 7
  %v1417 = vsub.s32 %v1414, %v1416
  %v1418 = vrot.slane %v1402, %v1417
  %v1420 = vunpack.c.l.s4 1966171168
  %v1421 = vunpack.c.0.s8 %v1420
  %v1422 = vlaneseq
  %v1423 = vshrl.u32 %v1422, 7
  %v1424 = vsub.s32 %v1421, %v1423
  %v1425 = vrot.slane %v1409, %v1424
  %v1427 = vunpack.c.l.s4 1966171168
  %v1428 = vunpack.c.0.s8 %v1427
  %v1429 = vlaneseq
  %v1430 = vshrl.u32 %v1429, 7
  %v1431 = vsub.s32 %v1428, %v1430
  %v1432 = vrot.slane %v1410, %v1431
  %v1434 = vunpack.c.l.s4 1966171168
  %v1435 = vunpack.c.0.s8 %v1434
  %v1436 = vlaneseq
  %v1437 = vshrl.u32 %v1436, 7
  %v1438 = vsub.s32 %v1435, %v1437
  %v1439 = vrot.slane %v1411, %v1438
  %v1440 = vcombine.high %v1418, %v1418
  %v1441 = vcombine.high %v1425, %v1425
  %v1442 = vcombine.high %v1432, %v1432
  %v1443 = vcombine.high %v1439, %v1439
  %v2532 = vunpack.c.l.b16 %v20
  %v2533 = vunpack.c.l.b16 %v21
  %v2534 = vunpack.c.l.b16 %v22
  %v2535 = vunpack.c.l.b16 %v23
  %v2536 = vunpack.c.l.b16 %v24
  %v2537 = vunpack.c.l.b16 %v25
  %v2538 = vunpack.c.l.b16 %v26
  %v2539 = vunpack.c.l.b16 %v27
  %v2540 = vunpack.c.l.b16 %v28
  %v2541 = vunpack.c.l.b16 %v29
  %v2542 = vunpack.c.l.b16 %v30
  %v2543 = vunpack.c.l.b16 %v31
  %v2544 = vunpack.c.l.b16 %v32
  %v2545 = vunpack.c.l.b16 %v33
  %v2546 = vunpack.c.l.b16 %v34
  %v2547 = vunpack.c.l.b16 %v35
  %v2548 = vunpack.c.l.b16 %v36
  %v2549 = vunpack.c.l.b16 %v37
  %v2550 = vunpack.c.l.b16 %v38
  %v2551 = vunpack.c.l.b16 %v39
  %v2552 = vunpack.c.l.b16 %v40
  %v2553 = vunpack.c.l.b16 %v41
  %v2554 = vunpack.c.l.b16 %v42
  %v2555 = vunpack.c.l.b16 %v43
  %v2556 = vunpack.c.l.b16 %v44
  %v2557 = vunpack.c.l.b16 %v45
  %v2558 = vunpack.c.l.b16 %v46
  %v2559 = vunpack.c.l.b16 %v47
  %v2560 = vunpack.c.l.b16 %v48
  %v2561 = vunpack.c.l.b16 %v49
  %v2562 = vunpack.c.l.b16 %v50
  %v2563 = vunpack.c.l.b16 %v51
  %v2564 = vunpack.c.l.b16 %v52
  %v2565 = vunpack.c.l.b16 %v53
  %v2566 = vunpack.c.l.b16 %v54
  %v2567 = vunpack.c.l.b16 %v55
  %v2568 = vunpack.c.l.b16 %v56
  %v2569 = vunpack.c.l.b16 %v57
  %v2570 = vunpack.c.l.b16 %v58
  %v2571 = vunpack.c.l.b16 %v59
  %v2572 = vunpack.c.l.b16 %v60
  %v2573 = vunpack.c.l.b16 %v61
  %v2574 = vunpack.c.l.b16 %v62
  %v2575 = vunpack.c.l.b16 %v63
  %v2576 = vunpack.c.l.b16 %v64
  %v2577 = vunpack.c.l.b16 %v65
  %v2578 = vunpack.c.l.b16 %v66
  %v2579 = vunpack.c.l.b16 %v67
  %v2580 = vunpack.c.l.b16 %v68
  %v2581 = vunpack.c.l.b16 %v69
  %v2582 = vunpack.c.l.b16 %v70
  %v2583 = vunpack.c.l.b16 %v71
  %v2584 = vunpack.c.l.b16 %v72
  %v2585 = vunpack.c.l.b16 %v73
  %v2586 = vunpack.c.l.b16 %v74
  %v2587 = vunpack.c.l.b16 %v75
  %v2588 = vunpack.c.l.b16 %v76
  %v2589 = vunpack.c.l.b16 %v77
  %v2590 = vunpack.c.l.b16 %v78
  %v2591 = vunpack.c.l.b16 %v79
  %v2592 = vunpack.c.l.b16 %v80
  %v2593 = vunpack.c.l.b16 %v81
  %v2594 = vunpack.c.l.b16 %v82
  %v2595 = vunpack.c.l.b16 %v83
  %v2596 = vunpack.c.l.b16 %v84
  %v2597 = vunpack.c.l.b16 %v85
  %v2598 = vunpack.c.l.b16 %v86
  %v2599 = vunpack.c.l.b16 %v87
  %v2600 = vunpack.c.l.b16 %v88
  %v2601 = vunpack.c.l.b16 %v89
  %v2602 = vunpack.c.l.b16 %v90
  %v2603 = vunpack.c.l.b16 %v91
  %v2604 = vunpack.c.l.b16 %v92
  %v2605 = vunpack.c.l.b16 %v93
  %v2606 = vunpack.c.l.b16 %v94
  %v2607 = vunpack.c.l.b16 %v95
  %v2608 = vunpack.c.l.b16 %v96
  %v2609 = vunpack.c.l.b16 %v97
  %v2610 = vunpack.c.l.b16 %v98
  %v2611 = vunpack.c.l.b16 %v99
  %v2612 = vunpack.c.l.b16 %v100
  %v2613 = vunpack.c.l.b16 %v101
  %v2614 = vunpack.c.l.b16 %v102
  %v2615 = vunpack.c.l.b16 %v103
  %v2616 = vunpack.c.l.b16 %v104
  %v2617 = vunpack.c.l.b16 %v105
  %v2618 = vunpack.c.l.b16 %v106
  %v2619 = vunpack.c.l.b16 %v107
  %v2620 = vunpack.c.l.b16 %v108
  %v2621 = vunpack.c.l.b16 %v109
  %v2622 = vunpack.c.l.b16 %v110
  %v2623 = vunpack.c.l.b16 %v111
  %v2624 = vunpack.c.l.b16 %v112
  %v2625 = vunpack.c.l.b16 %v113
  %v2626 = vunpack.c.l.b16 %v114
  %v2627 = vunpack.c.l.b16 %v115
  %v2628 = vunpack.c.l.b16 %v116
  %v2629 = vunpack.c.l.b16 %v117
  %v2630 = vunpack.c.l.b16 %v118
  %v2631 = vunpack.c.l.b16 %v119
  %v2632 = vunpack.c.l.b16 %v120
  %v2633 = vunpack.c.l.b16 %v121
  %v2634 = vunpack.c.l.b16 %v122
  %v2635 = vunpack.c.l.b16 %v123
  %v2636 = vunpack.c.l.b16 %v124
  %v2637 = vunpack.c.l.b16 %v125
  %v2638 = vunpack.c.l.b16 %v126
  %v2639 = vunpack.c.l.b16 %v127
  %v2640 = vunpack.c.l.b16 %v128
  %v2641 = vunpack.c.l.b16 %v129
  %v2642 = vunpack.c.l.b16 %v130
  %v2643 = vunpack.c.l.b16 %v131
  %v2644 = vunpack.c.l.b16 %v132
  %v2645 = vunpack.c.l.b16 %v133
  %v2646 = vunpack.c.l.b16 %v134
  %v2647 = vunpack.c.l.b16 %v135
  %v2648 = vunpack.c.l.b16 %v136
  %v2649 = vunpack.c.l.b16 %v137
  %v2650 = vunpack.c.l.b16 %v138
  %v2651 = vunpack.c.l.b16 %v139
  %v2652 = vunpack.c.l.b16 %v140
  %v2653 = vunpack.c.l.b16 %v141
  %v2654 = vunpack.c.l.b16 %v142
  %v2655 = vunpack.c.l.b16 %v143
  %v2656 = vunpack.c.l.b16 %v144
  %v2657 = vunpack.c.l.b16 %v145
  %v2658 = vunpack.c.l.b16 %v146
  %v2659 = vunpack.c.l.b16 %v147
  %v2660 = vunpack.c.l.b16 %v148
  %v2661 = vunpack.c.l.b16 %v149
  %v2662 = vunpack.c.l.b16 %v150
  %v2663 = vunpack.c.l.b16 %v151
  %v2664 = vunpack.c.l.b16 %v152
  %v2665 = vunpack.c.l.b16 %v153
  %v2666 = vunpack.c.l.b16 %v154
  %v2667 = vunpack.c.l.b16 %v155
  %v2668 = vunpack.c.l.b16 %v156
  %v2669 = vunpack.c.l.b16 %v157
  %v2670 = vunpack.c.l.b16 %v158
  %v2671 = vunpack.c.l.b16 %v159
  %v2672 = vunpack.c.l.b16 %v160
  %v2673 = vunpack.c.l.b16 %v161
  %v2674 = vunpack.c.l.b16 %v162
  %v2675 = vunpack.c.l.b16 %v163
  %v2676 = vunpack.c.l.b16 %v164
  %v2677 = vunpack.c.l.b16 %v165
  %v2678 = vunpack.c.l.b16 %v166
  %v2679 = vunpack.c.l.b16 %v167
  %v2680 = vunpack.c.l.b16 %v168
  %v2681 = vunpack.c.l.b16 %v169
  %v2682 = vunpack.c.l.b16 %v170
  %v2683 = vunpack.c.l.b16 %v171
  %v2684 = vunpack.c.l.b16 %v172
  %v2685 = vunpack.c.l.b16 %v173
  %v2686 = vunpack.c.l.b16 %v174
  %v2687 = vunpack.c.l.b16 %v175
  %v2688 = vunpack.c.l.b16 %v176
  %v2689 = vunpack.c.l.b16 %v177
  %v2690 = vunpack.c.l.b16 %v178
  %v2691 = vunpack.c.l.b16 %v179
  %v2692 = vunpack.c.l.b16 %v180
  %v2693 = vunpack.c.l.b16 %v181
  %v2694 = vunpack.c.l.b16 %v182
  %v2695 = vunpack.c.l.b16 %v183
  %v2696 = vunpack.c.l.b16 %v184
  %v2697 = vunpack.c.l.b16 %v185
  %v2698 = vunpack.c.l.b16 %v186
  %v2699 = vunpack.c.l.b16 %v187
  %v2700 = vunpack.c.l.b16 %v188
  %v2701 = vunpack.c.l.b16 %v189
  %v2702 = vunpack.c.l.b16 %v190
  %v2703 = vunpack.c.l.b16 %v191
  %v2704 = vunpack.c.l.b16 %v192
  %v2705 = vunpack.c.l.b16 %v193
  %v2706 = vunpack.c.l.b16 %v194
  %v2707 = vunpack.c.l.b16 %v195
  %v2708 = vunpack.c.l.b16 %v196
  %v2709 = vunpack.c.l.b16 %v197
  %v2710 = vunpack.c.l.b16 %v198
  %v2711 = vunpack.c.l.b16 %v199
  %v2712 = vunpack.c.l.b16 %v200
  %v2713 = vunpack.c.l.b16 %v201
  %v2714 = vunpack.c.l.b16 %v202
  %v2715 = vunpack.c.l.b16 %v203
  %v2716 = vunpack.c.l.b16 %v204
  %v2717 = vunpack.c.l.b16 %v205
  %v2718 = vunpack.c.l.b16 %v206
  %v2719 = vunpack.c.l.b16 %v207
  %v2720 = vunpack.c.l.b16 %v208
  %v2721 = vunpack.c.l.b16 %v209
  %v2722 = vunpack.c.l.b16 %v210
  %v2723 = vunpack.c.l.b16 %v211
  %v2724 = vunpack.c.l.b16 %v212
  %v2725 = vunpack.c.l.b16 %v213
  %v2726 = vunpack.c.l.b16 %v214
  %v2727 = vunpack.c.l.b16 %v215
  %v2728 = vunpack.c.l.b16 %v216
  %v2729 = vunpack.c.l.b16 %v217
  %v2730 = vunpack.c.l.b16 %v218
  %v2731 = vunpack.c.l.b16 %v219
  %v2732 = vunpack.c.l.b16 %v220
  %v2733 = vunpack.c.l.b16 %v221
  %v2734 = vunpack.c.l.b16 %v222
  %v2735 = vunpack.c.l.b16 %v223
  %v2736 = vunpack.c.l.b16 %v224
  %v2737 = vunpack.c.l.b16 %v225
  %v2738 = vunpack.c.l.b16 %v226
  %v2739 = vunpack.c.l.b16 %v227
  %v2740 = vunpack.c.l.b16 %v228
  %v2741 = vunpack.c.l.b16 %v229
  %v2742 = vunpack.c.l.b16 %v230
  %v2743 = vunpack.c.l.b16 %v231
  %v2744 = vunpack.c.l.b16 %v232
  %v2745 = vunpack.c.l.b16 %v233
  %v2746 = vunpack.c.l.b16 %v234
  %v2747 = vunpack.c.l.b16 %v235
  %v2748 = vunpack.c.l.b16 %v236
  %v2749 = vunpack.c.l.b16 %v237
  %v2750 = vunpack.c.l.b16 %v238
  %v2751 = vunpack.c.l.b16 %v239
  %v2752 = vunpack.c.l.b16 %v240
  %v2753 = vunpack.c.l.b16 %v241
  %v2754 = vunpack.c.l.b16 %v242
  %v2755 = vunpack.c.l.b16 %v243
  %v2756 = vunpack.c.l.b16 %v244
  %v2757 = vunpack.c.l.b16 %v245
  %v2758 = vunpack.c.l.b16 %v246
  %v2759 = vunpack.c.l.b16 %v247
  %v2760 = vunpack.c.l.b16 %v248
  %v2761 = vunpack.c.l.b16 %v249
  %v2762 = vunpack.c.l.b16 %v250
  %v2763 = vunpack.c.l.b16 %v251
  %v2764 = vunpack.c.l.b16 %v252
  %v2765 = vunpack.c.l.b16 %v253
  %v2766 = vunpack.c.l.b16 %v254
  %v2767 = vunpack.c.l.b16 %v255
  %v2768 = vunpack.c.l.b16 %v256
  %v2769 = vunpack.c.l.b16 %v257
  %v2770 = vunpack.c.l.b16 %v258
  %v2771 = vunpack.c.l.b16 %v259
  %v2772 = vunpack.c.l.b16 %v260
  %v2773 = vunpack.c.l.b16 %v261
  %v2774 = vunpack.c.l.b16 %v262
  %v2775 = vunpack.c.l.b16 %v263
  %v2776 = vunpack.c.l.b16 %v264
  %v2777 = vunpack.c.l.b16 %v265
  %v2778 = vunpack.c.l.b16 %v266
  %v2779 = vunpack.c.l.b16 %v267
  %v2780 = vunpack.c.l.b16 %v268
  %v2781 = vunpack.c.l.b16 %v269
  %v2782 = vunpack.c.l.b16 %v270
  %v2783 = vunpack.c.l.b16 %v271
  %v2784 = vunpack.c.l.b16 %v272
  %v2785 = vunpack.c.l.b16 %v273
  %v2786 = vunpack.c.l.b16 %v274
  %v2787 = vunpack.c.l.b16 %v275
  %v2788 = vunpack.c.l.b16 %v276
  %v2789 = vunpack.c.l.b16 %v277
  %v2790 = vunpack.c.l.b16 %v278
  %v2791 = vunpack.c.l.b16 %v279
  %v2792 = vunpack.c.l.b16 %v280
  %v2793 = vunpack.c.l.b16 %v281
  %v2794 = vunpack.c.l.b16 %v282
  %v2795 = vunpack.c.l.b16 %v283
  %v2796 = vunpack.c.l.b16 %v284
  %v2797 = vunpack.c.l.b16 %v285
  %v2798 = vunpack.c.l.b16 %v286
  %v2799 = vunpack.c.l.b16 %v287
  %v2800 = vunpack.c.l.b16 %v288
  %v2801 = vunpack.c.l.b16 %v289
  %v2802 = vunpack.c.l.b16 %v290
  %v2803 = vunpack.c.l.b16 %v291
  %v2804 = vunpack.c.l.b16 %v292
  %v2805 = vunpack.c.l.b16 %v293
  %v2806 = vunpack.c.l.b16 %v294
  %v2807 = vunpack.c.l.b16 %v295
  %v2808 = vunpack.c.l.b16 %v296
  %v2809 = vunpack.c.l.b16 %v297
  %v2810 = vunpack.c.l.b16 %v298
  %v2811 = vunpack.c.l.b16 %v299
  %v2812 = vunpack.c.l.b16 %v300
  %v2813 = vunpack.c.l.b16 %v301
  %v2814 = vunpack.c.l.b16 %v302
  %v2815 = vunpack.c.l.b16 %v303
  %v2816 = vunpack.c.l.b16 %v304
  %v2817 = vunpack.c.l.b16 %v305
  %v2818 = vunpack.c.l.b16 %v306
  %v2819 = vunpack.c.l.b16 %v307
  %v2820 = vunpack.c.l.b16 %v308
  %v2821 = vunpack.c.l.b16 %v309
  %v2822 = vunpack.c.l.b16 %v310
  %v2823 = vunpack.c.l.b16 %v311
  %v2824 = vunpack.c.l.b16 %v312
  %v2825 = vunpack.c.l.b16 %v313
  %v2826 = vunpack.c.l.b16 %v314
  %v2827 = vunpack.c.l.b16 %v315
  %v2828 = vunpack.c.l.b16 %v316
  %v2829 = vunpack.c.l.b16 %v317
  %v2830 = vunpack.c.l.b16 %v318
  %v2831 = vunpack.c.l.b16 %v319
  %v2832 = vunpack.c.l.b16 %v320
  %v2833 = vunpack.c.l.b16 %v321
  %v2834 = vunpack.c.l.b16 %v322
  %v2835 = vunpack.c.l.b16 %v323
  %v2836 = vunpack.c.l.b16 %v324
  %v2837 = vunpack.c.l.b16 %v325
  %v2838 = vunpack.c.l.b16 %v326
  %v2839 = vunpack.c.l.b16 %v327
  %v2840 = vunpack.c.l.b16 %v328
  %v2841 = vunpack.c.l.b16 %v329
  %v2842 = vunpack.c.l.b16 %v330
  %v2843 = vunpack.c.l.b16 %v331
  %v2844 = vunpack.c.l.b16 %v332
  %v2845 = vunpack.c.l.b16 %v333
  %v2846 = vunpack.c.l.b16 %v334
  %v2847 = vunpack.c.l.b16 %v335
  %v2848 = vunpack.c.l.b16 %v336
  %v2849 = vunpack.c.l.b16 %v337
  %v2850 = vunpack.c.l.b16 %v338
  %v2851 = vunpack.c.l.b16 %v339
  %v2852 = vunpack.c.l.b16 %v340
  %v2853 = vunpack.c.l.b16 %v341
  %v2854 = vunpack.c.l.b16 %v342
  %v2855 = vunpack.c.l.b16 %v343
  %v2856 = vunpack.c.l.b16 %v344
  %v2857 = vunpack.c.l.b16 %v345
  %v2858 = vunpack.c.l.b16 %v346
  %v2859 = vunpack.c.l.b16 %v347
  %v2860 = vunpack.c.l.b16 %v348
  %v2861 = vunpack.c.l.b16 %v349
  %v2862 = vunpack.c.l.b16 %v350
  %v2863 = vunpack.c.l.b16 %v351
  %v2864 = vunpack.c.l.b16 %v352
  %v2865 = vunpack.c.l.b16 %v353
  %v2866 = vunpack.c.l.b16 %v354
  %v2867 = vunpack.c.l.b16 %v355
  %v2868 = vunpack.c.l.b16 %v356
  %v2869 = vunpack.c.l.b16 %v357
  %v2870 = vunpack.c.l.b16 %v358
  %v2871 = vunpack.c.l.b16 %v359
  %v2872 = vunpack.c.l.b16 %v360
  %v2873 = vunpack.c.l.b16 %v361
  %v2874 = vunpack.c.l.b16 %v362
  %v2875 = vunpack.c.l.b16 %v363
  %v2876 = vunpack.c.l.b16 %v364
  %v2877 = vunpack.c.l.b16 %v365
  %v2878 = vunpack.c.l.b16 %v366
  %v2879 = vunpack.c.l.b16 %v367
  %v2880 = vunpack.c.l.b16 %v368
  %v2881 = vunpack.c.l.b16 %v369
  %v2882 = vunpack.c.l.b16 %v370
  %v2883 = vunpack.c.l.b16 %v371
  %v2884 = vunpack.c.l.b16 %v372
  %v2885 = vunpack.c.l.b16 %v373
  %v2886 = vunpack.c.l.b16 %v374
  %v2887 = vunpack.c.l.b16 %v375
  %v2888 = vunpack.c.l.b16 %v376
  %v2889 = vunpack.c.l.b16 %v377
  %v2890 = vunpack.c.l.b16 %v378
  %v2891 = vunpack.c.l.b16 %v379
  %v2892 = vunpack.c.l.b16 %v380
  %v2893 = vunpack.c.l.b16 %v381
  %v2894 = vunpack.c.l.b16 %v382
  %v2895 = vunpack.c.l.b16 %v383
  %v2896 = vunpack.c.l.b16 %v384
  %v2897 = vunpack.c.l.b16 %v385
  %v2898 = vunpack.c.l.b16 %v386
  %v2899 = vunpack.c.l.b16 %v387
  %v2900 = vunpack.c.l.b16 %v388
  %v2901 = vunpack.c.l.b16 %v389
  %v2902 = vunpack.c.l.b16 %v390
  %v2903 = vunpack.c.l.b16 %v391
  %v2904 = vunpack.c.l.b16 %v392
  %v2905 = vunpack.c.l.b16 %v393
  %v2906 = vunpack.c.l.b16 %v394
  %v2907 = vunpack.c.l.b16 %v395
  %v2908 = vunpack.c.l.b16 %v396
  %v2909 = vunpack.c.l.b16 %v397
  %v2910 = vunpack.c.l.b16 %v398
  %v2911 = vunpack.c.l.b16 %v399
  %v2912 = vunpack.c.l.b16 %v400
  %v2913 = vunpack.c.l.b16 %v401
  %v2914 = vunpack.c.l.b16 %v402
  %v2915 = vunpack.c.l.b16 %v403
  %v2916 = vunpack.c.l.b16 %v404
  %v2917 = vunpack.c.l.b16 %v405
  %v2918 = vunpack.c.l.b16 %v406
  %v2919 = vunpack.c.l.b16 %v407
  %v2920 = vunpack.c.l.b16 %v408
  %v2921 = vunpack.c.l.b16 %v409
  %v2922 = vunpack.c.l.b16 %v410
  %v2923 = vunpack.c.l.b16 %v411
  %v2924 = vunpack.c.l.b16 %v412
  %v2925 = vunpack.c.l.b16 %v413
  %v2926 = vunpack.c.l.b16 %v414
  %v2927 = vunpack.c.l.b16 %v415
  %v2928 = vunpack.c.l.b16 %v416
  %v2929 = vunpack.c.l.b16 %v417
  %v2930 = vunpack.c.l.b16 %v418
  %v2931 = vunpack.c.l.b16 %v419
  %v2932 = vunpack.c.l.b16 %v420
  %v2933 = vunpack.c.l.b16 %v421
  %v2934 = vunpack.c.l.b16 %v422
  %v2935 = vunpack.c.l.b16 %v423
  %v2936 = vunpack.c.l.b16 %v424
  %v2937 = vunpack.c.l.b16 %v425
  %v2938 = vunpack.c.l.b16 %v426
  %v2939 = vunpack.c.l.b16 %v427
  %v2940 = vunpack.c.l.b16 %v428
  %v2941 = vunpack.c.l.b16 %v429
  %v2942 = vunpack.c.l.b16 %v430
  %v2943 = vunpack.c.l.b16 %v431
  %v2944 = vunpack.c.l.b16 %v432
  %v2945 = vunpack.c.l.b16 %v433
  %v2946 = vunpack.c.l.b16 %v434
  %v2947 = vunpack.c.l.b16 %v435
  %v2948 = vunpack.c.l.b16 %v436
  %v2949 = vunpack.c.l.b16 %v437
  %v2950 = vunpack.c.l.b16 %v438
  %v2951 = vunpack.c.l.b16 %v439
  %v2952 = vunpack.c.l.b16 %v440
  %v2953 = vunpack.c.l.b16 %v441
  %v2954 = vunpack.c.l.b16 %v442
  %v2955 = vunpack.c.l.b16 %v443
  %v2956 = vunpack.c.l.b16 %v444
  %v2957 = vunpack.c.l.b16 %v445
  %v2958 = vunpack.c.l.b16 %v446
  %v2959 = vunpack.c.l.b16 %v447
  %v2960 = vunpack.c.l.b16 %v448
  %v2961 = vunpack.c.l.b16 %v449
  %v2962 = vunpack.c.l.b16 %v450
  %v2963 = vunpack.c.l.b16 %v451
  %v2964 = vunpack.c.l.b16 %v452
  %v2965 = vunpack.c.l.b16 %v453
  %v2966 = vunpack.c.l.b16 %v454
  %v2967 = vunpack.c.l.b16 %v455
  %v2968 = vunpack.c.l.b16 %v456
  %v2969 = vunpack.c.l.b16 %v457
  %v2970 = vunpack.c.l.b16 %v458
  %v2971 = vunpack.c.l.b16 %v459
  %v2972 = vunpack.c.l.b16 %v460
  %v2973 = vunpack.c.l.b16 %v461
  %v2974 = vunpack.c.l.b16 %v462
  %v2975 = vunpack.c.l.b16 %v463
  %v2976 = vunpack.c.l.b16 %v464
  %v2977 = vunpack.c.l.b16 %v465
  %v2978 = vunpack.c.l.b16 %v466
  %v2979 = vunpack.c.l.b16 %v467
  %v2980 = vunpack.c.l.b16 %v468
  %v2981 = vunpack.c.l.b16 %v469
  %v2982 = vunpack.c.l.b16 %v470
  %v2983 = vunpack.c.l.b16 %v471
  %v2984 = vunpack.c.l.b16 %v472
  %v2985 = vunpack.c.l.b16 %v473
  %v2986 = vunpack.c.l.b16 %v474
  %v2987 = vunpack.c.l.b16 %v475
  %v2988 = vunpack.c.l.b16 %v476
  %v2989 = vunpack.c.l.b16 %v477
  %v2990 = vunpack.c.l.b16 %v478
  %v2991 = vunpack.c.l.b16 %v479
  %v2992 = vunpack.c.l.b16 %v480
  %v2993 = vunpack.c.l.b16 %v481
  %v2994 = vunpack.c.l.b16 %v482
  %v2995 = vunpack.c.l.b16 %v483
  %v2996 = vunpack.c.l.b16 %v484
  %v2997 = vunpack.c.l.b16 %v485
  %v2998 = vunpack.c.l.b16 %v486
  %v2999 = vunpack.c.l.b16 %v487
  %v3000 = vunpack.c.l.b16 %v488
  %v3001 = vunpack.c.l.b16 %v489
  %v3002 = vunpack.c.l.b16 %v490
  %v3003 = vunpack.c.l.b16 %v491
  %v3004 = vunpack.c.l.b16 %v492
  %v3005 = vunpack.c.l.b16 %v493
  %v3006 = vunpack.c.l.b16 %v494
  %v3007 = vunpack.c.l.b16 %v495
  %v3008 = vunpack.c.l.b16 %v496
  %v3009 = vunpack.c.l.b16 %v497
  %v3010 = vunpack.c.l.b16 %v498
  %v3011 = vunpack.c.l.b16 %v499
  %v3012 = vunpack.c.l.b16 %v500
  %v3013 = vunpack.c.l.b16 %v501
  %v3014 = vunpack.c.l.b16 %v502
  %v3015 = vunpack.c.l.b16 %v503
  %v3016 = vunpack.c.l.b16 %v504
  %v3017 = vunpack.c.l.b16 %v505
  %v3018 = vunpack.c.l.b16 %v506
  %v3019 = vunpack.c.l.b16 %v507
  %v3020 = vunpack.c.l.b16 %v508
  %v3021 = vunpack.c.l.b16 %v509
  %v3022 = vunpack.c.l.b16 %v510
  %v3023 = vunpack.c.l.b16 %v511
  %v3024 = vunpack.c.l.b16 %v512
  %v3025 = vunpack.c.l.b16 %v513
  %v3026 = vunpack.c.l.b16 %v514
  %v3027 = vunpack.c.l.b16 %v515
  %v3028 = vunpack.c.l.b16 %v516
  %v3029 = vunpack.c.l.b16 %v517
  %v3030 = vunpack.c.l.b16 %v518
  %v3031 = vunpack.c.l.b16 %v519
  %v3032 = vunpack.c.l.b16 %v520
  %v3033 = vunpack.c.l.b16 %v521
  %v3034 = vunpack.c.l.b16 %v522
  %v3035 = vunpack.c.l.b16 %v523
  %v3036 = vunpack.c.l.b16 %v524
  %v3037 = vunpack.c.l.b16 %v525
  %v3038 = vunpack.c.l.b16 %v526
  %v3039 = vunpack.c.l.b16 %v527
  %v3040 = vunpack.c.l.b16 %v528
  %v3041 = vunpack.c.l.b16 %v529
  %v3042 = vunpack.c.l.b16 %v530
  %v3043 = vunpack.c.l.b16 %v531
  %v3044 = vunpack.c.l.b16 %v532
  %v3045 = vunpack.c.l.b16 %v533
  %v3046 = vunpack.c.l.b16 %v534
  %v3047 = vunpack.c.l.b16 %v535
  %v3048 = vunpack.c.l.b16 %v536
  %v3049 = vunpack.c.l.b16 %v537
  %v3050 = vunpack.c.l.b16 %v538
  %v3051 = vunpack.c.l.b16 %v539
  %v3052 = vunpack.c.l.b16 %v540
  %v3053 = vunpack.c.l.b16 %v541
  %v3054 = vunpack.c.l.b16 %v542
  %v3055 = vunpack.c.l.b16 %v543
  %v3056 = vunpack.c.l.b16 %v544
  %v3057 = vunpack.c.l.b16 %v545
  %v3058 = vunpack.c.l.b16 %v546
  %v3059 = vunpack.c.l.b16 %v547
  %v3060 = vunpack.c.l.b16 %v548
  %v3061 = vunpack.c.l.b16 %v549
  %v3062 = vunpack.c.l.b16 %v550
  %v3063 = vunpack.c.l.b16 %v551
  %v3064 = vunpack.c.l.b16 %v552
  %v3065 = vunpack.c.l.b16 %v553
  %v3066 = vunpack.c.l.b16 %v554
  %v3067 = vunpack.c.l.b16 %v555
  %v3068 = vunpack.c.l.b16 %v556
  %v3069 = vunpack.c.l.b16 %v557
  %v3070 = vunpack.c.l.b16 %v558
  %v3071 = vunpack.c.l.b16 %v559
  %v3072 = vunpack.c.l.b16 %v560
  %v3073 = vunpack.c.l.b16 %v561
  %v3074 = vunpack.c.l.b16 %v562
  %v3075 = vunpack.c.l.b16 %v563
  %v3076 = vunpack.c.l.b16 %v564
  %v3077 = vunpack.c.l.b16 %v565
  %v3078 = vunpack.c.l.b16 %v566
  %v3079 = vunpack.c.l.b16 %v567
  %v3080 = vunpack.c.l.b16 %v568
  %v3081 = vunpack.c.l.b16 %v569
  %v3082 = vunpack.c.l.b16 %v570
  %v3083 = vunpack.c.l.b16 %v571
  %v3084 = vunpack.c.l.b16 %v572
  %v3085 = vunpack.c.l.b16 %v573
  %v3086 = vunpack.c.l.b16 %v574
  %v3087 = vunpack.c.l.b16 %v575
  %v3088 = vunpack.c.l.b16 %v576
  %v3089 = vunpack.c.l.b16 %v577
  %v3090 = vunpack.c.l.b16 %v578
  %v3091 = vunpack.c.l.b16 %v579
  %v3092 = vunpack.c.l.b16 %v580
  %v3093 = vunpack.c.l.b16 %v581
  %v3094 = vunpack.c.l.b16 %v582
  %v3095 = vunpack.c.l.b16 %v583
  %v3096 = vunpack.c.l.b16 %v584
  %v3097 = vunpack.c.l.b16 %v585
  %v3098 = vunpack.c.l.b16 %v586
  %v3099 = vunpack.c.l.b16 %v587
  %v3100 = vunpack.c.l.b16 %v588
  %v3101 = vunpack.c.l.b16 %v589
  %v3102 = vunpack.c.l.b16 %v590
  %v3103 = vunpack.c.l.b16 %v591
  %v3104 = vunpack.c.l.b16 %v592
  %v3105 = vunpack.c.l.b16 %v593
  %v3106 = vunpack.c.l.b16 %v594
  %v3107 = vunpack.c.l.b16 %v595
  %v3108 = vunpack.c.l.b16 %v596
  %v3109 = vunpack.c.l.b16 %v597
  %v3110 = vunpack.c.l.b16 %v598
  %v3111 = vunpack.c.l.b16 %v599
  %v3112 = vunpack.c.l.b16 %v600
  %v3113 = vunpack.c.l.b16 %v601
  %v3114 = vunpack.c.l.b16 %v602
  %v3115 = vunpack.c.l.b16 %v603
  %v3116 = vunpack.c.l.b16 %v604
  %v3117 = vunpack.c.l.b16 %v605
  %v3118 = vunpack.c.l.b16 %v606
  %v3119 = vunpack.c.l.b16 %v607
  %v3120 = vunpack.c.l.b16 %v608
  %v3121 = vunpack.c.l.b16 %v609
  %v3122 = vunpack.c.l.b16 %v610
  %v3123 = vunpack.c.l.b16 %v611
  %v3124 = vunpack.c.l.b16 %v612
  %v3125 = vunpack.c.l.b16 %v613
  %v3126 = vunpack.c.l.b16 %v614
  %v3127 = vunpack.c.l.b16 %v615
  %v3128 = vunpack.c.l.b16 %v616
  %v3129 = vunpack.c.l.b16 %v617
  %v3130 = vunpack.c.l.b16 %v618
  %v3131 = vunpack.c.l.b16 %v619
  %v3132 = vunpack.c.l.b16 %v620
  %v3133 = vunpack.c.l.b16 %v621
  %v3134 = vunpack.c.l.b16 %v622
  %v3135 = vunpack.c.l.b16 %v623
  %v3136 = vunpack.c.l.b16 %v624
  %v3137 = vunpack.c.l.b16 %v625
  %v3138 = vunpack.c.l.b16 %v626
  %v3139 = vunpack.c.l.b16 %v627
  %v3140 = vunpack.c.l.b16 %v628
  %v3141 = vunpack.c.l.b16 %v629
  %v3142 = vunpack.c.l.b16 %v630
  %v3143 = vunpack.c.l.b16 %v631
  %v3144 = vunpack.c.l.b16 %v632
  %v3145 = vunpack.c.l.b16 %v633
  %v3146 = vunpack.c.l.b16 %v634
  %v3147 = vunpack.c.l.b16 %v635
  %v3148 = vunpack.c.l.b16 %v636
  %v3149 = vunpack.c.l.b16 %v637
  %v3150 = vunpack.c.l.b16 %v638
  %v3151 = vunpack.c.l.b16 %v639
  %v3152 = vunpack.c.l.b16 %v640
  %v3153 = vunpack.c.l.b16 %v641
  %v3154 = vunpack.c.l.b16 %v642
  %v3155 = vunpack.c.l.b16 %v643
  %v3156 = vunpack.c.l.b16 %v644
  %v3157 = vunpack.c.l.b16 %v645
  %v3158 = vunpack.c.l.b16 %v646
  %v3159 = vunpack.c.l.b16 %v647
  %v3160 = vunpack.c.l.b16 %v648
  %v3161 = vunpack.c.l.b16 %v649
  %v3162 = vunpack.c.l.b16 %v650
  %v3163 = vunpack.c.l.b16 %v651
  %v3164 = vunpack.c.l.b16 %v652
  %v3165 = vunpack.c.l.b16 %v653
  %v3166 = vunpack.c.l.b16 %v654
  %v3167 = vunpack.c.l.b16 %v655
  %v3168 = vunpack.c.l.b16 %v656
  %v3169 = vunpack.c.l.b16 %v657
  %v3170 = vunpack.c.l.b16 %v658
  %v3171 = vunpack.c.l.b16 %v659
  %v3172 = vunpack.c.l.b16 %v660
  %v3173 = vunpack.c.l.b16 %v661
  %v3174 = vunpack.c.l.b16 %v662
  %v3175 = vunpack.c.l.b16 %v663
  %v3176 = vunpack.c.l.b16 %v664
  %v3177 = vunpack.c.l.b16 %v665
  %v3178 = vunpack.c.l.b16 %v666
  %v3179 = vunpack.c.l.b16 %v667
  %v3180 = vunpack.c.l.b16 %v668
  %v3181 = vunpack.c.l.b16 %v669
  %v3182 = vunpack.c.l.b16 %v670
  %v3183 = vunpack.c.l.b16 %v671
  %v3184 = vunpack.c.l.b16 %v672
  %v3185 = vunpack.c.l.b16 %v673
  %v3186 = vunpack.c.l.b16 %v674
  %v3187 = vunpack.c.l.b16 %v675
  %v3188 = vunpack.c.l.b16 %v676
  %v3189 = vunpack.c.l.b16 %v677
  %v3190 = vunpack.c.l.b16 %v678
  %v3191 = vunpack.c.l.b16 %v679
  %v3192 = vunpack.c.l.b16 %v680
  %v3193 = vunpack.c.l.b16 %v681
  %v3194 = vunpack.c.l.b16 %v682
  %v3195 = vunpack.c.l.b16 %v683
  %v3196 = vunpack.c.l.b16 %v684
  %v3197 = vunpack.c.l.b16 %v685
  %v3198 = vunpack.c.l.b16 %v686
  %v3199 = vunpack.c.l.b16 %v687
  %v3200 = vunpack.c.l.b16 %v688
  %v3201 = vunpack.c.l.b16 %v689
  %v3202 = vunpack.c.l.b16 %v690
  %v3203 = vunpack.c.l.b16 %v691
  %v3204 = vunpack.c.l.b16 %v692
  %v3205 = vunpack.c.l.b16 %v693
  %v3206 = vunpack.c.l.b16 %v694
  %v3207 = vunpack.c.l.b16 %v695
  %v3208 = vunpack.c.l.b16 %v696
  %v3209 = vunpack.c.l.b16 %v697
  %v3210 = vunpack.c.l.b16 %v698
  %v3211 = vunpack.c.l.b16 %v699
  %v3212 = vunpack.c.l.b16 %v700
  %v3213 = vunpack.c.l.b16 %v701
  %v3214 = vunpack.c.l.b16 %v702
  %v3215 = vunpack.c.l.b16 %v703
  %v3216 = vunpack.c.l.b16 %v704
  %v3217 = vunpack.c.l.b16 %v705
  %v3218 = vunpack.c.l.b16 %v706
  %v3219 = vunpack.c.l.b16 %v707
  %v3220 = vunpack.c.l.b16 %v708
  %v3221 = vunpack.c.l.b16 %v709
  %v3222 = vunpack.c.l.b16 %v710
  %v3223 = vunpack.c.l.b16 %v711
  %v3224 = vunpack.c.l.b16 %v712
  %v3225 = vunpack.c.l.b16 %v713
  %v3226 = vunpack.c.l.b16 %v714
  %v3227 = vunpack.c.l.b16 %v715
  %v3228 = vunpack.c.l.b16 %v716
  %v3229 = vunpack.c.l.b16 %v717
  %v3230 = vunpack.c.l.b16 %v718
  %v3231 = vunpack.c.l.b16 %v719
  %v3232 = vunpack.c.l.b16 %v720
  %v3233 = vunpack.c.l.b16 %v721
  %v3234 = vunpack.c.l.b16 %v722
  %v3235 = vunpack.c.l.b16 %v723
  %v3236 = vunpack.c.l.b16 %v724
  %v3237 = vunpack.c.l.b16 %v725
  %v3238 = vunpack.c.l.b16 %v726
  %v3239 = vunpack.c.l.b16 %v727
  %v3240 = vunpack.c.l.b16 %v728
  %v3241 = vunpack.c.l.b16 %v729
  %v3242 = vunpack.c.l.b16 %v730
  %v3243 = vunpack.c.l.b16 %v731
  %v3244 = vunpack.c.l.b16 %v732
  %v3245 = vunpack.c.l.b16 %v733
  %v3246 = vunpack.c.l.b16 %v734
  %v3247 = vunpack.c.l.b16 %v735
  %v3248 = vunpack.c.l.b16 %v736
  %v3249 = vunpack.c.l.b16 %v737
  %v3250 = vunpack.c.l.b16 %v738
  %v3251 = vunpack.c.l.b16 %v739
  %v3252 = vunpack.c.l.b16 %v740
  %v3253 = vunpack.c.l.b16 %v741
  %v3254 = vunpack.c.l.b16 %v742
  %v3255 = vunpack.c.l.b16 %v743
  %v3256 = vunpack.c.l.b16 %v744
  %v3257 = vunpack.c.l.b16 %v745
  %v3258 = vunpack.c.l.b16 %v746
  %v3259 = vunpack.c.l.b16 %v747
  %v3260 = vunpack.c.l.b16 %v748
  %v3261 = vunpack.c.l.b16 %v749
  %v3262 = vunpack.c.l.b16 %v750
  %v3263 = vunpack.c.l.b16 %v751
  %v3264 = vunpack.c.l.b16 %v752
  %v3265 = vunpack.c.l.b16 %v753
  %v3266 = vunpack.c.l.b16 %v754
  %v3267 = vunpack.c.l.b16 %v755
  %v3268 = vunpack.c.l.b16 %v756
  %v3269 = vunpack.c.l.b16 %v757
  %v3270 = vunpack.c.l.b16 %v758
  %v3271 = vunpack.c.l.b16 %v759
  %v3272 = vunpack.c.l.b16 %v760
  %v3273 = vunpack.c.l.b16 %v761
  %v3274 = vunpack.c.l.b16 %v762
  %v3275 = vunpack.c.l.b16 %v763
  %v3276 = vunpack.c.l.b16 %v764
  %v3277 = vunpack.c.l.b16 %v765
  %v3278 = vunpack.c.l.b16 %v766
  %v3279 = vunpack.c.l.b16 %v767
  %v3280 = vunpack.c.l.b16 %v768
  %v3281 = vunpack.c.l.b16 %v769
  %v3282 = vunpack.c.l.b16 %v770
  %v3283 = vunpack.c.l.b16 %v771
  %v3284 = vunpack.c.l.b16 %v772
  %v3285 = vunpack.c.l.b16 %v773
  %v3286 = vunpack.c.l.b16 %v774
  %v3287 = vunpack.c.l.b16 %v775
  %v3288 = vunpack.c.l.b16 %v776
  %v3289 = vunpack.c.l.b16 %v777
  %v3290 = vunpack.c.l.b16 %v778
  %v3291 = vunpack.c.l.b16 %v779
  %v3292 = vunpack.c.l.b16 %v780
  %v3293 = vunpack.c.l.b16 %v781
  %v3294 = vunpack.c.l.b16 %v782
  %v3295 = vunpack.c.l.b16 %v783
  %v3296 = vunpack.c.l.b16 %v784
  %v3297 = vunpack.c.l.b16 %v785
  %v3298 = vunpack.c.l.b16 %v786
  %v3299 = vunpack.c.l.b16 %v787
  %v3300 = vunpack.c.l.b16 %v788
  %v3301 = vunpack.c.l.b16 %v789
  %v3302 = vunpack.c.l.b16 %v790
  %v3303 = vunpack.c.l.b16 %v791
  %v3304 = vunpack.c.l.b16 %v792
  %v3305 = vunpack.c.l.b16 %v793
  %v3306 = vunpack.c.l.b16 %v794
  %v3307 = vunpack.c.l.b16 %v795
  %v3308 = vunpack.c.l.b16 %v796
  %v3309 = vunpack.c.l.b16 %v797
  %v3310 = vunpack.c.l.b16 %v798
  %v3311 = vunpack.c.l.b16 %v799
  %v3312 = vunpack.c.l.b16 %v800
  %v3313 = vunpack.c.l.b16 %v801
  %v3314 = vunpack.c.l.b16 %v802
  %v3315 = vunpack.c.l.b16 %v803
  %v3316 = vunpack.c.l.b16 %v804
  %v3317 = vunpack.c.l.b16 %v805
  %v3318 = vunpack.c.l.b16 %v806
  %v3319 = vunpack.c.l.b16 %v807
  %v3320 = vunpack.c.l.b16 %v808
  %v3321 = vunpack.c.l.b16 %v809
  %v3322 = vunpack.c.l.b16 %v810
  %v3323 = vunpack.c.l.b16 %v811
  %v3324 = vunpack.c.l.b16 %v812
  %v3325 = vunpack.c.l.b16 %v813
  %v3326 = vunpack.c.l.b16 %v814
  %v3327 = vunpack.c.l.b16 %v815
  %v3328 = vunpack.c.l.b16 %v816
  %v3329 = vunpack.c.l.b16 %v817
  %v3330 = vunpack.c.l.b16 %v818
  %v3331 = vunpack.c.l.b16 %v819
  %v3332 = vunpack.c.l.b16 %v820
  %v3333 = vunpack.c.l.b16 %v821
  %v3334 = vunpack.c.l.b16 %v822
  %v3335 = vunpack.c.l.b16 %v823
  %v3336 = vunpack.c.l.b16 %v824
  %v3337 = vunpack.c.l.b16 %v825
  %v3338 = vunpack.c.l.b16 %v826
  %v3339 = vunpack.c.l.b16 %v827
  %v3340 = vunpack.c.l.b16 %v828
  %v3341 = vunpack.c.l.b16 %v829
  %v3342 = vunpack.c.l.b16 %v830
  %v3343 = vunpack.c.l.b16 %v831
  %v3344 = vunpack.c.l.b16 %v832
  %v3345 = vunpack.c.l.b16 %v833
  %v3346 = vunpack.c.l.b16 %v834
  %v3347 = vunpack.c.l.b16 %v835
  %v3348 = vunpack.c.l.b16 %v836
  %v3349 = vunpack.c.l.b16 %v837
  %v3350 = vunpack.c.l.b16 %v838
  %v3351 = vunpack.c.l.b16 %v839
  %v3352 = vunpack.c.l.b16 %v840
  %v3353 = vunpack.c.l.b16 %v841
  %v3354 = vunpack.c.l.b16 %v842
  %v3355 = vunpack.c.l.b16 %v843
  %v3356 = vunpack.c.l.b16 %v844
  %v3357 = vunpack.c.l.b16 %v845
  %v3358 = vunpack.c.l.b16 %v846
  %v3359 = vunpack.c.l.b16 %v847
  %v3360 = vunpack.c.l.b16 %v848
  %v3361 = vunpack.c.l.b16 %v849
  %v3362 = vunpack.c.l.b16 %v850
  %v3363 = vunpack.c.l.b16 %v851
  %v3364 = vunpack.c.l.b16 %v852
  %v3365 = vunpack.c.l.b16 %v853
  %v3366 = vunpack.c.l.b16 %v854
  %v3367 = vunpack.c.l.b16 %v855
  %v3368 = vunpack.c.l.b16 %v856
  %v3369 = vunpack.c.l.b16 %v857
  %v3370 = vunpack.c.l.b16 %v858
  %v3371 = vunpack.c.l.b16 %v859
  %v3372 = vunpack.c.l.b16 %v860
  %v3373 = vunpack.c.l.b16 %v861
  %v3374 = vunpack.c.l.b16 %v862
  %v3375 = vunpack.c.l.b16 %v863
  %v3376 = vunpack.c.l.b16 %v864
  %v3377 = vunpack.c.l.b16 %v865
  %v3378 = vunpack.c.l.b16 %v866
  %v3379 = vunpack.c.l.b16 %v867
  %v3380 = vunpack.c.l.b16 %v868
  %v3381 = vunpack.c.l.b16 %v869
  %v3382 = vunpack.c.l.b16 %v870
  %v3383 = vunpack.c.l.b16 %v871
  %v3384 = vunpack.c.l.b16 %v872
  %v3385 = vunpack.c.l.b16 %v873
  %v3386 = vunpack.c.l.b16 %v874
  %v3387 = vunpack.c.l.b16 %v875
  %v3388 = vunpack.c.l.b16 %v876
  %v3389 = vunpack.c.l.b16 %v877
  %v3390 = vunpack.c.l.b16 %v878
  %v3391 = vunpack.c.l.b16 %v879
  %v3392 = vunpack.c.l.b16 %v880
  %v3393 = vunpack.c.l.b16 %v881
  %v3394 = vunpack.c.l.b16 %v882
  %v3395 = vunpack.c.l.b16 %v883
  %v3396 = vunpack.c.l.b16 %v884
  %v3397 = vunpack.c.l.b16 %v885
  %v3398 = vunpack.c.l.b16 %v886
  %v3399 = vunpack.c.l.b16 %v887
  %v3400 = vunpack.c.l.b16 %v888
  %v3401 = vunpack.c.l.b16 %v889
  %v3402 = vunpack.c.l.b16 %v890
  %v3403 = vunpack.c.l.b16 %v891
  %v3404 = vunpack.c.l.b16 %v892
  %v3405 = vunpack.c.l.b16 %v893
  %v3406 = vunpack.c.l.b16 %v894
  %v3407 = vunpack.c.l.b16 %v895
  %v3408 = vunpack.c.l.b16 %v896
  %v3409 = vunpack.c.l.b16 %v897
  %v3410 = vunpack.c.l.b16 %v898
  %v3411 = vunpack.c.l.b16 %v899
  %v3412 = vunpack.c.l.b16 %v900
  %v3413 = vunpack.c.l.b16 %v901
  %v3414 = vunpack.c.l.b16 %v902
  %v3415 = vunpack.c.l.b16 %v903
  %v3416 = vunpack.c.l.b16 %v904
  %v3417 = vunpack.c.l.b16 %v905
  %v3418 = vunpack.c.l.b16 %v906
  %v3419 = vunpack.c.l.b16 %v907
  %v3420 = vunpack.c.l.b16 %v908
  %v3421 = vunpack.c.l.b16 %v909
  %v3422 = vunpack.c.l.b16 %v910
  %v3423 = vunpack.c.l.b16 %v911
  %v3424 = vunpack.c.l.b16 %v912
  %v3425 = vunpack.c.l.b16 %v913
  %v3426 = vunpack.c.l.b16 %v914
  %v3427 = vunpack.c.l.b16 %v915
  %v3428 = vunpack.c.l.b16 %v916
  %v3429 = vunpack.c.l.b16 %v917
  %v3430 = vunpack.c.l.b16 %v918
  %v3431 = vunpack.c.l.b16 %v919
  %v3432 = vunpack.c.l.b16 %v920
  %v3433 = vunpack.c.l.b16 %v921
  %v3434 = vunpack.c.l.b16 %v922
  %v3435 = vunpack.c.l.b16 %v923
  %v3436 = vunpack.c.l.b16 %v924
  %v3437 = vunpack.c.l.b16 %v925
  %v3438 = vunpack.c.l.b16 %v926
  %v3439 = vunpack.c.l.b16 %v927
  %v3440 = vunpack.c.l.b16 %v928
  %v3441 = vunpack.c.l.b16 %v929
  %v3442 = vunpack.c.l.b16 %v930
  %v3443 = vunpack.c.l.b16 %v931
  %v3444 = vunpack.c.l.b16 %v932
  %v3445 = vunpack.c.l.b16 %v933
  %v3446 = vunpack.c.l.b16 %v934
  %v3447 = vunpack.c.l.b16 %v935
  %v3448 = vunpack.c.l.b16 %v936
  %v3449 = vunpack.c.l.b16 %v937
  %v3450 = vunpack.c.l.b16 %v938
  %v3451 = vunpack.c.l.b16 %v939
  %v3452 = vunpack.c.l.b16 %v940
  %v3453 = vunpack.c.l.b16 %v941
  %v3454 = vunpack.c.l.b16 %v942
  %v3455 = vunpack.c.l.b16 %v943
  %v3456 = vunpack.c.l.b16 %v944
  %v3457 = vunpack.c.l.b16 %v945
  %v3458 = vunpack.c.l.b16 %v946
  %v3459 = vunpack.c.l.b16 %v947
  %v3460 = vunpack.c.l.b16 %v948
  %v3461 = vunpack.c.l.b16 %v949
  %v3462 = vunpack.c.l.b16 %v950
  %v3463 = vunpack.c.l.b16 %v951
  %v3464 = vunpack.c.l.b16 %v952
  %v3465 = vunpack.c.l.b16 %v953
  %v3466 = vunpack.c.l.b16 %v954
  %v3467 = vunpack.c.l.b16 %v955
  %v3468 = vunpack.c.l.b16 %v956
  %v3469 = vunpack.c.l.b16 %v957
  %v3470 = vunpack.c.l.b16 %v958
  %v3471 = vunpack.c.l.b16 %v959
  %v3472 = vunpack.c.l.b16 %v960
  %v3473 = vunpack.c.l.b16 %v961
  %v3474 = vunpack.c.l.b16 %v962
  %v3475 = vunpack.c.l.b16 %v963
  %v3476 = vunpack.c.l.b16 %v964
  %v3477 = vunpack.c.l.b16 %v965
  %v3478 = vunpack.c.l.b16 %v966
  %v3479 = vunpack.c.l.b16 %v967
  %v3480 = vunpack.c.l.b16 %v968
  %v3481 = vunpack.c.l.b16 %v969
  %v3482 = vunpack.c.l.b16 %v970
  %v3483 = vunpack.c.l.b16 %v971
  %v3484 = vunpack.c.l.b16 %v972
  %v3485 = vunpack.c.l.b16 %v973
  %v3486 = vunpack.c.l.b16 %v974
  %v3487 = vunpack.c.l.b16 %v975
  %v3488 = vunpack.c.l.b16 %v976
  %v3489 = vunpack.c.l.b16 %v977
  %v3490 = vunpack.c.l.b16 %v978
  %v3491 = vunpack.c.l.b16 %v979
  %v3492 = vunpack.c.l.b16 %v980
  %v3493 = vunpack.c.l.b16 %v981
  %v3494 = vunpack.c.l.b16 %v982
  %v3495 = vunpack.c.l.b16 %v983
  %v3496 = vunpack.c.l.b16 %v984
  %v3497 = vunpack.c.l.b16 %v985
  %v3498 = vunpack.c.l.b16 %v986
  %v3499 = vunpack.c.l.b16 %v987
  %v3500 = vunpack.c.l.b16 %v988
  %v3501 = vunpack.c.l.b16 %v989
  %v3502 = vunpack.c.l.b16 %v990
  %v3503 = vunpack.c.l.b16 %v991
  %v3504 = vunpack.c.l.b16 %v992
  %v3505 = vunpack.c.l.b16 %v993
  %v3506 = vunpack.c.l.b16 %v994
  %v3507 = vunpack.c.l.b16 %v995
  %v3508 = vunpack.c.l.b16 %v996
  %v3509 = vunpack.c.l.b16 %v997
  %v3510 = vunpack.c.l.b16 %v998
  %v3511 = vunpack.c.l.b16 %v999
  %v3512 = vunpack.c.l.b16 %v1000
  %v3513 = vunpack.c.l.b16 %v1001
  %v3514 = vunpack.c.l.b16 %v1002
  %v3515 = vunpack.c.l.b16 %v1003
  %v3516 = vunpack.c.l.b16 %v1004
  %v3517 = vunpack.c.l.b16 %v1005
  %v3518 = vunpack.c.l.b16 %v1006
  %v3519 = vunpack.c.l.b16 %v1007
  %v3520 = vunpack.c.l.b16 %v1008
  %v3521 = vunpack.c.l.b16 %v1009
  %v3522 = vunpack.c.l.b16 %v1010
  %v3523 = vunpack.c.l.b16 %v1011
  %v3524 = vunpack.c.l.b16 %v1012
  %v3525 = vunpack.c.l.b16 %v1013
  %v3526 = vunpack.c.l.b16 %v1014
  %v3527 = vunpack.c.l.b16 %v1015
  %v3528 = vunpack.c.l.b16 %v1016
  %v3529 = vunpack.c.l.b16 %v1017
  %v3530 = vunpack.c.l.b16 %v1018
  %v3531 = vunpack.c.l.b16 %v1019
  %v3532 = vunpack.c.l.b16 %v1020
  %v3533 = vunpack.c.l.b16 %v1021
  %v3534 = vunpack.c.l.b16 %v1022
  %v3535 = vunpack.c.l.b16 %v1023
  %v3536 = vunpack.c.l.b16 %v1024
  %v3537 = vunpack.c.l.b16 %v1025
  %v3538 = vunpack.c.l.b16 %v1026
  %v3539 = vunpack.c.l.b16 %v1027
  %v3540 = vunpack.c.l.b16 %v1028
  %v3541 = vunpack.c.l.b16 %v1029
  %v3542 = vunpack.c.l.b16 %v1030
  %v3543 = vunpack.c.l.b16 %v1031
  %v3544 = vunpack.c.l.b16 %v1032
  %v3545 = vunpack.c.l.b16 %v1033
  %v3546 = vunpack.c.l.b16 %v1034
  %v3547 = vunpack.c.l.b16 %v1035
  %v3548 = vunpack.c.l.b16 %v1036
  %v3549 = vunpack.c.l.b16 %v1037
  %v3550 = vunpack.c.l.b16 %v1038
  %v3551 = vunpack.c.l.b16 %v1039
  %v3552 = vunpack.c.l.b16 %v1040
  %v3553 = vunpack.c.l.b16 %v1041
  %v3554 = vunpack.c.l.b16 %v1042
  %v3555 = vunpack.c.l.b16 %v1043
  %v3556 = vpack.c.b16 %v2533, %v2532
  %v3557 = vpack.c.b16 %v2535, %v2534
  %v3558 = vpack.c.b16 %v2537, %v2536
  %v3559 = vpack.c.b16 %v2539, %v2538
  %v3560 = vpack.c.b16 %v2541, %v2540
  %v3561 = vpack.c.b16 %v2543, %v2542
  %v3562 = vpack.c.b16 %v2545, %v2544
  %v3563 = vpack.c.b16 %v2547, %v2546
  %v3564 = vpack.c.b16 %v2549, %v2548
  %v3565 = vpack.c.b16 %v2551, %v2550
  %v3566 = vpack.c.b16 %v2553, %v2552
  %v3567 = vpack.c.b16 %v2555, %v2554
  %v3568 = vpack.c.b16 %v2557, %v2556
  %v3569 = vpack.c.b16 %v2559, %v2558
  %v3570 = vpack.c.b16 %v2561, %v2560
  %v3571 = vpack.c.b16 %v2563, %v2562
  %v3572 = vpack.c.b16 %v2565, %v2564
  %v3573 = vpack.c.b16 %v2567, %v2566
  %v3574 = vpack.c.b16 %v2569, %v2568
  %v3575 = vpack.c.b16 %v2571, %v2570
  %v3576 = vpack.c.b16 %v2573, %v2572
  %v3577 = vpack.c.b16 %v2575, %v2574
  %v3578 = vpack.c.b16 %v2577, %v2576
  %v3579 = vpack.c.b16 %v2579, %v2578
  %v3580 = vpack.c.b16 %v2581, %v2580
  %v3581 = vpack.c.b16 %v2583, %v2582
  %v3582 = vpack.c.b16 %v2585, %v2584
  %v3583 = vpack.c.b16 %v2587, %v2586
  %v3584 = vpack.c.b16 %v2589, %v2588
  %v3585 = vpack.c.b16 %v2591, %v2590
  %v3586 = vpack.c.b16 %v2593, %v2592
  %v3587 = vpack.c.b16 %v2595, %v2594
  %v3588 = vpack.c.b16 %v2597, %v2596
  %v3589 = vpack.c.b16 %v2599, %v2598
  %v3590 = vpack.c.b16 %v2601, %v2600
  %v3591 = vpack.c.b16 %v2603, %v2602
  %v3592 = vpack.c.b16 %v2605, %v2604
  %v3593 = vpack.c.b16 %v2607, %v2606
  %v3594 = vpack.c.b16 %v2609, %v2608
  %v3595 = vpack.c.b16 %v2611, %v2610
  %v3596 = vpack.c.b16 %v2613, %v2612
  %v3597 = vpack.c.b16 %v2615, %v2614
  %v3598 = vpack.c.b16 %v2617, %v2616
  %v3599 = vpack.c.b16 %v2619, %v2618
  %v3600 = vpack.c.b16 %v2621, %v2620
  %v3601 = vpack.c.b16 %v2623, %v2622
  %v3602 = vpack.c.b16 %v2625, %v2624
  %v3603 = vpack.c.b16 %v2627, %v2626
  %v3604 = vpack.c.b16 %v2629, %v2628
  %v3605 = vpack.c.b16 %v2631, %v2630
  %v3606 = vpack.c.b16 %v2633, %v2632
  %v3607 = vpack.c.b16 %v2635, %v2634
  %v3608 = vpack.c.b16 %v2637, %v2636
  %v3609 = vpack.c.b16 %v2639, %v2638
  %v3610 = vpack.c.b16 %v2641, %v2640
  %v3611 = vpack.c.b16 %v2643, %v2642
  %v3612 = vpack.c.b16 %v2645, %v2644
  %v3613 = vpack.c.b16 %v2647, %v2646
  %v3614 = vpack.c.b16 %v2649, %v2648
  %v3615 = vpack.c.b16 %v2651, %v2650
  %v3616 = vpack.c.b16 %v2653, %v2652
  %v3617 = vpack.c.b16 %v2655, %v2654
  %v3618 = vpack.c.b16 %v2657, %v2656
  %v3619 = vpack.c.b16 %v2659, %v2658
  %v3620 = vpack.c.b16 %v2661, %v2660
  %v3621 = vpack.c.b16 %v2663, %v2662
  %v3622 = vpack.c.b16 %v2665, %v2664
  %v3623 = vpack.c.b16 %v2667, %v2666
  %v3624 = vpack.c.b16 %v2669, %v2668
  %v3625 = vpack.c.b16 %v2671, %v2670
  %v3626 = vpack.c.b16 %v2673, %v2672
  %v3627 = vpack.c.b16 %v2675, %v2674
  %v3628 = vpack.c.b16 %v2677, %v2676
  %v3629 = vpack.c.b16 %v2679, %v2678
  %v3630 = vpack.c.b16 %v2681, %v2680
  %v3631 = vpack.c.b16 %v2683, %v2682
  %v3632 = vpack.c.b16 %v2685, %v2684
  %v3633 = vpack.c.b16 %v2687, %v2686
  %v3634 = vpack.c.b16 %v2689, %v2688
  %v3635 = vpack.c.b16 %v2691, %v2690
  %v3636 = vpack.c.b16 %v2693, %v2692
  %v3637 = vpack.c.b16 %v2695, %v2694
  %v3638 = vpack.c.b16 %v2697, %v2696
  %v3639 = vpack.c.b16 %v2699, %v2698
  %v3640 = vpack.c.b16 %v2701, %v2700
  %v3641 = vpack.c.b16 %v2703, %v2702
  %v3642 = vpack.c.b16 %v2705, %v2704
  %v3643 = vpack.c.b16 %v2707, %v2706
  %v3644 = vpack.c.b16 %v2709, %v2708
  %v3645 = vpack.c.b16 %v2711, %v2710
  %v3646 = vpack.c.b16 %v2713, %v2712
  %v3647 = vpack.c.b16 %v2715, %v2714
  %v3648 = vpack.c.b16 %v2717, %v2716
  %v3649 = vpack.c.b16 %v2719, %v2718
  %v3650 = vpack.c.b16 %v2721, %v2720
  %v3651 = vpack.c.b16 %v2723, %v2722
  %v3652 = vpack.c.b16 %v2725, %v2724
  %v3653 = vpack.c.b16 %v2727, %v2726
  %v3654 = vpack.c.b16 %v2729, %v2728
  %v3655 = vpack.c.b16 %v2731, %v2730
  %v3656 = vpack.c.b16 %v2733, %v2732
  %v3657 = vpack.c.b16 %v2735, %v2734
  %v3658 = vpack.c.b16 %v2737, %v2736
  %v3659 = vpack.c.b16 %v2739, %v2738
  %v3660 = vpack.c.b16 %v2741, %v2740
  %v3661 = vpack.c.b16 %v2743, %v2742
  %v3662 = vpack.c.b16 %v2745, %v2744
  %v3663 = vpack.c.b16 %v2747, %v2746
  %v3664 = vpack.c.b16 %v2749, %v2748
  %v3665 = vpack.c.b16 %v2751, %v2750
  %v3666 = vpack.c.b16 %v2753, %v2752
  %v3667 = vpack.c.b16 %v2755, %v2754
  %v3668 = vpack.c.b16 %v2757, %v2756
  %v3669 = vpack.c.b16 %v2759, %v2758
  %v3670 = vpack.c.b16 %v2761, %v2760
  %v3671 = vpack.c.b16 %v2763, %v2762
  %v3672 = vpack.c.b16 %v2765, %v2764
  %v3673 = vpack.c.b16 %v2767, %v2766
  %v3674 = vpack.c.b16 %v2769, %v2768
  %v3675 = vpack.c.b16 %v2771, %v2770
  %v3676 = vpack.c.b16 %v2773, %v2772
  %v3677 = vpack.c.b16 %v2775, %v2774
  %v3678 = vpack.c.b16 %v2777, %v2776
  %v3679 = vpack.c.b16 %v2779, %v2778
  %v3680 = vpack.c.b16 %v2781, %v2780
  %v3681 = vpack.c.b16 %v2783, %v2782
  %v3682 = vpack.c.b16 %v2785, %v2784
  %v3683 = vpack.c.b16 %v2787, %v2786
  %v3684 = vpack.c.b16 %v2789, %v2788
  %v3685 = vpack.c.b16 %v2791, %v2790
  %v3686 = vpack.c.b16 %v2793, %v2792
  %v3687 = vpack.c.b16 %v2795, %v2794
  %v3688 = vpack.c.b16 %v2797, %v2796
  %v3689 = vpack.c.b16 %v2799, %v2798
  %v3690 = vpack.c.b16 %v2801, %v2800
  %v3691 = vpack.c.b16 %v2803, %v2802
  %v3692 = vpack.c.b16 %v2805, %v2804
  %v3693 = vpack.c.b16 %v2807, %v2806
  %v3694 = vpack.c.b16 %v2809, %v2808
  %v3695 = vpack.c.b16 %v2811, %v2810
  %v3696 = vpack.c.b16 %v2813, %v2812
  %v3697 = vpack.c.b16 %v2815, %v2814
  %v3698 = vpack.c.b16 %v2817, %v2816
  %v3699 = vpack.c.b16 %v2819, %v2818
  %v3700 = vpack.c.b16 %v2821, %v2820
  %v3701 = vpack.c.b16 %v2823, %v2822
  %v3702 = vpack.c.b16 %v2825, %v2824
  %v3703 = vpack.c.b16 %v2827, %v2826
  %v3704 = vpack.c.b16 %v2829, %v2828
  %v3705 = vpack.c.b16 %v2831, %v2830
  %v3706 = vpack.c.b16 %v2833, %v2832
  %v3707 = vpack.c.b16 %v2835, %v2834
  %v3708 = vpack.c.b16 %v2837, %v2836
  %v3709 = vpack.c.b16 %v2839, %v2838
  %v3710 = vpack.c.b16 %v2841, %v2840
  %v3711 = vpack.c.b16 %v2843, %v2842
  %v3712 = vpack.c.b16 %v2845, %v2844
  %v3713 = vpack.c.b16 %v2847, %v2846
  %v3714 = vpack.c.b16 %v2849, %v2848
  %v3715 = vpack.c.b16 %v2851, %v2850
  %v3716 = vpack.c.b16 %v2853, %v2852
  %v3717 = vpack.c.b16 %v2855, %v2854
  %v3718 = vpack.c.b16 %v2857, %v2856
  %v3719 = vpack.c.b16 %v2859, %v2858
  %v3720 = vpack.c.b16 %v2861, %v2860
  %v3721 = vpack.c.b16 %v2863, %v2862
  %v3722 = vpack.c.b16 %v2865, %v2864
  %v3723 = vpack.c.b16 %v2867, %v2866
  %v3724 = vpack.c.b16 %v2869, %v2868
  %v3725 = vpack.c.b16 %v2871, %v2870
  %v3726 = vpack.c.b16 %v2873, %v2872
  %v3727 = vpack.c.b16 %v2875, %v2874
  %v3728 = vpack.c.b16 %v2877, %v2876
  %v3729 = vpack.c.b16 %v2879, %v2878
  %v3730 = vpack.c.b16 %v2881, %v2880
  %v3731 = vpack.c.b16 %v2883, %v2882
  %v3732 = vpack.c.b16 %v2885, %v2884
  %v3733 = vpack.c.b16 %v2887, %v2886
  %v3734 = vpack.c.b16 %v2889, %v2888
  %v3735 = vpack.c.b16 %v2891, %v2890
  %v3736 = vpack.c.b16 %v2893, %v2892
  %v3737 = vpack.c.b16 %v2895, %v2894
  %v3738 = vpack.c.b16 %v2897, %v2896
  %v3739 = vpack.c.b16 %v2899, %v2898
  %v3740 = vpack.c.b16 %v2901, %v2900
  %v3741 = vpack.c.b16 %v2903, %v2902
  %v3742 = vpack.c.b16 %v2905, %v2904
  %v3743 = vpack.c.b16 %v2907, %v2906
  %v3744 = vpack.c.b16 %v2909, %v2908
  %v3745 = vpack.c.b16 %v2911, %v2910
  %v3746 = vpack.c.b16 %v2913, %v2912
  %v3747 = vpack.c.b16 %v2915, %v2914
  %v3748 = vpack.c.b16 %v2917, %v2916
  %v3749 = vpack.c.b16 %v2919, %v2918
  %v3750 = vpack.c.b16 %v2921, %v2920
  %v3751 = vpack.c.b16 %v2923, %v2922
  %v3752 = vpack.c.b16 %v2925, %v2924
  %v3753 = vpack.c.b16 %v2927, %v2926
  %v3754 = vpack.c.b16 %v2929, %v2928
  %v3755 = vpack.c.b16 %v2931, %v2930
  %v3756 = vpack.c.b16 %v2933, %v2932
  %v3757 = vpack.c.b16 %v2935, %v2934
  %v3758 = vpack.c.b16 %v2937, %v2936
  %v3759 = vpack.c.b16 %v2939, %v2938
  %v3760 = vpack.c.b16 %v2941, %v2940
  %v3761 = vpack.c.b16 %v2943, %v2942
  %v3762 = vpack.c.b16 %v2945, %v2944
  %v3763 = vpack.c.b16 %v2947, %v2946
  %v3764 = vpack.c.b16 %v2949, %v2948
  %v3765 = vpack.c.b16 %v2951, %v2950
  %v3766 = vpack.c.b16 %v2953, %v2952
  %v3767 = vpack.c.b16 %v2955, %v2954
  %v3768 = vpack.c.b16 %v2957, %v2956
  %v3769 = vpack.c.b16 %v2959, %v2958
  %v3770 = vpack.c.b16 %v2961, %v2960
  %v3771 = vpack.c.b16 %v2963, %v2962
  %v3772 = vpack.c.b16 %v2965, %v2964
  %v3773 = vpack.c.b16 %v2967, %v2966
  %v3774 = vpack.c.b16 %v2969, %v2968
  %v3775 = vpack.c.b16 %v2971, %v2970
  %v3776 = vpack.c.b16 %v2973, %v2972
  %v3777 = vpack.c.b16 %v2975, %v2974
  %v3778 = vpack.c.b16 %v2977, %v2976
  %v3779 = vpack.c.b16 %v2979, %v2978
  %v3780 = vpack.c.b16 %v2981, %v2980
  %v3781 = vpack.c.b16 %v2983, %v2982
  %v3782 = vpack.c.b16 %v2985, %v2984
  %v3783 = vpack.c.b16 %v2987, %v2986
  %v3784 = vpack.c.b16 %v2989, %v2988
  %v3785 = vpack.c.b16 %v2991, %v2990
  %v3786 = vpack.c.b16 %v2993, %v2992
  %v3787 = vpack.c.b16 %v2995, %v2994
  %v3788 = vpack.c.b16 %v2997, %v2996
  %v3789 = vpack.c.b16 %v2999, %v2998
  %v3790 = vpack.c.b16 %v3001, %v3000
  %v3791 = vpack.c.b16 %v3003, %v3002
  %v3792 = vpack.c.b16 %v3005, %v3004
  %v3793 = vpack.c.b16 %v3007, %v3006
  %v3794 = vpack.c.b16 %v3009, %v3008
  %v3795 = vpack.c.b16 %v3011, %v3010
  %v3796 = vpack.c.b16 %v3013, %v3012
  %v3797 = vpack.c.b16 %v3015, %v3014
  %v3798 = vpack.c.b16 %v3017, %v3016
  %v3799 = vpack.c.b16 %v3019, %v3018
  %v3800 = vpack.c.b16 %v3021, %v3020
  %v3801 = vpack.c.b16 %v3023, %v3022
  %v3802 = vpack.c.b16 %v3025, %v3024
  %v3803 = vpack.c.b16 %v3027, %v3026
  %v3804 = vpack.c.b16 %v3029, %v3028
  %v3805 = vpack.c.b16 %v3031, %v3030
  %v3806 = vpack.c.b16 %v3033, %v3032
  %v3807 = vpack.c.b16 %v3035, %v3034
  %v3808 = vpack.c.b16 %v3037, %v3036
  %v3809 = vpack.c.b16 %v3039, %v3038
  %v3810 = vpack.c.b16 %v3041, %v3040
  %v3811 = vpack.c.b16 %v3043, %v3042
  %v3812 = vpack.c.b16 %v3045, %v3044
  %v3813 = vpack.c.b16 %v3047, %v3046
  %v3814 = vpack.c.b16 %v3049, %v3048
  %v3815 = vpack.c.b16 %v3051, %v3050
  %v3816 = vpack.c.b16 %v3053, %v3052
  %v3817 = vpack.c.b16 %v3055, %v3054
  %v3818 = vpack.c.b16 %v3057, %v3056
  %v3819 = vpack.c.b16 %v3059, %v3058
  %v3820 = vpack.c.b16 %v3061, %v3060
  %v3821 = vpack.c.b16 %v3063, %v3062
  %v3822 = vpack.c.b16 %v3065, %v3064
  %v3823 = vpack.c.b16 %v3067, %v3066
  %v3824 = vpack.c.b16 %v3069, %v3068
  %v3825 = vpack.c.b16 %v3071, %v3070
  %v3826 = vpack.c.b16 %v3073, %v3072
  %v3827 = vpack.c.b16 %v3075, %v3074
  %v3828 = vpack.c.b16 %v3077, %v3076
  %v3829 = vpack.c.b16 %v3079, %v3078
  %v3830 = vpack.c.b16 %v3081, %v3080
  %v3831 = vpack.c.b16 %v3083, %v3082
  %v3832 = vpack.c.b16 %v3085, %v3084
  %v3833 = vpack.c.b16 %v3087, %v3086
  %v3834 = vpack.c.b16 %v3089, %v3088
  %v3835 = vpack.c.b16 %v3091, %v3090
  %v3836 = vpack.c.b16 %v3093, %v3092
  %v3837 = vpack.c.b16 %v3095, %v3094
  %v3838 = vpack.c.b16 %v3097, %v3096
  %v3839 = vpack.c.b16 %v3099, %v3098
  %v3840 = vpack.c.b16 %v3101, %v3100
  %v3841 = vpack.c.b16 %v3103, %v3102
  %v3842 = vpack.c.b16 %v3105, %v3104
  %v3843 = vpack.c.b16 %v3107, %v3106
  %v3844 = vpack.c.b16 %v3109, %v3108
  %v3845 = vpack.c.b16 %v3111, %v3110
  %v3846 = vpack.c.b16 %v3113, %v3112
  %v3847 = vpack.c.b16 %v3115, %v3114
  %v3848 = vpack.c.b16 %v3117, %v3116
  %v3849 = vpack.c.b16 %v3119, %v3118
  %v3850 = vpack.c.b16 %v3121, %v3120
  %v3851 = vpack.c.b16 %v3123, %v3122
  %v3852 = vpack.c.b16 %v3125, %v3124
  %v3853 = vpack.c.b16 %v3127, %v3126
  %v3854 = vpack.c.b16 %v3129, %v3128
  %v3855 = vpack.c.b16 %v3131, %v3130
  %v3856 = vpack.c.b16 %v3133, %v3132
  %v3857 = vpack.c.b16 %v3135, %v3134
  %v3858 = vpack.c.b16 %v3137, %v3136
  %v3859 = vpack.c.b16 %v3139, %v3138
  %v3860 = vpack.c.b16 %v3141, %v3140
  %v3861 = vpack.c.b16 %v3143, %v3142
  %v3862 = vpack.c.b16 %v3145, %v3144
  %v3863 = vpack.c.b16 %v3147, %v3146
  %v3864 = vpack.c.b16 %v3149, %v3148
  %v3865 = vpack.c.b16 %v3151, %v3150
  %v3866 = vpack.c.b16 %v3153, %v3152
  %v3867 = vpack.c.b16 %v3155, %v3154
  %v3868 = vpack.c.b16 %v3157, %v3156
  %v3869 = vpack.c.b16 %v3159, %v3158
  %v3870 = vpack.c.b16 %v3161, %v3160
  %v3871 = vpack.c.b16 %v3163, %v3162
  %v3872 = vpack.c.b16 %v3165, %v3164
  %v3873 = vpack.c.b16 %v3167, %v3166
  %v3874 = vpack.c.b16 %v3169, %v3168
  %v3875 = vpack.c.b16 %v3171, %v3170
  %v3876 = vpack.c.b16 %v3173, %v3172
  %v3877 = vpack.c.b16 %v3175, %v3174
  %v3878 = vpack.c.b16 %v3177, %v3176
  %v3879 = vpack.c.b16 %v3179, %v3178
  %v3880 = vpack.c.b16 %v3181, %v3180
  %v3881 = vpack.c.b16 %v3183, %v3182
  %v3882 = vpack.c.b16 %v3185, %v3184
  %v3883 = vpack.c.b16 %v3187, %v3186
  %v3884 = vpack.c.b16 %v3189, %v3188
  %v3885 = vpack.c.b16 %v3191, %v3190
  %v3886 = vpack.c.b16 %v3193, %v3192
  %v3887 = vpack.c.b16 %v3195, %v3194
  %v3888 = vpack.c.b16 %v3197, %v3196
  %v3889 = vpack.c.b16 %v3199, %v3198
  %v3890 = vpack.c.b16 %v3201, %v3200
  %v3891 = vpack.c.b16 %v3203, %v3202
  %v3892 = vpack.c.b16 %v3205, %v3204
  %v3893 = vpack.c.b16 %v3207, %v3206
  %v3894 = vpack.c.b16 %v3209, %v3208
  %v3895 = vpack.c.b16 %v3211, %v3210
  %v3896 = vpack.c.b16 %v3213, %v3212
  %v3897 = vpack.c.b16 %v3215, %v3214
  %v3898 = vpack.c.b16 %v3217, %v3216
  %v3899 = vpack.c.b16 %v3219, %v3218
  %v3900 = vpack.c.b16 %v3221, %v3220
  %v3901 = vpack.c.b16 %v3223, %v3222
  %v3902 = vpack.c.b16 %v3225, %v3224
  %v3903 = vpack.c.b16 %v3227, %v3226
  %v3904 = vpack.c.b16 %v3229, %v3228
  %v3905 = vpack.c.b16 %v3231, %v3230
  %v3906 = vpack.c.b16 %v3233, %v3232
  %v3907 = vpack.c.b16 %v3235, %v3234
  %v3908 = vpack.c.b16 %v3237, %v3236
  %v3909 = vpack.c.b16 %v3239, %v3238
  %v3910 = vpack.c.b16 %v3241, %v3240
  %v3911 = vpack.c.b16 %v3243, %v3242
  %v3912 = vpack.c.b16 %v3245, %v3244
  %v3913 = vpack.c.b16 %v3247, %v3246
  %v3914 = vpack.c.b16 %v3249, %v3248
  %v3915 = vpack.c.b16 %v3251, %v3250
  %v3916 = vpack.c.b16 %v3253, %v3252
  %v3917 = vpack.c.b16 %v3255, %v3254
  %v3918 = vpack.c.b16 %v3257, %v3256
  %v3919 = vpack.c.b16 %v3259, %v3258
  %v3920 = vpack.c.b16 %v3261, %v3260
  %v3921 = vpack.c.b16 %v3263, %v3262
  %v3922 = vpack.c.b16 %v3265, %v3264
  %v3923 = vpack.c.b16 %v3267, %v3266
  %v3924 = vpack.c.b16 %v3269, %v3268
  %v3925 = vpack.c.b16 %v3271, %v3270
  %v3926 = vpack.c.b16 %v3273, %v3272
  %v3927 = vpack.c.b16 %v3275, %v3274
  %v3928 = vpack.c.b16 %v3277, %v3276
  %v3929 = vpack.c.b16 %v3279, %v3278
  %v3930 = vpack.c.b16 %v3281, %v3280
  %v3931 = vpack.c.b16 %v3283, %v3282
  %v3932 = vpack.c.b16 %v3285, %v3284
  %v3933 = vpack.c.b16 %v3287, %v3286
  %v3934 = vpack.c.b16 %v3289, %v3288
  %v3935 = vpack.c.b16 %v3291, %v3290
  %v3936 = vpack.c.b16 %v3293, %v3292
  %v3937 = vpack.c.b16 %v3295, %v3294
  %v3938 = vpack.c.b16 %v3297, %v3296
  %v3939 = vpack.c.b16 %v3299, %v3298
  %v3940 = vpack.c.b16 %v3301, %v3300
  %v3941 = vpack.c.b16 %v3303, %v3302
  %v3942 = vpack.c.b16 %v3305, %v3304
  %v3943 = vpack.c.b16 %v3307, %v3306
  %v3944 = vpack.c.b16 %v3309, %v3308
  %v3945 = vpack.c.b16 %v3311, %v3310
  %v3946 = vpack.c.b16 %v3313, %v3312
  %v3947 = vpack.c.b16 %v3315, %v3314
  %v3948 = vpack.c.b16 %v3317, %v3316
  %v3949 = vpack.c.b16 %v3319, %v3318
  %v3950 = vpack.c.b16 %v3321, %v3320
  %v3951 = vpack.c.b16 %v3323, %v3322
  %v3952 = vpack.c.b16 %v3325, %v3324
  %v3953 = vpack.c.b16 %v3327, %v3326
  %v3954 = vpack.c.b16 %v3329, %v3328
  %v3955 = vpack.c.b16 %v3331, %v3330
  %v3956 = vpack.c.b16 %v3333, %v3332
  %v3957 = vpack.c.b16 %v3335, %v3334
  %v3958 = vpack.c.b16 %v3337, %v3336
  %v3959 = vpack.c.b16 %v3339, %v3338
  %v3960 = vpack.c.b16 %v3341, %v3340
  %v3961 = vpack.c.b16 %v3343, %v3342
  %v3962 = vpack.c.b16 %v3345, %v3344
  %v3963 = vpack.c.b16 %v3347, %v3346
  %v3964 = vpack.c.b16 %v3349, %v3348
  %v3965 = vpack.c.b16 %v3351, %v3350
  %v3966 = vpack.c.b16 %v3353, %v3352
  %v3967 = vpack.c.b16 %v3355, %v3354
  %v3968 = vpack.c.b16 %v3357, %v3356
  %v3969 = vpack.c.b16 %v3359, %v3358
  %v3970 = vpack.c.b16 %v3361, %v3360
  %v3971 = vpack.c.b16 %v3363, %v3362
  %v3972 = vpack.c.b16 %v3365, %v3364
  %v3973 = vpack.c.b16 %v3367, %v3366
  %v3974 = vpack.c.b16 %v3369, %v3368
  %v3975 = vpack.c.b16 %v3371, %v3370
  %v3976 = vpack.c.b16 %v3373, %v3372
  %v3977 = vpack.c.b16 %v3375, %v3374
  %v3978 = vpack.c.b16 %v3377, %v3376
  %v3979 = vpack.c.b16 %v3379, %v3378
  %v3980 = vpack.c.b16 %v3381, %v3380
  %v3981 = vpack.c.b16 %v3383, %v3382
  %v3982 = vpack.c.b16 %v3385, %v3384
  %v3983 = vpack.c.b16 %v3387, %v3386
  %v3984 = vpack.c.b16 %v3389, %v3388
  %v3985 = vpack.c.b16 %v3391, %v3390
  %v3986 = vpack.c.b16 %v3393, %v3392
  %v3987 = vpack.c.b16 %v3395, %v3394
  %v3988 = vpack.c.b16 %v3397, %v3396
  %v3989 = vpack.c.b16 %v3399, %v3398
  %v3990 = vpack.c.b16 %v3401, %v3400
  %v3991 = vpack.c.b16 %v3403, %v3402
  %v3992 = vpack.c.b16 %v3405, %v3404
  %v3993 = vpack.c.b16 %v3407, %v3406
  %v3994 = vpack.c.b16 %v3409, %v3408
  %v3995 = vpack.c.b16 %v3411, %v3410
  %v3996 = vpack.c.b16 %v3413, %v3412
  %v3997 = vpack.c.b16 %v3415, %v3414
  %v3998 = vpack.c.b16 %v3417, %v3416
  %v3999 = vpack.c.b16 %v3419, %v3418
  %v4000 = vpack.c.b16 %v3421, %v3420
  %v4001 = vpack.c.b16 %v3423, %v3422
  %v4002 = vpack.c.b16 %v3425, %v3424
  %v4003 = vpack.c.b16 %v3427, %v3426
  %v4004 = vpack.c.b16 %v3429, %v3428
  %v4005 = vpack.c.b16 %v3431, %v3430
  %v4006 = vpack.c.b16 %v3433, %v3432
  %v4007 = vpack.c.b16 %v3435, %v3434
  %v4008 = vpack.c.b16 %v3437, %v3436
  %v4009 = vpack.c.b16 %v3439, %v3438
  %v4010 = vpack.c.b16 %v3441, %v3440
  %v4011 = vpack.c.b16 %v3443, %v3442
  %v4012 = vpack.c.b16 %v3445, %v3444
  %v4013 = vpack.c.b16 %v3447, %v3446
  %v4014 = vpack.c.b16 %v3449, %v3448
  %v4015 = vpack.c.b16 %v3451, %v3450
  %v4016 = vpack.c.b16 %v3453, %v3452
  %v4017 = vpack.c.b16 %v3455, %v3454
  %v4018 = vpack.c.b16 %v3457, %v3456
  %v4019 = vpack.c.b16 %v3459, %v3458
  %v4020 = vpack.c.b16 %v3461, %v3460
  %v4021 = vpack.c.b16 %v3463, %v3462
  %v4022 = vpack.c.b16 %v3465, %v3464
  %v4023 = vpack.c.b16 %v3467, %v3466
  %v4024 = vpack.c.b16 %v3469, %v3468
  %v4025 = vpack.c.b16 %v3471, %v3470
  %v4026 = vpack.c.b16 %v3473, %v3472
  %v4027 = vpack.c.b16 %v3475, %v3474
  %v4028 = vpack.c.b16 %v3477, %v3476
  %v4029 = vpack.c.b16 %v3479, %v3478
  %v4030 = vpack.c.b16 %v3481, %v3480
  %v4031 = vpack.c.b16 %v3483, %v3482
  %v4032 = vpack.c.b16 %v3485, %v3484
  %v4033 = vpack.c.b16 %v3487, %v3486
  %v4034 = vpack.c.b16 %v3489, %v3488
  %v4035 = vpack.c.b16 %v3491, %v3490
  %v4036 = vpack.c.b16 %v3493, %v3492
  %v4037 = vpack.c.b16 %v3495, %v3494
  %v4038 = vpack.c.b16 %v3497, %v3496
  %v4039 = vpack.c.b16 %v3499, %v3498
  %v4040 = vpack.c.b16 %v3501, %v3500
  %v4041 = vpack.c.b16 %v3503, %v3502
  %v4042 = vpack.c.b16 %v3505, %v3504
  %v4043 = vpack.c.b16 %v3507, %v3506
  %v4044 = vpack.c.b16 %v3509, %v3508
  %v4045 = vpack.c.b16 %v3511, %v3510
  %v4046 = vpack.c.b16 %v3513, %v3512
  %v4047 = vpack.c.b16 %v3515, %v3514
  %v4048 = vpack.c.b16 %v3517, %v3516
  %v4049 = vpack.c.b16 %v3519, %v3518
  %v4050 = vpack.c.b16 %v3521, %v3520
  %v4051 = vpack.c.b16 %v3523, %v3522
  %v4052 = vpack.c.b16 %v3525, %v3524
  %v4053 = vpack.c.b16 %v3527, %v3526
  %v4054 = vpack.c.b16 %v3529, %v3528
  %v4055 = vpack.c.b16 %v3531, %v3530
  %v4056 = vpack.c.b16 %v3533, %v3532
  %v4057 = vpack.c.b16 %v3535, %v3534
  %v4058 = vpack.c.b16 %v3537, %v3536
  %v4059 = vpack.c.b16 %v3539, %v3538
  %v4060 = vpack.c.b16 %v3541, %v3540
  %v4061 = vpack.c.b16 %v3543, %v3542
  %v4062 = vpack.c.b16 %v3545, %v3544
  %v4063 = vpack.c.b16 %v3547, %v3546
  %v4064 = vpack.c.b16 %v3549, %v3548
  %v4065 = vpack.c.b16 %v3551, %v3550
  %v4066 = vpack.c.b16 %v3553, %v3552
  %v4067 = vpack.c.b16 %v3555, %v3554
  %4580 = vmatprep.subr.bf16.mxu0 0
  %4581 = vmatpush1.bf16.msra.mxu0 %v3556
  %4582 = vmatprep.subr.bf16.mxu0 0
  %4583 = vmatpush1.bf16.msra.mxu0 %v3557
  %4584 = vmatprep.subr.bf16.mxu0 0
  %4585 = vmatpush1.bf16.msra.mxu0 %v3558
  %4586 = vmatprep.subr.bf16.mxu0 0
  %4587 = vmatpush1.bf16.msra.mxu0 %v3559
  %4588 = vmatprep.subr.bf16.mxu0 0
  %4589 = vmatpush1.bf16.msra.mxu0 %v3560
  %4590 = vmatprep.subr.bf16.mxu0 0
  %4591 = vmatpush1.bf16.msra.mxu0 %v3561
  %4592 = vmatprep.subr.bf16.mxu0 0
  %4593 = vmatpush1.bf16.msra.mxu0 %v3562
  %4594 = vmatprep.subr.bf16.mxu0 0
  %4595 = vmatpush1.bf16.msra.mxu0 %v3563
  %4596 = vmatprep.subr.bf16.mxu0 0
  %4597 = vmatpush1.bf16.msra.mxu0 %v3564
  %4598 = vmatprep.subr.bf16.mxu0 0
  %4599 = vmatpush1.bf16.msra.mxu0 %v3565
  %4600 = vmatprep.subr.bf16.mxu0 0
  %4601 = vmatpush1.bf16.msra.mxu0 %v3566
  %4602 = vmatprep.subr.bf16.mxu0 0
  %4603 = vmatpush1.bf16.msra.mxu0 %v3567
  %4604 = vmatprep.subr.bf16.mxu0 0
  %4605 = vmatpush1.bf16.msra.mxu0 %v3568
  %4606 = vmatprep.subr.bf16.mxu0 0
  %4607 = vmatpush1.bf16.msra.mxu0 %v3569
  %4608 = vmatprep.subr.bf16.mxu0 0
  %4609 = vmatpush1.bf16.msra.mxu0 %v3570
  %4610 = vmatprep.subr.bf16.mxu0 0
  %4611 = vmatpush1.bf16.msra.mxu0 %v3571
  %4612 = vmatprep.mubr.bf16.mxu0 %v1089
  %4613 = vmatmul.mubr.bf16.gmra.mrb[0].mxu0 %v1075
  %v4614 = vpop.f32.mrb[0].mxu0
  %v4615 = vadd.f32 0.0, %v4614
  %v4616 = vpop.f32.mrb[0].mxu0
  %v4617 = vpop.f32.mrb[0].mxu0
  %v4618 = vpop.f32.mrb[0].mxu0
  %4619 = vdwg.mxu0
  %4620 = vmatprep.subr.bf16.mxu0 0
  %4621 = vmatpush1.bf16.msra.mxu0 %v3572
  %4622 = vmatprep.subr.bf16.mxu0 0
  %4623 = vmatpush1.bf16.msra.mxu0 %v3573
  %4624 = vmatprep.subr.bf16.mxu0 0
  %4625 = vmatpush1.bf16.msra.mxu0 %v3574
  %4626 = vmatprep.subr.bf16.mxu0 0
  %4627 = vmatpush1.bf16.msra.mxu0 %v3575
  %4628 = vmatprep.subr.bf16.mxu0 0
  %4629 = vmatpush1.bf16.msra.mxu0 %v3576
  %4630 = vmatprep.subr.bf16.mxu0 0
  %4631 = vmatpush1.bf16.msra.mxu0 %v3577
  %4632 = vmatprep.subr.bf16.mxu0 0
  %4633 = vmatpush1.bf16.msra.mxu0 %v3578
  %4634 = vmatprep.subr.bf16.mxu0 0
  %4635 = vmatpush1.bf16.msra.mxu0 %v3579
  %4636 = vmatprep.subr.bf16.mxu0 0
  %4637 = vmatpush1.bf16.msra.mxu0 %v3580
  %4638 = vmatprep.subr.bf16.mxu0 0
  %4639 = vmatpush1.bf16.msra.mxu0 %v3581
  %4640 = vmatprep.subr.bf16.mxu0 0
  %4641 = vmatpush1.bf16.msra.mxu0 %v3582
  %4642 = vmatprep.subr.bf16.mxu0 0
  %4643 = vmatpush1.bf16.msra.mxu0 %v3583
  %4644 = vmatprep.subr.bf16.mxu0 0
  %4645 = vmatpush1.bf16.msra.mxu0 %v3584
  %4646 = vmatprep.subr.bf16.mxu0 0
  %4647 = vmatpush1.bf16.msra.mxu0 %v3585
  %4648 = vmatprep.subr.bf16.mxu0 0
  %4649 = vmatpush1.bf16.msra.mxu0 %v3586
  %4650 = vmatprep.subr.bf16.mxu0 0
  %4651 = vmatpush1.bf16.msra.mxu0 %v3587
  %4652 = vmatprep.mubr.bf16.mxu0 %v1099
  %4653 = vmatmul.mubr.bf16.gmra.mrb[0].mxu0 %v1097
  %v4654 = vpop.f32.mrb[0].mxu0
  %v4655 = vadd.f32 %v4615, %v4654
  %v4656 = vpop.f32.mrb[0].mxu0
  %v4657 = vpop.f32.mrb[0].mxu0
  %v4658 = vpop.f32.mrb[0].mxu0
  %4659 = vdwg.mxu0
  %4660 = vmatprep.subr.bf16.mxu0 0
  %4661 = vmatpush1.bf16.msra.mxu0 %v3588
  %4662 = vmatprep.subr.bf16.mxu0 0
  %4663 = vmatpush1.bf16.msra.mxu0 %v3589
  %4664 = vmatprep.subr.bf16.mxu0 0
  %4665 = vmatpush1.bf16.msra.mxu0 %v3590
  %4666 = vmatprep.subr.bf16.mxu0 0
  %4667 = vmatpush1.bf16.msra.mxu0 %v3591
  %4668 = vmatprep.subr.bf16.mxu0 0
  %4669 = vmatpush1.bf16.msra.mxu0 %v3592
  %4670 = vmatprep.subr.bf16.mxu0 0
  %4671 = vmatpush1.bf16.msra.mxu0 %v3593
  %4672 = vmatprep.subr.bf16.mxu0 0
  %4673 = vmatpush1.bf16.msra.mxu0 %v3594
  %4674 = vmatprep.subr.bf16.mxu0 0
  %4675 = vmatpush1.bf16.msra.mxu0 %v3595
  %4676 = vmatprep.subr.bf16.mxu0 0
  %4677 = vmatpush1.bf16.msra.mxu0 %v3596
  %4678 = vmatprep.subr.bf16.mxu0 0
  %4679 = vmatpush1.bf16.msra.mxu0 %v3597
  %4680 = vmatprep.subr.bf16.mxu0 0
  %4681 = vmatpush1.bf16.msra.mxu0 %v3598
  %4682 = vmatprep.subr.bf16.mxu0 0
  %4683 = vmatpush1.bf16.msra.mxu0 %v3599
  %4684 = vmatprep.subr.bf16.mxu0 0
  %4685 = vmatpush1.bf16.msra.mxu0 %v3600
  %4686 = vmatprep.subr.bf16.mxu0 0
  %4687 = vmatpush1.bf16.msra.mxu0 %v3601
  %4688 = vmatprep.subr.bf16.mxu0 0
  %4689 = vmatpush1.bf16.msra.mxu0 %v3602
  %4690 = vmatprep.subr.bf16.mxu0 0
  %4691 = vmatpush1.bf16.msra.mxu0 %v3603
  %4692 = vmatprep.mubr.bf16.mxu0 %v1096
  %4693 = vmatmul.mubr.bf16.gmra.mrb[0].mxu0 %v1082
  %v4694 = vpop.f32.mrb[0].mxu0
  %v4695 = vadd.f32 %v4655, %v4694
  %v4696 = vpop.f32.mrb[0].mxu0
  %v4697 = vpop.f32.mrb[0].mxu0
  %v4698 = vpop.f32.mrb[0].mxu0
  %4699 = vdwg.mxu0
  %4700 = vmatprep.subr.bf16.mxu0 0
  %4701 = vmatpush1.bf16.msra.mxu0 %v3604
  %4702 = vmatprep.subr.bf16.mxu0 0
  %4703 = vmatpush1.bf16.msra.mxu0 %v3605
  %4704 = vmatprep.subr.bf16.mxu0 0
  %4705 = vmatpush1.bf16.msra.mxu0 %v3606
  %4706 = vmatprep.subr.bf16.mxu0 0
  %4707 = vmatpush1.bf16.msra.mxu0 %v3607
  %4708 = vmatprep.subr.bf16.mxu0 0
  %4709 = vmatpush1.bf16.msra.mxu0 %v3608
  %4710 = vmatprep.subr.bf16.mxu0 0
  %4711 = vmatpush1.bf16.msra.mxu0 %v3609
  %4712 = vmatprep.subr.bf16.mxu0 0
  %4713 = vmatpush1.bf16.msra.mxu0 %v3610
  %4714 = vmatprep.subr.bf16.mxu0 0
  %4715 = vmatpush1.bf16.msra.mxu0 %v3611
  %4716 = vmatprep.subr.bf16.mxu0 0
  %4717 = vmatpush1.bf16.msra.mxu0 %v3612
  %4718 = vmatprep.subr.bf16.mxu0 0
  %4719 = vmatpush1.bf16.msra.mxu0 %v3613
  %4720 = vmatprep.subr.bf16.mxu0 0
  %4721 = vmatpush1.bf16.msra.mxu0 %v3614
  %4722 = vmatprep.subr.bf16.mxu0 0
  %4723 = vmatpush1.bf16.msra.mxu0 %v3615
  %4724 = vmatprep.subr.bf16.mxu0 0
  %4725 = vmatpush1.bf16.msra.mxu0 %v3616
  %4726 = vmatprep.subr.bf16.mxu0 0
  %4727 = vmatpush1.bf16.msra.mxu0 %v3617
  %4728 = vmatprep.subr.bf16.mxu0 0
  %4729 = vmatpush1.bf16.msra.mxu0 %v3618
  %4730 = vmatprep.subr.bf16.mxu0 0
  %4731 = vmatpush1.bf16.msra.mxu0 %v3619
  %4732 = vmatprep.mubr.bf16.mxu0 %v1100
  %4733 = vmatmul.mubr.bf16.gmra.mrb[0].mxu0 %v1098
  %v4734 = vpop.f32.mrb[0].mxu0
  %v4735 = vadd.f32 %v4695, %v4734
  %v4736 = vpop.f32.mrb[0].mxu0
  %v4737 = vpop.f32.mrb[0].mxu0
  %v4738 = vpop.f32.mrb[0].mxu0
  %4739 = vdwg.mxu0
  %4740 = vmatprep.subr.bf16.mxu0 0
  %4741 = vmatpush1.bf16.msra.mxu0 %v3620
  %4742 = vmatprep.subr.bf16.mxu0 0
  %4743 = vmatpush1.bf16.msra.mxu0 %v3621
  %4744 = vmatprep.subr.bf16.mxu0 0
  %4745 = vmatpush1.bf16.msra.mxu0 %v3622
  %4746 = vmatprep.subr.bf16.mxu0 0
  %4747 = vmatpush1.bf16.msra.mxu0 %v3623
  %4748 = vmatprep.subr.bf16.mxu0 0
  %4749 = vmatpush1.bf16.msra.mxu0 %v3624
  %4750 = vmatprep.subr.bf16.mxu0 0
  %4751 = vmatpush1.bf16.msra.mxu0 %v3625
  %4752 = vmatprep.subr.bf16.mxu0 0
  %4753 = vmatpush1.bf16.msra.mxu0 %v3626
  %4754 = vmatprep.subr.bf16.mxu0 0
  %4755 = vmatpush1.bf16.msra.mxu0 %v3627
  %4756 = vmatprep.subr.bf16.mxu0 0
  %4757 = vmatpush1.bf16.msra.mxu0 %v3628
  %4758 = vmatprep.subr.bf16.mxu0 0
  %4759 = vmatpush1.bf16.msra.mxu0 %v3629
  %4760 = vmatprep.subr.bf16.mxu0 0
  %4761 = vmatpush1.bf16.msra.mxu0 %v3630
  %4762 = vmatprep.subr.bf16.mxu0 0
  %4763 = vmatpush1.bf16.msra.mxu0 %v3631
  %4764 = vmatprep.subr.bf16.mxu0 0
  %4765 = vmatpush1.bf16.msra.mxu0 %v3632
  %4766 = vmatprep.subr.bf16.mxu0 0
  %4767 = vmatpush1.bf16.msra.mxu0 %v3633
  %4768 = vmatprep.subr.bf16.mxu0 0
  %4769 = vmatpush1.bf16.msra.mxu0 %v3634
  %4770 = vmatprep.subr.bf16.mxu0 0
  %4771 = vmatpush1.bf16.msra.mxu0 %v3635
  %4772 = vmatprep.mubr.bf16.mxu0 %v1138
  %4773 = vmatmul.mubr.bf16.gmra.mrb[0].mxu0 %v1124
  %v4774 = vpop.f32.mrb[0].mxu0
  %v4775 = vadd.f32 %v4735, %v4774
  %v4776 = vpop.f32.mrb[0].mxu0
  %v4777 = vpop.f32.mrb[0].mxu0
  %v4778 = vpop.f32.mrb[0].mxu0
  %4779 = vdwg.mxu0
  %4780 = vmatprep.subr.bf16.mxu0 0
  %4781 = vmatpush1.bf16.msra.mxu0 %v3636
  %4782 = vmatprep.subr.bf16.mxu0 0
  %4783 = vmatpush1.bf16.msra.mxu0 %v3637
  %4784 = vmatprep.subr.bf16.mxu0 0
  %4785 = vmatpush1.bf16.msra.mxu0 %v3638
  %4786 = vmatprep.subr.bf16.mxu0 0
  %4787 = vmatpush1.bf16.msra.mxu0 %v3639
  %4788 = vmatprep.subr.bf16.mxu0 0
  %4789 = vmatpush1.bf16.msra.mxu0 %v3640
  %4790 = vmatprep.subr.bf16.mxu0 0
  %4791 = vmatpush1.bf16.msra.mxu0 %v3641
  %4792 = vmatprep.subr.bf16.mxu0 0
  %4793 = vmatpush1.bf16.msra.mxu0 %v3642
  %4794 = vmatprep.subr.bf16.mxu0 0
  %4795 = vmatpush1.bf16.msra.mxu0 %v3643
  %4796 = vmatprep.subr.bf16.mxu0 0
  %4797 = vmatpush1.bf16.msra.mxu0 %v3644
  %4798 = vmatprep.subr.bf16.mxu0 0
  %4799 = vmatpush1.bf16.msra.mxu0 %v3645
  %4800 = vmatprep.subr.bf16.mxu0 0
  %4801 = vmatpush1.bf16.msra.mxu0 %v3646
  %4802 = vmatprep.subr.bf16.mxu0 0
  %4803 = vmatpush1.bf16.msra.mxu0 %v3647
  %4804 = vmatprep.subr.bf16.mxu0 0
  %4805 = vmatpush1.bf16.msra.mxu0 %v3648
  %4806 = vmatprep.subr.bf16.mxu0 0
  %4807 = vmatpush1.bf16.msra.mxu0 %v3649
  %4808 = vmatprep.subr.bf16.mxu0 0
  %4809 = vmatpush1.bf16.msra.mxu0 %v3650
  %4810 = vmatprep.subr.bf16.mxu0 0
  %4811 = vmatpush1.bf16.msra.mxu0 %v3651
  %4812 = vmatprep.mubr.bf16.mxu0 %v1148
  %4813 = vmatmul.mubr.bf16.gmra.mrb[0].mxu0 %v1146
  %v4814 = vpop.f32.mrb[0].mxu0
  %v4815 = vadd.f32 %v4775, %v4814
  %v4816 = vpop.f32.mrb[0].mxu0
  %v4817 = vpop.f32.mrb[0].mxu0
  %v4818 = vpop.f32.mrb[0].mxu0
  %4819 = vdwg.mxu0
  %4820 = vmatprep.subr.bf16.mxu0 0
  %4821 = vmatpush1.bf16.msra.mxu0 %v3652
  %4822 = vmatprep.subr.bf16.mxu0 0
  %4823 = vmatpush1.bf16.msra.mxu0 %v3653
  %4824 = vmatprep.subr.bf16.mxu0 0
  %4825 = vmatpush1.bf16.msra.mxu0 %v3654
  %4826 = vmatprep.subr.bf16.mxu0 0
  %4827 = vmatpush1.bf16.msra.mxu0 %v3655
  %4828 = vmatprep.subr.bf16.mxu0 0
  %4829 = vmatpush1.bf16.msra.mxu0 %v3656
  %4830 = vmatprep.subr.bf16.mxu0 0
  %4831 = vmatpush1.bf16.msra.mxu0 %v3657
  %4832 = vmatprep.subr.bf16.mxu0 0
  %4833 = vmatpush1.bf16.msra.mxu0 %v3658
  %4834 = vmatprep.subr.bf16.mxu0 0
  %4835 = vmatpush1.bf16.msra.mxu0 %v3659
  %4836 = vmatprep.subr.bf16.mxu0 0
  %4837 = vmatpush1.bf16.msra.mxu0 %v3660
  %4838 = vmatprep.subr.bf16.mxu0 0
  %4839 = vmatpush1.bf16.msra.mxu0 %v3661
  %4840 = vmatprep.subr.bf16.mxu0 0
  %4841 = vmatpush1.bf16.msra.mxu0 %v3662
  %4842 = vmatprep.subr.bf16.mxu0 0
  %4843 = vmatpush1.bf16.msra.mxu0 %v3663
  %4844 = vmatprep.subr.bf16.mxu0 0
  %4845 = vmatpush1.bf16.msra.mxu0 %v3664
  %4846 = vmatprep.subr.bf16.mxu0 0
  %4847 = vmatpush1.bf16.msra.mxu0 %v3665
  %4848 = vmatprep.subr.bf16.mxu0 0
  %4849 = vmatpush1.bf16.msra.mxu0 %v3666
  %4850 = vmatprep.subr.bf16.mxu0 0
  %4851 = vmatpush1.bf16.msra.mxu0 %v3667
  %4852 = vmatprep.mubr.bf16.mxu0 %v1145
  %4853 = vmatmul.mubr.bf16.gmra.mrb[0].mxu0 %v1131
  %v4854 = vpop.f32.mrb[0].mxu0
  %v4855 = vadd.f32 %v4815, %v4854
  %v4856 = vpop.f32.mrb[0].mxu0
  %v4857 = vpop.f32.mrb[0].mxu0
  %v4858 = vpop.f32.mrb[0].mxu0
  %4859 = vdwg.mxu0
  %4860 = vmatprep.subr.bf16.mxu0 0
  %4861 = vmatpush1.bf16.msra.mxu0 %v3668
  %4862 = vmatprep.subr.bf16.mxu0 0
  %4863 = vmatpush1.bf16.msra.mxu0 %v3669
  %4864 = vmatprep.subr.bf16.mxu0 0
  %4865 = vmatpush1.bf16.msra.mxu0 %v3670
  %4866 = vmatprep.subr.bf16.mxu0 0
  %4867 = vmatpush1.bf16.msra.mxu0 %v3671
  %4868 = vmatprep.subr.bf16.mxu0 0
  %4869 = vmatpush1.bf16.msra.mxu0 %v3672
  %4870 = vmatprep.subr.bf16.mxu0 0
  %4871 = vmatpush1.bf16.msra.mxu0 %v3673
  %4872 = vmatprep.subr.bf16.mxu0 0
  %4873 = vmatpush1.bf16.msra.mxu0 %v3674
  %4874 = vmatprep.subr.bf16.mxu0 0
  %4875 = vmatpush1.bf16.msra.mxu0 %v3675
  %4876 = vmatprep.subr.bf16.mxu0 0
  %4877 = vmatpush1.bf16.msra.mxu0 %v3676
  %4878 = vmatprep.subr.bf16.mxu0 0
  %4879 = vmatpush1.bf16.msra.mxu0 %v3677
  %4880 = vmatprep.subr.bf16.mxu0 0
  %4881 = vmatpush1.bf16.msra.mxu0 %v3678
  %4882 = vmatprep.subr.bf16.mxu0 0
  %4883 = vmatpush1.bf16.msra.mxu0 %v3679
  %4884 = vmatprep.subr.bf16.mxu0 0
  %4885 = vmatpush1.bf16.msra.mxu0 %v3680
  %4886 = vmatprep.subr.bf16.mxu0 0
  %4887 = vmatpush1.bf16.msra.mxu0 %v3681
  %4888 = vmatprep.subr.bf16.mxu0 0
  %4889 = vmatpush1.bf16.msra.mxu0 %v3682
  %4890 = vmatprep.subr.bf16.mxu0 0
  %4891 = vmatpush1.bf16.msra.mxu0 %v3683
  %4892 = vmatprep.mubr.bf16.mxu0 %v1149
  %4893 = vmatmul.mubr.bf16.gmra.mrb[0].mxu0 %v1147
  %v4894 = vpop.f32.mrb[0].mxu0
  %v4895 = vadd.f32 %v4855, %v4894
  %v4896 = vpop.f32.mrb[0].mxu0
  %v4897 = vpop.f32.mrb[0].mxu0
  %v4898 = vpop.f32.mrb[0].mxu0
  %4899 = vdwg.mxu0
  %4900 = vmatprep.subr.bf16.mxu0 0
  %4901 = vmatpush1.bf16.msra.mxu0 %v3684
  %4902 = vmatprep.subr.bf16.mxu0 0
  %4903 = vmatpush1.bf16.msra.mxu0 %v3685
  %4904 = vmatprep.subr.bf16.mxu0 0
  %4905 = vmatpush1.bf16.msra.mxu0 %v3686
  %4906 = vmatprep.subr.bf16.mxu0 0
  %4907 = vmatpush1.bf16.msra.mxu0 %v3687
  %4908 = vmatprep.subr.bf16.mxu0 0
  %4909 = vmatpush1.bf16.msra.mxu0 %v3688
  %4910 = vmatprep.subr.bf16.mxu0 0
  %4911 = vmatpush1.bf16.msra.mxu0 %v3689
  %4912 = vmatprep.subr.bf16.mxu0 0
  %4913 = vmatpush1.bf16.msra.mxu0 %v3690
  %4914 = vmatprep.subr.bf16.mxu0 0
  %4915 = vmatpush1.bf16.msra.mxu0 %v3691
  %4916 = vmatprep.subr.bf16.mxu0 0
  %4917 = vmatpush1.bf16.msra.mxu0 %v3692
  %4918 = vmatprep.subr.bf16.mxu0 0
  %4919 = vmatpush1.bf16.msra.mxu0 %v3693
  %4920 = vmatprep.subr.bf16.mxu0 0
  %4921 = vmatpush1.bf16.msra.mxu0 %v3694
  %4922 = vmatprep.subr.bf16.mxu0 0
  %4923 = vmatpush1.bf16.msra.mxu0 %v3695
  %4924 = vmatprep.subr.bf16.mxu0 0
  %4925 = vmatpush1.bf16.msra.mxu0 %v3696
  %4926 = vmatprep.subr.bf16.mxu0 0
  %4927 = vmatpush1.bf16.msra.mxu0 %v3697
  %4928 = vmatprep.subr.bf16.mxu0 0
  %4929 = vmatpush1.bf16.msra.mxu0 %v3698
  %4930 = vmatprep.subr.bf16.mxu0 0
  %4931 = vmatpush1.bf16.msra.mxu0 %v3699
  %4932 = vmatprep.mubr.bf16.mxu0 %v1187
  %4933 = vmatmul.mubr.bf16.gmra.mrb[0].mxu0 %v1173
  %v4934 = vpop.f32.mrb[0].mxu0
  %v4935 = vadd.f32 %v4895, %v4934
  %v4936 = vpop.f32.mrb[0].mxu0
  %v4937 = vpop.f32.mrb[0].mxu0
  %v4938 = vpop.f32.mrb[0].mxu0
  %4939 = vdwg.mxu0
  %4940 = vmatprep.subr.bf16.mxu0 0
  %4941 = vmatpush1.bf16.msra.mxu0 %v3700
  %4942 = vmatprep.subr.bf16.mxu0 0
  %4943 = vmatpush1.bf16.msra.mxu0 %v3701
  %4944 = vmatprep.subr.bf16.mxu0 0
  %4945 = vmatpush1.bf16.msra.mxu0 %v3702
  %4946 = vmatprep.subr.bf16.mxu0 0
  %4947 = vmatpush1.bf16.msra.mxu0 %v3703
  %4948 = vmatprep.subr.bf16.mxu0 0
  %4949 = vmatpush1.bf16.msra.mxu0 %v3704
  %4950 = vmatprep.subr.bf16.mxu0 0
  %4951 = vmatpush1.bf16.msra.mxu0 %v3705
  %4952 = vmatprep.subr.bf16.mxu0 0
  %4953 = vmatpush1.bf16.msra.mxu0 %v3706
  %4954 = vmatprep.subr.bf16.mxu0 0
  %4955 = vmatpush1.bf16.msra.mxu0 %v3707
  %4956 = vmatprep.subr.bf16.mxu0 0
  %4957 = vmatpush1.bf16.msra.mxu0 %v3708
  %4958 = vmatprep.subr.bf16.mxu0 0
  %4959 = vmatpush1.bf16.msra.mxu0 %v3709
  %4960 = vmatprep.subr.bf16.mxu0 0
  %4961 = vmatpush1.bf16.msra.mxu0 %v3710
  %4962 = vmatprep.subr.bf16.mxu0 0
  %4963 = vmatpush1.bf16.msra.mxu0 %v3711
  %4964 = vmatprep.subr.bf16.mxu0 0
  %4965 = vmatpush1.bf16.msra.mxu0 %v3712
  %4966 = vmatprep.subr.bf16.mxu0 0
  %4967 = vmatpush1.bf16.msra.mxu0 %v3713
  %4968 = vmatprep.subr.bf16.mxu0 0
  %4969 = vmatpush1.bf16.msra.mxu0 %v3714
  %4970 = vmatprep.subr.bf16.mxu0 0
  %4971 = vmatpush1.bf16.msra.mxu0 %v3715
  %4972 = vmatprep.mubr.bf16.mxu0 %v1197
  %4973 = vmatmul.mubr.bf16.gmra.mrb[0].mxu0 %v1195
  %v4974 = vpop.f32.mrb[0].mxu0
  %v4975 = vadd.f32 %v4935, %v4974
  %v4976 = vpop.f32.mrb[0].mxu0
  %v4977 = vpop.f32.mrb[0].mxu0
  %v4978 = vpop.f32.mrb[0].mxu0
  %4979 = vdwg.mxu0
  %4980 = vmatprep.subr.bf16.mxu0 0
  %4981 = vmatpush1.bf16.msra.mxu0 %v3716
  %4982 = vmatprep.subr.bf16.mxu0 0
  %4983 = vmatpush1.bf16.msra.mxu0 %v3717
  %4984 = vmatprep.subr.bf16.mxu0 0
  %4985 = vmatpush1.bf16.msra.mxu0 %v3718
  %4986 = vmatprep.subr.bf16.mxu0 0
  %4987 = vmatpush1.bf16.msra.mxu0 %v3719
  %4988 = vmatprep.subr.bf16.mxu0 0
  %4989 = vmatpush1.bf16.msra.mxu0 %v3720
  %4990 = vmatprep.subr.bf16.mxu0 0
  %4991 = vmatpush1.bf16.msra.mxu0 %v3721
  %4992 = vmatprep.subr.bf16.mxu0 0
  %4993 = vmatpush1.bf16.msra.mxu0 %v3722
  %4994 = vmatprep.subr.bf16.mxu0 0
  %4995 = vmatpush1.bf16.msra.mxu0 %v3723
  %4996 = vmatprep.subr.bf16.mxu0 0
  %4997 = vmatpush1.bf16.msra.mxu0 %v3724
  %4998 = vmatprep.subr.bf16.mxu0 0
  %4999 = vmatpush1.bf16.msra.mxu0 %v3725
  %5000 = vmatprep.subr.bf16.mxu0 0
  %5001 = vmatpush1.bf16.msra.mxu0 %v3726
  %5002 = vmatprep.subr.bf16.mxu0 0
  %5003 = vmatpush1.bf16.msra.mxu0 %v3727
  %5004 = vmatprep.subr.bf16.mxu0 0
  %5005 = vmatpush1.bf16.msra.mxu0 %v3728
  %5006 = vmatprep.subr.bf16.mxu0 0
  %5007 = vmatpush1.bf16.msra.mxu0 %v3729
  %5008 = vmatprep.subr.bf16.mxu0 0
  %5009 = vmatpush1.bf16.msra.mxu0 %v3730
  %5010 = vmatprep.subr.bf16.mxu0 0
  %5011 = vmatpush1.bf16.msra.mxu0 %v3731
  %5012 = vmatprep.mubr.bf16.mxu0 %v1194
  %5013 = vmatmul.mubr.bf16.gmra.mrb[0].mxu0 %v1180
  %v5014 = vpop.f32.mrb[0].mxu0
  %v5015 = vadd.f32 %v4975, %v5014
  %v5016 = vpop.f32.mrb[0].mxu0
  %v5017 = vpop.f32.mrb[0].mxu0
  %v5018 = vpop.f32.mrb[0].mxu0
  %5019 = vdwg.mxu0
  %5020 = vmatprep.subr.bf16.mxu0 0
  %5021 = vmatpush1.bf16.msra.mxu0 %v3732
  %5022 = vmatprep.subr.bf16.mxu0 0
  %5023 = vmatpush1.bf16.msra.mxu0 %v3733
  %5024 = vmatprep.subr.bf16.mxu0 0
  %5025 = vmatpush1.bf16.msra.mxu0 %v3734
  %5026 = vmatprep.subr.bf16.mxu0 0
  %5027 = vmatpush1.bf16.msra.mxu0 %v3735
  %5028 = vmatprep.subr.bf16.mxu0 0
  %5029 = vmatpush1.bf16.msra.mxu0 %v3736
  %5030 = vmatprep.subr.bf16.mxu0 0
  %5031 = vmatpush1.bf16.msra.mxu0 %v3737
  %5032 = vmatprep.subr.bf16.mxu0 0
  %5033 = vmatpush1.bf16.msra.mxu0 %v3738
  %5034 = vmatprep.subr.bf16.mxu0 0
  %5035 = vmatpush1.bf16.msra.mxu0 %v3739
  %5036 = vmatprep.subr.bf16.mxu0 0
  %5037 = vmatpush1.bf16.msra.mxu0 %v3740
  %5038 = vmatprep.subr.bf16.mxu0 0
  %5039 = vmatpush1.bf16.msra.mxu0 %v3741
  %5040 = vmatprep.subr.bf16.mxu0 0
  %5041 = vmatpush1.bf16.msra.mxu0 %v3742
  %5042 = vmatprep.subr.bf16.mxu0 0
  %5043 = vmatpush1.bf16.msra.mxu0 %v3743
  %5044 = vmatprep.subr.bf16.mxu0 0
  %5045 = vmatpush1.bf16.msra.mxu0 %v3744
  %5046 = vmatprep.subr.bf16.mxu0 0
  %5047 = vmatpush1.bf16.msra.mxu0 %v3745
  %5048 = vmatprep.subr.bf16.mxu0 0
  %5049 = vmatpush1.bf16.msra.mxu0 %v3746
  %5050 = vmatprep.subr.bf16.mxu0 0
  %5051 = vmatpush1.bf16.msra.mxu0 %v3747
  %5052 = vmatprep.mubr.bf16.mxu0 %v1198
  %5053 = vmatmul.mubr.bf16.gmra.mrb[0].mxu0 %v1196
  %v5054 = vpop.f32.mrb[0].mxu0
  %v5055 = vadd.f32 %v5015, %v5054
  %v5056 = vpop.f32.mrb[0].mxu0
  %v5057 = vpop.f32.mrb[0].mxu0
  %v5058 = vpop.f32.mrb[0].mxu0
  %5059 = vdwg.mxu0
  %5060 = vmatprep.subr.bf16.mxu0 0
  %5061 = vmatpush1.bf16.msra.mxu0 %v3748
  %5062 = vmatprep.subr.bf16.mxu0 0
  %5063 = vmatpush1.bf16.msra.mxu0 %v3749
  %5064 = vmatprep.subr.bf16.mxu0 0
  %5065 = vmatpush1.bf16.msra.mxu0 %v3750
  %5066 = vmatprep.subr.bf16.mxu0 0
  %5067 = vmatpush1.bf16.msra.mxu0 %v3751
  %5068 = vmatprep.subr.bf16.mxu0 0
  %5069 = vmatpush1.bf16.msra.mxu0 %v3752
  %5070 = vmatprep.subr.bf16.mxu0 0
  %5071 = vmatpush1.bf16.msra.mxu0 %v3753
  %5072 = vmatprep.subr.bf16.mxu0 0
  %5073 = vmatpush1.bf16.msra.mxu0 %v3754
  %5074 = vmatprep.subr.bf16.mxu0 0
  %5075 = vmatpush1.bf16.msra.mxu0 %v3755
  %5076 = vmatprep.subr.bf16.mxu0 0
  %5077 = vmatpush1.bf16.msra.mxu0 %v3756
  %5078 = vmatprep.subr.bf16.mxu0 0
  %5079 = vmatpush1.bf16.msra.mxu0 %v3757
  %5080 = vmatprep.subr.bf16.mxu0 0
  %5081 = vmatpush1.bf16.msra.mxu0 %v3758
  %5082 = vmatprep.subr.bf16.mxu0 0
  %5083 = vmatpush1.bf16.msra.mxu0 %v3759
  %5084 = vmatprep.subr.bf16.mxu0 0
  %5085 = vmatpush1.bf16.msra.mxu0 %v3760
  %5086 = vmatprep.subr.bf16.mxu0 0
  %5087 = vmatpush1.bf16.msra.mxu0 %v3761
  %5088 = vmatprep.subr.bf16.mxu0 0
  %5089 = vmatpush1.bf16.msra.mxu0 %v3762
  %5090 = vmatprep.subr.bf16.mxu0 0
  %5091 = vmatpush1.bf16.msra.mxu0 %v3763
  %5092 = vmatprep.mubr.bf16.mxu0 %v1236
  %5093 = vmatmul.mubr.bf16.gmra.mrb[0].mxu0 %v1222
  %v5094 = vpop.f32.mrb[0].mxu0
  %v5095 = vadd.f32 %v5055, %v5094
  %v5096 = vpop.f32.mrb[0].mxu0
  %v5097 = vpop.f32.mrb[0].mxu0
  %v5098 = vpop.f32.mrb[0].mxu0
  %5099 = vdwg.mxu0
  %5100 = vmatprep.subr.bf16.mxu0 0
  %5101 = vmatpush1.bf16.msra.mxu0 %v3764
  %5102 = vmatprep.subr.bf16.mxu0 0
  %5103 = vmatpush1.bf16.msra.mxu0 %v3765
  %5104 = vmatprep.subr.bf16.mxu0 0
  %5105 = vmatpush1.bf16.msra.mxu0 %v3766
  %5106 = vmatprep.subr.bf16.mxu0 0
  %5107 = vmatpush1.bf16.msra.mxu0 %v3767
  %5108 = vmatprep.subr.bf16.mxu0 0
  %5109 = vmatpush1.bf16.msra.mxu0 %v3768
  %5110 = vmatprep.subr.bf16.mxu0 0
  %5111 = vmatpush1.bf16.msra.mxu0 %v3769
  %5112 = vmatprep.subr.bf16.mxu0 0
  %5113 = vmatpush1.bf16.msra.mxu0 %v3770
  %5114 = vmatprep.subr.bf16.mxu0 0
  %5115 = vmatpush1.bf16.msra.mxu0 %v3771
  %5116 = vmatprep.subr.bf16.mxu0 0
  %5117 = vmatpush1.bf16.msra.mxu0 %v3772
  %5118 = vmatprep.subr.bf16.mxu0 0
  %5119 = vmatpush1.bf16.msra.mxu0 %v3773
  %5120 = vmatprep.subr.bf16.mxu0 0
  %5121 = vmatpush1.bf16.msra.mxu0 %v3774
  %5122 = vmatprep.subr.bf16.mxu0 0
  %5123 = vmatpush1.bf16.msra.mxu0 %v3775
  %5124 = vmatprep.subr.bf16.mxu0 0
  %5125 = vmatpush1.bf16.msra.mxu0 %v3776
  %5126 = vmatprep.subr.bf16.mxu0 0
  %5127 = vmatpush1.bf16.msra.mxu0 %v3777
  %5128 = vmatprep.subr.bf16.mxu0 0
  %5129 = vmatpush1.bf16.msra.mxu0 %v3778
  %5130 = vmatprep.subr.bf16.mxu0 0
  %5131 = vmatpush1.bf16.msra.mxu0 %v3779
  %5132 = vmatprep.mubr.bf16.mxu0 %v1246
  %5133 = vmatmul.mubr.bf16.gmra.mrb[0].mxu0 %v1244
  %v5134 = vpop.f32.mrb[0].mxu0
  %v5135 = vadd.f32 %v5095, %v5134
  %v5136 = vpop.f32.mrb[0].mxu0
  %v5137 = vpop.f32.mrb[0].mxu0
  %v5138 = vpop.f32.mrb[0].mxu0
  %5139 = vdwg.mxu0
  %5140 = vmatprep.subr.bf16.mxu0 0
  %5141 = vmatpush1.bf16.msra.mxu0 %v3780
  %5142 = vmatprep.subr.bf16.mxu0 0
  %5143 = vmatpush1.bf16.msra.mxu0 %v3781
  %5144 = vmatprep.subr.bf16.mxu0 0
  %5145 = vmatpush1.bf16.msra.mxu0 %v3782
  %5146 = vmatprep.subr.bf16.mxu0 0
  %5147 = vmatpush1.bf16.msra.mxu0 %v3783
  %5148 = vmatprep.subr.bf16.mxu0 0
  %5149 = vmatpush1.bf16.msra.mxu0 %v3784
  %5150 = vmatprep.subr.bf16.mxu0 0
  %5151 = vmatpush1.bf16.msra.mxu0 %v3785
  %5152 = vmatprep.subr.bf16.mxu0 0
  %5153 = vmatpush1.bf16.msra.mxu0 %v3786
  %5154 = vmatprep.subr.bf16.mxu0 0
  %5155 = vmatpush1.bf16.msra.mxu0 %v3787
  %5156 = vmatprep.subr.bf16.mxu0 0
  %5157 = vmatpush1.bf16.msra.mxu0 %v3788
  %5158 = vmatprep.subr.bf16.mxu0 0
  %5159 = vmatpush1.bf16.msra.mxu0 %v3789
  %5160 = vmatprep.subr.bf16.mxu0 0
  %5161 = vmatpush1.bf16.msra.mxu0 %v3790
  %5162 = vmatprep.subr.bf16.mxu0 0
  %5163 = vmatpush1.bf16.msra.mxu0 %v3791
  %5164 = vmatprep.subr.bf16.mxu0 0
  %5165 = vmatpush1.bf16.msra.mxu0 %v3792
  %5166 = vmatprep.subr.bf16.mxu0 0
  %5167 = vmatpush1.bf16.msra.mxu0 %v3793
  %5168 = vmatprep.subr.bf16.mxu0 0
  %5169 = vmatpush1.bf16.msra.mxu0 %v3794
  %5170 = vmatprep.subr.bf16.mxu0 0
  %5171 = vmatpush1.bf16.msra.mxu0 %v3795
  %5172 = vmatprep.mubr.bf16.mxu0 %v1243
  %5173 = vmatmul.mubr.bf16.gmra.mrb[0].mxu0 %v1229
  %v5174 = vpop.f32.mrb[0].mxu0
  %v5175 = vadd.f32 %v5135, %v5174
  %v5176 = vpop.f32.mrb[0].mxu0
  %v5177 = vpop.f32.mrb[0].mxu0
  %v5178 = vpop.f32.mrb[0].mxu0
  %5179 = vdwg.mxu0
  %5180 = vmatprep.subr.bf16.mxu0 0
  %5181 = vmatpush1.bf16.msra.mxu0 %v3796
  %5182 = vmatprep.subr.bf16.mxu0 0
  %5183 = vmatpush1.bf16.msra.mxu0 %v3797
  %5184 = vmatprep.subr.bf16.mxu0 0
  %5185 = vmatpush1.bf16.msra.mxu0 %v3798
  %5186 = vmatprep.subr.bf16.mxu0 0
  %5187 = vmatpush1.bf16.msra.mxu0 %v3799
  %5188 = vmatprep.subr.bf16.mxu0 0
  %5189 = vmatpush1.bf16.msra.mxu0 %v3800
  %5190 = vmatprep.subr.bf16.mxu0 0
  %5191 = vmatpush1.bf16.msra.mxu0 %v3801
  %5192 = vmatprep.subr.bf16.mxu0 0
  %5193 = vmatpush1.bf16.msra.mxu0 %v3802
  %5194 = vmatprep.subr.bf16.mxu0 0
  %5195 = vmatpush1.bf16.msra.mxu0 %v3803
  %5196 = vmatprep.subr.bf16.mxu0 0
  %5197 = vmatpush1.bf16.msra.mxu0 %v3804
  %5198 = vmatprep.subr.bf16.mxu0 0
  %5199 = vmatpush1.bf16.msra.mxu0 %v3805
  %5200 = vmatprep.subr.bf16.mxu0 0
  %5201 = vmatpush1.bf16.msra.mxu0 %v3806
  %5202 = vmatprep.subr.bf16.mxu0 0
  %5203 = vmatpush1.bf16.msra.mxu0 %v3807
  %5204 = vmatprep.subr.bf16.mxu0 0
  %5205 = vmatpush1.bf16.msra.mxu0 %v3808
  %5206 = vmatprep.subr.bf16.mxu0 0
  %5207 = vmatpush1.bf16.msra.mxu0 %v3809
  %5208 = vmatprep.subr.bf16.mxu0 0
  %5209 = vmatpush1.bf16.msra.mxu0 %v3810
  %5210 = vmatprep.subr.bf16.mxu0 0
  %5211 = vmatpush1.bf16.msra.mxu0 %v3811
  %5212 = vmatprep.mubr.bf16.mxu0 %v1247
  %5213 = vmatmul.mubr.bf16.gmra.mrb[0].mxu0 %v1245
  %v5214 = vpop.f32.mrb[0].mxu0
  %v5215 = vadd.f32 %v5175, %v5214
  %v5216 = vpop.f32.mrb[0].mxu0
  %v5217 = vpop.f32.mrb[0].mxu0
  %v5218 = vpop.f32.mrb[0].mxu0
  %5219 = vdwg.mxu0
  %5220 = vmatprep.subr.bf16.mxu0 0
  %5221 = vmatpush1.bf16.msra.mxu0 %v3812
  %5222 = vmatprep.subr.bf16.mxu0 0
  %5223 = vmatpush1.bf16.msra.mxu0 %v3813
  %5224 = vmatprep.subr.bf16.mxu0 0
  %5225 = vmatpush1.bf16.msra.mxu0 %v3814
  %5226 = vmatprep.subr.bf16.mxu0 0
  %5227 = vmatpush1.bf16.msra.mxu0 %v3815
  %5228 = vmatprep.subr.bf16.mxu0 0
  %5229 = vmatpush1.bf16.msra.mxu0 %v3816
  %5230 = vmatprep.subr.bf16.mxu0 0
  %5231 = vmatpush1.bf16.msra.mxu0 %v3817
  %5232 = vmatprep.subr.bf16.mxu0 0
  %5233 = vmatpush1.bf16.msra.mxu0 %v3818
  %5234 = vmatprep.subr.bf16.mxu0 0
  %5235 = vmatpush1.bf16.msra.mxu0 %v3819
  %5236 = vmatprep.subr.bf16.mxu0 0
  %5237 = vmatpush1.bf16.msra.mxu0 %v3820
  %5238 = vmatprep.subr.bf16.mxu0 0
  %5239 = vmatpush1.bf16.msra.mxu0 %v3821
  %5240 = vmatprep.subr.bf16.mxu0 0
  %5241 = vmatpush1.bf16.msra.mxu0 %v3822
  %5242 = vmatprep.subr.bf16.mxu0 0
  %5243 = vmatpush1.bf16.msra.mxu0 %v3823
  %5244 = vmatprep.subr.bf16.mxu0 0
  %5245 = vmatpush1.bf16.msra.mxu0 %v3824
  %5246 = vmatprep.subr.bf16.mxu0 0
  %5247 = vmatpush1.bf16.msra.mxu0 %v3825
  %5248 = vmatprep.subr.bf16.mxu0 0
  %5249 = vmatpush1.bf16.msra.mxu0 %v3826
  %5250 = vmatprep.subr.bf16.mxu0 0
  %5251 = vmatpush1.bf16.msra.mxu0 %v3827
  %5252 = vmatprep.mubr.bf16.mxu0 %v1285
  %5253 = vmatmul.mubr.bf16.gmra.mrb[0].mxu0 %v1271
  %v5254 = vpop.f32.mrb[0].mxu0
  %v5255 = vadd.f32 %v5215, %v5254
  %v5256 = vpop.f32.mrb[0].mxu0
  %v5257 = vpop.f32.mrb[0].mxu0
  %v5258 = vpop.f32.mrb[0].mxu0
  %5259 = vdwg.mxu0
  %5260 = vmatprep.subr.bf16.mxu0 0
  %5261 = vmatpush1.bf16.msra.mxu0 %v3828
  %5262 = vmatprep.subr.bf16.mxu0 0
  %5263 = vmatpush1.bf16.msra.mxu0 %v3829
  %5264 = vmatprep.subr.bf16.mxu0 0
  %5265 = vmatpush1.bf16.msra.mxu0 %v3830
  %5266 = vmatprep.subr.bf16.mxu0 0
  %5267 = vmatpush1.bf16.msra.mxu0 %v3831
  %5268 = vmatprep.subr.bf16.mxu0 0
  %5269 = vmatpush1.bf16.msra.mxu0 %v3832
  %5270 = vmatprep.subr.bf16.mxu0 0
  %5271 = vmatpush1.bf16.msra.mxu0 %v3833
  %5272 = vmatprep.subr.bf16.mxu0 0
  %5273 = vmatpush1.bf16.msra.mxu0 %v3834
  %5274 = vmatprep.subr.bf16.mxu0 0
  %5275 = vmatpush1.bf16.msra.mxu0 %v3835
  %5276 = vmatprep.subr.bf16.mxu0 0
  %5277 = vmatpush1.bf16.msra.mxu0 %v3836
  %5278 = vmatprep.subr.bf16.mxu0 0
  %5279 = vmatpush1.bf16.msra.mxu0 %v3837
  %5280 = vmatprep.subr.bf16.mxu0 0
  %5281 = vmatpush1.bf16.msra.mxu0 %v3838
  %5282 = vmatprep.subr.bf16.mxu0 0
  %5283 = vmatpush1.bf16.msra.mxu0 %v3839
  %5284 = vmatprep.subr.bf16.mxu0 0
  %5285 = vmatpush1.bf16.msra.mxu0 %v3840
  %5286 = vmatprep.subr.bf16.mxu0 0
  %5287 = vmatpush1.bf16.msra.mxu0 %v3841
  %5288 = vmatprep.subr.bf16.mxu0 0
  %5289 = vmatpush1.bf16.msra.mxu0 %v3842
  %5290 = vmatprep.subr.bf16.mxu0 0
  %5291 = vmatpush1.bf16.msra.mxu0 %v3843
  %5292 = vmatprep.mubr.bf16.mxu0 %v1295
  %5293 = vmatmul.mubr.bf16.gmra.mrb[0].mxu0 %v1293
  %v5294 = vpop.f32.mrb[0].mxu0
  %v5295 = vadd.f32 %v5255, %v5294
  %v5296 = vpop.f32.mrb[0].mxu0
  %v5297 = vpop.f32.mrb[0].mxu0
  %v5298 = vpop.f32.mrb[0].mxu0
  %5299 = vdwg.mxu0
  %5300 = vmatprep.subr.bf16.mxu0 0
  %5301 = vmatpush1.bf16.msra.mxu0 %v3844
  %5302 = vmatprep.subr.bf16.mxu0 0
  %5303 = vmatpush1.bf16.msra.mxu0 %v3845
  %5304 = vmatprep.subr.bf16.mxu0 0
  %5305 = vmatpush1.bf16.msra.mxu0 %v3846
  %5306 = vmatprep.subr.bf16.mxu0 0
  %5307 = vmatpush1.bf16.msra.mxu0 %v3847
  %5308 = vmatprep.subr.bf16.mxu0 0
  %5309 = vmatpush1.bf16.msra.mxu0 %v3848
  %5310 = vmatprep.subr.bf16.mxu0 0
  %5311 = vmatpush1.bf16.msra.mxu0 %v3849
  %5312 = vmatprep.subr.bf16.mxu0 0
  %5313 = vmatpush1.bf16.msra.mxu0 %v3850
  %5314 = vmatprep.subr.bf16.mxu0 0
  %5315 = vmatpush1.bf16.msra.mxu0 %v3851
  %5316 = vmatprep.subr.bf16.mxu0 0
  %5317 = vmatpush1.bf16.msra.mxu0 %v3852
  %5318 = vmatprep.subr.bf16.mxu0 0
  %5319 = vmatpush1.bf16.msra.mxu0 %v3853
  %5320 = vmatprep.subr.bf16.mxu0 0
  %5321 = vmatpush1.bf16.msra.mxu0 %v3854
  %5322 = vmatprep.subr.bf16.mxu0 0
  %5323 = vmatpush1.bf16.msra.mxu0 %v3855
  %5324 = vmatprep.subr.bf16.mxu0 0
  %5325 = vmatpush1.bf16.msra.mxu0 %v3856
  %5326 = vmatprep.subr.bf16.mxu0 0
  %5327 = vmatpush1.bf16.msra.mxu0 %v3857
  %5328 = vmatprep.subr.bf16.mxu0 0
  %5329 = vmatpush1.bf16.msra.mxu0 %v3858
  %5330 = vmatprep.subr.bf16.mxu0 0
  %5331 = vmatpush1.bf16.msra.mxu0 %v3859
  %5332 = vmatprep.mubr.bf16.mxu0 %v1292
  %5333 = vmatmul.mubr.bf16.gmra.mrb[0].mxu0 %v1278
  %v5334 = vpop.f32.mrb[0].mxu0
  %v5335 = vadd.f32 %v5295, %v5334
  %v5336 = vpop.f32.mrb[0].mxu0
  %v5337 = vpop.f32.mrb[0].mxu0
  %v5338 = vpop.f32.mrb[0].mxu0
  %5339 = vdwg.mxu0
  %5340 = vmatprep.subr.bf16.mxu0 0
  %5341 = vmatpush1.bf16.msra.mxu0 %v3860
  %5342 = vmatprep.subr.bf16.mxu0 0
  %5343 = vmatpush1.bf16.msra.mxu0 %v3861
  %5344 = vmatprep.subr.bf16.mxu0 0
  %5345 = vmatpush1.bf16.msra.mxu0 %v3862
  %5346 = vmatprep.subr.bf16.mxu0 0
  %5347 = vmatpush1.bf16.msra.mxu0 %v3863
  %5348 = vmatprep.subr.bf16.mxu0 0
  %5349 = vmatpush1.bf16.msra.mxu0 %v3864
  %5350 = vmatprep.subr.bf16.mxu0 0
  %5351 = vmatpush1.bf16.msra.mxu0 %v3865
  %5352 = vmatprep.subr.bf16.mxu0 0
  %5353 = vmatpush1.bf16.msra.mxu0 %v3866
  %5354 = vmatprep.subr.bf16.mxu0 0
  %5355 = vmatpush1.bf16.msra.mxu0 %v3867
  %5356 = vmatprep.subr.bf16.mxu0 0
  %5357 = vmatpush1.bf16.msra.mxu0 %v3868
  %5358 = vmatprep.subr.bf16.mxu0 0
  %5359 = vmatpush1.bf16.msra.mxu0 %v3869
  %5360 = vmatprep.subr.bf16.mxu0 0
  %5361 = vmatpush1.bf16.msra.mxu0 %v3870
  %5362 = vmatprep.subr.bf16.mxu0 0
  %5363 = vmatpush1.bf16.msra.mxu0 %v3871
  %5364 = vmatprep.subr.bf16.mxu0 0
  %5365 = vmatpush1.bf16.msra.mxu0 %v3872
  %5366 = vmatprep.subr.bf16.mxu0 0
  %5367 = vmatpush1.bf16.msra.mxu0 %v3873
  %5368 = vmatprep.subr.bf16.mxu0 0
  %5369 = vmatpush1.bf16.msra.mxu0 %v3874
  %5370 = vmatprep.subr.bf16.mxu0 0
  %5371 = vmatpush1.bf16.msra.mxu0 %v3875
  %5372 = vmatprep.mubr.bf16.mxu0 %v1296
  %5373 = vmatmul.mubr.bf16.gmra.mrb[0].mxu0 %v1294
  %v5374 = vpop.f32.mrb[0].mxu0
  %v5375 = vadd.f32 %v5335, %v5374
  %v5376 = vpop.f32.mrb[0].mxu0
  %v5377 = vpop.f32.mrb[0].mxu0
  %v5378 = vpop.f32.mrb[0].mxu0
  %5379 = vdwg.mxu0
  %5380 = vmatprep.subr.bf16.mxu0 0
  %5381 = vmatpush1.bf16.msra.mxu0 %v3876
  %5382 = vmatprep.subr.bf16.mxu0 0
  %5383 = vmatpush1.bf16.msra.mxu0 %v3877
  %5384 = vmatprep.subr.bf16.mxu0 0
  %5385 = vmatpush1.bf16.msra.mxu0 %v3878
  %5386 = vmatprep.subr.bf16.mxu0 0
  %5387 = vmatpush1.bf16.msra.mxu0 %v3879
  %5388 = vmatprep.subr.bf16.mxu0 0
  %5389 = vmatpush1.bf16.msra.mxu0 %v3880
  %5390 = vmatprep.subr.bf16.mxu0 0
  %5391 = vmatpush1.bf16.msra.mxu0 %v3881
  %5392 = vmatprep.subr.bf16.mxu0 0
  %5393 = vmatpush1.bf16.msra.mxu0 %v3882
  %5394 = vmatprep.subr.bf16.mxu0 0
  %5395 = vmatpush1.bf16.msra.mxu0 %v3883
  %5396 = vmatprep.subr.bf16.mxu0 0
  %5397 = vmatpush1.bf16.msra.mxu0 %v3884
  %5398 = vmatprep.subr.bf16.mxu0 0
  %5399 = vmatpush1.bf16.msra.mxu0 %v3885
  %5400 = vmatprep.subr.bf16.mxu0 0
  %5401 = vmatpush1.bf16.msra.mxu0 %v3886
  %5402 = vmatprep.subr.bf16.mxu0 0
  %5403 = vmatpush1.bf16.msra.mxu0 %v3887
  %5404 = vmatprep.subr.bf16.mxu0 0
  %5405 = vmatpush1.bf16.msra.mxu0 %v3888
  %5406 = vmatprep.subr.bf16.mxu0 0
  %5407 = vmatpush1.bf16.msra.mxu0 %v3889
  %5408 = vmatprep.subr.bf16.mxu0 0
  %5409 = vmatpush1.bf16.msra.mxu0 %v3890
  %5410 = vmatprep.subr.bf16.mxu0 0
  %5411 = vmatpush1.bf16.msra.mxu0 %v3891
  %5412 = vmatprep.mubr.bf16.mxu0 %v1334
  %5413 = vmatmul.mubr.bf16.gmra.mrb[0].mxu0 %v1320
  %v5414 = vpop.f32.mrb[0].mxu0
  %v5415 = vadd.f32 %v5375, %v5414
  %v5416 = vpop.f32.mrb[0].mxu0
  %v5417 = vpop.f32.mrb[0].mxu0
  %v5418 = vpop.f32.mrb[0].mxu0
  %5419 = vdwg.mxu0
  %5420 = vmatprep.subr.bf16.mxu0 0
  %5421 = vmatpush1.bf16.msra.mxu0 %v3892
  %5422 = vmatprep.subr.bf16.mxu0 0
  %5423 = vmatpush1.bf16.msra.mxu0 %v3893
  %5424 = vmatprep.subr.bf16.mxu0 0
  %5425 = vmatpush1.bf16.msra.mxu0 %v3894
  %5426 = vmatprep.subr.bf16.mxu0 0
  %5427 = vmatpush1.bf16.msra.mxu0 %v3895
  %5428 = vmatprep.subr.bf16.mxu0 0
  %5429 = vmatpush1.bf16.msra.mxu0 %v3896
  %5430 = vmatprep.subr.bf16.mxu0 0
  %5431 = vmatpush1.bf16.msra.mxu0 %v3897
  %5432 = vmatprep.subr.bf16.mxu0 0
  %5433 = vmatpush1.bf16.msra.mxu0 %v3898
  %5434 = vmatprep.subr.bf16.mxu0 0
  %5435 = vmatpush1.bf16.msra.mxu0 %v3899
  %5436 = vmatprep.subr.bf16.mxu0 0
  %5437 = vmatpush1.bf16.msra.mxu0 %v3900
  %5438 = vmatprep.subr.bf16.mxu0 0
  %5439 = vmatpush1.bf16.msra.mxu0 %v3901
  %5440 = vmatprep.subr.bf16.mxu0 0
  %5441 = vmatpush1.bf16.msra.mxu0 %v3902
  %5442 = vmatprep.subr.bf16.mxu0 0
  %5443 = vmatpush1.bf16.msra.mxu0 %v3903
  %5444 = vmatprep.subr.bf16.mxu0 0
  %5445 = vmatpush1.bf16.msra.mxu0 %v3904
  %5446 = vmatprep.subr.bf16.mxu0 0
  %5447 = vmatpush1.bf16.msra.mxu0 %v3905
  %5448 = vmatprep.subr.bf16.mxu0 0
  %5449 = vmatpush1.bf16.msra.mxu0 %v3906
  %5450 = vmatprep.subr.bf16.mxu0 0
  %5451 = vmatpush1.bf16.msra.mxu0 %v3907
  %5452 = vmatprep.mubr.bf16.mxu0 %v1344
  %5453 = vmatmul.mubr.bf16.gmra.mrb[0].mxu0 %v1342
  %v5454 = vpop.f32.mrb[0].mxu0
  %v5455 = vadd.f32 %v5415, %v5454
  %v5456 = vpop.f32.mrb[0].mxu0
  %v5457 = vpop.f32.mrb[0].mxu0
  %v5458 = vpop.f32.mrb[0].mxu0
  %5459 = vdwg.mxu0
  %5460 = vmatprep.subr.bf16.mxu0 0
  %5461 = vmatpush1.bf16.msra.mxu0 %v3908
  %5462 = vmatprep.subr.bf16.mxu0 0
  %5463 = vmatpush1.bf16.msra.mxu0 %v3909
  %5464 = vmatprep.subr.bf16.mxu0 0
  %5465 = vmatpush1.bf16.msra.mxu0 %v3910
  %5466 = vmatprep.subr.bf16.mxu0 0
  %5467 = vmatpush1.bf16.msra.mxu0 %v3911
  %5468 = vmatprep.subr.bf16.mxu0 0
  %5469 = vmatpush1.bf16.msra.mxu0 %v3912
  %5470 = vmatprep.subr.bf16.mxu0 0
  %5471 = vmatpush1.bf16.msra.mxu0 %v3913
  %5472 = vmatprep.subr.bf16.mxu0 0
  %5473 = vmatpush1.bf16.msra.mxu0 %v3914
  %5474 = vmatprep.subr.bf16.mxu0 0
  %5475 = vmatpush1.bf16.msra.mxu0 %v3915
  %5476 = vmatprep.subr.bf16.mxu0 0
  %5477 = vmatpush1.bf16.msra.mxu0 %v3916
  %5478 = vmatprep.subr.bf16.mxu0 0
  %5479 = vmatpush1.bf16.msra.mxu0 %v3917
  %5480 = vmatprep.subr.bf16.mxu0 0
  %5481 = vmatpush1.bf16.msra.mxu0 %v3918
  %5482 = vmatprep.subr.bf16.mxu0 0
  %5483 = vmatpush1.bf16.msra.mxu0 %v3919
  %5484 = vmatprep.subr.bf16.mxu0 0
  %5485 = vmatpush1.bf16.msra.mxu0 %v3920
  %5486 = vmatprep.subr.bf16.mxu0 0
  %5487 = vmatpush1.bf16.msra.mxu0 %v3921
  %5488 = vmatprep.subr.bf16.mxu0 0
  %5489 = vmatpush1.bf16.msra.mxu0 %v3922
  %5490 = vmatprep.subr.bf16.mxu0 0
  %5491 = vmatpush1.bf16.msra.mxu0 %v3923
  %5492 = vmatprep.mubr.bf16.mxu0 %v1341
  %5493 = vmatmul.mubr.bf16.gmra.mrb[0].mxu0 %v1327
  %v5494 = vpop.f32.mrb[0].mxu0
  %v5495 = vadd.f32 %v5455, %v5494
  %v5496 = vpop.f32.mrb[0].mxu0
  %v5497 = vpop.f32.mrb[0].mxu0
  %v5498 = vpop.f32.mrb[0].mxu0
  %5499 = vdwg.mxu0
  %5500 = vmatprep.subr.bf16.mxu0 0
  %5501 = vmatpush1.bf16.msra.mxu0 %v3924
  %5502 = vmatprep.subr.bf16.mxu0 0
  %5503 = vmatpush1.bf16.msra.mxu0 %v3925
  %5504 = vmatprep.subr.bf16.mxu0 0
  %5505 = vmatpush1.bf16.msra.mxu0 %v3926
  %5506 = vmatprep.subr.bf16.mxu0 0
  %5507 = vmatpush1.bf16.msra.mxu0 %v3927
  %5508 = vmatprep.subr.bf16.mxu0 0
  %5509 = vmatpush1.bf16.msra.mxu0 %v3928
  %5510 = vmatprep.subr.bf16.mxu0 0
  %5511 = vmatpush1.bf16.msra.mxu0 %v3929
  %5512 = vmatprep.subr.bf16.mxu0 0
  %5513 = vmatpush1.bf16.msra.mxu0 %v3930
  %5514 = vmatprep.subr.bf16.mxu0 0
  %5515 = vmatpush1.bf16.msra.mxu0 %v3931
  %5516 = vmatprep.subr.bf16.mxu0 0
  %5517 = vmatpush1.bf16.msra.mxu0 %v3932
  %5518 = vmatprep.subr.bf16.mxu0 0
  %5519 = vmatpush1.bf16.msra.mxu0 %v3933
  %5520 = vmatprep.subr.bf16.mxu0 0
  %5521 = vmatpush1.bf16.msra.mxu0 %v3934
  %5522 = vmatprep.subr.bf16.mxu0 0
  %5523 = vmatpush1.bf16.msra.mxu0 %v3935
  %5524 = vmatprep.subr.bf16.mxu0 0
  %5525 = vmatpush1.bf16.msra.mxu0 %v3936
  %5526 = vmatprep.subr.bf16.mxu0 0
  %5527 = vmatpush1.bf16.msra.mxu0 %v3937
  %5528 = vmatprep.subr.bf16.mxu0 0
  %5529 = vmatpush1.bf16.msra.mxu0 %v3938
  %5530 = vmatprep.subr.bf16.mxu0 0
  %5531 = vmatpush1.bf16.msra.mxu0 %v3939
  %5532 = vmatprep.mubr.bf16.mxu0 %v1345
  %5533 = vmatmul.mubr.bf16.gmra.mrb[0].mxu0 %v1343
  %v5534 = vpop.f32.mrb[0].mxu0
  %v5535 = vadd.f32 %v5495, %v5534
  %v5536 = vpop.f32.mrb[0].mxu0
  %v5537 = vpop.f32.mrb[0].mxu0
  %v5538 = vpop.f32.mrb[0].mxu0
  %5539 = vdwg.mxu0
  %5540 = vmatprep.subr.bf16.mxu0 0
  %5541 = vmatpush1.bf16.msra.mxu0 %v3940
  %5542 = vmatprep.subr.bf16.mxu0 0
  %5543 = vmatpush1.bf16.msra.mxu0 %v3941
  %5544 = vmatprep.subr.bf16.mxu0 0
  %5545 = vmatpush1.bf16.msra.mxu0 %v3942
  %5546 = vmatprep.subr.bf16.mxu0 0
  %5547 = vmatpush1.bf16.msra.mxu0 %v3943
  %5548 = vmatprep.subr.bf16.mxu0 0
  %5549 = vmatpush1.bf16.msra.mxu0 %v3944
  %5550 = vmatprep.subr.bf16.mxu0 0
  %5551 = vmatpush1.bf16.msra.mxu0 %v3945
  %5552 = vmatprep.subr.bf16.mxu0 0
  %5553 = vmatpush1.bf16.msra.mxu0 %v3946
  %5554 = vmatprep.subr.bf16.mxu0 0
  %5555 = vmatpush1.bf16.msra.mxu0 %v3947
  %5556 = vmatprep.subr.bf16.mxu0 0
  %5557 = vmatpush1.bf16.msra.mxu0 %v3948
  %5558 = vmatprep.subr.bf16.mxu0 0
  %5559 = vmatpush1.bf16.msra.mxu0 %v3949
  %5560 = vmatprep.subr.bf16.mxu0 0
  %5561 = vmatpush1.bf16.msra.mxu0 %v3950
  %5562 = vmatprep.subr.bf16.mxu0 0
  %5563 = vmatpush1.bf16.msra.mxu0 %v3951
  %5564 = vmatprep.subr.bf16.mxu0 0
  %5565 = vmatpush1.bf16.msra.mxu0 %v3952
  %5566 = vmatprep.subr.bf16.mxu0 0
  %5567 = vmatpush1.bf16.msra.mxu0 %v3953
  %5568 = vmatprep.subr.bf16.mxu0 0
  %5569 = vmatpush1.bf16.msra.mxu0 %v3954
  %5570 = vmatprep.subr.bf16.mxu0 0
  %5571 = vmatpush1.bf16.msra.mxu0 %v3955
  %5572 = vmatprep.mubr.bf16.mxu0 %v1383
  %5573 = vmatmul.mubr.bf16.gmra.mrb[0].mxu0 %v1369
  %v5574 = vpop.f32.mrb[0].mxu0
  %v5575 = vadd.f32 %v5535, %v5574
  %v5576 = vpop.f32.mrb[0].mxu0
  %v5577 = vpop.f32.mrb[0].mxu0
  %v5578 = vpop.f32.mrb[0].mxu0
  %5579 = vdwg.mxu0
  %5580 = vmatprep.subr.bf16.mxu0 0
  %5581 = vmatpush1.bf16.msra.mxu0 %v3956
  %5582 = vmatprep.subr.bf16.mxu0 0
  %5583 = vmatpush1.bf16.msra.mxu0 %v3957
  %5584 = vmatprep.subr.bf16.mxu0 0
  %5585 = vmatpush1.bf16.msra.mxu0 %v3958
  %5586 = vmatprep.subr.bf16.mxu0 0
  %5587 = vmatpush1.bf16.msra.mxu0 %v3959
  %5588 = vmatprep.subr.bf16.mxu0 0
  %5589 = vmatpush1.bf16.msra.mxu0 %v3960
  %5590 = vmatprep.subr.bf16.mxu0 0
  %5591 = vmatpush1.bf16.msra.mxu0 %v3961
  %5592 = vmatprep.subr.bf16.mxu0 0
  %5593 = vmatpush1.bf16.msra.mxu0 %v3962
  %5594 = vmatprep.subr.bf16.mxu0 0
  %5595 = vmatpush1.bf16.msra.mxu0 %v3963
  %5596 = vmatprep.subr.bf16.mxu0 0
  %5597 = vmatpush1.bf16.msra.mxu0 %v3964
  %5598 = vmatprep.subr.bf16.mxu0 0
  %5599 = vmatpush1.bf16.msra.mxu0 %v3965
  %5600 = vmatprep.subr.bf16.mxu0 0
  %5601 = vmatpush1.bf16.msra.mxu0 %v3966
  %5602 = vmatprep.subr.bf16.mxu0 0
  %5603 = vmatpush1.bf16.msra.mxu0 %v3967
  %5604 = vmatprep.subr.bf16.mxu0 0
  %5605 = vmatpush1.bf16.msra.mxu0 %v3968
  %5606 = vmatprep.subr.bf16.mxu0 0
  %5607 = vmatpush1.bf16.msra.mxu0 %v3969
  %5608 = vmatprep.subr.bf16.mxu0 0
  %5609 = vmatpush1.bf16.msra.mxu0 %v3970
  %5610 = vmatprep.subr.bf16.mxu0 0
  %5611 = vmatpush1.bf16.msra.mxu0 %v3971
  %5612 = vmatprep.mubr.bf16.mxu0 %v1393
  %5613 = vmatmul.mubr.bf16.gmra.mrb[0].mxu0 %v1391
  %v5614 = vpop.f32.mrb[0].mxu0
  %v5615 = vadd.f32 %v5575, %v5614
  %v5616 = vpop.f32.mrb[0].mxu0
  %v5617 = vpop.f32.mrb[0].mxu0
  %v5618 = vpop.f32.mrb[0].mxu0
  %5619 = vdwg.mxu0
  %5620 = vmatprep.subr.bf16.mxu0 0
  %5621 = vmatpush1.bf16.msra.mxu0 %v3972
  %5622 = vmatprep.subr.bf16.mxu0 0
  %5623 = vmatpush1.bf16.msra.mxu0 %v3973
  %5624 = vmatprep.subr.bf16.mxu0 0
  %5625 = vmatpush1.bf16.msra.mxu0 %v3974
  %5626 = vmatprep.subr.bf16.mxu0 0
  %5627 = vmatpush1.bf16.msra.mxu0 %v3975
  %5628 = vmatprep.subr.bf16.mxu0 0
  %5629 = vmatpush1.bf16.msra.mxu0 %v3976
  %5630 = vmatprep.subr.bf16.mxu0 0
  %5631 = vmatpush1.bf16.msra.mxu0 %v3977
  %5632 = vmatprep.subr.bf16.mxu0 0
  %5633 = vmatpush1.bf16.msra.mxu0 %v3978
  %5634 = vmatprep.subr.bf16.mxu0 0
  %5635 = vmatpush1.bf16.msra.mxu0 %v3979
  %5636 = vmatprep.subr.bf16.mxu0 0
  %5637 = vmatpush1.bf16.msra.mxu0 %v3980
  %5638 = vmatprep.subr.bf16.mxu0 0
  %5639 = vmatpush1.bf16.msra.mxu0 %v3981
  %5640 = vmatprep.subr.bf16.mxu0 0
  %5641 = vmatpush1.bf16.msra.mxu0 %v3982
  %5642 = vmatprep.subr.bf16.mxu0 0
  %5643 = vmatpush1.bf16.msra.mxu0 %v3983
  %5644 = vmatprep.subr.bf16.mxu0 0
  %5645 = vmatpush1.bf16.msra.mxu0 %v3984
  %5646 = vmatprep.subr.bf16.mxu0 0
  %5647 = vmatpush1.bf16.msra.mxu0 %v3985
  %5648 = vmatprep.subr.bf16.mxu0 0
  %5649 = vmatpush1.bf16.msra.mxu0 %v3986
  %5650 = vmatprep.subr.bf16.mxu0 0
  %5651 = vmatpush1.bf16.msra.mxu0 %v3987
  %5652 = vmatprep.mubr.bf16.mxu0 %v1390
  %5653 = vmatmul.mubr.bf16.gmra.mrb[0].mxu0 %v1376
  %v5654 = vpop.f32.mrb[0].mxu0
  %v5655 = vadd.f32 %v5615, %v5654
  %v5656 = vpop.f32.mrb[0].mxu0
  %v5657 = vpop.f32.mrb[0].mxu0
  %v5658 = vpop.f32.mrb[0].mxu0
  %5659 = vdwg.mxu0
  %5660 = vmatprep.subr.bf16.mxu0 0
  %5661 = vmatpush1.bf16.msra.mxu0 %v3988
  %5662 = vmatprep.subr.bf16.mxu0 0
  %5663 = vmatpush1.bf16.msra.mxu0 %v3989
  %5664 = vmatprep.subr.bf16.mxu0 0
  %5665 = vmatpush1.bf16.msra.mxu0 %v3990
  %5666 = vmatprep.subr.bf16.mxu0 0
  %5667 = vmatpush1.bf16.msra.mxu0 %v3991
  %5668 = vmatprep.subr.bf16.mxu0 0
  %5669 = vmatpush1.bf16.msra.mxu0 %v3992
  %5670 = vmatprep.subr.bf16.mxu0 0
  %5671 = vmatpush1.bf16.msra.mxu0 %v3993
  %5672 = vmatprep.subr.bf16.mxu0 0
  %5673 = vmatpush1.bf16.msra.mxu0 %v3994
  %5674 = vmatprep.subr.bf16.mxu0 0
  %5675 = vmatpush1.bf16.msra.mxu0 %v3995
  %5676 = vmatprep.subr.bf16.mxu0 0
  %5677 = vmatpush1.bf16.msra.mxu0 %v3996
  %5678 = vmatprep.subr.bf16.mxu0 0
  %5679 = vmatpush1.bf16.msra.mxu0 %v3997
  %5680 = vmatprep.subr.bf16.mxu0 0
  %5681 = vmatpush1.bf16.msra.mxu0 %v3998
  %5682 = vmatprep.subr.bf16.mxu0 0
  %5683 = vmatpush1.bf16.msra.mxu0 %v3999
  %5684 = vmatprep.subr.bf16.mxu0 0
  %5685 = vmatpush1.bf16.msra.mxu0 %v4000
  %5686 = vmatprep.subr.bf16.mxu0 0
  %5687 = vmatpush1.bf16.msra.mxu0 %v4001
  %5688 = vmatprep.subr.bf16.mxu0 0
  %5689 = vmatpush1.bf16.msra.mxu0 %v4002
  %5690 = vmatprep.subr.bf16.mxu0 0
  %5691 = vmatpush1.bf16.msra.mxu0 %v4003
  %5692 = vmatprep.mubr.bf16.mxu0 %v1394
  %5693 = vmatmul.mubr.bf16.gmra.mrb[0].mxu0 %v1392
  %v5694 = vpop.f32.mrb[0].mxu0
  %v5695 = vadd.f32 %v5655, %v5694
  %v5696 = vpop.f32.mrb[0].mxu0
  %v5697 = vpop.f32.mrb[0].mxu0
  %v5698 = vpop.f32.mrb[0].mxu0
  %5699 = vdwg.mxu0
  %5700 = vmatprep.subr.bf16.mxu0 0
  %5701 = vmatpush1.bf16.msra.mxu0 %v4004
  %5702 = vmatprep.subr.bf16.mxu0 0
  %5703 = vmatpush1.bf16.msra.mxu0 %v4005
  %5704 = vmatprep.subr.bf16.mxu0 0
  %5705 = vmatpush1.bf16.msra.mxu0 %v4006
  %5706 = vmatprep.subr.bf16.mxu0 0
  %5707 = vmatpush1.bf16.msra.mxu0 %v4007
  %5708 = vmatprep.subr.bf16.mxu0 0
  %5709 = vmatpush1.bf16.msra.mxu0 %v4008
  %5710 = vmatprep.subr.bf16.mxu0 0
  %5711 = vmatpush1.bf16.msra.mxu0 %v4009
  %5712 = vmatprep.subr.bf16.mxu0 0
  %5713 = vmatpush1.bf16.msra.mxu0 %v4010
  %5714 = vmatprep.subr.bf16.mxu0 0
  %5715 = vmatpush1.bf16.msra.mxu0 %v4011
  %5716 = vmatprep.subr.bf16.mxu0 0
  %5717 = vmatpush1.bf16.msra.mxu0 %v4012
  %5718 = vmatprep.subr.bf16.mxu0 0
  %5719 = vmatpush1.bf16.msra.mxu0 %v4013
  %5720 = vmatprep.subr.bf16.mxu0 0
  %5721 = vmatpush1.bf16.msra.mxu0 %v4014
  %5722 = vmatprep.subr.bf16.mxu0 0
  %5723 = vmatpush1.bf16.msra.mxu0 %v4015
  %5724 = vmatprep.subr.bf16.mxu0 0
  %5725 = vmatpush1.bf16.msra.mxu0 %v4016
  %5726 = vmatprep.subr.bf16.mxu0 0
  %5727 = vmatpush1.bf16.msra.mxu0 %v4017
  %5728 = vmatprep.subr.bf16.mxu0 0
  %5729 = vmatpush1.bf16.msra.mxu0 %v4018
  %5730 = vmatprep.subr.bf16.mxu0 0
  %5731 = vmatpush1.bf16.msra.mxu0 %v4019
  %5732 = vmatprep.mubr.bf16.mxu0 %v1432
  %5733 = vmatmul.mubr.bf16.gmra.mrb[0].mxu0 %v1418
  %v5734 = vpop.f32.mrb[0].mxu0
  %v5735 = vadd.f32 %v5695, %v5734
  %v5736 = vpop.f32.mrb[0].mxu0
  %v5737 = vpop.f32.mrb[0].mxu0
  %v5738 = vpop.f32.mrb[0].mxu0
  %5739 = vdwg.mxu0
  %5740 = vmatprep.subr.bf16.mxu0 0
  %5741 = vmatpush1.bf16.msra.mxu0 %v4020
  %5742 = vmatprep.subr.bf16.mxu0 0
  %5743 = vmatpush1.bf16.msra.mxu0 %v4021
  %5744 = vmatprep.subr.bf16.mxu0 0
  %5745 = vmatpush1.bf16.msra.mxu0 %v4022
  %5746 = vmatprep.subr.bf16.mxu0 0
  %5747 = vmatpush1.bf16.msra.mxu0 %v4023
  %5748 = vmatprep.subr.bf16.mxu0 0
  %5749 = vmatpush1.bf16.msra.mxu0 %v4024
  %5750 = vmatprep.subr.bf16.mxu0 0
  %5751 = vmatpush1.bf16.msra.mxu0 %v4025
  %5752 = vmatprep.subr.bf16.mxu0 0
  %5753 = vmatpush1.bf16.msra.mxu0 %v4026
  %5754 = vmatprep.subr.bf16.mxu0 0
  %5755 = vmatpush1.bf16.msra.mxu0 %v4027
  %5756 = vmatprep.subr.bf16.mxu0 0
  %5757 = vmatpush1.bf16.msra.mxu0 %v4028
  %5758 = vmatprep.subr.bf16.mxu0 0
  %5759 = vmatpush1.bf16.msra.mxu0 %v4029
  %5760 = vmatprep.subr.bf16.mxu0 0
  %5761 = vmatpush1.bf16.msra.mxu0 %v4030
  %5762 = vmatprep.subr.bf16.mxu0 0
  %5763 = vmatpush1.bf16.msra.mxu0 %v4031
  %5764 = vmatprep.subr.bf16.mxu0 0
  %5765 = vmatpush1.bf16.msra.mxu0 %v4032
  %5766 = vmatprep.subr.bf16.mxu0 0
  %5767 = vmatpush1.bf16.msra.mxu0 %v4033
  %5768 = vmatprep.subr.bf16.mxu0 0
  %5769 = vmatpush1.bf16.msra.mxu0 %v4034
  %5770 = vmatprep.subr.bf16.mxu0 0
  %5771 = vmatpush1.bf16.msra.mxu0 %v4035
  %5772 = vmatprep.mubr.bf16.mxu0 %v1442
  %5773 = vmatmul.mubr.bf16.gmra.mrb[0].mxu0 %v1440
  %v5774 = vpop.f32.mrb[0].mxu0
  %v5775 = vadd.f32 %v5735, %v5774
  %v5776 = vpop.f32.mrb[0].mxu0
  %v5777 = vpop.f32.mrb[0].mxu0
  %v5778 = vpop.f32.mrb[0].mxu0
  %5779 = vdwg.mxu0
  %5780 = vmatprep.subr.bf16.mxu0 0
  %5781 = vmatpush1.bf16.msra.mxu0 %v4036
  %5782 = vmatprep.subr.bf16.mxu0 0
  %5783 = vmatpush1.bf16.msra.mxu0 %v4037
  %5784 = vmatprep.subr.bf16.mxu0 0
  %5785 = vmatpush1.bf16.msra.mxu0 %v4038
  %5786 = vmatprep.subr.bf16.mxu0 0
  %5787 = vmatpush1.bf16.msra.mxu0 %v4039
  %5788 = vmatprep.subr.bf16.mxu0 0
  %5789 = vmatpush1.bf16.msra.mxu0 %v4040
  %5790 = vmatprep.subr.bf16.mxu0 0
  %5791 = vmatpush1.bf16.msra.mxu0 %v4041
  %5792 = vmatprep.subr.bf16.mxu0 0
  %5793 = vmatpush1.bf16.msra.mxu0 %v4042
  %5794 = vmatprep.subr.bf16.mxu0 0
  %5795 = vmatpush1.bf16.msra.mxu0 %v4043
  %5796 = vmatprep.subr.bf16.mxu0 0
  %5797 = vmatpush1.bf16.msra.mxu0 %v4044
  %5798 = vmatprep.subr.bf16.mxu0 0
  %5799 = vmatpush1.bf16.msra.mxu0 %v4045
  %5800 = vmatprep.subr.bf16.mxu0 0
  %5801 = vmatpush1.bf16.msra.mxu0 %v4046
  %5802 = vmatprep.subr.bf16.mxu0 0
  %5803 = vmatpush1.bf16.msra.mxu0 %v4047
  %5804 = vmatprep.subr.bf16.mxu0 0
  %5805 = vmatpush1.bf16.msra.mxu0 %v4048
  %5806 = vmatprep.subr.bf16.mxu0 0
  %5807 = vmatpush1.bf16.msra.mxu0 %v4049
  %5808 = vmatprep.subr.bf16.mxu0 0
  %5809 = vmatpush1.bf16.msra.mxu0 %v4050
  %5810 = vmatprep.subr.bf16.mxu0 0
  %5811 = vmatpush1.bf16.msra.mxu0 %v4051
  %5812 = vmatprep.mubr.bf16.mxu0 %v1439
  %5813 = vmatmul.mubr.bf16.gmra.mrb[0].mxu0 %v1425
  %v5814 = vpop.f32.mrb[0].mxu0
  %v5815 = vadd.f32 %v5775, %v5814
  %v5816 = vpop.f32.mrb[0].mxu0
  %v5817 = vpop.f32.mrb[0].mxu0
  %v5818 = vpop.f32.mrb[0].mxu0
  %5819 = vdwg.mxu0
  %5820 = vmatprep.subr.bf16.mxu0 0
  %5821 = vmatpush1.bf16.msra.mxu0 %v4052
  %5822 = vmatprep.subr.bf16.mxu0 0
  %5823 = vmatpush1.bf16.msra.mxu0 %v4053
  %5824 = vmatprep.subr.bf16.mxu0 0
  %5825 = vmatpush1.bf16.msra.mxu0 %v4054
  %5826 = vmatprep.subr.bf16.mxu0 0
  %5827 = vmatpush1.bf16.msra.mxu0 %v4055
  %5828 = vmatprep.subr.bf16.mxu0 0
  %5829 = vmatpush1.bf16.msra.mxu0 %v4056
  %5830 = vmatprep.subr.bf16.mxu0 0
  %5831 = vmatpush1.bf16.msra.mxu0 %v4057
  %5832 = vmatprep.subr.bf16.mxu0 0
  %5833 = vmatpush1.bf16.msra.mxu0 %v4058
  %5834 = vmatprep.subr.bf16.mxu0 0
  %5835 = vmatpush1.bf16.msra.mxu0 %v4059
  %5836 = vmatprep.subr.bf16.mxu0 0
  %5837 = vmatpush1.bf16.msra.mxu0 %v4060
  %5838 = vmatprep.subr.bf16.mxu0 0
  %5839 = vmatpush1.bf16.msra.mxu0 %v4061
  %5840 = vmatprep.subr.bf16.mxu0 0
  %5841 = vmatpush1.bf16.msra.mxu0 %v4062
  %5842 = vmatprep.subr.bf16.mxu0 0
  %5843 = vmatpush1.bf16.msra.mxu0 %v4063
  %5844 = vmatprep.subr.bf16.mxu0 0
  %5845 = vmatpush1.bf16.msra.mxu0 %v4064
  %5846 = vmatprep.subr.bf16.mxu0 0
  %5847 = vmatpush1.bf16.msra.mxu0 %v4065
  %5848 = vmatprep.subr.bf16.mxu0 0
  %5849 = vmatpush1.bf16.msra.mxu0 %v4066
  %5850 = vmatprep.subr.bf16.mxu0 0
  %5851 = vmatpush1.bf16.msra.mxu0 %v4067
  %5852 = vmatprep.mubr.bf16.mxu0 %v1443
  %5853 = vmatmul.mubr.bf16.gmra.mrb[0].mxu0 %v1441
  %v5854 = vpop.f32.mrb[0].mxu0
  %v5855 = vadd.f32 %v5815, %v5854
  %v5856 = vpop.f32.mrb[0].mxu0
  %v5857 = vpop.f32.mrb[0].mxu0
  %v5858 = vpop.f32.mrb[0].mxu0
  %5859 = vdwg.mxu0
  %v5860 = vxor.u32 %v5855, 2147483648
  %v5861 = vmul.f32 %v5860, 1.442695
  %v5862 = vpow.pop %v5861
  %v5863 = vadd.f32 %v5862, 1.0
  %v5864 = vrcp.pop %v5863
  %v5865 = vmul.f32 1.0, %v5864
  %5866 = vst [vmem:[%s2] sm:$0x3] %v5865
  // Predicated region
  $region10: #{discriminator_forward.11} parent=0 // pred_check
    _
  $region11: #{discriminator_forward.11} parent=0 // pred_check_branch
    %5868 = sbr.rel (0) target = $region13
  $region12: #{discriminator_forward.11} parent=0 // pred_region
    _
  $region13: #{discriminator_forward.11} parent=0 // pred_fallthru
    _
  // Predicated region
  $region14: #{discriminator_forward.11} parent=0 // pred_check
    _
  $region15: #{discriminator_forward.11} parent=0 // pred_check_branch
    %5870 = sbr.rel (0) target = $region17
  $region16: #{discriminator_forward.11} parent=0 // pred_region
    _
  $region17: #{discriminator_forward.11} parent=0 // pred_fallthru
    _

</llo_original>
